<compile_context>
chip_gen: v7x
topology: tpu7x:2x2x1
jax: 0.10.0
libtpu: 0.0.40
codegen_flags: <defaults>
</compile_context>

<pallas_src>
import jax
import jax.numpy as jnp
from jax.experimental import pallas as pl
from jax.experimental.pallas import tpu as pltpu

IN_DIM = 12288
H1 = 84
H2 = 50
OUT_DIM = 2

# Lane-dense (multiple-of-128) padded sizes; extra columns/rows are zero, so the math
# is identical to the original module.
H1_PAD = 128
H2_PAD = 128
OUT_PAD = 128

_TINY_BATCH = 8   # at/below this, a single grid=() invocation beats per-step overhead
_TM = 256         # batch tile for the pipelined path (multiple of 128; fits v5e/v6e/v7x VMEM)


def _mlp_kernel(x_ref, w1_ref, b1_ref, w2_ref, b2_ref, w3_ref, b3_ref, o_ref):
    # fc1: bf16 x bf16 on the MXU with f32 accumulation, then bias + ReLU in f32.
    x = x_ref[...].astype(jnp.bfloat16)
    h1 = jnp.dot(x, w1_ref[...], preferred_element_type=jnp.float32) + b1_ref[...]
    h1 = jnp.maximum(h1, 0.0)
    # fc2 + ReLU (tiny; f32 is fine, compute is negligible).
    h2 = jnp.dot(h1, w2_ref[...], preferred_element_type=jnp.float32) + b2_ref[...]
    h2 = jnp.maximum(h2, 0.0)
    # fc3 (no activation); padded output lanes carry exact zeros (zero weights + zero bias).
    o_ref[...] = jnp.dot(h2, w3_ref[...], preferred_element_type=jnp.float32) + b3_ref[...]


def simplenet_forward(x, params):
    """x: (B, 3, 64, 64) or (B, 12288) float32. params: prepared (padded / bf16-w1) params."""
    x_flat = x.reshape(-1, IN_DIM)
    B = x_flat.shape[0]
    weight_args = (params["w1"], params["b1"], params["w2"],
                   params["b2"], params["w3"], params["b3"])

    if B <= _TINY_BATCH:
        # Whole problem is ~3.3 MiB of weights + a few KiB of activations: single shot,
        # no grid, default scoped VMEM (no over-ask that could hurt v7x).
        full = lambda shape: pl.BlockSpec(shape, lambda: tuple(0 for _ in shape))
        out_padded = pl.pallas_call(
            _mlp_kernel,
            out_shape=jax.ShapeDtypeStruct((B, OUT_PAD), jnp.float32),
            in_specs=[
                full((B, IN_DIM)),
                full((IN_DIM, H1_PAD)),
                full((1, H1_PAD)),
                full((H1_PAD, H2_PAD)),
                full((1, H2_PAD)),
                full((H2_PAD, OUT_PAD)),
                full((1, OUT_PAD)),
            ],
            out_specs=full((B, OUT_PAD)),
        )(x_flat, *weight_args)
    else:
        # Batch-tiled: weights resident (constant index_map), x/out tiles double-buffered,
        # batch axis "parallel" (shards across v7x's two TensorCores).
        tm = _TM
        grid = (pl.cdiv(B, tm),)
        resident = lambda shape: pl.BlockSpec(shape, lambda i: tuple(0 for _ in shape))
        out_padded = pl.pallas_call(
            _mlp_kernel,
            out_shape=jax.ShapeDtypeStruct((B, OUT_PAD), jnp.float32),
            grid=grid,
            in_specs=[
                pl.BlockSpec((tm, IN_DIM), lambda i: (i, 0)),
                resident((IN_DIM, H1_PAD)),
                resident((1, H1_PAD)),
                resident((H1_PAD, H2_PAD)),
                resident((1, H2_PAD)),
                resident((H2_PAD, OUT_PAD)),
                resident((1, OUT_PAD)),
            ],
            out_specs=pl.BlockSpec((tm, OUT_PAD), lambda i: (i, 0)),
            compiler_params=pltpu.CompilerParams(
                dimension_semantics=("parallel",),
                # ~3.3 MiB resident weights + 2 x (256 x 12288 x 4B) x-buffers ~= 28 MiB.
                vmem_limit_bytes=40 << 20,
            ),
        )(x_flat, *weight_args)

    return out_padded[:, :OUT_DIM]


def init_params(key):
    """Deterministic init mimicking torch.nn.Linear's U(-1/sqrt(fan_in), 1/sqrt(fan_in)).
    Weights stored (in_features, out_features), i.e. transposed vs torch, so y = x @ W + b."""
    ks = jax.random.split(key, 6)

    def linear(kw, kb, fan_in, fan_out):
        bound = 1.0 / jnp.sqrt(float(fan_in))
        w = jax.random.uniform(kw, (fan_in, fan_out), jnp.float32, -bound, bound)
        b = jax.random.uniform(kb, (fan_out,), jnp.float32, -bound, bound)
        return w, b

    w1, b1 = linear(ks[0], ks[1], IN_DIM, H1)
    w2, b2 = linear(ks[2], ks[3], H1, H2)
    w3, b3 = linear(ks[4], ks[5], H2, OUT_DIM)
    return {"w1": w1, "b1": b1, "w2": w2, "b2": b2, "w3": w3, "b3": b3}


def prepare_params(p):
    """Zero-pad hidden/output dims to 128 lanes and store w1 in bf16 (dominant HBM bytes).
    TODO(synk): on v7x an fp8(e4m3)+scale path for w1 would cut DMA another ~2x."""
    def pad2(w, rows, cols):
        return jnp.zeros((rows, cols), w.dtype).at[: w.shape[0], : w.shape[1]].set(w)

    def pad_b(b, cols):
        return jnp.zeros((1, cols), b.dtype).at[0, : b.shape[0]].set(b)

    return {
        "w1": pad2(p["w1"], IN_DIM, H1_PAD).astype(jnp.bfloat16),
        "b1": pad_b(p["b1"], H1_PAD),
        "w2": pad2(p["w2"], H1_PAD, H2_PAD),
        "b2": pad_b(p["b2"], H2_PAD),
        "w3": pad2(p["w3"], H2_PAD, OUT_PAD),
        "b3": pad_b(p["b3"], OUT_PAD),
    }


def reference_forward(x, pp):
    """Pure-JAX reference using the same prepared (padded / bf16-w1) parameters."""
    x_flat = x.reshape(-1, IN_DIM)
    h1 = jnp.maximum(
        jnp.dot(x_flat.astype(jnp.bfloat16), pp["w1"], preferred_element_type=jnp.float32)
        + pp["b1"], 0.0)
    h2 = jnp.maximum(
        jnp.dot(h1, pp["w2"], preferred_element_type=jnp.float32) + pp["b2"], 0.0)
    out = jnp.dot(h2, pp["w3"], preferred_element_type=jnp.float32) + pp["b3"]
    return out[:, :OUT_DIM]


if __name__ == "__main__":
    key = jax.random.PRNGKey(0)
    k_x, k_p = jax.random.split(key)

    # Small batch of NCHW images (2, 3, 64, 64) -> x.view(-1, 12288) inside the wrapper.
    x_img = jax.random.normal(k_x, (2, 3, 64, 64), jnp.float32)

    raw_params = init_params(k_p)
    params = prepare_params(raw_params)

    out = simplenet_forward(x_img, params)
    out = jax.block_until_ready(out)

    ref = reference_forward(x_img, params)
    assert out.shape == (2, OUT_DIM)
    assert jnp.allclose(out, ref, atol=1e-3, rtol=1e-3), "mismatch vs. reference"

    print("KERNEL_OK")
</pallas_src>

<mosaic_0001>
module attributes {stable_mosaic.version = 11 : i64} {
  func.func @_mlp_kernel(%arg0: memref<2x12288xf32, #tpu.memory_space<vmem>>, %arg1: memref<12288x128xbf16, #tpu.memory_space<vmem>>, %arg2: memref<1x128xf32, #tpu.memory_space<vmem>>, %arg3: memref<128x128xf32, #tpu.memory_space<vmem>>, %arg4: memref<1x128xf32, #tpu.memory_space<vmem>>, %arg5: memref<128x128xf32, #tpu.memory_space<vmem>>, %arg6: memref<1x128xf32, #tpu.memory_space<vmem>>, %arg7: memref<2x128xf32, #tpu.memory_space<vmem>>) attributes {dimension_semantics = [], scalar_prefetch = 0 : i64, scratch_operands = 0 : i64, tpu.core_type = #tpu.core_type<tc>} {
    %c0 = arith.constant 0 : index
    %c0_0 = arith.constant 0 : index
    %0 = vector.load %arg0[%c0, %c0_0] : memref<2x12288xf32, #tpu.memory_space<vmem>>, vector<2x12288xf32>
    %1 = arith.truncf %0 : vector<2x12288xf32> to vector<2x12288xbf16>
    %c0_1 = arith.constant 0 : index
    %c0_2 = arith.constant 0 : index
    %2 = vector.load %arg1[%c0_1, %c0_2] : memref<12288x128xbf16, #tpu.memory_space<vmem>>, vector<12288x128xbf16>
    %cst = arith.constant dense<0.000000e+00> : vector<2x128xf32>
    %3 = tpu.matmul %1, %2, %cst {dimension_numbers = #tpu.dot_dimension_numbers<[1], [0], [0], [1], [0, 0, 1, 1], [], []>} : vector<2x12288xbf16>, vector<12288x128xbf16>, vector<2x128xf32> -> vector<2x128xf32>
    %c0_3 = arith.constant 0 : index
    %c0_4 = arith.constant 0 : index
    %4 = vector.load %arg2[%c0_3, %c0_4] : memref<1x128xf32, #tpu.memory_space<vmem>>, vector<1x128xf32>
    %5 = vector.broadcast %4 : vector<1x128xf32> to vector<2x128xf32>
    %6 = arith.addf %3, %5 : vector<2x128xf32>
    %cst_5 = arith.constant 0.000000e+00 : f32
    %7 = vector.broadcast %cst_5 : f32 to vector<2x128xf32>
    %8 = arith.maximumf %6, %7 : vector<2x128xf32>
    %c0_6 = arith.constant 0 : index
    %c0_7 = arith.constant 0 : index
    %9 = vector.load %arg3[%c0_6, %c0_7] : memref<128x128xf32, #tpu.memory_space<vmem>>, vector<128x128xf32>
    %cst_8 = arith.constant dense<0.000000e+00> : vector<2x128xf32>
    %10 = tpu.matmul %8, %9, %cst_8 {dimension_numbers = #tpu.dot_dimension_numbers<[1], [0], [0], [1], [0, 0, 1, 1], [], []>} : vector<2x128xf32>, vector<128x128xf32>, vector<2x128xf32> -> vector<2x128xf32>
    %c0_9 = arith.constant 0 : index
    %c0_10 = arith.constant 0 : index
    %11 = vector.load %arg4[%c0_9, %c0_10] : memref<1x128xf32, #tpu.memory_space<vmem>>, vector<1x128xf32>
    %12 = vector.broadcast %11 : vector<1x128xf32> to vector<2x128xf32>
    %13 = arith.addf %10, %12 : vector<2x128xf32>
    %cst_11 = arith.constant 0.000000e+00 : f32
    %14 = vector.broadcast %cst_11 : f32 to vector<2x128xf32>
    %15 = arith.maximumf %13, %14 : vector<2x128xf32>
    %c0_12 = arith.constant 0 : index
    %c0_13 = arith.constant 0 : index
    %16 = vector.load %arg5[%c0_12, %c0_13] : memref<128x128xf32, #tpu.memory_space<vmem>>, vector<128x128xf32>
    %cst_14 = arith.constant dense<0.000000e+00> : vector<2x128xf32>
    %17 = tpu.matmul %15, %16, %cst_14 {dimension_numbers = #tpu.dot_dimension_numbers<[1], [0], [0], [1], [0, 0, 1, 1], [], []>} : vector<2x128xf32>, vector<128x128xf32>, vector<2x128xf32> -> vector<2x128xf32>
    %c0_15 = arith.constant 0 : index
    %c0_16 = arith.constant 0 : index
    %18 = vector.load %arg6[%c0_15, %c0_16] : memref<1x128xf32, #tpu.memory_space<vmem>>, vector<1x128xf32>
    %19 = vector.broadcast %18 : vector<1x128xf32> to vector<2x128xf32>
    %20 = arith.addf %17, %19 : vector<2x128xf32>
    %c0_17 = arith.constant 0 : index
    %c0_18 = arith.constant 0 : index
    %21 = vector.load %arg7[%c0_17, %c0_18] : memref<2x128xf32, #tpu.memory_space<vmem>>, vector<2x128xf32>
    tpu.vector_store %arg7[%c0_17, %c0_18], %20 {strides = array<i32>} : memref<2x128xf32, #tpu.memory_space<vmem>>, vector<2x128xf32>,
    return
  }
}

</mosaic_0001>

<llo_original>
// kernel: tpu_custom_call.1
$region0: #{tpu_custom_call.1}
  #allocation0 [shape = 'u32[]', space=smem, size = 0x4, offset = 0x4, fixed_abs, tag = 'smem constant byte address 0x4 - core index']
  #allocation1 [shape = 'u32[144,128]{1,0:T(1,128)}', space=vmem, size = 0x12000, scoped, tag = 'internal scratch']
  %s0 = inlined_call_operand.hbm [shape: f32[2,12288], index: 0, kind: input, shape index: {}]
  %s1 = inlined_call_operand.hbm [shape: bf16[12288,128], index: 1, kind: input, shape index: {}]
  %s2 = inlined_call_operand.hbm [shape: f32[1,128], index: 2, kind: input, shape index: {}]
  %s3 = inlined_call_operand.hbm [shape: f32[128,128], index: 3, kind: input, shape index: {}]
  %s4 = inlined_call_operand.hbm [shape: f32[1,128], index: 4, kind: input, shape index: {}]
  %s5 = inlined_call_operand.hbm [shape: f32[128,128], index: 5, kind: input, shape index: {}]
  %s6 = inlined_call_operand.hbm [shape: f32[1,128], index: 6, kind: input, shape index: {}]
  %s7 = inlined_call_operand.hbm [shape: f32[2,128], index: 7, kind: output, shape index: {}]
  %s8 = sld [smem:[#allocation0]]
  $region66: #{tpu_custom_call.1} parent=0
    _
  %s10 = ssub.s32 1, %s8
  %s11 = scalar_select 0, %s10, %s8
  $region1: #{tpu_custom_call.1} parent=0
    #allocation2 [shape = 'u8[98304]{0}', space=vmem, size = 0x18000, scoped, tag = 'input window, operand 0, single buffered']
    #allocation3 [shape = 's32[1]{0}', space=sflag, size = 0x4, scoped, tag = 'scoped memory for tpu_custom_call.1']
    #allocation4 [shape = 's32[1]{0}', space=sflag, size = 0x4, scoped, tag = 'scoped memory for tpu_custom_call.1']
    #allocation5 [shape = 'u8[3145728]{0}', space=vmem, size = 0x300000, scoped, tag = 'input window, operand 1, single buffered']
    #allocation6 [shape = 's32[1]{0}', space=sflag, size = 0x4, scoped, tag = 'scoped memory for tpu_custom_call.1']
    #allocation7 [shape = 'u8[512]{0}', space=vmem, size = 0x400, scoped, tag = 'input window, operand 2, single buffered']
    #allocation8 [shape = 'u8[65536]{0}', space=vmem, size = 0x10000, scoped, tag = 'input window, operand 3, single buffered']
    #allocation9 [shape = 's32[1]{0}', space=sflag, size = 0x4, scoped, tag = 'scoped memory for tpu_custom_call.1']
    #allocation10 [shape = 'u8[512]{0}', space=vmem, size = 0x400, scoped, tag = 'input window, operand 4, single buffered']
    #allocation11 [shape = 'u8[65536]{0}', space=vmem, size = 0x10000, scoped, tag = 'input window, operand 5, single buffered']
    #allocation12 [shape = 's32[1]{0}', space=sflag, size = 0x4, scoped, tag = 'scoped memory for tpu_custom_call.1']
    #allocation13 [shape = 'u8[512]{0}', space=vmem, size = 0x400, scoped, tag = 'input window, operand 6, single buffered']
    #allocation14 [shape = 'u8[1024]{0}', space=vmem, size = 0x400, scoped, tag = 'output window, operand 0, single buffered']
    %12 = vsyncpa [#allocation3], 0
    %13 = vsyncpa [#allocation6], 0
    %14 = vsyncpa [#allocation9], 0
    %15 = vsyncpa [#allocation12], 0
    %16 = vsyncpa [#allocation4], 0
    // Predicated region
    $region2: #{tpu_custom_call.1} parent=1 // pred_check
      _
    $region3: #{tpu_custom_call.1} parent=1 // pred_check_branch
      %18 = sbr.rel (0) target = $region5
    $region4: #{tpu_custom_call.1} parent=1 // pred_region
      %s20 = ssub.s32 3072, 3072
      %21 = vsyncadd [#allocation3], %s20
      %s23 = sshll.u32 [#allocation2], 4
      %s24 = int_to_ptr.vmem [resolvable:$true] %s23
      %26 = dma.hbm_to_vmem [thread:$0]  %s0, 3072, %s24, [#allocation3]
    $region5: #{tpu_custom_call.1} parent=1 // pred_fallthru
      _
    // Predicated region
    $region6: #{tpu_custom_call.1} parent=1 // pred_check
      _
    $region7: #{tpu_custom_call.1} parent=1 // pred_check_branch
      %28 = sbr.rel (0) target = $region9
    $region8: #{tpu_custom_call.1} parent=1 // pred_region
      %s30 = ssub.s32 98304, 98304
      %31 = vsyncadd [#allocation6], %s30
      %s32 = sshll.u32 [#allocation5], 4
      %s33 = int_to_ptr.vmem [resolvable:$true] %s32
      %38 = dma.hbm_to_vmem [thread:$0]  %s1, 98304, %s33, [#allocation6], 64, 64, 4
    $region9: #{tpu_custom_call.1} parent=1 // pred_fallthru
      _
    // Predicated region
    $region10: #{tpu_custom_call.1} parent=1 // pred_check
      _
    $region11: #{tpu_custom_call.1} parent=1 // pred_check_branch
      %40 = sbr.rel (0) target = $region13
    $region12: #{tpu_custom_call.1} parent=1 // pred_region
      %s42 = ssub.s32 16, 16
      %43 = vsyncadd [#allocation6], %s42
      %s45 = sshll.u32 [#allocation7], 4
      %s46 = int_to_ptr.vmem [resolvable:$true] %s45
      %48 = dma.hbm_to_vmem [thread:$0]  %s2, 16, %s46, [#allocation6]
    $region13: #{tpu_custom_call.1} parent=1 // pred_fallthru
      _
    // Predicated region
    $region14: #{tpu_custom_call.1} parent=1 // pred_check
      _
    $region15: #{tpu_custom_call.1} parent=1 // pred_check_branch
      %50 = sbr.rel (0) target = $region17
    $region16: #{tpu_custom_call.1} parent=1 // pred_region
      %s52 = ssub.s32 2048, 2048
      %53 = vsyncadd [#allocation9], %s52
      %s54 = sshll.u32 [#allocation8], 4
      %s55 = int_to_ptr.vmem [resolvable:$true] %s54
      %60 = dma.hbm_to_vmem [thread:$0]  %s3, 2048, %s55, [#allocation9], 128, 128, 8
    $region17: #{tpu_custom_call.1} parent=1 // pred_fallthru
      _
    // Predicated region
    $region18: #{tpu_custom_call.1} parent=1 // pred_check
      _
    $region19: #{tpu_custom_call.1} parent=1 // pred_check_branch
      %62 = sbr.rel (0) target = $region21
    $region20: #{tpu_custom_call.1} parent=1 // pred_region
      %s64 = ssub.s32 16, 16
      %65 = vsyncadd [#allocation9], %s64
      %s67 = sshll.u32 [#allocation10], 4
      %s68 = int_to_ptr.vmem [resolvable:$true] %s67
      %70 = dma.hbm_to_vmem [thread:$0]  %s4, 16, %s68, [#allocation9]
    $region21: #{tpu_custom_call.1} parent=1 // pred_fallthru
      _
    // Predicated region
    $region22: #{tpu_custom_call.1} parent=1 // pred_check
      _
    $region23: #{tpu_custom_call.1} parent=1 // pred_check_branch
      %72 = sbr.rel (0) target = $region25
    $region24: #{tpu_custom_call.1} parent=1 // pred_region
      %s74 = ssub.s32 2048, 2048
      %75 = vsyncadd [#allocation12], %s74
      %s76 = sshll.u32 [#allocation11], 4
      %s77 = int_to_ptr.vmem [resolvable:$true] %s76
      %82 = dma.hbm_to_vmem [thread:$0]  %s5, 2048, %s77, [#allocation12], 128, 128, 8
    $region25: #{tpu_custom_call.1} parent=1 // pred_fallthru
      _
    // Predicated region
    $region26: #{tpu_custom_call.1} parent=1 // pred_check
      _
    $region27: #{tpu_custom_call.1} parent=1 // pred_check_branch
      %84 = sbr.rel (0) target = $region29
    $region28: #{tpu_custom_call.1} parent=1 // pred_region
      %s86 = ssub.s32 16, 16
      %87 = vsyncadd [#allocation12], %s86
      %s89 = sshll.u32 [#allocation13], 4
      %s90 = int_to_ptr.vmem [resolvable:$true] %s89
      %92 = dma.hbm_to_vmem [thread:$0]  %s6, 16, %s90, [#allocation12]
    $region29: #{tpu_custom_call.1} parent=1 // pred_fallthru
      _
    // Predicated region
    $region30: #{tpu_custom_call.1} parent=1 // pred_check
      _
    $region31: #{tpu_custom_call.1} parent=1 // pred_check_branch
      %94 = sbr.rel (0) target = $region33
    $region32: #{tpu_custom_call.1} parent=1 // pred_region
      %95 = dma.done [#allocation3], 3072
    $region33: #{tpu_custom_call.1} parent=1 // pred_fallthru
      _
    // Predicated region
    $region34: #{tpu_custom_call.1} parent=1 // pred_check
      _
    $region35: #{tpu_custom_call.1} parent=1 // pred_check_branch
      %97 = sbr.rel (0) target = $region37
    $region36: #{tpu_custom_call.1} parent=1 // pred_region
      %98 = dma.done [#allocation6], 98304
    $region37: #{tpu_custom_call.1} parent=1 // pred_fallthru
      _
    // Predicated region
    $region38: #{tpu_custom_call.1} parent=1 // pred_check
      _
    $region39: #{tpu_custom_call.1} parent=1 // pred_check_branch
      %100 = sbr.rel (0) target = $region41
    $region40: #{tpu_custom_call.1} parent=1 // pred_region
      %101 = dma.done [#allocation6], 16
    $region41: #{tpu_custom_call.1} parent=1 // pred_fallthru
      _
    // Predicated region
    $region42: #{tpu_custom_call.1} parent=1 // pred_check
      _
    $region43: #{tpu_custom_call.1} parent=1 // pred_check_branch
      %103 = sbr.rel (0) target = $region45
    $region44: #{tpu_custom_call.1} parent=1 // pred_region
      %104 = dma.done [#allocation9], 2048
    $region45: #{tpu_custom_call.1} parent=1 // pred_fallthru
      _
    // Predicated region
    $region46: #{tpu_custom_call.1} parent=1 // pred_check
      _
    $region47: #{tpu_custom_call.1} parent=1 // pred_check_branch
      %106 = sbr.rel (0) target = $region49
    $region48: #{tpu_custom_call.1} parent=1 // pred_region
      %107 = dma.done [#allocation9], 16
    $region49: #{tpu_custom_call.1} parent=1 // pred_fallthru
      _
    // Predicated region
    $region50: #{tpu_custom_call.1} parent=1 // pred_check
      _
    $region51: #{tpu_custom_call.1} parent=1 // pred_check_branch
      %109 = sbr.rel (0) target = $region53
    $region52: #{tpu_custom_call.1} parent=1 // pred_region
      %110 = dma.done [#allocation12], 2048
    $region53: #{tpu_custom_call.1} parent=1 // pred_fallthru
      _
    // Predicated region
    $region54: #{tpu_custom_call.1} parent=1 // pred_check
      _
    $region55: #{tpu_custom_call.1} parent=1 // pred_check_branch
      %112 = sbr.rel (0) target = $region57
    $region56: #{tpu_custom_call.1} parent=1 // pred_region
      %113 = dma.done [#allocation12], 16
    $region57: #{tpu_custom_call.1} parent=1 // pred_fallthru
      _
    %v115 = vld [vmem:[#allocation2] sm:$0xff]
    %v116 = vld [vmem:[#allocation2 + $0x8] sm:$0xff]
    %v117 = vld [vmem:[#allocation2 + $0x10] sm:$0xff]
    %v118 = vld [vmem:[#allocation2 + $0x18] sm:$0xff]
    %v119 = vld [vmem:[#allocation2 + $0x20] sm:$0xff]
    %v120 = vld [vmem:[#allocation2 + $0x28] sm:$0xff]
    %v121 = vld [vmem:[#allocation2 + $0x30] sm:$0xff]
    %v122 = vld [vmem:[#allocation2 + $0x38] sm:$0xff]
    %v123 = vld [vmem:[#allocation2 + $0x40] sm:$0xff]
    %v124 = vld [vmem:[#allocation2 + $0x48] sm:$0xff]
    %v125 = vld [vmem:[#allocation2 + $0x50] sm:$0xff]
    %v126 = vld [vmem:[#allocation2 + $0x58] sm:$0xff]
    %v127 = vld [vmem:[#allocation2 + $0x60] sm:$0xff]
    %v128 = vld [vmem:[#allocation2 + $0x68] sm:$0xff]
    %v129 = vld [vmem:[#allocation2 + $0x70] sm:$0xff]
    %v130 = vld [vmem:[#allocation2 + $0x78] sm:$0xff]
    %v131 = vld [vmem:[#allocation2 + $0x80] sm:$0xff]
    %v132 = vld [vmem:[#allocation2 + $0x88] sm:$0xff]
    %v133 = vld [vmem:[#allocation2 + $0x90] sm:$0xff]
    %v134 = vld [vmem:[#allocation2 + $0x98] sm:$0xff]
    %v135 = vld [vmem:[#allocation2 + $0xa0] sm:$0xff]
    %v136 = vld [vmem:[#allocation2 + $0xa8] sm:$0xff]
    %v137 = vld [vmem:[#allocation2 + $0xb0] sm:$0xff]
    %v138 = vld [vmem:[#allocation2 + $0xb8] sm:$0xff]
    %v163 = vcombine.high %v115, %v115
    %v165 = vunpack.c.l.s4 1983009808
    %v166 = vunpack.c.0.s8 %v165
    %v167 = vlaneseq
    %v168 = vshrl.u32 %v167, 7
    %v169 = vsub.s32 %v166, %v168
    %v170 = vrot.slane %v115, %v169
    %v172 = vunpack.c.l.s4 1983009808
    %v173 = vunpack.c.0.s8 %v172
    %v174 = vlaneseq
    %v175 = vshrl.u32 %v174, 7
    %v176 = vsub.s32 %v173, %v175
    %v177 = vrot.slane %v163, %v176
    %v178 = vcombine.high %v170, %v170
    %v179 = vcombine.high %v177, %v177
    %v180 = vcombine.high %v116, %v116
    %v182 = vunpack.c.l.s4 1983009808
    %v183 = vunpack.c.0.s8 %v182
    %v184 = vlaneseq
    %v185 = vshrl.u32 %v184, 7
    %v186 = vsub.s32 %v183, %v185
    %v187 = vrot.slane %v116, %v186
    %v189 = vunpack.c.l.s4 1983009808
    %v190 = vunpack.c.0.s8 %v189
    %v191 = vlaneseq
    %v192 = vshrl.u32 %v191, 7
    %v193 = vsub.s32 %v190, %v192
    %v194 = vrot.slane %v180, %v193
    %v195 = vcombine.high %v187, %v187
    %v196 = vcombine.high %v194, %v194
    %v197 = vcombine.high %v117, %v117
    %v199 = vunpack.c.l.s4 1983009808
    %v200 = vunpack.c.0.s8 %v199
    %v201 = vlaneseq
    %v202 = vshrl.u32 %v201, 7
    %v203 = vsub.s32 %v200, %v202
    %v204 = vrot.slane %v117, %v203
    %v206 = vunpack.c.l.s4 1983009808
    %v207 = vunpack.c.0.s8 %v206
    %v208 = vlaneseq
    %v209 = vshrl.u32 %v208, 7
    %v210 = vsub.s32 %v207, %v209
    %v211 = vrot.slane %v197, %v210
    %v212 = vcombine.high %v204, %v204
    %v213 = vcombine.high %v211, %v211
    %v214 = vcombine.high %v118, %v118
    %v216 = vunpack.c.l.s4 1983009808
    %v217 = vunpack.c.0.s8 %v216
    %v218 = vlaneseq
    %v219 = vshrl.u32 %v218, 7
    %v220 = vsub.s32 %v217, %v219
    %v221 = vrot.slane %v118, %v220
    %v223 = vunpack.c.l.s4 1983009808
    %v224 = vunpack.c.0.s8 %v223
    %v225 = vlaneseq
    %v226 = vshrl.u32 %v225, 7
    %v227 = vsub.s32 %v224, %v226
    %v228 = vrot.slane %v214, %v227
    %v229 = vcombine.high %v221, %v221
    %v230 = vcombine.high %v228, %v228
    %v231 = vcombine.high %v119, %v119
    %v233 = vunpack.c.l.s4 1983009808
    %v234 = vunpack.c.0.s8 %v233
    %v235 = vlaneseq
    %v236 = vshrl.u32 %v235, 7
    %v237 = vsub.s32 %v234, %v236
    %v238 = vrot.slane %v119, %v237
    %v240 = vunpack.c.l.s4 1983009808
    %v241 = vunpack.c.0.s8 %v240
    %v242 = vlaneseq
    %v243 = vshrl.u32 %v242, 7
    %v244 = vsub.s32 %v241, %v243
    %v245 = vrot.slane %v231, %v244
    %v246 = vcombine.high %v238, %v238
    %v247 = vcombine.high %v245, %v245
    %v248 = vcombine.high %v120, %v120
    %v250 = vunpack.c.l.s4 1983009808
    %v251 = vunpack.c.0.s8 %v250
    %v252 = vlaneseq
    %v253 = vshrl.u32 %v252, 7
    %v254 = vsub.s32 %v251, %v253
    %v255 = vrot.slane %v120, %v254
    %v257 = vunpack.c.l.s4 1983009808
    %v258 = vunpack.c.0.s8 %v257
    %v259 = vlaneseq
    %v260 = vshrl.u32 %v259, 7
    %v261 = vsub.s32 %v258, %v260
    %v262 = vrot.slane %v248, %v261
    %v263 = vcombine.high %v255, %v255
    %v264 = vcombine.high %v262, %v262
    %v265 = vcombine.high %v121, %v121
    %v267 = vunpack.c.l.s4 1983009808
    %v268 = vunpack.c.0.s8 %v267
    %v269 = vlaneseq
    %v270 = vshrl.u32 %v269, 7
    %v271 = vsub.s32 %v268, %v270
    %v272 = vrot.slane %v121, %v271
    %v274 = vunpack.c.l.s4 1983009808
    %v275 = vunpack.c.0.s8 %v274
    %v276 = vlaneseq
    %v277 = vshrl.u32 %v276, 7
    %v278 = vsub.s32 %v275, %v277
    %v279 = vrot.slane %v265, %v278
    %v280 = vcombine.high %v272, %v272
    %v281 = vcombine.high %v279, %v279
    %v282 = vcombine.high %v122, %v122
    %v284 = vunpack.c.l.s4 1983009808
    %v285 = vunpack.c.0.s8 %v284
    %v286 = vlaneseq
    %v287 = vshrl.u32 %v286, 7
    %v288 = vsub.s32 %v285, %v287
    %v289 = vrot.slane %v122, %v288
    %v291 = vunpack.c.l.s4 1983009808
    %v292 = vunpack.c.0.s8 %v291
    %v293 = vlaneseq
    %v294 = vshrl.u32 %v293, 7
    %v295 = vsub.s32 %v292, %v294
    %v296 = vrot.slane %v282, %v295
    %v297 = vcombine.high %v289, %v289
    %v298 = vcombine.high %v296, %v296
    %v299 = vcombine.high %v123, %v123
    %v301 = vunpack.c.l.s4 1983009808
    %v302 = vunpack.c.0.s8 %v301
    %v303 = vlaneseq
    %v304 = vshrl.u32 %v303, 7
    %v305 = vsub.s32 %v302, %v304
    %v306 = vrot.slane %v123, %v305
    %v308 = vunpack.c.l.s4 1983009808
    %v309 = vunpack.c.0.s8 %v308
    %v310 = vlaneseq
    %v311 = vshrl.u32 %v310, 7
    %v312 = vsub.s32 %v309, %v311
    %v313 = vrot.slane %v299, %v312
    %v314 = vcombine.high %v306, %v306
    %v315 = vcombine.high %v313, %v313
    %v316 = vcombine.high %v124, %v124
    %v318 = vunpack.c.l.s4 1983009808
    %v319 = vunpack.c.0.s8 %v318
    %v320 = vlaneseq
    %v321 = vshrl.u32 %v320, 7
    %v322 = vsub.s32 %v319, %v321
    %v323 = vrot.slane %v124, %v322
    %v325 = vunpack.c.l.s4 1983009808
    %v326 = vunpack.c.0.s8 %v325
    %v327 = vlaneseq
    %v328 = vshrl.u32 %v327, 7
    %v329 = vsub.s32 %v326, %v328
    %v330 = vrot.slane %v316, %v329
    %v331 = vcombine.high %v323, %v323
    %v332 = vcombine.high %v330, %v330
    %v333 = vcombine.high %v125, %v125
    %v335 = vunpack.c.l.s4 1983009808
    %v336 = vunpack.c.0.s8 %v335
    %v337 = vlaneseq
    %v338 = vshrl.u32 %v337, 7
    %v339 = vsub.s32 %v336, %v338
    %v340 = vrot.slane %v125, %v339
    %v342 = vunpack.c.l.s4 1983009808
    %v343 = vunpack.c.0.s8 %v342
    %v344 = vlaneseq
    %v345 = vshrl.u32 %v344, 7
    %v346 = vsub.s32 %v343, %v345
    %v347 = vrot.slane %v333, %v346
    %v348 = vcombine.high %v340, %v340
    %v349 = vcombine.high %v347, %v347
    %v350 = vcombine.high %v126, %v126
    %v352 = vunpack.c.l.s4 1983009808
    %v353 = vunpack.c.0.s8 %v352
    %v354 = vlaneseq
    %v355 = vshrl.u32 %v354, 7
    %v356 = vsub.s32 %v353, %v355
    %v357 = vrot.slane %v126, %v356
    %v359 = vunpack.c.l.s4 1983009808
    %v360 = vunpack.c.0.s8 %v359
    %v361 = vlaneseq
    %v362 = vshrl.u32 %v361, 7
    %v363 = vsub.s32 %v360, %v362
    %v364 = vrot.slane %v350, %v363
    %v365 = vcombine.high %v357, %v357
    %v366 = vcombine.high %v364, %v364
    %v367 = vcombine.high %v127, %v127
    %v369 = vunpack.c.l.s4 1983009808
    %v370 = vunpack.c.0.s8 %v369
    %v371 = vlaneseq
    %v372 = vshrl.u32 %v371, 7
    %v373 = vsub.s32 %v370, %v372
    %v374 = vrot.slane %v127, %v373
    %v376 = vunpack.c.l.s4 1983009808
    %v377 = vunpack.c.0.s8 %v376
    %v378 = vlaneseq
    %v379 = vshrl.u32 %v378, 7
    %v380 = vsub.s32 %v377, %v379
    %v381 = vrot.slane %v367, %v380
    %v382 = vcombine.high %v374, %v374
    %v383 = vcombine.high %v381, %v381
    %v384 = vcombine.high %v128, %v128
    %v386 = vunpack.c.l.s4 1983009808
    %v387 = vunpack.c.0.s8 %v386
    %v388 = vlaneseq
    %v389 = vshrl.u32 %v388, 7
    %v390 = vsub.s32 %v387, %v389
    %v391 = vrot.slane %v128, %v390
    %v393 = vunpack.c.l.s4 1983009808
    %v394 = vunpack.c.0.s8 %v393
    %v395 = vlaneseq
    %v396 = vshrl.u32 %v395, 7
    %v397 = vsub.s32 %v394, %v396
    %v398 = vrot.slane %v384, %v397
    %v399 = vcombine.high %v391, %v391
    %v400 = vcombine.high %v398, %v398
    %v401 = vcombine.high %v129, %v129
    %v403 = vunpack.c.l.s4 1983009808
    %v404 = vunpack.c.0.s8 %v403
    %v405 = vlaneseq
    %v406 = vshrl.u32 %v405, 7
    %v407 = vsub.s32 %v404, %v406
    %v408 = vrot.slane %v129, %v407
    %v410 = vunpack.c.l.s4 1983009808
    %v411 = vunpack.c.0.s8 %v410
    %v412 = vlaneseq
    %v413 = vshrl.u32 %v412, 7
    %v414 = vsub.s32 %v411, %v413
    %v415 = vrot.slane %v401, %v414
    %v416 = vcombine.high %v408, %v408
    %v417 = vcombine.high %v415, %v415
    %v418 = vcombine.high %v130, %v130
    %v420 = vunpack.c.l.s4 1983009808
    %v421 = vunpack.c.0.s8 %v420
    %v422 = vlaneseq
    %v423 = vshrl.u32 %v422, 7
    %v424 = vsub.s32 %v421, %v423
    %v425 = vrot.slane %v130, %v424
    %v427 = vunpack.c.l.s4 1983009808
    %v428 = vunpack.c.0.s8 %v427
    %v429 = vlaneseq
    %v430 = vshrl.u32 %v429, 7
    %v431 = vsub.s32 %v428, %v430
    %v432 = vrot.slane %v418, %v431
    %v433 = vcombine.high %v425, %v425
    %v434 = vcombine.high %v432, %v432
    %v435 = vcombine.high %v131, %v131
    %v437 = vunpack.c.l.s4 1983009808
    %v438 = vunpack.c.0.s8 %v437
    %v439 = vlaneseq
    %v440 = vshrl.u32 %v439, 7
    %v441 = vsub.s32 %v438, %v440
    %v442 = vrot.slane %v131, %v441
    %v444 = vunpack.c.l.s4 1983009808
    %v445 = vunpack.c.0.s8 %v444
    %v446 = vlaneseq
    %v447 = vshrl.u32 %v446, 7
    %v448 = vsub.s32 %v445, %v447
    %v449 = vrot.slane %v435, %v448
    %v450 = vcombine.high %v442, %v442
    %v451 = vcombine.high %v449, %v449
    %v452 = vcombine.high %v132, %v132
    %v454 = vunpack.c.l.s4 1983009808
    %v455 = vunpack.c.0.s8 %v454
    %v456 = vlaneseq
    %v457 = vshrl.u32 %v456, 7
    %v458 = vsub.s32 %v455, %v457
    %v459 = vrot.slane %v132, %v458
    %v461 = vunpack.c.l.s4 1983009808
    %v462 = vunpack.c.0.s8 %v461
    %v463 = vlaneseq
    %v464 = vshrl.u32 %v463, 7
    %v465 = vsub.s32 %v462, %v464
    %v466 = vrot.slane %v452, %v465
    %v467 = vcombine.high %v459, %v459
    %v468 = vcombine.high %v466, %v466
    %v469 = vcombine.high %v133, %v133
    %v471 = vunpack.c.l.s4 1983009808
    %v472 = vunpack.c.0.s8 %v471
    %v473 = vlaneseq
    %v474 = vshrl.u32 %v473, 7
    %v475 = vsub.s32 %v472, %v474
    %v476 = vrot.slane %v133, %v475
    %v478 = vunpack.c.l.s4 1983009808
    %v479 = vunpack.c.0.s8 %v478
    %v480 = vlaneseq
    %v481 = vshrl.u32 %v480, 7
    %v482 = vsub.s32 %v479, %v481
    %v483 = vrot.slane %v469, %v482
    %v484 = vcombine.high %v476, %v476
    %v485 = vcombine.high %v483, %v483
    %v486 = vcombine.high %v134, %v134
    %v488 = vunpack.c.l.s4 1983009808
    %v489 = vunpack.c.0.s8 %v488
    %v490 = vlaneseq
    %v491 = vshrl.u32 %v490, 7
    %v492 = vsub.s32 %v489, %v491
    %v493 = vrot.slane %v134, %v492
    %v495 = vunpack.c.l.s4 1983009808
    %v496 = vunpack.c.0.s8 %v495
    %v497 = vlaneseq
    %v498 = vshrl.u32 %v497, 7
    %v499 = vsub.s32 %v496, %v498
    %v500 = vrot.slane %v486, %v499
    %v501 = vcombine.high %v493, %v493
    %v502 = vcombine.high %v500, %v500
    %v503 = vcombine.high %v135, %v135
    %v505 = vunpack.c.l.s4 1983009808
    %v506 = vunpack.c.0.s8 %v505
    %v507 = vlaneseq
    %v508 = vshrl.u32 %v507, 7
    %v509 = vsub.s32 %v506, %v508
    %v510 = vrot.slane %v135, %v509
    %v512 = vunpack.c.l.s4 1983009808
    %v513 = vunpack.c.0.s8 %v512
    %v514 = vlaneseq
    %v515 = vshrl.u32 %v514, 7
    %v516 = vsub.s32 %v513, %v515
    %v517 = vrot.slane %v503, %v516
    %v518 = vcombine.high %v510, %v510
    %v519 = vcombine.high %v517, %v517
    %v520 = vcombine.high %v136, %v136
    %v522 = vunpack.c.l.s4 1983009808
    %v523 = vunpack.c.0.s8 %v522
    %v524 = vlaneseq
    %v525 = vshrl.u32 %v524, 7
    %v526 = vsub.s32 %v523, %v525
    %v527 = vrot.slane %v136, %v526
    %v529 = vunpack.c.l.s4 1983009808
    %v530 = vunpack.c.0.s8 %v529
    %v531 = vlaneseq
    %v532 = vshrl.u32 %v531, 7
    %v533 = vsub.s32 %v530, %v532
    %v534 = vrot.slane %v520, %v533
    %v535 = vcombine.high %v527, %v527
    %v536 = vcombine.high %v534, %v534
    %v537 = vcombine.high %v137, %v137
    %v539 = vunpack.c.l.s4 1983009808
    %v540 = vunpack.c.0.s8 %v539
    %v541 = vlaneseq
    %v542 = vshrl.u32 %v541, 7
    %v543 = vsub.s32 %v540, %v542
    %v544 = vrot.slane %v137, %v543
    %v546 = vunpack.c.l.s4 1983009808
    %v547 = vunpack.c.0.s8 %v546
    %v548 = vlaneseq
    %v549 = vshrl.u32 %v548, 7
    %v550 = vsub.s32 %v547, %v549
    %v551 = vrot.slane %v537, %v550
    %v552 = vcombine.high %v544, %v544
    %v553 = vcombine.high %v551, %v551
    %v554 = vcombine.high %v138, %v138
    %v556 = vunpack.c.l.s4 1983009808
    %v557 = vunpack.c.0.s8 %v556
    %v558 = vlaneseq
    %v559 = vshrl.u32 %v558, 7
    %v560 = vsub.s32 %v557, %v559
    %v561 = vrot.slane %v138, %v560
    %v563 = vunpack.c.l.s4 1983009808
    %v564 = vunpack.c.0.s8 %v563
    %v565 = vlaneseq
    %v566 = vshrl.u32 %v565, 7
    %v567 = vsub.s32 %v564, %v566
    %v568 = vrot.slane %v554, %v567
    %v569 = vcombine.high %v561, %v561
    %v570 = vcombine.high %v568, %v568
    %v667 = vpack.c.bf16 %v170, %v170
    %v668 = vpack.c.bf16 %v178, %v178
    %v669 = vpack.c.bf16 %v177, %v177
    %v670 = vpack.c.bf16 %v179, %v179
    %v671 = vpack.c.bf16 %v187, %v187
    %v672 = vpack.c.bf16 %v195, %v195
    %v673 = vpack.c.bf16 %v194, %v194
    %v674 = vpack.c.bf16 %v196, %v196
    %v675 = vpack.c.bf16 %v204, %v204
    %v676 = vpack.c.bf16 %v212, %v212
    %v677 = vpack.c.bf16 %v211, %v211
    %v678 = vpack.c.bf16 %v213, %v213
    %v679 = vpack.c.bf16 %v221, %v221
    %v680 = vpack.c.bf16 %v229, %v229
    %v681 = vpack.c.bf16 %v228, %v228
    %v682 = vpack.c.bf16 %v230, %v230
    %v683 = vpack.c.bf16 %v238, %v238
    %v684 = vpack.c.bf16 %v246, %v246
    %v685 = vpack.c.bf16 %v245, %v245
    %v686 = vpack.c.bf16 %v247, %v247
    %v687 = vpack.c.bf16 %v255, %v255
    %v688 = vpack.c.bf16 %v263, %v263
    %v689 = vpack.c.bf16 %v262, %v262
    %v690 = vpack.c.bf16 %v264, %v264
    %v691 = vpack.c.bf16 %v272, %v272
    %v692 = vpack.c.bf16 %v280, %v280
    %v693 = vpack.c.bf16 %v279, %v279
    %v694 = vpack.c.bf16 %v281, %v281
    %v695 = vpack.c.bf16 %v289, %v289
    %v696 = vpack.c.bf16 %v297, %v297
    %v697 = vpack.c.bf16 %v296, %v296
    %v698 = vpack.c.bf16 %v298, %v298
    %v699 = vpack.c.bf16 %v306, %v306
    %v700 = vpack.c.bf16 %v314, %v314
    %v701 = vpack.c.bf16 %v313, %v313
    %v702 = vpack.c.bf16 %v315, %v315
    %v703 = vpack.c.bf16 %v323, %v323
    %v704 = vpack.c.bf16 %v331, %v331
    %v705 = vpack.c.bf16 %v330, %v330
    %v706 = vpack.c.bf16 %v332, %v332
    %v707 = vpack.c.bf16 %v340, %v340
    %v708 = vpack.c.bf16 %v348, %v348
    %v709 = vpack.c.bf16 %v347, %v347
    %v710 = vpack.c.bf16 %v349, %v349
    %v711 = vpack.c.bf16 %v357, %v357
    %v712 = vpack.c.bf16 %v365, %v365
    %v713 = vpack.c.bf16 %v364, %v364
    %v714 = vpack.c.bf16 %v366, %v366
    %v715 = vpack.c.bf16 %v374, %v374
    %v716 = vpack.c.bf16 %v382, %v382
    %v717 = vpack.c.bf16 %v381, %v381
    %v718 = vpack.c.bf16 %v383, %v383
    %v719 = vpack.c.bf16 %v391, %v391
    %v720 = vpack.c.bf16 %v399, %v399
    %v721 = vpack.c.bf16 %v398, %v398
    %v722 = vpack.c.bf16 %v400, %v400
    %v723 = vpack.c.bf16 %v408, %v408
    %v724 = vpack.c.bf16 %v416, %v416
    %v725 = vpack.c.bf16 %v415, %v415
    %v726 = vpack.c.bf16 %v417, %v417
    %v727 = vpack.c.bf16 %v425, %v425
    %v728 = vpack.c.bf16 %v433, %v433
    %v729 = vpack.c.bf16 %v432, %v432
    %v730 = vpack.c.bf16 %v434, %v434
    %v731 = vpack.c.bf16 %v442, %v442
    %v732 = vpack.c.bf16 %v450, %v450
    %v733 = vpack.c.bf16 %v449, %v449
    %v734 = vpack.c.bf16 %v451, %v451
    %v735 = vpack.c.bf16 %v459, %v459
    %v736 = vpack.c.bf16 %v467, %v467
    %v737 = vpack.c.bf16 %v466, %v466
    %v738 = vpack.c.bf16 %v468, %v468
    %v739 = vpack.c.bf16 %v476, %v476
    %v740 = vpack.c.bf16 %v484, %v484
    %v741 = vpack.c.bf16 %v483, %v483
    %v742 = vpack.c.bf16 %v485, %v485
    %v743 = vpack.c.bf16 %v493, %v493
    %v744 = vpack.c.bf16 %v501, %v501
    %v745 = vpack.c.bf16 %v500, %v500
    %v746 = vpack.c.bf16 %v502, %v502
    %v747 = vpack.c.bf16 %v510, %v510
    %v748 = vpack.c.bf16 %v518, %v518
    %v749 = vpack.c.bf16 %v517, %v517
    %v750 = vpack.c.bf16 %v519, %v519
    %v751 = vpack.c.bf16 %v527, %v527
    %v752 = vpack.c.bf16 %v535, %v535
    %v753 = vpack.c.bf16 %v534, %v534
    %v754 = vpack.c.bf16 %v536, %v536
    %v755 = vpack.c.bf16 %v544, %v544
    %v756 = vpack.c.bf16 %v552, %v552
    %v757 = vpack.c.bf16 %v551, %v551
    %v758 = vpack.c.bf16 %v553, %v553
    %v759 = vpack.c.bf16 %v561, %v561
    %v760 = vpack.c.bf16 %v569, %v569
    %v761 = vpack.c.bf16 %v568, %v568
    %v762 = vpack.c.bf16 %v570, %v570
    %v763 = vld [vmem:[#allocation5] sm:$0xf]
    %v764 = vld [vmem:[#allocation5 + $0x4] sm:$0xf]
    %v765 = vld [vmem:[#allocation5 + $0x8] sm:$0xf]
    %v766 = vld [vmem:[#allocation5 + $0xc] sm:$0xf]
    %v767 = vld [vmem:[#allocation5 + $0x10] sm:$0xf]
    %v768 = vld [vmem:[#allocation5 + $0x14] sm:$0xf]
    %v769 = vld [vmem:[#allocation5 + $0x18] sm:$0xf]
    %v770 = vld [vmem:[#allocation5 + $0x1c] sm:$0xf]
    %v771 = vld [vmem:[#allocation5 + $0x20] sm:$0xf]
    %v772 = vld [vmem:[#allocation5 + $0x24] sm:$0xf]
    %v773 = vld [vmem:[#allocation5 + $0x28] sm:$0xf]
    %v774 = vld [vmem:[#allocation5 + $0x2c] sm:$0xf]
    %v775 = vld [vmem:[#allocation5 + $0x30] sm:$0xf]
    %v776 = vld [vmem:[#allocation5 + $0x34] sm:$0xf]
    %v777 = vld [vmem:[#allocation5 + $0x38] sm:$0xf]
    %v778 = vld [vmem:[#allocation5 + $0x3c] sm:$0xf]
    %v779 = vld [vmem:[#allocation5 + $0x40] sm:$0xf]
    %v780 = vld [vmem:[#allocation5 + $0x44] sm:$0xf]
    %v781 = vld [vmem:[#allocation5 + $0x48] sm:$0xf]
    %v782 = vld [vmem:[#allocation5 + $0x4c] sm:$0xf]
    %v783 = vld [vmem:[#allocation5 + $0x50] sm:$0xf]
    %v784 = vld [vmem:[#allocation5 + $0x54] sm:$0xf]
    %v785 = vld [vmem:[#allocation5 + $0x58] sm:$0xf]
    %v786 = vld [vmem:[#allocation5 + $0x5c] sm:$0xf]
    %v787 = vld [vmem:[#allocation5 + $0x60] sm:$0xf]
    %v788 = vld [vmem:[#allocation5 + $0x64] sm:$0xf]
    %v789 = vld [vmem:[#allocation5 + $0x68] sm:$0xf]
    %v790 = vld [vmem:[#allocation5 + $0x6c] sm:$0xf]
    %v791 = vld [vmem:[#allocation5 + $0x70] sm:$0xf]
    %v792 = vld [vmem:[#allocation5 + $0x74] sm:$0xf]
    %v793 = vld [vmem:[#allocation5 + $0x78] sm:$0xf]
    %v794 = vld [vmem:[#allocation5 + $0x7c] sm:$0xf]
    %v795 = vld [vmem:[#allocation5 + $0x80] sm:$0xf]
    %v796 = vld [vmem:[#allocation5 + $0x84] sm:$0xf]
    %v797 = vld [vmem:[#allocation5 + $0x88] sm:$0xf]
    %v798 = vld [vmem:[#allocation5 + $0x8c] sm:$0xf]
    %v799 = vld [vmem:[#allocation5 + $0x90] sm:$0xf]
    %v800 = vld [vmem:[#allocation5 + $0x94] sm:$0xf]
    %v801 = vld [vmem:[#allocation5 + $0x98] sm:$0xf]
    %v802 = vld [vmem:[#allocation5 + $0x9c] sm:$0xf]
    %v803 = vld [vmem:[#allocation5 + $0xa0] sm:$0xf]
    %v804 = vld [vmem:[#allocation5 + $0xa4] sm:$0xf]
    %v805 = vld [vmem:[#allocation5 + $0xa8] sm:$0xf]
    %v806 = vld [vmem:[#allocation5 + $0xac] sm:$0xf]
    %v807 = vld [vmem:[#allocation5 + $0xb0] sm:$0xf]
    %v808 = vld [vmem:[#allocation5 + $0xb4] sm:$0xf]
    %v809 = vld [vmem:[#allocation5 + $0xb8] sm:$0xf]
    %v810 = vld [vmem:[#allocation5 + $0xbc] sm:$0xf]
    %v811 = vld [vmem:[#allocation5 + $0xc0] sm:$0xf]
    %v812 = vld [vmem:[#allocation5 + $0xc4] sm:$0xf]
    %v813 = vld [vmem:[#allocation5 + $0xc8] sm:$0xf]
    %v814 = vld [vmem:[#allocation5 + $0xcc] sm:$0xf]
    %v815 = vld [vmem:[#allocation5 + $0xd0] sm:$0xf]
    %v816 = vld [vmem:[#allocation5 + $0xd4] sm:$0xf]
    %v817 = vld [vmem:[#allocation5 + $0xd8] sm:$0xf]
    %v818 = vld [vmem:[#allocation5 + $0xdc] sm:$0xf]
    %v819 = vld [vmem:[#allocation5 + $0xe0] sm:$0xf]
    %v820 = vld [vmem:[#allocation5 + $0xe4] sm:$0xf]
    %v821 = vld [vmem:[#allocation5 + $0xe8] sm:$0xf]
    %v822 = vld [vmem:[#allocation5 + $0xec] sm:$0xf]
    %v823 = vld [vmem:[#allocation5 + $0xf0] sm:$0xf]
    %v824 = vld [vmem:[#allocation5 + $0xf4] sm:$0xf]
    %v825 = vld [vmem:[#allocation5 + $0xf8] sm:$0xf]
    %v826 = vld [vmem:[#allocation5 + $0xfc] sm:$0xf]
    %v827 = vld [vmem:[#allocation5 + $0x100] sm:$0xf]
    %v828 = vld [vmem:[#allocation5 + $0x104] sm:$0xf]
    %v829 = vld [vmem:[#allocation5 + $0x108] sm:$0xf]
    %v830 = vld [vmem:[#allocation5 + $0x10c] sm:$0xf]
    %v831 = vld [vmem:[#allocation5 + $0x110] sm:$0xf]
    %v832 = vld [vmem:[#allocation5 + $0x114] sm:$0xf]
    %v833 = vld [vmem:[#allocation5 + $0x118] sm:$0xf]
    %v834 = vld [vmem:[#allocation5 + $0x11c] sm:$0xf]
    %v835 = vld [vmem:[#allocation5 + $0x120] sm:$0xf]
    %v836 = vld [vmem:[#allocation5 + $0x124] sm:$0xf]
    %v837 = vld [vmem:[#allocation5 + $0x128] sm:$0xf]
    %v838 = vld [vmem:[#allocation5 + $0x12c] sm:$0xf]
    %v839 = vld [vmem:[#allocation5 + $0x130] sm:$0xf]
    %v840 = vld [vmem:[#allocation5 + $0x134] sm:$0xf]
    %v841 = vld [vmem:[#allocation5 + $0x138] sm:$0xf]
    %v842 = vld [vmem:[#allocation5 + $0x13c] sm:$0xf]
    %v843 = vld [vmem:[#allocation5 + $0x140] sm:$0xf]
    %v844 = vld [vmem:[#allocation5 + $0x144] sm:$0xf]
    %v845 = vld [vmem:[#allocation5 + $0x148] sm:$0xf]
    %v846 = vld [vmem:[#allocation5 + $0x14c] sm:$0xf]
    %v847 = vld [vmem:[#allocation5 + $0x150] sm:$0xf]
    %v848 = vld [vmem:[#allocation5 + $0x154] sm:$0xf]
    %v849 = vld [vmem:[#allocation5 + $0x158] sm:$0xf]
    %v850 = vld [vmem:[#allocation5 + $0x15c] sm:$0xf]
    %v851 = vld [vmem:[#allocation5 + $0x160] sm:$0xf]
    %v852 = vld [vmem:[#allocation5 + $0x164] sm:$0xf]
    %v853 = vld [vmem:[#allocation5 + $0x168] sm:$0xf]
    %v854 = vld [vmem:[#allocation5 + $0x16c] sm:$0xf]
    %v855 = vld [vmem:[#allocation5 + $0x170] sm:$0xf]
    %v856 = vld [vmem:[#allocation5 + $0x174] sm:$0xf]
    %v857 = vld [vmem:[#allocation5 + $0x178] sm:$0xf]
    %v858 = vld [vmem:[#allocation5 + $0x17c] sm:$0xf]
    %v859 = vld [vmem:[#allocation5 + $0x180] sm:$0xf]
    %v860 = vld [vmem:[#allocation5 + $0x184] sm:$0xf]
    %v861 = vld [vmem:[#allocation5 + $0x188] sm:$0xf]
    %v862 = vld [vmem:[#allocation5 + $0x18c] sm:$0xf]
    %v863 = vld [vmem:[#allocation5 + $0x190] sm:$0xf]
    %v864 = vld [vmem:[#allocation5 + $0x194] sm:$0xf]
    %v865 = vld [vmem:[#allocation5 + $0x198] sm:$0xf]
    %v866 = vld [vmem:[#allocation5 + $0x19c] sm:$0xf]
    %v867 = vld [vmem:[#allocation5 + $0x1a0] sm:$0xf]
    %v868 = vld [vmem:[#allocation5 + $0x1a4] sm:$0xf]
    %v869 = vld [vmem:[#allocation5 + $0x1a8] sm:$0xf]
    %v870 = vld [vmem:[#allocation5 + $0x1ac] sm:$0xf]
    %v871 = vld [vmem:[#allocation5 + $0x1b0] sm:$0xf]
    %v872 = vld [vmem:[#allocation5 + $0x1b4] sm:$0xf]
    %v873 = vld [vmem:[#allocation5 + $0x1b8] sm:$0xf]
    %v874 = vld [vmem:[#allocation5 + $0x1bc] sm:$0xf]
    %v875 = vld [vmem:[#allocation5 + $0x1c0] sm:$0xf]
    %v876 = vld [vmem:[#allocation5 + $0x1c4] sm:$0xf]
    %v877 = vld [vmem:[#allocation5 + $0x1c8] sm:$0xf]
    %v878 = vld [vmem:[#allocation5 + $0x1cc] sm:$0xf]
    %v879 = vld [vmem:[#allocation5 + $0x1d0] sm:$0xf]
    %v880 = vld [vmem:[#allocation5 + $0x1d4] sm:$0xf]
    %v881 = vld [vmem:[#allocation5 + $0x1d8] sm:$0xf]
    %v882 = vld [vmem:[#allocation5 + $0x1dc] sm:$0xf]
    %v883 = vld [vmem:[#allocation5 + $0x1e0] sm:$0xf]
    %v884 = vld [vmem:[#allocation5 + $0x1e4] sm:$0xf]
    %v885 = vld [vmem:[#allocation5 + $0x1e8] sm:$0xf]
    %v886 = vld [vmem:[#allocation5 + $0x1ec] sm:$0xf]
    %v887 = vld [vmem:[#allocation5 + $0x1f0] sm:$0xf]
    %v888 = vld [vmem:[#allocation5 + $0x1f4] sm:$0xf]
    %v889 = vld [vmem:[#allocation5 + $0x1f8] sm:$0xf]
    %v890 = vld [vmem:[#allocation5 + $0x1fc] sm:$0xf]
    %v891 = vld [vmem:[#allocation5 + $0x200] sm:$0xf]
    %v892 = vld [vmem:[#allocation5 + $0x204] sm:$0xf]
    %v893 = vld [vmem:[#allocation5 + $0x208] sm:$0xf]
    %v894 = vld [vmem:[#allocation5 + $0x20c] sm:$0xf]
    %v895 = vld [vmem:[#allocation5 + $0x210] sm:$0xf]
    %v896 = vld [vmem:[#allocation5 + $0x214] sm:$0xf]
    %v897 = vld [vmem:[#allocation5 + $0x218] sm:$0xf]
    %v898 = vld [vmem:[#allocation5 + $0x21c] sm:$0xf]
    %v899 = vld [vmem:[#allocation5 + $0x220] sm:$0xf]
    %v900 = vld [vmem:[#allocation5 + $0x224] sm:$0xf]
    %v901 = vld [vmem:[#allocation5 + $0x228] sm:$0xf]
    %v902 = vld [vmem:[#allocation5 + $0x22c] sm:$0xf]
    %v903 = vld [vmem:[#allocation5 + $0x230] sm:$0xf]
    %v904 = vld [vmem:[#allocation5 + $0x234] sm:$0xf]
    %v905 = vld [vmem:[#allocation5 + $0x238] sm:$0xf]
    %v906 = vld [vmem:[#allocation5 + $0x23c] sm:$0xf]
    %v907 = vld [vmem:[#allocation5 + $0x240] sm:$0xf]
    %v908 = vld [vmem:[#allocation5 + $0x244] sm:$0xf]
    %v909 = vld [vmem:[#allocation5 + $0x248] sm:$0xf]
    %v910 = vld [vmem:[#allocation5 + $0x24c] sm:$0xf]
    %v911 = vld [vmem:[#allocation5 + $0x250] sm:$0xf]
    %v912 = vld [vmem:[#allocation5 + $0x254] sm:$0xf]
    %v913 = vld [vmem:[#allocation5 + $0x258] sm:$0xf]
    %v914 = vld [vmem:[#allocation5 + $0x25c] sm:$0xf]
    %v915 = vld [vmem:[#allocation5 + $0x260] sm:$0xf]
    %v916 = vld [vmem:[#allocation5 + $0x264] sm:$0xf]
    %v917 = vld [vmem:[#allocation5 + $0x268] sm:$0xf]
    %v918 = vld [vmem:[#allocation5 + $0x26c] sm:$0xf]
    %v919 = vld [vmem:[#allocation5 + $0x270] sm:$0xf]
    %v920 = vld [vmem:[#allocation5 + $0x274] sm:$0xf]
    %v921 = vld [vmem:[#allocation5 + $0x278] sm:$0xf]
    %v922 = vld [vmem:[#allocation5 + $0x27c] sm:$0xf]
    %v923 = vld [vmem:[#allocation5 + $0x280] sm:$0xf]
    %v924 = vld [vmem:[#allocation5 + $0x284] sm:$0xf]
    %v925 = vld [vmem:[#allocation5 + $0x288] sm:$0xf]
    %v926 = vld [vmem:[#allocation5 + $0x28c] sm:$0xf]
    %v927 = vld [vmem:[#allocation5 + $0x290] sm:$0xf]
    %v928 = vld [vmem:[#allocation5 + $0x294] sm:$0xf]
    %v929 = vld [vmem:[#allocation5 + $0x298] sm:$0xf]
    %v930 = vld [vmem:[#allocation5 + $0x29c] sm:$0xf]
    %v931 = vld [vmem:[#allocation5 + $0x2a0] sm:$0xf]
    %v932 = vld [vmem:[#allocation5 + $0x2a4] sm:$0xf]
    %v933 = vld [vmem:[#allocation5 + $0x2a8] sm:$0xf]
    %v934 = vld [vmem:[#allocation5 + $0x2ac] sm:$0xf]
    %v935 = vld [vmem:[#allocation5 + $0x2b0] sm:$0xf]
    %v936 = vld [vmem:[#allocation5 + $0x2b4] sm:$0xf]
    %v937 = vld [vmem:[#allocation5 + $0x2b8] sm:$0xf]
    %v938 = vld [vmem:[#allocation5 + $0x2bc] sm:$0xf]
    %v939 = vld [vmem:[#allocation5 + $0x2c0] sm:$0xf]
    %v940 = vld [vmem:[#allocation5 + $0x2c4] sm:$0xf]
    %v941 = vld [vmem:[#allocation5 + $0x2c8] sm:$0xf]
    %v942 = vld [vmem:[#allocation5 + $0x2cc] sm:$0xf]
    %v943 = vld [vmem:[#allocation5 + $0x2d0] sm:$0xf]
    %v944 = vld [vmem:[#allocation5 + $0x2d4] sm:$0xf]
    %v945 = vld [vmem:[#allocation5 + $0x2d8] sm:$0xf]
    %v946 = vld [vmem:[#allocation5 + $0x2dc] sm:$0xf]
    %v947 = vld [vmem:[#allocation5 + $0x2e0] sm:$0xf]
    %v948 = vld [vmem:[#allocation5 + $0x2e4] sm:$0xf]
    %v949 = vld [vmem:[#allocation5 + $0x2e8] sm:$0xf]
    %v950 = vld [vmem:[#allocation5 + $0x2ec] sm:$0xf]
    %v951 = vld [vmem:[#allocation5 + $0x2f0] sm:$0xf]
    %v952 = vld [vmem:[#allocation5 + $0x2f4] sm:$0xf]
    %v953 = vld [vmem:[#allocation5 + $0x2f8] sm:$0xf]
    %v954 = vld [vmem:[#allocation5 + $0x2fc] sm:$0xf]
    %v955 = vld [vmem:[#allocation5 + $0x300] sm:$0xf]
    %v956 = vld [vmem:[#allocation5 + $0x304] sm:$0xf]
    %v957 = vld [vmem:[#allocation5 + $0x308] sm:$0xf]
    %v958 = vld [vmem:[#allocation5 + $0x30c] sm:$0xf]
    %v959 = vld [vmem:[#allocation5 + $0x310] sm:$0xf]
    %v960 = vld [vmem:[#allocation5 + $0x314] sm:$0xf]
    %v961 = vld [vmem:[#allocation5 + $0x318] sm:$0xf]
    %v962 = vld [vmem:[#allocation5 + $0x31c] sm:$0xf]
    %v963 = vld [vmem:[#allocation5 + $0x320] sm:$0xf]
    %v964 = vld [vmem:[#allocation5 + $0x324] sm:$0xf]
    %v965 = vld [vmem:[#allocation5 + $0x328] sm:$0xf]
    %v966 = vld [vmem:[#allocation5 + $0x32c] sm:$0xf]
    %v967 = vld [vmem:[#allocation5 + $0x330] sm:$0xf]
    %v968 = vld [vmem:[#allocation5 + $0x334] sm:$0xf]
    %v969 = vld [vmem:[#allocation5 + $0x338] sm:$0xf]
    %v970 = vld [vmem:[#allocation5 + $0x33c] sm:$0xf]
    %v971 = vld [vmem:[#allocation5 + $0x340] sm:$0xf]
    %v972 = vld [vmem:[#allocation5 + $0x344] sm:$0xf]
    %v973 = vld [vmem:[#allocation5 + $0x348] sm:$0xf]
    %v974 = vld [vmem:[#allocation5 + $0x34c] sm:$0xf]
    %v975 = vld [vmem:[#allocation5 + $0x350] sm:$0xf]
    %v976 = vld [vmem:[#allocation5 + $0x354] sm:$0xf]
    %v977 = vld [vmem:[#allocation5 + $0x358] sm:$0xf]
    %v978 = vld [vmem:[#allocation5 + $0x35c] sm:$0xf]
    %v979 = vld [vmem:[#allocation5 + $0x360] sm:$0xf]
    %v980 = vld [vmem:[#allocation5 + $0x364] sm:$0xf]
    %v981 = vld [vmem:[#allocation5 + $0x368] sm:$0xf]
    %v982 = vld [vmem:[#allocation5 + $0x36c] sm:$0xf]
    %v983 = vld [vmem:[#allocation5 + $0x370] sm:$0xf]
    %v984 = vld [vmem:[#allocation5 + $0x374] sm:$0xf]
    %v985 = vld [vmem:[#allocation5 + $0x378] sm:$0xf]
    %v986 = vld [vmem:[#allocation5 + $0x37c] sm:$0xf]
    %v987 = vld [vmem:[#allocation5 + $0x380] sm:$0xf]
    %v988 = vld [vmem:[#allocation5 + $0x384] sm:$0xf]
    %v989 = vld [vmem:[#allocation5 + $0x388] sm:$0xf]
    %v990 = vld [vmem:[#allocation5 + $0x38c] sm:$0xf]
    %v991 = vld [vmem:[#allocation5 + $0x390] sm:$0xf]
    %v992 = vld [vmem:[#allocation5 + $0x394] sm:$0xf]
    %v993 = vld [vmem:[#allocation5 + $0x398] sm:$0xf]
    %v994 = vld [vmem:[#allocation5 + $0x39c] sm:$0xf]
    %v995 = vld [vmem:[#allocation5 + $0x3a0] sm:$0xf]
    %v996 = vld [vmem:[#allocation5 + $0x3a4] sm:$0xf]
    %v997 = vld [vmem:[#allocation5 + $0x3a8] sm:$0xf]
    %v998 = vld [vmem:[#allocation5 + $0x3ac] sm:$0xf]
    %v999 = vld [vmem:[#allocation5 + $0x3b0] sm:$0xf]
    %v1000 = vld [vmem:[#allocation5 + $0x3b4] sm:$0xf]
    %v1001 = vld [vmem:[#allocation5 + $0x3b8] sm:$0xf]
    %v1002 = vld [vmem:[#allocation5 + $0x3bc] sm:$0xf]
    %v1003 = vld [vmem:[#allocation5 + $0x3c0] sm:$0xf]
    %v1004 = vld [vmem:[#allocation5 + $0x3c4] sm:$0xf]
    %v1005 = vld [vmem:[#allocation5 + $0x3c8] sm:$0xf]
    %v1006 = vld [vmem:[#allocation5 + $0x3cc] sm:$0xf]
    %v1007 = vld [vmem:[#allocation5 + $0x3d0] sm:$0xf]
    %v1008 = vld [vmem:[#allocation5 + $0x3d4] sm:$0xf]
    %v1009 = vld [vmem:[#allocation5 + $0x3d8] sm:$0xf]
    %v1010 = vld [vmem:[#allocation5 + $0x3dc] sm:$0xf]
    %v1011 = vld [vmem:[#allocation5 + $0x3e0] sm:$0xf]
    %v1012 = vld [vmem:[#allocation5 + $0x3e4] sm:$0xf]
    %v1013 = vld [vmem:[#allocation5 + $0x3e8] sm:$0xf]
    %v1014 = vld [vmem:[#allocation5 + $0x3ec] sm:$0xf]
    %v1015 = vld [vmem:[#allocation5 + $0x3f0] sm:$0xf]
    %v1016 = vld [vmem:[#allocation5 + $0x3f4] sm:$0xf]
    %v1017 = vld [vmem:[#allocation5 + $0x3f8] sm:$0xf]
    %v1018 = vld [vmem:[#allocation5 + $0x3fc] sm:$0xf]
    %v1019 = vld [vmem:[#allocation5 + $0x400] sm:$0xf]
    %v1020 = vld [vmem:[#allocation5 + $0x404] sm:$0xf]
    %v1021 = vld [vmem:[#allocation5 + $0x408] sm:$0xf]
    %v1022 = vld [vmem:[#allocation5 + $0x40c] sm:$0xf]
    %v1023 = vld [vmem:[#allocation5 + $0x410] sm:$0xf]
    %v1024 = vld [vmem:[#allocation5 + $0x414] sm:$0xf]
    %v1025 = vld [vmem:[#allocation5 + $0x418] sm:$0xf]
    %v1026 = vld [vmem:[#allocation5 + $0x41c] sm:$0xf]
    %v1027 = vld [vmem:[#allocation5 + $0x420] sm:$0xf]
    %v1028 = vld [vmem:[#allocation5 + $0x424] sm:$0xf]
    %v1029 = vld [vmem:[#allocation5 + $0x428] sm:$0xf]
    %v1030 = vld [vmem:[#allocation5 + $0x42c] sm:$0xf]
    %v1031 = vld [vmem:[#allocation5 + $0x430] sm:$0xf]
    %v1032 = vld [vmem:[#allocation5 + $0x434] sm:$0xf]
    %v1033 = vld [vmem:[#allocation5 + $0x438] sm:$0xf]
    %v1034 = vld [vmem:[#allocation5 + $0x43c] sm:$0xf]
    %v1035 = vld [vmem:[#allocation5 + $0x440] sm:$0xf]
    %v1036 = vld [vmem:[#allocation5 + $0x444] sm:$0xf]
    %v1037 = vld [vmem:[#allocation5 + $0x448] sm:$0xf]
    %v1038 = vld [vmem:[#allocation5 + $0x44c] sm:$0xf]
    %v1039 = vld [vmem:[#allocation5 + $0x450] sm:$0xf]
    %v1040 = vld [vmem:[#allocation5 + $0x454] sm:$0xf]
    %v1041 = vld [vmem:[#allocation5 + $0x458] sm:$0xf]
    %v1042 = vld [vmem:[#allocation5 + $0x45c] sm:$0xf]
    %v1043 = vld [vmem:[#allocation5 + $0x460] sm:$0xf]
    %v1044 = vld [vmem:[#allocation5 + $0x464] sm:$0xf]
    %v1045 = vld [vmem:[#allocation5 + $0x468] sm:$0xf]
    %v1046 = vld [vmem:[#allocation5 + $0x46c] sm:$0xf]
    %v1047 = vld [vmem:[#allocation5 + $0x470] sm:$0xf]
    %v1048 = vld [vmem:[#allocation5 + $0x474] sm:$0xf]
    %v1049 = vld [vmem:[#allocation5 + $0x478] sm:$0xf]
    %v1050 = vld [vmem:[#allocation5 + $0x47c] sm:$0xf]
    %v1051 = vld [vmem:[#allocation5 + $0x480] sm:$0xf]
    %v1052 = vld [vmem:[#allocation5 + $0x484] sm:$0xf]
    %v1053 = vld [vmem:[#allocation5 + $0x488] sm:$0xf]
    %v1054 = vld [vmem:[#allocation5 + $0x48c] sm:$0xf]
    %v1055 = vld [vmem:[#allocation5 + $0x490] sm:$0xf]
    %v1056 = vld [vmem:[#allocation5 + $0x494] sm:$0xf]
    %v1057 = vld [vmem:[#allocation5 + $0x498] sm:$0xf]
    %v1058 = vld [vmem:[#allocation5 + $0x49c] sm:$0xf]
    %v1059 = vld [vmem:[#allocation5 + $0x4a0] sm:$0xf]
    %v1060 = vld [vmem:[#allocation5 + $0x4a4] sm:$0xf]
    %v1061 = vld [vmem:[#allocation5 + $0x4a8] sm:$0xf]
    %v1062 = vld [vmem:[#allocation5 + $0x4ac] sm:$0xf]
    %v1063 = vld [vmem:[#allocation5 + $0x4b0] sm:$0xf]
    %v1064 = vld [vmem:[#allocation5 + $0x4b4] sm:$0xf]
    %v1065 = vld [vmem:[#allocation5 + $0x4b8] sm:$0xf]
    %v1066 = vld [vmem:[#allocation5 + $0x4bc] sm:$0xf]
    %v1067 = vld [vmem:[#allocation5 + $0x4c0] sm:$0xf]
    %v1068 = vld [vmem:[#allocation5 + $0x4c4] sm:$0xf]
    %v1069 = vld [vmem:[#allocation5 + $0x4c8] sm:$0xf]
    %v1070 = vld [vmem:[#allocation5 + $0x4cc] sm:$0xf]
    %v1071 = vld [vmem:[#allocation5 + $0x4d0] sm:$0xf]
    %v1072 = vld [vmem:[#allocation5 + $0x4d4] sm:$0xf]
    %v1073 = vld [vmem:[#allocation5 + $0x4d8] sm:$0xf]
    %v1074 = vld [vmem:[#allocation5 + $0x4dc] sm:$0xf]
    %v1075 = vld [vmem:[#allocation5 + $0x4e0] sm:$0xf]
    %v1076 = vld [vmem:[#allocation5 + $0x4e4] sm:$0xf]
    %v1077 = vld [vmem:[#allocation5 + $0x4e8] sm:$0xf]
    %v1078 = vld [vmem:[#allocation5 + $0x4ec] sm:$0xf]
    %v1079 = vld [vmem:[#allocation5 + $0x4f0] sm:$0xf]
    %v1080 = vld [vmem:[#allocation5 + $0x4f4] sm:$0xf]
    %v1081 = vld [vmem:[#allocation5 + $0x4f8] sm:$0xf]
    %v1082 = vld [vmem:[#allocation5 + $0x4fc] sm:$0xf]
    %v1083 = vld [vmem:[#allocation5 + $0x500] sm:$0xf]
    %v1084 = vld [vmem:[#allocation5 + $0x504] sm:$0xf]
    %v1085 = vld [vmem:[#allocation5 + $0x508] sm:$0xf]
    %v1086 = vld [vmem:[#allocation5 + $0x50c] sm:$0xf]
    %v1087 = vld [vmem:[#allocation5 + $0x510] sm:$0xf]
    %v1088 = vld [vmem:[#allocation5 + $0x514] sm:$0xf]
    %v1089 = vld [vmem:[#allocation5 + $0x518] sm:$0xf]
    %v1090 = vld [vmem:[#allocation5 + $0x51c] sm:$0xf]
    %v1091 = vld [vmem:[#allocation5 + $0x520] sm:$0xf]
    %v1092 = vld [vmem:[#allocation5 + $0x524] sm:$0xf]
    %v1093 = vld [vmem:[#allocation5 + $0x528] sm:$0xf]
    %v1094 = vld [vmem:[#allocation5 + $0x52c] sm:$0xf]
    %v1095 = vld [vmem:[#allocation5 + $0x530] sm:$0xf]
    %v1096 = vld [vmem:[#allocation5 + $0x534] sm:$0xf]
    %v1097 = vld [vmem:[#allocation5 + $0x538] sm:$0xf]
    %v1098 = vld [vmem:[#allocation5 + $0x53c] sm:$0xf]
    %v1099 = vld [vmem:[#allocation5 + $0x540] sm:$0xf]
    %v1100 = vld [vmem:[#allocation5 + $0x544] sm:$0xf]
    %v1101 = vld [vmem:[#allocation5 + $0x548] sm:$0xf]
    %v1102 = vld [vmem:[#allocation5 + $0x54c] sm:$0xf]
    %v1103 = vld [vmem:[#allocation5 + $0x550] sm:$0xf]
    %v1104 = vld [vmem:[#allocation5 + $0x554] sm:$0xf]
    %v1105 = vld [vmem:[#allocation5 + $0x558] sm:$0xf]
    %v1106 = vld [vmem:[#allocation5 + $0x55c] sm:$0xf]
    %v1107 = vld [vmem:[#allocation5 + $0x560] sm:$0xf]
    %v1108 = vld [vmem:[#allocation5 + $0x564] sm:$0xf]
    %v1109 = vld [vmem:[#allocation5 + $0x568] sm:$0xf]
    %v1110 = vld [vmem:[#allocation5 + $0x56c] sm:$0xf]
    %v1111 = vld [vmem:[#allocation5 + $0x570] sm:$0xf]
    %v1112 = vld [vmem:[#allocation5 + $0x574] sm:$0xf]
    %v1113 = vld [vmem:[#allocation5 + $0x578] sm:$0xf]
    %v1114 = vld [vmem:[#allocation5 + $0x57c] sm:$0xf]
    %v1115 = vld [vmem:[#allocation5 + $0x580] sm:$0xf]
    %v1116 = vld [vmem:[#allocation5 + $0x584] sm:$0xf]
    %v1117 = vld [vmem:[#allocation5 + $0x588] sm:$0xf]
    %v1118 = vld [vmem:[#allocation5 + $0x58c] sm:$0xf]
    %v1119 = vld [vmem:[#allocation5 + $0x590] sm:$0xf]
    %v1120 = vld [vmem:[#allocation5 + $0x594] sm:$0xf]
    %v1121 = vld [vmem:[#allocation5 + $0x598] sm:$0xf]
    %v1122 = vld [vmem:[#allocation5 + $0x59c] sm:$0xf]
    %v1123 = vld [vmem:[#allocation5 + $0x5a0] sm:$0xf]
    %v1124 = vld [vmem:[#allocation5 + $0x5a4] sm:$0xf]
    %v1125 = vld [vmem:[#allocation5 + $0x5a8] sm:$0xf]
    %v1126 = vld [vmem:[#allocation5 + $0x5ac] sm:$0xf]
    %v1127 = vld [vmem:[#allocation5 + $0x5b0] sm:$0xf]
    %v1128 = vld [vmem:[#allocation5 + $0x5b4] sm:$0xf]
    %v1129 = vld [vmem:[#allocation5 + $0x5b8] sm:$0xf]
    %v1130 = vld [vmem:[#allocation5 + $0x5bc] sm:$0xf]
    %v1131 = vld [vmem:[#allocation5 + $0x5c0] sm:$0xf]
    %v1132 = vld [vmem:[#allocation5 + $0x5c4] sm:$0xf]
    %v1133 = vld [vmem:[#allocation5 + $0x5c8] sm:$0xf]
    %v1134 = vld [vmem:[#allocation5 + $0x5cc] sm:$0xf]
    %v1135 = vld [vmem:[#allocation5 + $0x5d0] sm:$0xf]
    %v1136 = vld [vmem:[#allocation5 + $0x5d4] sm:$0xf]
    %v1137 = vld [vmem:[#allocation5 + $0x5d8] sm:$0xf]
    %v1138 = vld [vmem:[#allocation5 + $0x5dc] sm:$0xf]
    %v1139 = vld [vmem:[#allocation5 + $0x5e0] sm:$0xf]
    %v1140 = vld [vmem:[#allocation5 + $0x5e4] sm:$0xf]
    %v1141 = vld [vmem:[#allocation5 + $0x5e8] sm:$0xf]
    %v1142 = vld [vmem:[#allocation5 + $0x5ec] sm:$0xf]
    %v1143 = vld [vmem:[#allocation5 + $0x5f0] sm:$0xf]
    %v1144 = vld [vmem:[#allocation5 + $0x5f4] sm:$0xf]
    %v1145 = vld [vmem:[#allocation5 + $0x5f8] sm:$0xf]
    %v1146 = vld [vmem:[#allocation5 + $0x5fc] sm:$0xf]
    %v1147 = vld [vmem:[#allocation5 + $0x600] sm:$0xf]
    %v1148 = vld [vmem:[#allocation5 + $0x604] sm:$0xf]
    %v1149 = vld [vmem:[#allocation5 + $0x608] sm:$0xf]
    %v1150 = vld [vmem:[#allocation5 + $0x60c] sm:$0xf]
    %v1151 = vld [vmem:[#allocation5 + $0x610] sm:$0xf]
    %v1152 = vld [vmem:[#allocation5 + $0x614] sm:$0xf]
    %v1153 = vld [vmem:[#allocation5 + $0x618] sm:$0xf]
    %v1154 = vld [vmem:[#allocation5 + $0x61c] sm:$0xf]
    %v1155 = vld [vmem:[#allocation5 + $0x620] sm:$0xf]
    %v1156 = vld [vmem:[#allocation5 + $0x624] sm:$0xf]
    %v1157 = vld [vmem:[#allocation5 + $0x628] sm:$0xf]
    %v1158 = vld [vmem:[#allocation5 + $0x62c] sm:$0xf]
    %v1159 = vld [vmem:[#allocation5 + $0x630] sm:$0xf]
    %v1160 = vld [vmem:[#allocation5 + $0x634] sm:$0xf]
    %v1161 = vld [vmem:[#allocation5 + $0x638] sm:$0xf]
    %v1162 = vld [vmem:[#allocation5 + $0x63c] sm:$0xf]
    %v1163 = vld [vmem:[#allocation5 + $0x640] sm:$0xf]
    %v1164 = vld [vmem:[#allocation5 + $0x644] sm:$0xf]
    %v1165 = vld [vmem:[#allocation5 + $0x648] sm:$0xf]
    %v1166 = vld [vmem:[#allocation5 + $0x64c] sm:$0xf]
    %v1167 = vld [vmem:[#allocation5 + $0x650] sm:$0xf]
    %v1168 = vld [vmem:[#allocation5 + $0x654] sm:$0xf]
    %v1169 = vld [vmem:[#allocation5 + $0x658] sm:$0xf]
    %v1170 = vld [vmem:[#allocation5 + $0x65c] sm:$0xf]
    %v1171 = vld [vmem:[#allocation5 + $0x660] sm:$0xf]
    %v1172 = vld [vmem:[#allocation5 + $0x664] sm:$0xf]
    %v1173 = vld [vmem:[#allocation5 + $0x668] sm:$0xf]
    %v1174 = vld [vmem:[#allocation5 + $0x66c] sm:$0xf]
    %v1175 = vld [vmem:[#allocation5 + $0x670] sm:$0xf]
    %v1176 = vld [vmem:[#allocation5 + $0x674] sm:$0xf]
    %v1177 = vld [vmem:[#allocation5 + $0x678] sm:$0xf]
    %v1178 = vld [vmem:[#allocation5 + $0x67c] sm:$0xf]
    %v1179 = vld [vmem:[#allocation5 + $0x680] sm:$0xf]
    %v1180 = vld [vmem:[#allocation5 + $0x684] sm:$0xf]
    %v1181 = vld [vmem:[#allocation5 + $0x688] sm:$0xf]
    %v1182 = vld [vmem:[#allocation5 + $0x68c] sm:$0xf]
    %v1183 = vld [vmem:[#allocation5 + $0x690] sm:$0xf]
    %v1184 = vld [vmem:[#allocation5 + $0x694] sm:$0xf]
    %v1185 = vld [vmem:[#allocation5 + $0x698] sm:$0xf]
    %v1186 = vld [vmem:[#allocation5 + $0x69c] sm:$0xf]
    %v1187 = vld [vmem:[#allocation5 + $0x6a0] sm:$0xf]
    %v1188 = vld [vmem:[#allocation5 + $0x6a4] sm:$0xf]
    %v1189 = vld [vmem:[#allocation5 + $0x6a8] sm:$0xf]
    %v1190 = vld [vmem:[#allocation5 + $0x6ac] sm:$0xf]
    %v1191 = vld [vmem:[#allocation5 + $0x6b0] sm:$0xf]
    %v1192 = vld [vmem:[#allocation5 + $0x6b4] sm:$0xf]
    %v1193 = vld [vmem:[#allocation5 + $0x6b8] sm:$0xf]
    %v1194 = vld [vmem:[#allocation5 + $0x6bc] sm:$0xf]
    %v1195 = vld [vmem:[#allocation5 + $0x6c0] sm:$0xf]
    %v1196 = vld [vmem:[#allocation5 + $0x6c4] sm:$0xf]
    %v1197 = vld [vmem:[#allocation5 + $0x6c8] sm:$0xf]
    %v1198 = vld [vmem:[#allocation5 + $0x6cc] sm:$0xf]
    %v1199 = vld [vmem:[#allocation5 + $0x6d0] sm:$0xf]
    %v1200 = vld [vmem:[#allocation5 + $0x6d4] sm:$0xf]
    %v1201 = vld [vmem:[#allocation5 + $0x6d8] sm:$0xf]
    %v1202 = vld [vmem:[#allocation5 + $0x6dc] sm:$0xf]
    %v1203 = vld [vmem:[#allocation5 + $0x6e0] sm:$0xf]
    %v1204 = vld [vmem:[#allocation5 + $0x6e4] sm:$0xf]
    %v1205 = vld [vmem:[#allocation5 + $0x6e8] sm:$0xf]
    %v1206 = vld [vmem:[#allocation5 + $0x6ec] sm:$0xf]
    %v1207 = vld [vmem:[#allocation5 + $0x6f0] sm:$0xf]
    %v1208 = vld [vmem:[#allocation5 + $0x6f4] sm:$0xf]
    %v1209 = vld [vmem:[#allocation5 + $0x6f8] sm:$0xf]
    %v1210 = vld [vmem:[#allocation5 + $0x6fc] sm:$0xf]
    %v1211 = vld [vmem:[#allocation5 + $0x700] sm:$0xf]
    %v1212 = vld [vmem:[#allocation5 + $0x704] sm:$0xf]
    %v1213 = vld [vmem:[#allocation5 + $0x708] sm:$0xf]
    %v1214 = vld [vmem:[#allocation5 + $0x70c] sm:$0xf]
    %v1215 = vld [vmem:[#allocation5 + $0x710] sm:$0xf]
    %v1216 = vld [vmem:[#allocation5 + $0x714] sm:$0xf]
    %v1217 = vld [vmem:[#allocation5 + $0x718] sm:$0xf]
    %v1218 = vld [vmem:[#allocation5 + $0x71c] sm:$0xf]
    %v1219 = vld [vmem:[#allocation5 + $0x720] sm:$0xf]
    %v1220 = vld [vmem:[#allocation5 + $0x724] sm:$0xf]
    %v1221 = vld [vmem:[#allocation5 + $0x728] sm:$0xf]
    %v1222 = vld [vmem:[#allocation5 + $0x72c] sm:$0xf]
    %v1223 = vld [vmem:[#allocation5 + $0x730] sm:$0xf]
    %v1224 = vld [vmem:[#allocation5 + $0x734] sm:$0xf]
    %v1225 = vld [vmem:[#allocation5 + $0x738] sm:$0xf]
    %v1226 = vld [vmem:[#allocation5 + $0x73c] sm:$0xf]
    %v1227 = vld [vmem:[#allocation5 + $0x740] sm:$0xf]
    %v1228 = vld [vmem:[#allocation5 + $0x744] sm:$0xf]
    %v1229 = vld [vmem:[#allocation5 + $0x748] sm:$0xf]
    %v1230 = vld [vmem:[#allocation5 + $0x74c] sm:$0xf]
    %v1231 = vld [vmem:[#allocation5 + $0x750] sm:$0xf]
    %v1232 = vld [vmem:[#allocation5 + $0x754] sm:$0xf]
    %v1233 = vld [vmem:[#allocation5 + $0x758] sm:$0xf]
    %v1234 = vld [vmem:[#allocation5 + $0x75c] sm:$0xf]
    %v1235 = vld [vmem:[#allocation5 + $0x760] sm:$0xf]
    %v1236 = vld [vmem:[#allocation5 + $0x764] sm:$0xf]
    %v1237 = vld [vmem:[#allocation5 + $0x768] sm:$0xf]
    %v1238 = vld [vmem:[#allocation5 + $0x76c] sm:$0xf]
    %v1239 = vld [vmem:[#allocation5 + $0x770] sm:$0xf]
    %v1240 = vld [vmem:[#allocation5 + $0x774] sm:$0xf]
    %v1241 = vld [vmem:[#allocation5 + $0x778] sm:$0xf]
    %v1242 = vld [vmem:[#allocation5 + $0x77c] sm:$0xf]
    %v1243 = vld [vmem:[#allocation5 + $0x780] sm:$0xf]
    %v1244 = vld [vmem:[#allocation5 + $0x784] sm:$0xf]
    %v1245 = vld [vmem:[#allocation5 + $0x788] sm:$0xf]
    %v1246 = vld [vmem:[#allocation5 + $0x78c] sm:$0xf]
    %v1247 = vld [vmem:[#allocation5 + $0x790] sm:$0xf]
    %v1248 = vld [vmem:[#allocation5 + $0x794] sm:$0xf]
    %v1249 = vld [vmem:[#allocation5 + $0x798] sm:$0xf]
    %v1250 = vld [vmem:[#allocation5 + $0x79c] sm:$0xf]
    %v1251 = vld [vmem:[#allocation5 + $0x7a0] sm:$0xf]
    %v1252 = vld [vmem:[#allocation5 + $0x7a4] sm:$0xf]
    %v1253 = vld [vmem:[#allocation5 + $0x7a8] sm:$0xf]
    %v1254 = vld [vmem:[#allocation5 + $0x7ac] sm:$0xf]
    %v1255 = vld [vmem:[#allocation5 + $0x7b0] sm:$0xf]
    %v1256 = vld [vmem:[#allocation5 + $0x7b4] sm:$0xf]
    %v1257 = vld [vmem:[#allocation5 + $0x7b8] sm:$0xf]
    %v1258 = vld [vmem:[#allocation5 + $0x7bc] sm:$0xf]
    %v1259 = vld [vmem:[#allocation5 + $0x7c0] sm:$0xf]
    %v1260 = vld [vmem:[#allocation5 + $0x7c4] sm:$0xf]
    %v1261 = vld [vmem:[#allocation5 + $0x7c8] sm:$0xf]
    %v1262 = vld [vmem:[#allocation5 + $0x7cc] sm:$0xf]
    %v1263 = vld [vmem:[#allocation5 + $0x7d0] sm:$0xf]
    %v1264 = vld [vmem:[#allocation5 + $0x7d4] sm:$0xf]
    %v1265 = vld [vmem:[#allocation5 + $0x7d8] sm:$0xf]
    %v1266 = vld [vmem:[#allocation5 + $0x7dc] sm:$0xf]
    %v1267 = vld [vmem:[#allocation5 + $0x7e0] sm:$0xf]
    %v1268 = vld [vmem:[#allocation5 + $0x7e4] sm:$0xf]
    %v1269 = vld [vmem:[#allocation5 + $0x7e8] sm:$0xf]
    %v1270 = vld [vmem:[#allocation5 + $0x7ec] sm:$0xf]
    %v1271 = vld [vmem:[#allocation5 + $0x7f0] sm:$0xf]
    %v1272 = vld [vmem:[#allocation5 + $0x7f4] sm:$0xf]
    %v1273 = vld [vmem:[#allocation5 + $0x7f8] sm:$0xf]
    %v1274 = vld [vmem:[#allocation5 + $0x7fc] sm:$0xf]
    %v1275 = vld [vmem:[#allocation5 + $0x800] sm:$0xf]
    %v1276 = vld [vmem:[#allocation5 + $0x804] sm:$0xf]
    %v1277 = vld [vmem:[#allocation5 + $0x808] sm:$0xf]
    %v1278 = vld [vmem:[#allocation5 + $0x80c] sm:$0xf]
    %v1279 = vld [vmem:[#allocation5 + $0x810] sm:$0xf]
    %v1280 = vld [vmem:[#allocation5 + $0x814] sm:$0xf]
    %v1281 = vld [vmem:[#allocation5 + $0x818] sm:$0xf]
    %v1282 = vld [vmem:[#allocation5 + $0x81c] sm:$0xf]
    %v1283 = vld [vmem:[#allocation5 + $0x820] sm:$0xf]
    %v1284 = vld [vmem:[#allocation5 + $0x824] sm:$0xf]
    %v1285 = vld [vmem:[#allocation5 + $0x828] sm:$0xf]
    %v1286 = vld [vmem:[#allocation5 + $0x82c] sm:$0xf]
    %v1287 = vld [vmem:[#allocation5 + $0x830] sm:$0xf]
    %v1288 = vld [vmem:[#allocation5 + $0x834] sm:$0xf]
    %v1289 = vld [vmem:[#allocation5 + $0x838] sm:$0xf]
    %v1290 = vld [vmem:[#allocation5 + $0x83c] sm:$0xf]
    %v1291 = vld [vmem:[#allocation5 + $0x840] sm:$0xf]
    %v1292 = vld [vmem:[#allocation5 + $0x844] sm:$0xf]
    %v1293 = vld [vmem:[#allocation5 + $0x848] sm:$0xf]
    %v1294 = vld [vmem:[#allocation5 + $0x84c] sm:$0xf]
    %v1295 = vld [vmem:[#allocation5 + $0x850] sm:$0xf]
    %v1296 = vld [vmem:[#allocation5 + $0x854] sm:$0xf]
    %v1297 = vld [vmem:[#allocation5 + $0x858] sm:$0xf]
    %v1298 = vld [vmem:[#allocation5 + $0x85c] sm:$0xf]
    %v1299 = vld [vmem:[#allocation5 + $0x860] sm:$0xf]
    %v1300 = vld [vmem:[#allocation5 + $0x864] sm:$0xf]
    %v1301 = vld [vmem:[#allocation5 + $0x868] sm:$0xf]
    %v1302 = vld [vmem:[#allocation5 + $0x86c] sm:$0xf]
    %v1303 = vld [vmem:[#allocation5 + $0x870] sm:$0xf]
    %v1304 = vld [vmem:[#allocation5 + $0x874] sm:$0xf]
    %v1305 = vld [vmem:[#allocation5 + $0x878] sm:$0xf]
    %v1306 = vld [vmem:[#allocation5 + $0x87c] sm:$0xf]
    %v1307 = vld [vmem:[#allocation5 + $0x880] sm:$0xf]
    %v1308 = vld [vmem:[#allocation5 + $0x884] sm:$0xf]
    %v1309 = vld [vmem:[#allocation5 + $0x888] sm:$0xf]
    %v1310 = vld [vmem:[#allocation5 + $0x88c] sm:$0xf]
    %v1311 = vld [vmem:[#allocation5 + $0x890] sm:$0xf]
    %v1312 = vld [vmem:[#allocation5 + $0x894] sm:$0xf]
    %v1313 = vld [vmem:[#allocation5 + $0x898] sm:$0xf]
    %v1314 = vld [vmem:[#allocation5 + $0x89c] sm:$0xf]
    %v1315 = vld [vmem:[#allocation5 + $0x8a0] sm:$0xf]
    %v1316 = vld [vmem:[#allocation5 + $0x8a4] sm:$0xf]
    %v1317 = vld [vmem:[#allocation5 + $0x8a8] sm:$0xf]
    %v1318 = vld [vmem:[#allocation5 + $0x8ac] sm:$0xf]
    %v1319 = vld [vmem:[#allocation5 + $0x8b0] sm:$0xf]
    %v1320 = vld [vmem:[#allocation5 + $0x8b4] sm:$0xf]
    %v1321 = vld [vmem:[#allocation5 + $0x8b8] sm:$0xf]
    %v1322 = vld [vmem:[#allocation5 + $0x8bc] sm:$0xf]
    %v1323 = vld [vmem:[#allocation5 + $0x8c0] sm:$0xf]
    %v1324 = vld [vmem:[#allocation5 + $0x8c4] sm:$0xf]
    %v1325 = vld [vmem:[#allocation5 + $0x8c8] sm:$0xf]
    %v1326 = vld [vmem:[#allocation5 + $0x8cc] sm:$0xf]
    %v1327 = vld [vmem:[#allocation5 + $0x8d0] sm:$0xf]
    %v1328 = vld [vmem:[#allocation5 + $0x8d4] sm:$0xf]
    %v1329 = vld [vmem:[#allocation5 + $0x8d8] sm:$0xf]
    %v1330 = vld [vmem:[#allocation5 + $0x8dc] sm:$0xf]
    %v1331 = vld [vmem:[#allocation5 + $0x8e0] sm:$0xf]
    %v1332 = vld [vmem:[#allocation5 + $0x8e4] sm:$0xf]
    %v1333 = vld [vmem:[#allocation5 + $0x8e8] sm:$0xf]
    %v1334 = vld [vmem:[#allocation5 + $0x8ec] sm:$0xf]
    %v1335 = vld [vmem:[#allocation5 + $0x8f0] sm:$0xf]
    %v1336 = vld [vmem:[#allocation5 + $0x8f4] sm:$0xf]
    %v1337 = vld [vmem:[#allocation5 + $0x8f8] sm:$0xf]
    %v1338 = vld [vmem:[#allocation5 + $0x8fc] sm:$0xf]
    %v1339 = vld [vmem:[#allocation5 + $0x900] sm:$0xf]
    %v1340 = vld [vmem:[#allocation5 + $0x904] sm:$0xf]
    %v1341 = vld [vmem:[#allocation5 + $0x908] sm:$0xf]
    %v1342 = vld [vmem:[#allocation5 + $0x90c] sm:$0xf]
    %v1343 = vld [vmem:[#allocation5 + $0x910] sm:$0xf]
    %v1344 = vld [vmem:[#allocation5 + $0x914] sm:$0xf]
    %v1345 = vld [vmem:[#allocation5 + $0x918] sm:$0xf]
    %v1346 = vld [vmem:[#allocation5 + $0x91c] sm:$0xf]
    %v1347 = vld [vmem:[#allocation5 + $0x920] sm:$0xf]
    %v1348 = vld [vmem:[#allocation5 + $0x924] sm:$0xf]
    %v1349 = vld [vmem:[#allocation5 + $0x928] sm:$0xf]
    %v1350 = vld [vmem:[#allocation5 + $0x92c] sm:$0xf]
    %v1351 = vld [vmem:[#allocation5 + $0x930] sm:$0xf]
    %v1352 = vld [vmem:[#allocation5 + $0x934] sm:$0xf]
    %v1353 = vld [vmem:[#allocation5 + $0x938] sm:$0xf]
    %v1354 = vld [vmem:[#allocation5 + $0x93c] sm:$0xf]
    %v1355 = vld [vmem:[#allocation5 + $0x940] sm:$0xf]
    %v1356 = vld [vmem:[#allocation5 + $0x944] sm:$0xf]
    %v1357 = vld [vmem:[#allocation5 + $0x948] sm:$0xf]
    %v1358 = vld [vmem:[#allocation5 + $0x94c] sm:$0xf]
    %v1359 = vld [vmem:[#allocation5 + $0x950] sm:$0xf]
    %v1360 = vld [vmem:[#allocation5 + $0x954] sm:$0xf]
    %v1361 = vld [vmem:[#allocation5 + $0x958] sm:$0xf]
    %v1362 = vld [vmem:[#allocation5 + $0x95c] sm:$0xf]
    %v1363 = vld [vmem:[#allocation5 + $0x960] sm:$0xf]
    %v1364 = vld [vmem:[#allocation5 + $0x964] sm:$0xf]
    %v1365 = vld [vmem:[#allocation5 + $0x968] sm:$0xf]
    %v1366 = vld [vmem:[#allocation5 + $0x96c] sm:$0xf]
    %v1367 = vld [vmem:[#allocation5 + $0x970] sm:$0xf]
    %v1368 = vld [vmem:[#allocation5 + $0x974] sm:$0xf]
    %v1369 = vld [vmem:[#allocation5 + $0x978] sm:$0xf]
    %v1370 = vld [vmem:[#allocation5 + $0x97c] sm:$0xf]
    %v1371 = vld [vmem:[#allocation5 + $0x980] sm:$0xf]
    %v1372 = vld [vmem:[#allocation5 + $0x984] sm:$0xf]
    %v1373 = vld [vmem:[#allocation5 + $0x988] sm:$0xf]
    %v1374 = vld [vmem:[#allocation5 + $0x98c] sm:$0xf]
    %v1375 = vld [vmem:[#allocation5 + $0x990] sm:$0xf]
    %v1376 = vld [vmem:[#allocation5 + $0x994] sm:$0xf]
    %v1377 = vld [vmem:[#allocation5 + $0x998] sm:$0xf]
    %v1378 = vld [vmem:[#allocation5 + $0x99c] sm:$0xf]
    %v1379 = vld [vmem:[#allocation5 + $0x9a0] sm:$0xf]
    %v1380 = vld [vmem:[#allocation5 + $0x9a4] sm:$0xf]
    %v1381 = vld [vmem:[#allocation5 + $0x9a8] sm:$0xf]
    %v1382 = vld [vmem:[#allocation5 + $0x9ac] sm:$0xf]
    %v1383 = vld [vmem:[#allocation5 + $0x9b0] sm:$0xf]
    %v1384 = vld [vmem:[#allocation5 + $0x9b4] sm:$0xf]
    %v1385 = vld [vmem:[#allocation5 + $0x9b8] sm:$0xf]
    %v1386 = vld [vmem:[#allocation5 + $0x9bc] sm:$0xf]
    %v1387 = vld [vmem:[#allocation5 + $0x9c0] sm:$0xf]
    %v1388 = vld [vmem:[#allocation5 + $0x9c4] sm:$0xf]
    %v1389 = vld [vmem:[#allocation5 + $0x9c8] sm:$0xf]
    %v1390 = vld [vmem:[#allocation5 + $0x9cc] sm:$0xf]
    %v1391 = vld [vmem:[#allocation5 + $0x9d0] sm:$0xf]
    %v1392 = vld [vmem:[#allocation5 + $0x9d4] sm:$0xf]
    %v1393 = vld [vmem:[#allocation5 + $0x9d8] sm:$0xf]
    %v1394 = vld [vmem:[#allocation5 + $0x9dc] sm:$0xf]
    %v1395 = vld [vmem:[#allocation5 + $0x9e0] sm:$0xf]
    %v1396 = vld [vmem:[#allocation5 + $0x9e4] sm:$0xf]
    %v1397 = vld [vmem:[#allocation5 + $0x9e8] sm:$0xf]
    %v1398 = vld [vmem:[#allocation5 + $0x9ec] sm:$0xf]
    %v1399 = vld [vmem:[#allocation5 + $0x9f0] sm:$0xf]
    %v1400 = vld [vmem:[#allocation5 + $0x9f4] sm:$0xf]
    %v1401 = vld [vmem:[#allocation5 + $0x9f8] sm:$0xf]
    %v1402 = vld [vmem:[#allocation5 + $0x9fc] sm:$0xf]
    %v1403 = vld [vmem:[#allocation5 + $0xa00] sm:$0xf]
    %v1404 = vld [vmem:[#allocation5 + $0xa04] sm:$0xf]
    %v1405 = vld [vmem:[#allocation5 + $0xa08] sm:$0xf]
    %v1406 = vld [vmem:[#allocation5 + $0xa0c] sm:$0xf]
    %v1407 = vld [vmem:[#allocation5 + $0xa10] sm:$0xf]
    %v1408 = vld [vmem:[#allocation5 + $0xa14] sm:$0xf]
    %v1409 = vld [vmem:[#allocation5 + $0xa18] sm:$0xf]
    %v1410 = vld [vmem:[#allocation5 + $0xa1c] sm:$0xf]
    %v1411 = vld [vmem:[#allocation5 + $0xa20] sm:$0xf]
    %v1412 = vld [vmem:[#allocation5 + $0xa24] sm:$0xf]
    %v1413 = vld [vmem:[#allocation5 + $0xa28] sm:$0xf]
    %v1414 = vld [vmem:[#allocation5 + $0xa2c] sm:$0xf]
    %v1415 = vld [vmem:[#allocation5 + $0xa30] sm:$0xf]
    %v1416 = vld [vmem:[#allocation5 + $0xa34] sm:$0xf]
    %v1417 = vld [vmem:[#allocation5 + $0xa38] sm:$0xf]
    %v1418 = vld [vmem:[#allocation5 + $0xa3c] sm:$0xf]
    %v1419 = vld [vmem:[#allocation5 + $0xa40] sm:$0xf]
    %v1420 = vld [vmem:[#allocation5 + $0xa44] sm:$0xf]
    %v1421 = vld [vmem:[#allocation5 + $0xa48] sm:$0xf]
    %v1422 = vld [vmem:[#allocation5 + $0xa4c] sm:$0xf]
    %v1423 = vld [vmem:[#allocation5 + $0xa50] sm:$0xf]
    %v1424 = vld [vmem:[#allocation5 + $0xa54] sm:$0xf]
    %v1425 = vld [vmem:[#allocation5 + $0xa58] sm:$0xf]
    %v1426 = vld [vmem:[#allocation5 + $0xa5c] sm:$0xf]
    %v1427 = vld [vmem:[#allocation5 + $0xa60] sm:$0xf]
    %v1428 = vld [vmem:[#allocation5 + $0xa64] sm:$0xf]
    %v1429 = vld [vmem:[#allocation5 + $0xa68] sm:$0xf]
    %v1430 = vld [vmem:[#allocation5 + $0xa6c] sm:$0xf]
    %v1431 = vld [vmem:[#allocation5 + $0xa70] sm:$0xf]
    %v1432 = vld [vmem:[#allocation5 + $0xa74] sm:$0xf]
    %v1433 = vld [vmem:[#allocation5 + $0xa78] sm:$0xf]
    %v1434 = vld [vmem:[#allocation5 + $0xa7c] sm:$0xf]
    %v1435 = vld [vmem:[#allocation5 + $0xa80] sm:$0xf]
    %v1436 = vld [vmem:[#allocation5 + $0xa84] sm:$0xf]
    %v1437 = vld [vmem:[#allocation5 + $0xa88] sm:$0xf]
    %v1438 = vld [vmem:[#allocation5 + $0xa8c] sm:$0xf]
    %v1439 = vld [vmem:[#allocation5 + $0xa90] sm:$0xf]
    %v1440 = vld [vmem:[#allocation5 + $0xa94] sm:$0xf]
    %v1441 = vld [vmem:[#allocation5 + $0xa98] sm:$0xf]
    %v1442 = vld [vmem:[#allocation5 + $0xa9c] sm:$0xf]
    %v1443 = vld [vmem:[#allocation5 + $0xaa0] sm:$0xf]
    %v1444 = vld [vmem:[#allocation5 + $0xaa4] sm:$0xf]
    %v1445 = vld [vmem:[#allocation5 + $0xaa8] sm:$0xf]
    %v1446 = vld [vmem:[#allocation5 + $0xaac] sm:$0xf]
    %v1447 = vld [vmem:[#allocation5 + $0xab0] sm:$0xf]
    %v1448 = vld [vmem:[#allocation5 + $0xab4] sm:$0xf]
    %v1449 = vld [vmem:[#allocation5 + $0xab8] sm:$0xf]
    %v1450 = vld [vmem:[#allocation5 + $0xabc] sm:$0xf]
    %v1451 = vld [vmem:[#allocation5 + $0xac0] sm:$0xf]
    %v1452 = vld [vmem:[#allocation5 + $0xac4] sm:$0xf]
    %v1453 = vld [vmem:[#allocation5 + $0xac8] sm:$0xf]
    %v1454 = vld [vmem:[#allocation5 + $0xacc] sm:$0xf]
    %v1455 = vld [vmem:[#allocation5 + $0xad0] sm:$0xf]
    %v1456 = vld [vmem:[#allocation5 + $0xad4] sm:$0xf]
    %v1457 = vld [vmem:[#allocation5 + $0xad8] sm:$0xf]
    %v1458 = vld [vmem:[#allocation5 + $0xadc] sm:$0xf]
    %v1459 = vld [vmem:[#allocation5 + $0xae0] sm:$0xf]
    %v1460 = vld [vmem:[#allocation5 + $0xae4] sm:$0xf]
    %v1461 = vld [vmem:[#allocation5 + $0xae8] sm:$0xf]
    %v1462 = vld [vmem:[#allocation5 + $0xaec] sm:$0xf]
    %v1463 = vld [vmem:[#allocation5 + $0xaf0] sm:$0xf]
    %v1464 = vld [vmem:[#allocation5 + $0xaf4] sm:$0xf]
    %v1465 = vld [vmem:[#allocation5 + $0xaf8] sm:$0xf]
    %v1466 = vld [vmem:[#allocation5 + $0xafc] sm:$0xf]
    %v1467 = vld [vmem:[#allocation5 + $0xb00] sm:$0xf]
    %v1468 = vld [vmem:[#allocation5 + $0xb04] sm:$0xf]
    %v1469 = vld [vmem:[#allocation5 + $0xb08] sm:$0xf]
    %v1470 = vld [vmem:[#allocation5 + $0xb0c] sm:$0xf]
    %v1471 = vld [vmem:[#allocation5 + $0xb10] sm:$0xf]
    %v1472 = vld [vmem:[#allocation5 + $0xb14] sm:$0xf]
    %v1473 = vld [vmem:[#allocation5 + $0xb18] sm:$0xf]
    %v1474 = vld [vmem:[#allocation5 + $0xb1c] sm:$0xf]
    %v1475 = vld [vmem:[#allocation5 + $0xb20] sm:$0xf]
    %v1476 = vld [vmem:[#allocation5 + $0xb24] sm:$0xf]
    %v1477 = vld [vmem:[#allocation5 + $0xb28] sm:$0xf]
    %v1478 = vld [vmem:[#allocation5 + $0xb2c] sm:$0xf]
    %v1479 = vld [vmem:[#allocation5 + $0xb30] sm:$0xf]
    %v1480 = vld [vmem:[#allocation5 + $0xb34] sm:$0xf]
    %v1481 = vld [vmem:[#allocation5 + $0xb38] sm:$0xf]
    %v1482 = vld [vmem:[#allocation5 + $0xb3c] sm:$0xf]
    %v1483 = vld [vmem:[#allocation5 + $0xb40] sm:$0xf]
    %v1484 = vld [vmem:[#allocation5 + $0xb44] sm:$0xf]
    %v1485 = vld [vmem:[#allocation5 + $0xb48] sm:$0xf]
    %v1486 = vld [vmem:[#allocation5 + $0xb4c] sm:$0xf]
    %v1487 = vld [vmem:[#allocation5 + $0xb50] sm:$0xf]
    %v1488 = vld [vmem:[#allocation5 + $0xb54] sm:$0xf]
    %v1489 = vld [vmem:[#allocation5 + $0xb58] sm:$0xf]
    %v1490 = vld [vmem:[#allocation5 + $0xb5c] sm:$0xf]
    %v1491 = vld [vmem:[#allocation5 + $0xb60] sm:$0xf]
    %v1492 = vld [vmem:[#allocation5 + $0xb64] sm:$0xf]
    %v1493 = vld [vmem:[#allocation5 + $0xb68] sm:$0xf]
    %v1494 = vld [vmem:[#allocation5 + $0xb6c] sm:$0xf]
    %v1495 = vld [vmem:[#allocation5 + $0xb70] sm:$0xf]
    %v1496 = vld [vmem:[#allocation5 + $0xb74] sm:$0xf]
    %v1497 = vld [vmem:[#allocation5 + $0xb78] sm:$0xf]
    %v1498 = vld [vmem:[#allocation5 + $0xb7c] sm:$0xf]
    %v1499 = vld [vmem:[#allocation5 + $0xb80] sm:$0xf]
    %v1500 = vld [vmem:[#allocation5 + $0xb84] sm:$0xf]
    %v1501 = vld [vmem:[#allocation5 + $0xb88] sm:$0xf]
    %v1502 = vld [vmem:[#allocation5 + $0xb8c] sm:$0xf]
    %v1503 = vld [vmem:[#allocation5 + $0xb90] sm:$0xf]
    %v1504 = vld [vmem:[#allocation5 + $0xb94] sm:$0xf]
    %v1505 = vld [vmem:[#allocation5 + $0xb98] sm:$0xf]
    %v1506 = vld [vmem:[#allocation5 + $0xb9c] sm:$0xf]
    %v1507 = vld [vmem:[#allocation5 + $0xba0] sm:$0xf]
    %v1508 = vld [vmem:[#allocation5 + $0xba4] sm:$0xf]
    %v1509 = vld [vmem:[#allocation5 + $0xba8] sm:$0xf]
    %v1510 = vld [vmem:[#allocation5 + $0xbac] sm:$0xf]
    %v1511 = vld [vmem:[#allocation5 + $0xbb0] sm:$0xf]
    %v1512 = vld [vmem:[#allocation5 + $0xbb4] sm:$0xf]
    %v1513 = vld [vmem:[#allocation5 + $0xbb8] sm:$0xf]
    %v1514 = vld [vmem:[#allocation5 + $0xbbc] sm:$0xf]
    %v1515 = vld [vmem:[#allocation5 + $0xbc0] sm:$0xf]
    %v1516 = vld [vmem:[#allocation5 + $0xbc4] sm:$0xf]
    %v1517 = vld [vmem:[#allocation5 + $0xbc8] sm:$0xf]
    %v1518 = vld [vmem:[#allocation5 + $0xbcc] sm:$0xf]
    %v1519 = vld [vmem:[#allocation5 + $0xbd0] sm:$0xf]
    %v1520 = vld [vmem:[#allocation5 + $0xbd4] sm:$0xf]
    %v1521 = vld [vmem:[#allocation5 + $0xbd8] sm:$0xf]
    %v1522 = vld [vmem:[#allocation5 + $0xbdc] sm:$0xf]
    %v1523 = vld [vmem:[#allocation5 + $0xbe0] sm:$0xf]
    %v1524 = vld [vmem:[#allocation5 + $0xbe4] sm:$0xf]
    %v1525 = vld [vmem:[#allocation5 + $0xbe8] sm:$0xf]
    %v1526 = vld [vmem:[#allocation5 + $0xbec] sm:$0xf]
    %v1527 = vld [vmem:[#allocation5 + $0xbf0] sm:$0xf]
    %v1528 = vld [vmem:[#allocation5 + $0xbf4] sm:$0xf]
    %v1529 = vld [vmem:[#allocation5 + $0xbf8] sm:$0xf]
    %v1530 = vld [vmem:[#allocation5 + $0xbfc] sm:$0xf]
    %v1531 = vld [vmem:[#allocation5 + $0xc00] sm:$0xf]
    %v1532 = vld [vmem:[#allocation5 + $0xc04] sm:$0xf]
    %v1533 = vld [vmem:[#allocation5 + $0xc08] sm:$0xf]
    %v1534 = vld [vmem:[#allocation5 + $0xc0c] sm:$0xf]
    %v1535 = vld [vmem:[#allocation5 + $0xc10] sm:$0xf]
    %v1536 = vld [vmem:[#allocation5 + $0xc14] sm:$0xf]
    %v1537 = vld [vmem:[#allocation5 + $0xc18] sm:$0xf]
    %v1538 = vld [vmem:[#allocation5 + $0xc1c] sm:$0xf]
    %v1539 = vld [vmem:[#allocation5 + $0xc20] sm:$0xf]
    %v1540 = vld [vmem:[#allocation5 + $0xc24] sm:$0xf]
    %v1541 = vld [vmem:[#allocation5 + $0xc28] sm:$0xf]
    %v1542 = vld [vmem:[#allocation5 + $0xc2c] sm:$0xf]
    %v1543 = vld [vmem:[#allocation5 + $0xc30] sm:$0xf]
    %v1544 = vld [vmem:[#allocation5 + $0xc34] sm:$0xf]
    %v1545 = vld [vmem:[#allocation5 + $0xc38] sm:$0xf]
    %v1546 = vld [vmem:[#allocation5 + $0xc3c] sm:$0xf]
    %v1547 = vld [vmem:[#allocation5 + $0xc40] sm:$0xf]
    %v1548 = vld [vmem:[#allocation5 + $0xc44] sm:$0xf]
    %v1549 = vld [vmem:[#allocation5 + $0xc48] sm:$0xf]
    %v1550 = vld [vmem:[#allocation5 + $0xc4c] sm:$0xf]
    %v1551 = vld [vmem:[#allocation5 + $0xc50] sm:$0xf]
    %v1552 = vld [vmem:[#allocation5 + $0xc54] sm:$0xf]
    %v1553 = vld [vmem:[#allocation5 + $0xc58] sm:$0xf]
    %v1554 = vld [vmem:[#allocation5 + $0xc5c] sm:$0xf]
    %v1555 = vld [vmem:[#allocation5 + $0xc60] sm:$0xf]
    %v1556 = vld [vmem:[#allocation5 + $0xc64] sm:$0xf]
    %v1557 = vld [vmem:[#allocation5 + $0xc68] sm:$0xf]
    %v1558 = vld [vmem:[#allocation5 + $0xc6c] sm:$0xf]
    %v1559 = vld [vmem:[#allocation5 + $0xc70] sm:$0xf]
    %v1560 = vld [vmem:[#allocation5 + $0xc74] sm:$0xf]
    %v1561 = vld [vmem:[#allocation5 + $0xc78] sm:$0xf]
    %v1562 = vld [vmem:[#allocation5 + $0xc7c] sm:$0xf]
    %v1563 = vld [vmem:[#allocation5 + $0xc80] sm:$0xf]
    %v1564 = vld [vmem:[#allocation5 + $0xc84] sm:$0xf]
    %v1565 = vld [vmem:[#allocation5 + $0xc88] sm:$0xf]
    %v1566 = vld [vmem:[#allocation5 + $0xc8c] sm:$0xf]
    %v1567 = vld [vmem:[#allocation5 + $0xc90] sm:$0xf]
    %v1568 = vld [vmem:[#allocation5 + $0xc94] sm:$0xf]
    %v1569 = vld [vmem:[#allocation5 + $0xc98] sm:$0xf]
    %v1570 = vld [vmem:[#allocation5 + $0xc9c] sm:$0xf]
    %v1571 = vld [vmem:[#allocation5 + $0xca0] sm:$0xf]
    %v1572 = vld [vmem:[#allocation5 + $0xca4] sm:$0xf]
    %v1573 = vld [vmem:[#allocation5 + $0xca8] sm:$0xf]
    %v1574 = vld [vmem:[#allocation5 + $0xcac] sm:$0xf]
    %v1575 = vld [vmem:[#allocation5 + $0xcb0] sm:$0xf]
    %v1576 = vld [vmem:[#allocation5 + $0xcb4] sm:$0xf]
    %v1577 = vld [vmem:[#allocation5 + $0xcb8] sm:$0xf]
    %v1578 = vld [vmem:[#allocation5 + $0xcbc] sm:$0xf]
    %v1579 = vld [vmem:[#allocation5 + $0xcc0] sm:$0xf]
    %v1580 = vld [vmem:[#allocation5 + $0xcc4] sm:$0xf]
    %v1581 = vld [vmem:[#allocation5 + $0xcc8] sm:$0xf]
    %v1582 = vld [vmem:[#allocation5 + $0xccc] sm:$0xf]
    %v1583 = vld [vmem:[#allocation5 + $0xcd0] sm:$0xf]
    %v1584 = vld [vmem:[#allocation5 + $0xcd4] sm:$0xf]
    %v1585 = vld [vmem:[#allocation5 + $0xcd8] sm:$0xf]
    %v1586 = vld [vmem:[#allocation5 + $0xcdc] sm:$0xf]
    %v1587 = vld [vmem:[#allocation5 + $0xce0] sm:$0xf]
    %v1588 = vld [vmem:[#allocation5 + $0xce4] sm:$0xf]
    %v1589 = vld [vmem:[#allocation5 + $0xce8] sm:$0xf]
    %v1590 = vld [vmem:[#allocation5 + $0xcec] sm:$0xf]
    %v1591 = vld [vmem:[#allocation5 + $0xcf0] sm:$0xf]
    %v1592 = vld [vmem:[#allocation5 + $0xcf4] sm:$0xf]
    %v1593 = vld [vmem:[#allocation5 + $0xcf8] sm:$0xf]
    %v1594 = vld [vmem:[#allocation5 + $0xcfc] sm:$0xf]
    %v1595 = vld [vmem:[#allocation5 + $0xd00] sm:$0xf]
    %v1596 = vld [vmem:[#allocation5 + $0xd04] sm:$0xf]
    %v1597 = vld [vmem:[#allocation5 + $0xd08] sm:$0xf]
    %v1598 = vld [vmem:[#allocation5 + $0xd0c] sm:$0xf]
    %v1599 = vld [vmem:[#allocation5 + $0xd10] sm:$0xf]
    %v1600 = vld [vmem:[#allocation5 + $0xd14] sm:$0xf]
    %v1601 = vld [vmem:[#allocation5 + $0xd18] sm:$0xf]
    %v1602 = vld [vmem:[#allocation5 + $0xd1c] sm:$0xf]
    %v1603 = vld [vmem:[#allocation5 + $0xd20] sm:$0xf]
    %v1604 = vld [vmem:[#allocation5 + $0xd24] sm:$0xf]
    %v1605 = vld [vmem:[#allocation5 + $0xd28] sm:$0xf]
    %v1606 = vld [vmem:[#allocation5 + $0xd2c] sm:$0xf]
    %v1607 = vld [vmem:[#allocation5 + $0xd30] sm:$0xf]
    %v1608 = vld [vmem:[#allocation5 + $0xd34] sm:$0xf]
    %v1609 = vld [vmem:[#allocation5 + $0xd38] sm:$0xf]
    %v1610 = vld [vmem:[#allocation5 + $0xd3c] sm:$0xf]
    %v1611 = vld [vmem:[#allocation5 + $0xd40] sm:$0xf]
    %v1612 = vld [vmem:[#allocation5 + $0xd44] sm:$0xf]
    %v1613 = vld [vmem:[#allocation5 + $0xd48] sm:$0xf]
    %v1614 = vld [vmem:[#allocation5 + $0xd4c] sm:$0xf]
    %v1615 = vld [vmem:[#allocation5 + $0xd50] sm:$0xf]
    %v1616 = vld [vmem:[#allocation5 + $0xd54] sm:$0xf]
    %v1617 = vld [vmem:[#allocation5 + $0xd58] sm:$0xf]
    %v1618 = vld [vmem:[#allocation5 + $0xd5c] sm:$0xf]
    %v1619 = vld [vmem:[#allocation5 + $0xd60] sm:$0xf]
    %v1620 = vld [vmem:[#allocation5 + $0xd64] sm:$0xf]
    %v1621 = vld [vmem:[#allocation5 + $0xd68] sm:$0xf]
    %v1622 = vld [vmem:[#allocation5 + $0xd6c] sm:$0xf]
    %v1623 = vld [vmem:[#allocation5 + $0xd70] sm:$0xf]
    %v1624 = vld [vmem:[#allocation5 + $0xd74] sm:$0xf]
    %v1625 = vld [vmem:[#allocation5 + $0xd78] sm:$0xf]
    %v1626 = vld [vmem:[#allocation5 + $0xd7c] sm:$0xf]
    %v1627 = vld [vmem:[#allocation5 + $0xd80] sm:$0xf]
    %v1628 = vld [vmem:[#allocation5 + $0xd84] sm:$0xf]
    %v1629 = vld [vmem:[#allocation5 + $0xd88] sm:$0xf]
    %v1630 = vld [vmem:[#allocation5 + $0xd8c] sm:$0xf]
    %v1631 = vld [vmem:[#allocation5 + $0xd90] sm:$0xf]
    %v1632 = vld [vmem:[#allocation5 + $0xd94] sm:$0xf]
    %v1633 = vld [vmem:[#allocation5 + $0xd98] sm:$0xf]
    %v1634 = vld [vmem:[#allocation5 + $0xd9c] sm:$0xf]
    %v1635 = vld [vmem:[#allocation5 + $0xda0] sm:$0xf]
    %v1636 = vld [vmem:[#allocation5 + $0xda4] sm:$0xf]
    %v1637 = vld [vmem:[#allocation5 + $0xda8] sm:$0xf]
    %v1638 = vld [vmem:[#allocation5 + $0xdac] sm:$0xf]
    %v1639 = vld [vmem:[#allocation5 + $0xdb0] sm:$0xf]
    %v1640 = vld [vmem:[#allocation5 + $0xdb4] sm:$0xf]
    %v1641 = vld [vmem:[#allocation5 + $0xdb8] sm:$0xf]
    %v1642 = vld [vmem:[#allocation5 + $0xdbc] sm:$0xf]
    %v1643 = vld [vmem:[#allocation5 + $0xdc0] sm:$0xf]
    %v1644 = vld [vmem:[#allocation5 + $0xdc4] sm:$0xf]
    %v1645 = vld [vmem:[#allocation5 + $0xdc8] sm:$0xf]
    %v1646 = vld [vmem:[#allocation5 + $0xdcc] sm:$0xf]
    %v1647 = vld [vmem:[#allocation5 + $0xdd0] sm:$0xf]
    %v1648 = vld [vmem:[#allocation5 + $0xdd4] sm:$0xf]
    %v1649 = vld [vmem:[#allocation5 + $0xdd8] sm:$0xf]
    %v1650 = vld [vmem:[#allocation5 + $0xddc] sm:$0xf]
    %v1651 = vld [vmem:[#allocation5 + $0xde0] sm:$0xf]
    %v1652 = vld [vmem:[#allocation5 + $0xde4] sm:$0xf]
    %v1653 = vld [vmem:[#allocation5 + $0xde8] sm:$0xf]
    %v1654 = vld [vmem:[#allocation5 + $0xdec] sm:$0xf]
    %v1655 = vld [vmem:[#allocation5 + $0xdf0] sm:$0xf]
    %v1656 = vld [vmem:[#allocation5 + $0xdf4] sm:$0xf]
    %v1657 = vld [vmem:[#allocation5 + $0xdf8] sm:$0xf]
    %v1658 = vld [vmem:[#allocation5 + $0xdfc] sm:$0xf]
    %v1659 = vld [vmem:[#allocation5 + $0xe00] sm:$0xf]
    %v1660 = vld [vmem:[#allocation5 + $0xe04] sm:$0xf]
    %v1661 = vld [vmem:[#allocation5 + $0xe08] sm:$0xf]
    %v1662 = vld [vmem:[#allocation5 + $0xe0c] sm:$0xf]
    %v1663 = vld [vmem:[#allocation5 + $0xe10] sm:$0xf]
    %v1664 = vld [vmem:[#allocation5 + $0xe14] sm:$0xf]
    %v1665 = vld [vmem:[#allocation5 + $0xe18] sm:$0xf]
    %v1666 = vld [vmem:[#allocation5 + $0xe1c] sm:$0xf]
    %v1667 = vld [vmem:[#allocation5 + $0xe20] sm:$0xf]
    %v1668 = vld [vmem:[#allocation5 + $0xe24] sm:$0xf]
    %v1669 = vld [vmem:[#allocation5 + $0xe28] sm:$0xf]
    %v1670 = vld [vmem:[#allocation5 + $0xe2c] sm:$0xf]
    %v1671 = vld [vmem:[#allocation5 + $0xe30] sm:$0xf]
    %v1672 = vld [vmem:[#allocation5 + $0xe34] sm:$0xf]
    %v1673 = vld [vmem:[#allocation5 + $0xe38] sm:$0xf]
    %v1674 = vld [vmem:[#allocation5 + $0xe3c] sm:$0xf]
    %v1675 = vld [vmem:[#allocation5 + $0xe40] sm:$0xf]
    %v1676 = vld [vmem:[#allocation5 + $0xe44] sm:$0xf]
    %v1677 = vld [vmem:[#allocation5 + $0xe48] sm:$0xf]
    %v1678 = vld [vmem:[#allocation5 + $0xe4c] sm:$0xf]
    %v1679 = vld [vmem:[#allocation5 + $0xe50] sm:$0xf]
    %v1680 = vld [vmem:[#allocation5 + $0xe54] sm:$0xf]
    %v1681 = vld [vmem:[#allocation5 + $0xe58] sm:$0xf]
    %v1682 = vld [vmem:[#allocation5 + $0xe5c] sm:$0xf]
    %v1683 = vld [vmem:[#allocation5 + $0xe60] sm:$0xf]
    %v1684 = vld [vmem:[#allocation5 + $0xe64] sm:$0xf]
    %v1685 = vld [vmem:[#allocation5 + $0xe68] sm:$0xf]
    %v1686 = vld [vmem:[#allocation5 + $0xe6c] sm:$0xf]
    %v1687 = vld [vmem:[#allocation5 + $0xe70] sm:$0xf]
    %v1688 = vld [vmem:[#allocation5 + $0xe74] sm:$0xf]
    %v1689 = vld [vmem:[#allocation5 + $0xe78] sm:$0xf]
    %v1690 = vld [vmem:[#allocation5 + $0xe7c] sm:$0xf]
    %v1691 = vld [vmem:[#allocation5 + $0xe80] sm:$0xf]
    %v1692 = vld [vmem:[#allocation5 + $0xe84] sm:$0xf]
    %v1693 = vld [vmem:[#allocation5 + $0xe88] sm:$0xf]
    %v1694 = vld [vmem:[#allocation5 + $0xe8c] sm:$0xf]
    %v1695 = vld [vmem:[#allocation5 + $0xe90] sm:$0xf]
    %v1696 = vld [vmem:[#allocation5 + $0xe94] sm:$0xf]
    %v1697 = vld [vmem:[#allocation5 + $0xe98] sm:$0xf]
    %v1698 = vld [vmem:[#allocation5 + $0xe9c] sm:$0xf]
    %v1699 = vld [vmem:[#allocation5 + $0xea0] sm:$0xf]
    %v1700 = vld [vmem:[#allocation5 + $0xea4] sm:$0xf]
    %v1701 = vld [vmem:[#allocation5 + $0xea8] sm:$0xf]
    %v1702 = vld [vmem:[#allocation5 + $0xeac] sm:$0xf]
    %v1703 = vld [vmem:[#allocation5 + $0xeb0] sm:$0xf]
    %v1704 = vld [vmem:[#allocation5 + $0xeb4] sm:$0xf]
    %v1705 = vld [vmem:[#allocation5 + $0xeb8] sm:$0xf]
    %v1706 = vld [vmem:[#allocation5 + $0xebc] sm:$0xf]
    %v1707 = vld [vmem:[#allocation5 + $0xec0] sm:$0xf]
    %v1708 = vld [vmem:[#allocation5 + $0xec4] sm:$0xf]
    %v1709 = vld [vmem:[#allocation5 + $0xec8] sm:$0xf]
    %v1710 = vld [vmem:[#allocation5 + $0xecc] sm:$0xf]
    %v1711 = vld [vmem:[#allocation5 + $0xed0] sm:$0xf]
    %v1712 = vld [vmem:[#allocation5 + $0xed4] sm:$0xf]
    %v1713 = vld [vmem:[#allocation5 + $0xed8] sm:$0xf]
    %v1714 = vld [vmem:[#allocation5 + $0xedc] sm:$0xf]
    %v1715 = vld [vmem:[#allocation5 + $0xee0] sm:$0xf]
    %v1716 = vld [vmem:[#allocation5 + $0xee4] sm:$0xf]
    %v1717 = vld [vmem:[#allocation5 + $0xee8] sm:$0xf]
    %v1718 = vld [vmem:[#allocation5 + $0xeec] sm:$0xf]
    %v1719 = vld [vmem:[#allocation5 + $0xef0] sm:$0xf]
    %v1720 = vld [vmem:[#allocation5 + $0xef4] sm:$0xf]
    %v1721 = vld [vmem:[#allocation5 + $0xef8] sm:$0xf]
    %v1722 = vld [vmem:[#allocation5 + $0xefc] sm:$0xf]
    %v1723 = vld [vmem:[#allocation5 + $0xf00] sm:$0xf]
    %v1724 = vld [vmem:[#allocation5 + $0xf04] sm:$0xf]
    %v1725 = vld [vmem:[#allocation5 + $0xf08] sm:$0xf]
    %v1726 = vld [vmem:[#allocation5 + $0xf0c] sm:$0xf]
    %v1727 = vld [vmem:[#allocation5 + $0xf10] sm:$0xf]
    %v1728 = vld [vmem:[#allocation5 + $0xf14] sm:$0xf]
    %v1729 = vld [vmem:[#allocation5 + $0xf18] sm:$0xf]
    %v1730 = vld [vmem:[#allocation5 + $0xf1c] sm:$0xf]
    %v1731 = vld [vmem:[#allocation5 + $0xf20] sm:$0xf]
    %v1732 = vld [vmem:[#allocation5 + $0xf24] sm:$0xf]
    %v1733 = vld [vmem:[#allocation5 + $0xf28] sm:$0xf]
    %v1734 = vld [vmem:[#allocation5 + $0xf2c] sm:$0xf]
    %v1735 = vld [vmem:[#allocation5 + $0xf30] sm:$0xf]
    %v1736 = vld [vmem:[#allocation5 + $0xf34] sm:$0xf]
    %v1737 = vld [vmem:[#allocation5 + $0xf38] sm:$0xf]
    %v1738 = vld [vmem:[#allocation5 + $0xf3c] sm:$0xf]
    %v1739 = vld [vmem:[#allocation5 + $0xf40] sm:$0xf]
    %v1740 = vld [vmem:[#allocation5 + $0xf44] sm:$0xf]
    %v1741 = vld [vmem:[#allocation5 + $0xf48] sm:$0xf]
    %v1742 = vld [vmem:[#allocation5 + $0xf4c] sm:$0xf]
    %v1743 = vld [vmem:[#allocation5 + $0xf50] sm:$0xf]
    %v1744 = vld [vmem:[#allocation5 + $0xf54] sm:$0xf]
    %v1745 = vld [vmem:[#allocation5 + $0xf58] sm:$0xf]
    %v1746 = vld [vmem:[#allocation5 + $0xf5c] sm:$0xf]
    %v1747 = vld [vmem:[#allocation5 + $0xf60] sm:$0xf]
    %v1748 = vld [vmem:[#allocation5 + $0xf64] sm:$0xf]
    %v1749 = vld [vmem:[#allocation5 + $0xf68] sm:$0xf]
    %v1750 = vld [vmem:[#allocation5 + $0xf6c] sm:$0xf]
    %v1751 = vld [vmem:[#allocation5 + $0xf70] sm:$0xf]
    %v1752 = vld [vmem:[#allocation5 + $0xf74] sm:$0xf]
    %v1753 = vld [vmem:[#allocation5 + $0xf78] sm:$0xf]
    %v1754 = vld [vmem:[#allocation5 + $0xf7c] sm:$0xf]
    %v1755 = vld [vmem:[#allocation5 + $0xf80] sm:$0xf]
    %v1756 = vld [vmem:[#allocation5 + $0xf84] sm:$0xf]
    %v1757 = vld [vmem:[#allocation5 + $0xf88] sm:$0xf]
    %v1758 = vld [vmem:[#allocation5 + $0xf8c] sm:$0xf]
    %v1759 = vld [vmem:[#allocation5 + $0xf90] sm:$0xf]
    %v1760 = vld [vmem:[#allocation5 + $0xf94] sm:$0xf]
    %v1761 = vld [vmem:[#allocation5 + $0xf98] sm:$0xf]
    %v1762 = vld [vmem:[#allocation5 + $0xf9c] sm:$0xf]
    %v1763 = vld [vmem:[#allocation5 + $0xfa0] sm:$0xf]
    %v1764 = vld [vmem:[#allocation5 + $0xfa4] sm:$0xf]
    %v1765 = vld [vmem:[#allocation5 + $0xfa8] sm:$0xf]
    %v1766 = vld [vmem:[#allocation5 + $0xfac] sm:$0xf]
    %v1767 = vld [vmem:[#allocation5 + $0xfb0] sm:$0xf]
    %v1768 = vld [vmem:[#allocation5 + $0xfb4] sm:$0xf]
    %v1769 = vld [vmem:[#allocation5 + $0xfb8] sm:$0xf]
    %v1770 = vld [vmem:[#allocation5 + $0xfbc] sm:$0xf]
    %v1771 = vld [vmem:[#allocation5 + $0xfc0] sm:$0xf]
    %v1772 = vld [vmem:[#allocation5 + $0xfc4] sm:$0xf]
    %v1773 = vld [vmem:[#allocation5 + $0xfc8] sm:$0xf]
    %v1774 = vld [vmem:[#allocation5 + $0xfcc] sm:$0xf]
    %v1775 = vld [vmem:[#allocation5 + $0xfd0] sm:$0xf]
    %v1776 = vld [vmem:[#allocation5 + $0xfd4] sm:$0xf]
    %v1777 = vld [vmem:[#allocation5 + $0xfd8] sm:$0xf]
    %v1778 = vld [vmem:[#allocation5 + $0xfdc] sm:$0xf]
    %v1779 = vld [vmem:[#allocation5 + $0xfe0] sm:$0xf]
    %v1780 = vld [vmem:[#allocation5 + $0xfe4] sm:$0xf]
    %v1781 = vld [vmem:[#allocation5 + $0xfe8] sm:$0xf]
    %v1782 = vld [vmem:[#allocation5 + $0xfec] sm:$0xf]
    %v1783 = vld [vmem:[#allocation5 + $0xff0] sm:$0xf]
    %v1784 = vld [vmem:[#allocation5 + $0xff4] sm:$0xf]
    %v1785 = vld [vmem:[#allocation5 + $0xff8] sm:$0xf]
    %v1786 = vld [vmem:[#allocation5 + $0xffc] sm:$0xf]
    %v1787 = vld [vmem:[#allocation5 + $0x1000] sm:$0xf]
    %v1788 = vld [vmem:[#allocation5 + $0x1004] sm:$0xf]
    %v1789 = vld [vmem:[#allocation5 + $0x1008] sm:$0xf]
    %v1790 = vld [vmem:[#allocation5 + $0x100c] sm:$0xf]
    %v1791 = vld [vmem:[#allocation5 + $0x1010] sm:$0xf]
    %v1792 = vld [vmem:[#allocation5 + $0x1014] sm:$0xf]
    %v1793 = vld [vmem:[#allocation5 + $0x1018] sm:$0xf]
    %v1794 = vld [vmem:[#allocation5 + $0x101c] sm:$0xf]
    %v1795 = vld [vmem:[#allocation5 + $0x1020] sm:$0xf]
    %v1796 = vld [vmem:[#allocation5 + $0x1024] sm:$0xf]
    %v1797 = vld [vmem:[#allocation5 + $0x1028] sm:$0xf]
    %v1798 = vld [vmem:[#allocation5 + $0x102c] sm:$0xf]
    %v1799 = vld [vmem:[#allocation5 + $0x1030] sm:$0xf]
    %v1800 = vld [vmem:[#allocation5 + $0x1034] sm:$0xf]
    %v1801 = vld [vmem:[#allocation5 + $0x1038] sm:$0xf]
    %v1802 = vld [vmem:[#allocation5 + $0x103c] sm:$0xf]
    %v1803 = vld [vmem:[#allocation5 + $0x1040] sm:$0xf]
    %v1804 = vld [vmem:[#allocation5 + $0x1044] sm:$0xf]
    %v1805 = vld [vmem:[#allocation5 + $0x1048] sm:$0xf]
    %v1806 = vld [vmem:[#allocation5 + $0x104c] sm:$0xf]
    %v1807 = vld [vmem:[#allocation5 + $0x1050] sm:$0xf]
    %v1808 = vld [vmem:[#allocation5 + $0x1054] sm:$0xf]
    %v1809 = vld [vmem:[#allocation5 + $0x1058] sm:$0xf]
    %v1810 = vld [vmem:[#allocation5 + $0x105c] sm:$0xf]
    %v1811 = vld [vmem:[#allocation5 + $0x1060] sm:$0xf]
    %v1812 = vld [vmem:[#allocation5 + $0x1064] sm:$0xf]
    %v1813 = vld [vmem:[#allocation5 + $0x1068] sm:$0xf]
    %v1814 = vld [vmem:[#allocation5 + $0x106c] sm:$0xf]
    %v1815 = vld [vmem:[#allocation5 + $0x1070] sm:$0xf]
    %v1816 = vld [vmem:[#allocation5 + $0x1074] sm:$0xf]
    %v1817 = vld [vmem:[#allocation5 + $0x1078] sm:$0xf]
    %v1818 = vld [vmem:[#allocation5 + $0x107c] sm:$0xf]
    %v1819 = vld [vmem:[#allocation5 + $0x1080] sm:$0xf]
    %v1820 = vld [vmem:[#allocation5 + $0x1084] sm:$0xf]
    %v1821 = vld [vmem:[#allocation5 + $0x1088] sm:$0xf]
    %v1822 = vld [vmem:[#allocation5 + $0x108c] sm:$0xf]
    %v1823 = vld [vmem:[#allocation5 + $0x1090] sm:$0xf]
    %v1824 = vld [vmem:[#allocation5 + $0x1094] sm:$0xf]
    %v1825 = vld [vmem:[#allocation5 + $0x1098] sm:$0xf]
    %v1826 = vld [vmem:[#allocation5 + $0x109c] sm:$0xf]
    %v1827 = vld [vmem:[#allocation5 + $0x10a0] sm:$0xf]
    %v1828 = vld [vmem:[#allocation5 + $0x10a4] sm:$0xf]
    %v1829 = vld [vmem:[#allocation5 + $0x10a8] sm:$0xf]
    %v1830 = vld [vmem:[#allocation5 + $0x10ac] sm:$0xf]
    %v1831 = vld [vmem:[#allocation5 + $0x10b0] sm:$0xf]
    %v1832 = vld [vmem:[#allocation5 + $0x10b4] sm:$0xf]
    %v1833 = vld [vmem:[#allocation5 + $0x10b8] sm:$0xf]
    %v1834 = vld [vmem:[#allocation5 + $0x10bc] sm:$0xf]
    %v1835 = vld [vmem:[#allocation5 + $0x10c0] sm:$0xf]
    %v1836 = vld [vmem:[#allocation5 + $0x10c4] sm:$0xf]
    %v1837 = vld [vmem:[#allocation5 + $0x10c8] sm:$0xf]
    %v1838 = vld [vmem:[#allocation5 + $0x10cc] sm:$0xf]
    %v1839 = vld [vmem:[#allocation5 + $0x10d0] sm:$0xf]
    %v1840 = vld [vmem:[#allocation5 + $0x10d4] sm:$0xf]
    %v1841 = vld [vmem:[#allocation5 + $0x10d8] sm:$0xf]
    %v1842 = vld [vmem:[#allocation5 + $0x10dc] sm:$0xf]
    %v1843 = vld [vmem:[#allocation5 + $0x10e0] sm:$0xf]
    %v1844 = vld [vmem:[#allocation5 + $0x10e4] sm:$0xf]
    %v1845 = vld [vmem:[#allocation5 + $0x10e8] sm:$0xf]
    %v1846 = vld [vmem:[#allocation5 + $0x10ec] sm:$0xf]
    %v1847 = vld [vmem:[#allocation5 + $0x10f0] sm:$0xf]
    %v1848 = vld [vmem:[#allocation5 + $0x10f4] sm:$0xf]
    %v1849 = vld [vmem:[#allocation5 + $0x10f8] sm:$0xf]
    %v1850 = vld [vmem:[#allocation5 + $0x10fc] sm:$0xf]
    %v1851 = vld [vmem:[#allocation5 + $0x1100] sm:$0xf]
    %v1852 = vld [vmem:[#allocation5 + $0x1104] sm:$0xf]
    %v1853 = vld [vmem:[#allocation5 + $0x1108] sm:$0xf]
    %v1854 = vld [vmem:[#allocation5 + $0x110c] sm:$0xf]
    %v1855 = vld [vmem:[#allocation5 + $0x1110] sm:$0xf]
    %v1856 = vld [vmem:[#allocation5 + $0x1114] sm:$0xf]
    %v1857 = vld [vmem:[#allocation5 + $0x1118] sm:$0xf]
    %v1858 = vld [vmem:[#allocation5 + $0x111c] sm:$0xf]
    %v1859 = vld [vmem:[#allocation5 + $0x1120] sm:$0xf]
    %v1860 = vld [vmem:[#allocation5 + $0x1124] sm:$0xf]
    %v1861 = vld [vmem:[#allocation5 + $0x1128] sm:$0xf]
    %v1862 = vld [vmem:[#allocation5 + $0x112c] sm:$0xf]
    %v1863 = vld [vmem:[#allocation5 + $0x1130] sm:$0xf]
    %v1864 = vld [vmem:[#allocation5 + $0x1134] sm:$0xf]
    %v1865 = vld [vmem:[#allocation5 + $0x1138] sm:$0xf]
    %v1866 = vld [vmem:[#allocation5 + $0x113c] sm:$0xf]
    %v1867 = vld [vmem:[#allocation5 + $0x1140] sm:$0xf]
    %v1868 = vld [vmem:[#allocation5 + $0x1144] sm:$0xf]
    %v1869 = vld [vmem:[#allocation5 + $0x1148] sm:$0xf]
    %v1870 = vld [vmem:[#allocation5 + $0x114c] sm:$0xf]
    %v1871 = vld [vmem:[#allocation5 + $0x1150] sm:$0xf]
    %v1872 = vld [vmem:[#allocation5 + $0x1154] sm:$0xf]
    %v1873 = vld [vmem:[#allocation5 + $0x1158] sm:$0xf]
    %v1874 = vld [vmem:[#allocation5 + $0x115c] sm:$0xf]
    %v1875 = vld [vmem:[#allocation5 + $0x1160] sm:$0xf]
    %v1876 = vld [vmem:[#allocation5 + $0x1164] sm:$0xf]
    %v1877 = vld [vmem:[#allocation5 + $0x1168] sm:$0xf]
    %v1878 = vld [vmem:[#allocation5 + $0x116c] sm:$0xf]
    %v1879 = vld [vmem:[#allocation5 + $0x1170] sm:$0xf]
    %v1880 = vld [vmem:[#allocation5 + $0x1174] sm:$0xf]
    %v1881 = vld [vmem:[#allocation5 + $0x1178] sm:$0xf]
    %v1882 = vld [vmem:[#allocation5 + $0x117c] sm:$0xf]
    %v1883 = vld [vmem:[#allocation5 + $0x1180] sm:$0xf]
    %v1884 = vld [vmem:[#allocation5 + $0x1184] sm:$0xf]
    %v1885 = vld [vmem:[#allocation5 + $0x1188] sm:$0xf]
    %v1886 = vld [vmem:[#allocation5 + $0x118c] sm:$0xf]
    %v1887 = vld [vmem:[#allocation5 + $0x1190] sm:$0xf]
    %v1888 = vld [vmem:[#allocation5 + $0x1194] sm:$0xf]
    %v1889 = vld [vmem:[#allocation5 + $0x1198] sm:$0xf]
    %v1890 = vld [vmem:[#allocation5 + $0x119c] sm:$0xf]
    %v1891 = vld [vmem:[#allocation5 + $0x11a0] sm:$0xf]
    %v1892 = vld [vmem:[#allocation5 + $0x11a4] sm:$0xf]
    %v1893 = vld [vmem:[#allocation5 + $0x11a8] sm:$0xf]
    %v1894 = vld [vmem:[#allocation5 + $0x11ac] sm:$0xf]
    %v1895 = vld [vmem:[#allocation5 + $0x11b0] sm:$0xf]
    %v1896 = vld [vmem:[#allocation5 + $0x11b4] sm:$0xf]
    %v1897 = vld [vmem:[#allocation5 + $0x11b8] sm:$0xf]
    %v1898 = vld [vmem:[#allocation5 + $0x11bc] sm:$0xf]
    %v1899 = vld [vmem:[#allocation5 + $0x11c0] sm:$0xf]
    %v1900 = vld [vmem:[#allocation5 + $0x11c4] sm:$0xf]
    %v1901 = vld [vmem:[#allocation5 + $0x11c8] sm:$0xf]
    %v1902 = vld [vmem:[#allocation5 + $0x11cc] sm:$0xf]
    %v1903 = vld [vmem:[#allocation5 + $0x11d0] sm:$0xf]
    %v1904 = vld [vmem:[#allocation5 + $0x11d4] sm:$0xf]
    %v1905 = vld [vmem:[#allocation5 + $0x11d8] sm:$0xf]
    %v1906 = vld [vmem:[#allocation5 + $0x11dc] sm:$0xf]
    %v1907 = vld [vmem:[#allocation5 + $0x11e0] sm:$0xf]
    %v1908 = vld [vmem:[#allocation5 + $0x11e4] sm:$0xf]
    %v1909 = vld [vmem:[#allocation5 + $0x11e8] sm:$0xf]
    %v1910 = vld [vmem:[#allocation5 + $0x11ec] sm:$0xf]
    %v1911 = vld [vmem:[#allocation5 + $0x11f0] sm:$0xf]
    %v1912 = vld [vmem:[#allocation5 + $0x11f4] sm:$0xf]
    %v1913 = vld [vmem:[#allocation5 + $0x11f8] sm:$0xf]
    %v1914 = vld [vmem:[#allocation5 + $0x11fc] sm:$0xf]
    %v1915 = vld [vmem:[#allocation5 + $0x1200] sm:$0xf]
    %v1916 = vld [vmem:[#allocation5 + $0x1204] sm:$0xf]
    %v1917 = vld [vmem:[#allocation5 + $0x1208] sm:$0xf]
    %v1918 = vld [vmem:[#allocation5 + $0x120c] sm:$0xf]
    %v1919 = vld [vmem:[#allocation5 + $0x1210] sm:$0xf]
    %v1920 = vld [vmem:[#allocation5 + $0x1214] sm:$0xf]
    %v1921 = vld [vmem:[#allocation5 + $0x1218] sm:$0xf]
    %v1922 = vld [vmem:[#allocation5 + $0x121c] sm:$0xf]
    %v1923 = vld [vmem:[#allocation5 + $0x1220] sm:$0xf]
    %v1924 = vld [vmem:[#allocation5 + $0x1224] sm:$0xf]
    %v1925 = vld [vmem:[#allocation5 + $0x1228] sm:$0xf]
    %v1926 = vld [vmem:[#allocation5 + $0x122c] sm:$0xf]
    %v1927 = vld [vmem:[#allocation5 + $0x1230] sm:$0xf]
    %v1928 = vld [vmem:[#allocation5 + $0x1234] sm:$0xf]
    %v1929 = vld [vmem:[#allocation5 + $0x1238] sm:$0xf]
    %v1930 = vld [vmem:[#allocation5 + $0x123c] sm:$0xf]
    %v1931 = vld [vmem:[#allocation5 + $0x1240] sm:$0xf]
    %v1932 = vld [vmem:[#allocation5 + $0x1244] sm:$0xf]
    %v1933 = vld [vmem:[#allocation5 + $0x1248] sm:$0xf]
    %v1934 = vld [vmem:[#allocation5 + $0x124c] sm:$0xf]
    %v1935 = vld [vmem:[#allocation5 + $0x1250] sm:$0xf]
    %v1936 = vld [vmem:[#allocation5 + $0x1254] sm:$0xf]
    %v1937 = vld [vmem:[#allocation5 + $0x1258] sm:$0xf]
    %v1938 = vld [vmem:[#allocation5 + $0x125c] sm:$0xf]
    %v1939 = vld [vmem:[#allocation5 + $0x1260] sm:$0xf]
    %v1940 = vld [vmem:[#allocation5 + $0x1264] sm:$0xf]
    %v1941 = vld [vmem:[#allocation5 + $0x1268] sm:$0xf]
    %v1942 = vld [vmem:[#allocation5 + $0x126c] sm:$0xf]
    %v1943 = vld [vmem:[#allocation5 + $0x1270] sm:$0xf]
    %v1944 = vld [vmem:[#allocation5 + $0x1274] sm:$0xf]
    %v1945 = vld [vmem:[#allocation5 + $0x1278] sm:$0xf]
    %v1946 = vld [vmem:[#allocation5 + $0x127c] sm:$0xf]
    %v1947 = vld [vmem:[#allocation5 + $0x1280] sm:$0xf]
    %v1948 = vld [vmem:[#allocation5 + $0x1284] sm:$0xf]
    %v1949 = vld [vmem:[#allocation5 + $0x1288] sm:$0xf]
    %v1950 = vld [vmem:[#allocation5 + $0x128c] sm:$0xf]
    %v1951 = vld [vmem:[#allocation5 + $0x1290] sm:$0xf]
    %v1952 = vld [vmem:[#allocation5 + $0x1294] sm:$0xf]
    %v1953 = vld [vmem:[#allocation5 + $0x1298] sm:$0xf]
    %v1954 = vld [vmem:[#allocation5 + $0x129c] sm:$0xf]
    %v1955 = vld [vmem:[#allocation5 + $0x12a0] sm:$0xf]
    %v1956 = vld [vmem:[#allocation5 + $0x12a4] sm:$0xf]
    %v1957 = vld [vmem:[#allocation5 + $0x12a8] sm:$0xf]
    %v1958 = vld [vmem:[#allocation5 + $0x12ac] sm:$0xf]
    %v1959 = vld [vmem:[#allocation5 + $0x12b0] sm:$0xf]
    %v1960 = vld [vmem:[#allocation5 + $0x12b4] sm:$0xf]
    %v1961 = vld [vmem:[#allocation5 + $0x12b8] sm:$0xf]
    %v1962 = vld [vmem:[#allocation5 + $0x12bc] sm:$0xf]
    %v1963 = vld [vmem:[#allocation5 + $0x12c0] sm:$0xf]
    %v1964 = vld [vmem:[#allocation5 + $0x12c4] sm:$0xf]
    %v1965 = vld [vmem:[#allocation5 + $0x12c8] sm:$0xf]
    %v1966 = vld [vmem:[#allocation5 + $0x12cc] sm:$0xf]
    %v1967 = vld [vmem:[#allocation5 + $0x12d0] sm:$0xf]
    %v1968 = vld [vmem:[#allocation5 + $0x12d4] sm:$0xf]
    %v1969 = vld [vmem:[#allocation5 + $0x12d8] sm:$0xf]
    %v1970 = vld [vmem:[#allocation5 + $0x12dc] sm:$0xf]
    %v1971 = vld [vmem:[#allocation5 + $0x12e0] sm:$0xf]
    %v1972 = vld [vmem:[#allocation5 + $0x12e4] sm:$0xf]
    %v1973 = vld [vmem:[#allocation5 + $0x12e8] sm:$0xf]
    %v1974 = vld [vmem:[#allocation5 + $0x12ec] sm:$0xf]
    %v1975 = vld [vmem:[#allocation5 + $0x12f0] sm:$0xf]
    %v1976 = vld [vmem:[#allocation5 + $0x12f4] sm:$0xf]
    %v1977 = vld [vmem:[#allocation5 + $0x12f8] sm:$0xf]
    %v1978 = vld [vmem:[#allocation5 + $0x12fc] sm:$0xf]
    %v1979 = vld [vmem:[#allocation5 + $0x1300] sm:$0xf]
    %v1980 = vld [vmem:[#allocation5 + $0x1304] sm:$0xf]
    %v1981 = vld [vmem:[#allocation5 + $0x1308] sm:$0xf]
    %v1982 = vld [vmem:[#allocation5 + $0x130c] sm:$0xf]
    %v1983 = vld [vmem:[#allocation5 + $0x1310] sm:$0xf]
    %v1984 = vld [vmem:[#allocation5 + $0x1314] sm:$0xf]
    %v1985 = vld [vmem:[#allocation5 + $0x1318] sm:$0xf]
    %v1986 = vld [vmem:[#allocation5 + $0x131c] sm:$0xf]
    %v1987 = vld [vmem:[#allocation5 + $0x1320] sm:$0xf]
    %v1988 = vld [vmem:[#allocation5 + $0x1324] sm:$0xf]
    %v1989 = vld [vmem:[#allocation5 + $0x1328] sm:$0xf]
    %v1990 = vld [vmem:[#allocation5 + $0x132c] sm:$0xf]
    %v1991 = vld [vmem:[#allocation5 + $0x1330] sm:$0xf]
    %v1992 = vld [vmem:[#allocation5 + $0x1334] sm:$0xf]
    %v1993 = vld [vmem:[#allocation5 + $0x1338] sm:$0xf]
    %v1994 = vld [vmem:[#allocation5 + $0x133c] sm:$0xf]
    %v1995 = vld [vmem:[#allocation5 + $0x1340] sm:$0xf]
    %v1996 = vld [vmem:[#allocation5 + $0x1344] sm:$0xf]
    %v1997 = vld [vmem:[#allocation5 + $0x1348] sm:$0xf]
    %v1998 = vld [vmem:[#allocation5 + $0x134c] sm:$0xf]
    %v1999 = vld [vmem:[#allocation5 + $0x1350] sm:$0xf]
    %v2000 = vld [vmem:[#allocation5 + $0x1354] sm:$0xf]
    %v2001 = vld [vmem:[#allocation5 + $0x1358] sm:$0xf]
    %v2002 = vld [vmem:[#allocation5 + $0x135c] sm:$0xf]
    %v2003 = vld [vmem:[#allocation5 + $0x1360] sm:$0xf]
    %v2004 = vld [vmem:[#allocation5 + $0x1364] sm:$0xf]
    %v2005 = vld [vmem:[#allocation5 + $0x1368] sm:$0xf]
    %v2006 = vld [vmem:[#allocation5 + $0x136c] sm:$0xf]
    %v2007 = vld [vmem:[#allocation5 + $0x1370] sm:$0xf]
    %v2008 = vld [vmem:[#allocation5 + $0x1374] sm:$0xf]
    %v2009 = vld [vmem:[#allocation5 + $0x1378] sm:$0xf]
    %v2010 = vld [vmem:[#allocation5 + $0x137c] sm:$0xf]
    %v2011 = vld [vmem:[#allocation5 + $0x1380] sm:$0xf]
    %v2012 = vld [vmem:[#allocation5 + $0x1384] sm:$0xf]
    %v2013 = vld [vmem:[#allocation5 + $0x1388] sm:$0xf]
    %v2014 = vld [vmem:[#allocation5 + $0x138c] sm:$0xf]
    %v2015 = vld [vmem:[#allocation5 + $0x1390] sm:$0xf]
    %v2016 = vld [vmem:[#allocation5 + $0x1394] sm:$0xf]
    %v2017 = vld [vmem:[#allocation5 + $0x1398] sm:$0xf]
    %v2018 = vld [vmem:[#allocation5 + $0x139c] sm:$0xf]
    %v2019 = vld [vmem:[#allocation5 + $0x13a0] sm:$0xf]
    %v2020 = vld [vmem:[#allocation5 + $0x13a4] sm:$0xf]
    %v2021 = vld [vmem:[#allocation5 + $0x13a8] sm:$0xf]
    %v2022 = vld [vmem:[#allocation5 + $0x13ac] sm:$0xf]
    %v2023 = vld [vmem:[#allocation5 + $0x13b0] sm:$0xf]
    %v2024 = vld [vmem:[#allocation5 + $0x13b4] sm:$0xf]
    %v2025 = vld [vmem:[#allocation5 + $0x13b8] sm:$0xf]
    %v2026 = vld [vmem:[#allocation5 + $0x13bc] sm:$0xf]
    %v2027 = vld [vmem:[#allocation5 + $0x13c0] sm:$0xf]
    %v2028 = vld [vmem:[#allocation5 + $0x13c4] sm:$0xf]
    %v2029 = vld [vmem:[#allocation5 + $0x13c8] sm:$0xf]
    %v2030 = vld [vmem:[#allocation5 + $0x13cc] sm:$0xf]
    %v2031 = vld [vmem:[#allocation5 + $0x13d0] sm:$0xf]
    %v2032 = vld [vmem:[#allocation5 + $0x13d4] sm:$0xf]
    %v2033 = vld [vmem:[#allocation5 + $0x13d8] sm:$0xf]
    %v2034 = vld [vmem:[#allocation5 + $0x13dc] sm:$0xf]
    %v2035 = vld [vmem:[#allocation5 + $0x13e0] sm:$0xf]
    %v2036 = vld [vmem:[#allocation5 + $0x13e4] sm:$0xf]
    %v2037 = vld [vmem:[#allocation5 + $0x13e8] sm:$0xf]
    %v2038 = vld [vmem:[#allocation5 + $0x13ec] sm:$0xf]
    %v2039 = vld [vmem:[#allocation5 + $0x13f0] sm:$0xf]
    %v2040 = vld [vmem:[#allocation5 + $0x13f4] sm:$0xf]
    %v2041 = vld [vmem:[#allocation5 + $0x13f8] sm:$0xf]
    %v2042 = vld [vmem:[#allocation5 + $0x13fc] sm:$0xf]
    %v2043 = vld [vmem:[#allocation5 + $0x1400] sm:$0xf]
    %v2044 = vld [vmem:[#allocation5 + $0x1404] sm:$0xf]
    %v2045 = vld [vmem:[#allocation5 + $0x1408] sm:$0xf]
    %v2046 = vld [vmem:[#allocation5 + $0x140c] sm:$0xf]
    %v2047 = vld [vmem:[#allocation5 + $0x1410] sm:$0xf]
    %v2048 = vld [vmem:[#allocation5 + $0x1414] sm:$0xf]
    %v2049 = vld [vmem:[#allocation5 + $0x1418] sm:$0xf]
    %v2050 = vld [vmem:[#allocation5 + $0x141c] sm:$0xf]
    %v2051 = vld [vmem:[#allocation5 + $0x1420] sm:$0xf]
    %v2052 = vld [vmem:[#allocation5 + $0x1424] sm:$0xf]
    %v2053 = vld [vmem:[#allocation5 + $0x1428] sm:$0xf]
    %v2054 = vld [vmem:[#allocation5 + $0x142c] sm:$0xf]
    %v2055 = vld [vmem:[#allocation5 + $0x1430] sm:$0xf]
    %v2056 = vld [vmem:[#allocation5 + $0x1434] sm:$0xf]
    %v2057 = vld [vmem:[#allocation5 + $0x1438] sm:$0xf]
    %v2058 = vld [vmem:[#allocation5 + $0x143c] sm:$0xf]
    %v2059 = vld [vmem:[#allocation5 + $0x1440] sm:$0xf]
    %v2060 = vld [vmem:[#allocation5 + $0x1444] sm:$0xf]
    %v2061 = vld [vmem:[#allocation5 + $0x1448] sm:$0xf]
    %v2062 = vld [vmem:[#allocation5 + $0x144c] sm:$0xf]
    %v2063 = vld [vmem:[#allocation5 + $0x1450] sm:$0xf]
    %v2064 = vld [vmem:[#allocation5 + $0x1454] sm:$0xf]
    %v2065 = vld [vmem:[#allocation5 + $0x1458] sm:$0xf]
    %v2066 = vld [vmem:[#allocation5 + $0x145c] sm:$0xf]
    %v2067 = vld [vmem:[#allocation5 + $0x1460] sm:$0xf]
    %v2068 = vld [vmem:[#allocation5 + $0x1464] sm:$0xf]
    %v2069 = vld [vmem:[#allocation5 + $0x1468] sm:$0xf]
    %v2070 = vld [vmem:[#allocation5 + $0x146c] sm:$0xf]
    %v2071 = vld [vmem:[#allocation5 + $0x1470] sm:$0xf]
    %v2072 = vld [vmem:[#allocation5 + $0x1474] sm:$0xf]
    %v2073 = vld [vmem:[#allocation5 + $0x1478] sm:$0xf]
    %v2074 = vld [vmem:[#allocation5 + $0x147c] sm:$0xf]
    %v2075 = vld [vmem:[#allocation5 + $0x1480] sm:$0xf]
    %v2076 = vld [vmem:[#allocation5 + $0x1484] sm:$0xf]
    %v2077 = vld [vmem:[#allocation5 + $0x1488] sm:$0xf]
    %v2078 = vld [vmem:[#allocation5 + $0x148c] sm:$0xf]
    %v2079 = vld [vmem:[#allocation5 + $0x1490] sm:$0xf]
    %v2080 = vld [vmem:[#allocation5 + $0x1494] sm:$0xf]
    %v2081 = vld [vmem:[#allocation5 + $0x1498] sm:$0xf]
    %v2082 = vld [vmem:[#allocation5 + $0x149c] sm:$0xf]
    %v2083 = vld [vmem:[#allocation5 + $0x14a0] sm:$0xf]
    %v2084 = vld [vmem:[#allocation5 + $0x14a4] sm:$0xf]
    %v2085 = vld [vmem:[#allocation5 + $0x14a8] sm:$0xf]
    %v2086 = vld [vmem:[#allocation5 + $0x14ac] sm:$0xf]
    %v2087 = vld [vmem:[#allocation5 + $0x14b0] sm:$0xf]
    %v2088 = vld [vmem:[#allocation5 + $0x14b4] sm:$0xf]
    %v2089 = vld [vmem:[#allocation5 + $0x14b8] sm:$0xf]
    %v2090 = vld [vmem:[#allocation5 + $0x14bc] sm:$0xf]
    %v2091 = vld [vmem:[#allocation5 + $0x14c0] sm:$0xf]
    %v2092 = vld [vmem:[#allocation5 + $0x14c4] sm:$0xf]
    %v2093 = vld [vmem:[#allocation5 + $0x14c8] sm:$0xf]
    %v2094 = vld [vmem:[#allocation5 + $0x14cc] sm:$0xf]
    %v2095 = vld [vmem:[#allocation5 + $0x14d0] sm:$0xf]
    %v2096 = vld [vmem:[#allocation5 + $0x14d4] sm:$0xf]
    %v2097 = vld [vmem:[#allocation5 + $0x14d8] sm:$0xf]
    %v2098 = vld [vmem:[#allocation5 + $0x14dc] sm:$0xf]
    %v2099 = vld [vmem:[#allocation5 + $0x14e0] sm:$0xf]
    %v2100 = vld [vmem:[#allocation5 + $0x14e4] sm:$0xf]
    %v2101 = vld [vmem:[#allocation5 + $0x14e8] sm:$0xf]
    %v2102 = vld [vmem:[#allocation5 + $0x14ec] sm:$0xf]
    %v2103 = vld [vmem:[#allocation5 + $0x14f0] sm:$0xf]
    %v2104 = vld [vmem:[#allocation5 + $0x14f4] sm:$0xf]
    %v2105 = vld [vmem:[#allocation5 + $0x14f8] sm:$0xf]
    %v2106 = vld [vmem:[#allocation5 + $0x14fc] sm:$0xf]
    %v2107 = vld [vmem:[#allocation5 + $0x1500] sm:$0xf]
    %v2108 = vld [vmem:[#allocation5 + $0x1504] sm:$0xf]
    %v2109 = vld [vmem:[#allocation5 + $0x1508] sm:$0xf]
    %v2110 = vld [vmem:[#allocation5 + $0x150c] sm:$0xf]
    %v2111 = vld [vmem:[#allocation5 + $0x1510] sm:$0xf]
    %v2112 = vld [vmem:[#allocation5 + $0x1514] sm:$0xf]
    %v2113 = vld [vmem:[#allocation5 + $0x1518] sm:$0xf]
    %v2114 = vld [vmem:[#allocation5 + $0x151c] sm:$0xf]
    %v2115 = vld [vmem:[#allocation5 + $0x1520] sm:$0xf]
    %v2116 = vld [vmem:[#allocation5 + $0x1524] sm:$0xf]
    %v2117 = vld [vmem:[#allocation5 + $0x1528] sm:$0xf]
    %v2118 = vld [vmem:[#allocation5 + $0x152c] sm:$0xf]
    %v2119 = vld [vmem:[#allocation5 + $0x1530] sm:$0xf]
    %v2120 = vld [vmem:[#allocation5 + $0x1534] sm:$0xf]
    %v2121 = vld [vmem:[#allocation5 + $0x1538] sm:$0xf]
    %v2122 = vld [vmem:[#allocation5 + $0x153c] sm:$0xf]
    %v2123 = vld [vmem:[#allocation5 + $0x1540] sm:$0xf]
    %v2124 = vld [vmem:[#allocation5 + $0x1544] sm:$0xf]
    %v2125 = vld [vmem:[#allocation5 + $0x1548] sm:$0xf]
    %v2126 = vld [vmem:[#allocation5 + $0x154c] sm:$0xf]
    %v2127 = vld [vmem:[#allocation5 + $0x1550] sm:$0xf]
    %v2128 = vld [vmem:[#allocation5 + $0x1554] sm:$0xf]
    %v2129 = vld [vmem:[#allocation5 + $0x1558] sm:$0xf]
    %v2130 = vld [vmem:[#allocation5 + $0x155c] sm:$0xf]
    %v2131 = vld [vmem:[#allocation5 + $0x1560] sm:$0xf]
    %v2132 = vld [vmem:[#allocation5 + $0x1564] sm:$0xf]
    %v2133 = vld [vmem:[#allocation5 + $0x1568] sm:$0xf]
    %v2134 = vld [vmem:[#allocation5 + $0x156c] sm:$0xf]
    %v2135 = vld [vmem:[#allocation5 + $0x1570] sm:$0xf]
    %v2136 = vld [vmem:[#allocation5 + $0x1574] sm:$0xf]
    %v2137 = vld [vmem:[#allocation5 + $0x1578] sm:$0xf]
    %v2138 = vld [vmem:[#allocation5 + $0x157c] sm:$0xf]
    %v2139 = vld [vmem:[#allocation5 + $0x1580] sm:$0xf]
    %v2140 = vld [vmem:[#allocation5 + $0x1584] sm:$0xf]
    %v2141 = vld [vmem:[#allocation5 + $0x1588] sm:$0xf]
    %v2142 = vld [vmem:[#allocation5 + $0x158c] sm:$0xf]
    %v2143 = vld [vmem:[#allocation5 + $0x1590] sm:$0xf]
    %v2144 = vld [vmem:[#allocation5 + $0x1594] sm:$0xf]
    %v2145 = vld [vmem:[#allocation5 + $0x1598] sm:$0xf]
    %v2146 = vld [vmem:[#allocation5 + $0x159c] sm:$0xf]
    %v2147 = vld [vmem:[#allocation5 + $0x15a0] sm:$0xf]
    %v2148 = vld [vmem:[#allocation5 + $0x15a4] sm:$0xf]
    %v2149 = vld [vmem:[#allocation5 + $0x15a8] sm:$0xf]
    %v2150 = vld [vmem:[#allocation5 + $0x15ac] sm:$0xf]
    %v2151 = vld [vmem:[#allocation5 + $0x15b0] sm:$0xf]
    %v2152 = vld [vmem:[#allocation5 + $0x15b4] sm:$0xf]
    %v2153 = vld [vmem:[#allocation5 + $0x15b8] sm:$0xf]
    %v2154 = vld [vmem:[#allocation5 + $0x15bc] sm:$0xf]
    %v2155 = vld [vmem:[#allocation5 + $0x15c0] sm:$0xf]
    %v2156 = vld [vmem:[#allocation5 + $0x15c4] sm:$0xf]
    %v2157 = vld [vmem:[#allocation5 + $0x15c8] sm:$0xf]
    %v2158 = vld [vmem:[#allocation5 + $0x15cc] sm:$0xf]
    %v2159 = vld [vmem:[#allocation5 + $0x15d0] sm:$0xf]
    %v2160 = vld [vmem:[#allocation5 + $0x15d4] sm:$0xf]
    %v2161 = vld [vmem:[#allocation5 + $0x15d8] sm:$0xf]
    %v2162 = vld [vmem:[#allocation5 + $0x15dc] sm:$0xf]
    %v2163 = vld [vmem:[#allocation5 + $0x15e0] sm:$0xf]
    %v2164 = vld [vmem:[#allocation5 + $0x15e4] sm:$0xf]
    %v2165 = vld [vmem:[#allocation5 + $0x15e8] sm:$0xf]
    %v2166 = vld [vmem:[#allocation5 + $0x15ec] sm:$0xf]
    %v2167 = vld [vmem:[#allocation5 + $0x15f0] sm:$0xf]
    %v2168 = vld [vmem:[#allocation5 + $0x15f4] sm:$0xf]
    %v2169 = vld [vmem:[#allocation5 + $0x15f8] sm:$0xf]
    %v2170 = vld [vmem:[#allocation5 + $0x15fc] sm:$0xf]
    %v2171 = vld [vmem:[#allocation5 + $0x1600] sm:$0xf]
    %v2172 = vld [vmem:[#allocation5 + $0x1604] sm:$0xf]
    %v2173 = vld [vmem:[#allocation5 + $0x1608] sm:$0xf]
    %v2174 = vld [vmem:[#allocation5 + $0x160c] sm:$0xf]
    %v2175 = vld [vmem:[#allocation5 + $0x1610] sm:$0xf]
    %v2176 = vld [vmem:[#allocation5 + $0x1614] sm:$0xf]
    %v2177 = vld [vmem:[#allocation5 + $0x1618] sm:$0xf]
    %v2178 = vld [vmem:[#allocation5 + $0x161c] sm:$0xf]
    %v2179 = vld [vmem:[#allocation5 + $0x1620] sm:$0xf]
    %v2180 = vld [vmem:[#allocation5 + $0x1624] sm:$0xf]
    %v2181 = vld [vmem:[#allocation5 + $0x1628] sm:$0xf]
    %v2182 = vld [vmem:[#allocation5 + $0x162c] sm:$0xf]
    %v2183 = vld [vmem:[#allocation5 + $0x1630] sm:$0xf]
    %v2184 = vld [vmem:[#allocation5 + $0x1634] sm:$0xf]
    %v2185 = vld [vmem:[#allocation5 + $0x1638] sm:$0xf]
    %v2186 = vld [vmem:[#allocation5 + $0x163c] sm:$0xf]
    %v2187 = vld [vmem:[#allocation5 + $0x1640] sm:$0xf]
    %v2188 = vld [vmem:[#allocation5 + $0x1644] sm:$0xf]
    %v2189 = vld [vmem:[#allocation5 + $0x1648] sm:$0xf]
    %v2190 = vld [vmem:[#allocation5 + $0x164c] sm:$0xf]
    %v2191 = vld [vmem:[#allocation5 + $0x1650] sm:$0xf]
    %v2192 = vld [vmem:[#allocation5 + $0x1654] sm:$0xf]
    %v2193 = vld [vmem:[#allocation5 + $0x1658] sm:$0xf]
    %v2194 = vld [vmem:[#allocation5 + $0x165c] sm:$0xf]
    %v2195 = vld [vmem:[#allocation5 + $0x1660] sm:$0xf]
    %v2196 = vld [vmem:[#allocation5 + $0x1664] sm:$0xf]
    %v2197 = vld [vmem:[#allocation5 + $0x1668] sm:$0xf]
    %v2198 = vld [vmem:[#allocation5 + $0x166c] sm:$0xf]
    %v2199 = vld [vmem:[#allocation5 + $0x1670] sm:$0xf]
    %v2200 = vld [vmem:[#allocation5 + $0x1674] sm:$0xf]
    %v2201 = vld [vmem:[#allocation5 + $0x1678] sm:$0xf]
    %v2202 = vld [vmem:[#allocation5 + $0x167c] sm:$0xf]
    %v2203 = vld [vmem:[#allocation5 + $0x1680] sm:$0xf]
    %v2204 = vld [vmem:[#allocation5 + $0x1684] sm:$0xf]
    %v2205 = vld [vmem:[#allocation5 + $0x1688] sm:$0xf]
    %v2206 = vld [vmem:[#allocation5 + $0x168c] sm:$0xf]
    %v2207 = vld [vmem:[#allocation5 + $0x1690] sm:$0xf]
    %v2208 = vld [vmem:[#allocation5 + $0x1694] sm:$0xf]
    %v2209 = vld [vmem:[#allocation5 + $0x1698] sm:$0xf]
    %v2210 = vld [vmem:[#allocation5 + $0x169c] sm:$0xf]
    %v2211 = vld [vmem:[#allocation5 + $0x16a0] sm:$0xf]
    %v2212 = vld [vmem:[#allocation5 + $0x16a4] sm:$0xf]
    %v2213 = vld [vmem:[#allocation5 + $0x16a8] sm:$0xf]
    %v2214 = vld [vmem:[#allocation5 + $0x16ac] sm:$0xf]
    %v2215 = vld [vmem:[#allocation5 + $0x16b0] sm:$0xf]
    %v2216 = vld [vmem:[#allocation5 + $0x16b4] sm:$0xf]
    %v2217 = vld [vmem:[#allocation5 + $0x16b8] sm:$0xf]
    %v2218 = vld [vmem:[#allocation5 + $0x16bc] sm:$0xf]
    %v2219 = vld [vmem:[#allocation5 + $0x16c0] sm:$0xf]
    %v2220 = vld [vmem:[#allocation5 + $0x16c4] sm:$0xf]
    %v2221 = vld [vmem:[#allocation5 + $0x16c8] sm:$0xf]
    %v2222 = vld [vmem:[#allocation5 + $0x16cc] sm:$0xf]
    %v2223 = vld [vmem:[#allocation5 + $0x16d0] sm:$0xf]
    %v2224 = vld [vmem:[#allocation5 + $0x16d4] sm:$0xf]
    %v2225 = vld [vmem:[#allocation5 + $0x16d8] sm:$0xf]
    %v2226 = vld [vmem:[#allocation5 + $0x16dc] sm:$0xf]
    %v2227 = vld [vmem:[#allocation5 + $0x16e0] sm:$0xf]
    %v2228 = vld [vmem:[#allocation5 + $0x16e4] sm:$0xf]
    %v2229 = vld [vmem:[#allocation5 + $0x16e8] sm:$0xf]
    %v2230 = vld [vmem:[#allocation5 + $0x16ec] sm:$0xf]
    %v2231 = vld [vmem:[#allocation5 + $0x16f0] sm:$0xf]
    %v2232 = vld [vmem:[#allocation5 + $0x16f4] sm:$0xf]
    %v2233 = vld [vmem:[#allocation5 + $0x16f8] sm:$0xf]
    %v2234 = vld [vmem:[#allocation5 + $0x16fc] sm:$0xf]
    %v2235 = vld [vmem:[#allocation5 + $0x1700] sm:$0xf]
    %v2236 = vld [vmem:[#allocation5 + $0x1704] sm:$0xf]
    %v2237 = vld [vmem:[#allocation5 + $0x1708] sm:$0xf]
    %v2238 = vld [vmem:[#allocation5 + $0x170c] sm:$0xf]
    %v2239 = vld [vmem:[#allocation5 + $0x1710] sm:$0xf]
    %v2240 = vld [vmem:[#allocation5 + $0x1714] sm:$0xf]
    %v2241 = vld [vmem:[#allocation5 + $0x1718] sm:$0xf]
    %v2242 = vld [vmem:[#allocation5 + $0x171c] sm:$0xf]
    %v2243 = vld [vmem:[#allocation5 + $0x1720] sm:$0xf]
    %v2244 = vld [vmem:[#allocation5 + $0x1724] sm:$0xf]
    %v2245 = vld [vmem:[#allocation5 + $0x1728] sm:$0xf]
    %v2246 = vld [vmem:[#allocation5 + $0x172c] sm:$0xf]
    %v2247 = vld [vmem:[#allocation5 + $0x1730] sm:$0xf]
    %v2248 = vld [vmem:[#allocation5 + $0x1734] sm:$0xf]
    %v2249 = vld [vmem:[#allocation5 + $0x1738] sm:$0xf]
    %v2250 = vld [vmem:[#allocation5 + $0x173c] sm:$0xf]
    %v2251 = vld [vmem:[#allocation5 + $0x1740] sm:$0xf]
    %v2252 = vld [vmem:[#allocation5 + $0x1744] sm:$0xf]
    %v2253 = vld [vmem:[#allocation5 + $0x1748] sm:$0xf]
    %v2254 = vld [vmem:[#allocation5 + $0x174c] sm:$0xf]
    %v2255 = vld [vmem:[#allocation5 + $0x1750] sm:$0xf]
    %v2256 = vld [vmem:[#allocation5 + $0x1754] sm:$0xf]
    %v2257 = vld [vmem:[#allocation5 + $0x1758] sm:$0xf]
    %v2258 = vld [vmem:[#allocation5 + $0x175c] sm:$0xf]
    %v2259 = vld [vmem:[#allocation5 + $0x1760] sm:$0xf]
    %v2260 = vld [vmem:[#allocation5 + $0x1764] sm:$0xf]
    %v2261 = vld [vmem:[#allocation5 + $0x1768] sm:$0xf]
    %v2262 = vld [vmem:[#allocation5 + $0x176c] sm:$0xf]
    %v2263 = vld [vmem:[#allocation5 + $0x1770] sm:$0xf]
    %v2264 = vld [vmem:[#allocation5 + $0x1774] sm:$0xf]
    %v2265 = vld [vmem:[#allocation5 + $0x1778] sm:$0xf]
    %v2266 = vld [vmem:[#allocation5 + $0x177c] sm:$0xf]
    %v2267 = vld [vmem:[#allocation5 + $0x1780] sm:$0xf]
    %v2268 = vld [vmem:[#allocation5 + $0x1784] sm:$0xf]
    %v2269 = vld [vmem:[#allocation5 + $0x1788] sm:$0xf]
    %v2270 = vld [vmem:[#allocation5 + $0x178c] sm:$0xf]
    %v2271 = vld [vmem:[#allocation5 + $0x1790] sm:$0xf]
    %v2272 = vld [vmem:[#allocation5 + $0x1794] sm:$0xf]
    %v2273 = vld [vmem:[#allocation5 + $0x1798] sm:$0xf]
    %v2274 = vld [vmem:[#allocation5 + $0x179c] sm:$0xf]
    %v2275 = vld [vmem:[#allocation5 + $0x17a0] sm:$0xf]
    %v2276 = vld [vmem:[#allocation5 + $0x17a4] sm:$0xf]
    %v2277 = vld [vmem:[#allocation5 + $0x17a8] sm:$0xf]
    %v2278 = vld [vmem:[#allocation5 + $0x17ac] sm:$0xf]
    %v2279 = vld [vmem:[#allocation5 + $0x17b0] sm:$0xf]
    %v2280 = vld [vmem:[#allocation5 + $0x17b4] sm:$0xf]
    %v2281 = vld [vmem:[#allocation5 + $0x17b8] sm:$0xf]
    %v2282 = vld [vmem:[#allocation5 + $0x17bc] sm:$0xf]
    %v2283 = vld [vmem:[#allocation5 + $0x17c0] sm:$0xf]
    %v2284 = vld [vmem:[#allocation5 + $0x17c4] sm:$0xf]
    %v2285 = vld [vmem:[#allocation5 + $0x17c8] sm:$0xf]
    %v2286 = vld [vmem:[#allocation5 + $0x17cc] sm:$0xf]
    %v2287 = vld [vmem:[#allocation5 + $0x17d0] sm:$0xf]
    %v2288 = vld [vmem:[#allocation5 + $0x17d4] sm:$0xf]
    %v2289 = vld [vmem:[#allocation5 + $0x17d8] sm:$0xf]
    %v2290 = vld [vmem:[#allocation5 + $0x17dc] sm:$0xf]
    %v2291 = vld [vmem:[#allocation5 + $0x17e0] sm:$0xf]
    %v2292 = vld [vmem:[#allocation5 + $0x17e4] sm:$0xf]
    %v2293 = vld [vmem:[#allocation5 + $0x17e8] sm:$0xf]
    %v2294 = vld [vmem:[#allocation5 + $0x17ec] sm:$0xf]
    %v2295 = vld [vmem:[#allocation5 + $0x17f0] sm:$0xf]
    %v2296 = vld [vmem:[#allocation5 + $0x17f4] sm:$0xf]
    %v2297 = vld [vmem:[#allocation5 + $0x17f8] sm:$0xf]
    %v2298 = vld [vmem:[#allocation5 + $0x17fc] sm:$0xf]
    %v2299 = vld [vmem:[#allocation7] sm:$0x1]
    %v2301 = vlaneseq
    %v2302 = vshrl.u32 %v2301, 7
    %v2303 = vsub.s32 0, %v2302
    %v2304 = vrot.slane %v2299, %v2303
    %v3842 = vunpack.c.l.b16 %v763
    %v3843 = vunpack.c.l.b16 %v764
    %v3844 = vunpack.c.l.b16 %v765
    %v3845 = vunpack.c.l.b16 %v766
    %v3846 = vunpack.c.l.b16 %v767
    %v3847 = vunpack.c.l.b16 %v768
    %v3848 = vunpack.c.l.b16 %v769
    %v3849 = vunpack.c.l.b16 %v770
    %v3850 = vunpack.c.l.b16 %v771
    %v3851 = vunpack.c.l.b16 %v772
    %v3852 = vunpack.c.l.b16 %v773
    %v3853 = vunpack.c.l.b16 %v774
    %v3854 = vunpack.c.l.b16 %v775
    %v3855 = vunpack.c.l.b16 %v776
    %v3856 = vunpack.c.l.b16 %v777
    %v3857 = vunpack.c.l.b16 %v778
    %v3858 = vunpack.c.l.b16 %v779
    %v3859 = vunpack.c.l.b16 %v780
    %v3860 = vunpack.c.l.b16 %v781
    %v3861 = vunpack.c.l.b16 %v782
    %v3862 = vunpack.c.l.b16 %v783
    %v3863 = vunpack.c.l.b16 %v784
    %v3864 = vunpack.c.l.b16 %v785
    %v3865 = vunpack.c.l.b16 %v786
    %v3866 = vunpack.c.l.b16 %v787
    %v3867 = vunpack.c.l.b16 %v788
    %v3868 = vunpack.c.l.b16 %v789
    %v3869 = vunpack.c.l.b16 %v790
    %v3870 = vunpack.c.l.b16 %v791
    %v3871 = vunpack.c.l.b16 %v792
    %v3872 = vunpack.c.l.b16 %v793
    %v3873 = vunpack.c.l.b16 %v794
    %v3874 = vunpack.c.l.b16 %v795
    %v3875 = vunpack.c.l.b16 %v796
    %v3876 = vunpack.c.l.b16 %v797
    %v3877 = vunpack.c.l.b16 %v798
    %v3878 = vunpack.c.l.b16 %v799
    %v3879 = vunpack.c.l.b16 %v800
    %v3880 = vunpack.c.l.b16 %v801
    %v3881 = vunpack.c.l.b16 %v802
    %v3882 = vunpack.c.l.b16 %v803
    %v3883 = vunpack.c.l.b16 %v804
    %v3884 = vunpack.c.l.b16 %v805
    %v3885 = vunpack.c.l.b16 %v806
    %v3886 = vunpack.c.l.b16 %v807
    %v3887 = vunpack.c.l.b16 %v808
    %v3888 = vunpack.c.l.b16 %v809
    %v3889 = vunpack.c.l.b16 %v810
    %v3890 = vunpack.c.l.b16 %v811
    %v3891 = vunpack.c.l.b16 %v812
    %v3892 = vunpack.c.l.b16 %v813
    %v3893 = vunpack.c.l.b16 %v814
    %v3894 = vunpack.c.l.b16 %v815
    %v3895 = vunpack.c.l.b16 %v816
    %v3896 = vunpack.c.l.b16 %v817
    %v3897 = vunpack.c.l.b16 %v818
    %v3898 = vunpack.c.l.b16 %v819
    %v3899 = vunpack.c.l.b16 %v820
    %v3900 = vunpack.c.l.b16 %v821
    %v3901 = vunpack.c.l.b16 %v822
    %v3902 = vunpack.c.l.b16 %v823
    %v3903 = vunpack.c.l.b16 %v824
    %v3904 = vunpack.c.l.b16 %v825
    %v3905 = vunpack.c.l.b16 %v826
    %v3906 = vunpack.c.l.b16 %v827
    %v3907 = vunpack.c.l.b16 %v828
    %v3908 = vunpack.c.l.b16 %v829
    %v3909 = vunpack.c.l.b16 %v830
    %v3910 = vunpack.c.l.b16 %v831
    %v3911 = vunpack.c.l.b16 %v832
    %v3912 = vunpack.c.l.b16 %v833
    %v3913 = vunpack.c.l.b16 %v834
    %v3914 = vunpack.c.l.b16 %v835
    %v3915 = vunpack.c.l.b16 %v836
    %v3916 = vunpack.c.l.b16 %v837
    %v3917 = vunpack.c.l.b16 %v838
    %v3918 = vunpack.c.l.b16 %v839
    %v3919 = vunpack.c.l.b16 %v840
    %v3920 = vunpack.c.l.b16 %v841
    %v3921 = vunpack.c.l.b16 %v842
    %v3922 = vunpack.c.l.b16 %v843
    %v3923 = vunpack.c.l.b16 %v844
    %v3924 = vunpack.c.l.b16 %v845
    %v3925 = vunpack.c.l.b16 %v846
    %v3926 = vunpack.c.l.b16 %v847
    %v3927 = vunpack.c.l.b16 %v848
    %v3928 = vunpack.c.l.b16 %v849
    %v3929 = vunpack.c.l.b16 %v850
    %v3930 = vunpack.c.l.b16 %v851
    %v3931 = vunpack.c.l.b16 %v852
    %v3932 = vunpack.c.l.b16 %v853
    %v3933 = vunpack.c.l.b16 %v854
    %v3934 = vunpack.c.l.b16 %v855
    %v3935 = vunpack.c.l.b16 %v856
    %v3936 = vunpack.c.l.b16 %v857
    %v3937 = vunpack.c.l.b16 %v858
    %v3938 = vunpack.c.l.b16 %v859
    %v3939 = vunpack.c.l.b16 %v860
    %v3940 = vunpack.c.l.b16 %v861
    %v3941 = vunpack.c.l.b16 %v862
    %v3942 = vunpack.c.l.b16 %v863
    %v3943 = vunpack.c.l.b16 %v864
    %v3944 = vunpack.c.l.b16 %v865
    %v3945 = vunpack.c.l.b16 %v866
    %v3946 = vunpack.c.l.b16 %v867
    %v3947 = vunpack.c.l.b16 %v868
    %v3948 = vunpack.c.l.b16 %v869
    %v3949 = vunpack.c.l.b16 %v870
    %v3950 = vunpack.c.l.b16 %v871
    %v3951 = vunpack.c.l.b16 %v872
    %v3952 = vunpack.c.l.b16 %v873
    %v3953 = vunpack.c.l.b16 %v874
    %v3954 = vunpack.c.l.b16 %v875
    %v3955 = vunpack.c.l.b16 %v876
    %v3956 = vunpack.c.l.b16 %v877
    %v3957 = vunpack.c.l.b16 %v878
    %v3958 = vunpack.c.l.b16 %v879
    %v3959 = vunpack.c.l.b16 %v880
    %v3960 = vunpack.c.l.b16 %v881
    %v3961 = vunpack.c.l.b16 %v882
    %v3962 = vunpack.c.l.b16 %v883
    %v3963 = vunpack.c.l.b16 %v884
    %v3964 = vunpack.c.l.b16 %v885
    %v3965 = vunpack.c.l.b16 %v886
    %v3966 = vunpack.c.l.b16 %v887
    %v3967 = vunpack.c.l.b16 %v888
    %v3968 = vunpack.c.l.b16 %v889
    %v3969 = vunpack.c.l.b16 %v890
    %v3970 = vunpack.c.l.b16 %v891
    %v3971 = vunpack.c.l.b16 %v892
    %v3972 = vunpack.c.l.b16 %v893
    %v3973 = vunpack.c.l.b16 %v894
    %v3974 = vunpack.c.l.b16 %v895
    %v3975 = vunpack.c.l.b16 %v896
    %v3976 = vunpack.c.l.b16 %v897
    %v3977 = vunpack.c.l.b16 %v898
    %v3978 = vunpack.c.l.b16 %v899
    %v3979 = vunpack.c.l.b16 %v900
    %v3980 = vunpack.c.l.b16 %v901
    %v3981 = vunpack.c.l.b16 %v902
    %v3982 = vunpack.c.l.b16 %v903
    %v3983 = vunpack.c.l.b16 %v904
    %v3984 = vunpack.c.l.b16 %v905
    %v3985 = vunpack.c.l.b16 %v906
    %v3986 = vunpack.c.l.b16 %v907
    %v3987 = vunpack.c.l.b16 %v908
    %v3988 = vunpack.c.l.b16 %v909
    %v3989 = vunpack.c.l.b16 %v910
    %v3990 = vunpack.c.l.b16 %v911
    %v3991 = vunpack.c.l.b16 %v912
    %v3992 = vunpack.c.l.b16 %v913
    %v3993 = vunpack.c.l.b16 %v914
    %v3994 = vunpack.c.l.b16 %v915
    %v3995 = vunpack.c.l.b16 %v916
    %v3996 = vunpack.c.l.b16 %v917
    %v3997 = vunpack.c.l.b16 %v918
    %v3998 = vunpack.c.l.b16 %v919
    %v3999 = vunpack.c.l.b16 %v920
    %v4000 = vunpack.c.l.b16 %v921
    %v4001 = vunpack.c.l.b16 %v922
    %v4002 = vunpack.c.l.b16 %v923
    %v4003 = vunpack.c.l.b16 %v924
    %v4004 = vunpack.c.l.b16 %v925
    %v4005 = vunpack.c.l.b16 %v926
    %v4006 = vunpack.c.l.b16 %v927
    %v4007 = vunpack.c.l.b16 %v928
    %v4008 = vunpack.c.l.b16 %v929
    %v4009 = vunpack.c.l.b16 %v930
    %v4010 = vunpack.c.l.b16 %v931
    %v4011 = vunpack.c.l.b16 %v932
    %v4012 = vunpack.c.l.b16 %v933
    %v4013 = vunpack.c.l.b16 %v934
    %v4014 = vunpack.c.l.b16 %v935
    %v4015 = vunpack.c.l.b16 %v936
    %v4016 = vunpack.c.l.b16 %v937
    %v4017 = vunpack.c.l.b16 %v938
    %v4018 = vunpack.c.l.b16 %v939
    %v4019 = vunpack.c.l.b16 %v940
    %v4020 = vunpack.c.l.b16 %v941
    %v4021 = vunpack.c.l.b16 %v942
    %v4022 = vunpack.c.l.b16 %v943
    %v4023 = vunpack.c.l.b16 %v944
    %v4024 = vunpack.c.l.b16 %v945
    %v4025 = vunpack.c.l.b16 %v946
    %v4026 = vunpack.c.l.b16 %v947
    %v4027 = vunpack.c.l.b16 %v948
    %v4028 = vunpack.c.l.b16 %v949
    %v4029 = vunpack.c.l.b16 %v950
    %v4030 = vunpack.c.l.b16 %v951
    %v4031 = vunpack.c.l.b16 %v952
    %v4032 = vunpack.c.l.b16 %v953
    %v4033 = vunpack.c.l.b16 %v954
    %v4034 = vunpack.c.l.b16 %v955
    %v4035 = vunpack.c.l.b16 %v956
    %v4036 = vunpack.c.l.b16 %v957
    %v4037 = vunpack.c.l.b16 %v958
    %v4038 = vunpack.c.l.b16 %v959
    %v4039 = vunpack.c.l.b16 %v960
    %v4040 = vunpack.c.l.b16 %v961
    %v4041 = vunpack.c.l.b16 %v962
    %v4042 = vunpack.c.l.b16 %v963
    %v4043 = vunpack.c.l.b16 %v964
    %v4044 = vunpack.c.l.b16 %v965
    %v4045 = vunpack.c.l.b16 %v966
    %v4046 = vunpack.c.l.b16 %v967
    %v4047 = vunpack.c.l.b16 %v968
    %v4048 = vunpack.c.l.b16 %v969
    %v4049 = vunpack.c.l.b16 %v970
    %v4050 = vunpack.c.l.b16 %v971
    %v4051 = vunpack.c.l.b16 %v972
    %v4052 = vunpack.c.l.b16 %v973
    %v4053 = vunpack.c.l.b16 %v974
    %v4054 = vunpack.c.l.b16 %v975
    %v4055 = vunpack.c.l.b16 %v976
    %v4056 = vunpack.c.l.b16 %v977
    %v4057 = vunpack.c.l.b16 %v978
    %v4058 = vunpack.c.l.b16 %v979
    %v4059 = vunpack.c.l.b16 %v980
    %v4060 = vunpack.c.l.b16 %v981
    %v4061 = vunpack.c.l.b16 %v982
    %v4062 = vunpack.c.l.b16 %v983
    %v4063 = vunpack.c.l.b16 %v984
    %v4064 = vunpack.c.l.b16 %v985
    %v4065 = vunpack.c.l.b16 %v986
    %v4066 = vunpack.c.l.b16 %v987
    %v4067 = vunpack.c.l.b16 %v988
    %v4068 = vunpack.c.l.b16 %v989
    %v4069 = vunpack.c.l.b16 %v990
    %v4070 = vunpack.c.l.b16 %v991
    %v4071 = vunpack.c.l.b16 %v992
    %v4072 = vunpack.c.l.b16 %v993
    %v4073 = vunpack.c.l.b16 %v994
    %v4074 = vunpack.c.l.b16 %v995
    %v4075 = vunpack.c.l.b16 %v996
    %v4076 = vunpack.c.l.b16 %v997
    %v4077 = vunpack.c.l.b16 %v998
    %v4078 = vunpack.c.l.b16 %v999
    %v4079 = vunpack.c.l.b16 %v1000
    %v4080 = vunpack.c.l.b16 %v1001
    %v4081 = vunpack.c.l.b16 %v1002
    %v4082 = vunpack.c.l.b16 %v1003
    %v4083 = vunpack.c.l.b16 %v1004
    %v4084 = vunpack.c.l.b16 %v1005
    %v4085 = vunpack.c.l.b16 %v1006
    %v4086 = vunpack.c.l.b16 %v1007
    %v4087 = vunpack.c.l.b16 %v1008
    %v4088 = vunpack.c.l.b16 %v1009
    %v4089 = vunpack.c.l.b16 %v1010
    %v4090 = vunpack.c.l.b16 %v1011
    %v4091 = vunpack.c.l.b16 %v1012
    %v4092 = vunpack.c.l.b16 %v1013
    %v4093 = vunpack.c.l.b16 %v1014
    %v4094 = vunpack.c.l.b16 %v1015
    %v4095 = vunpack.c.l.b16 %v1016
    %v4096 = vunpack.c.l.b16 %v1017
    %v4097 = vunpack.c.l.b16 %v1018
    %v4098 = vunpack.c.l.b16 %v1019
    %v4099 = vunpack.c.l.b16 %v1020
    %v4100 = vunpack.c.l.b16 %v1021
    %v4101 = vunpack.c.l.b16 %v1022
    %v4102 = vunpack.c.l.b16 %v1023
    %v4103 = vunpack.c.l.b16 %v1024
    %v4104 = vunpack.c.l.b16 %v1025
    %v4105 = vunpack.c.l.b16 %v1026
    %v4106 = vunpack.c.l.b16 %v1027
    %v4107 = vunpack.c.l.b16 %v1028
    %v4108 = vunpack.c.l.b16 %v1029
    %v4109 = vunpack.c.l.b16 %v1030
    %v4110 = vunpack.c.l.b16 %v1031
    %v4111 = vunpack.c.l.b16 %v1032
    %v4112 = vunpack.c.l.b16 %v1033
    %v4113 = vunpack.c.l.b16 %v1034
    %v4114 = vunpack.c.l.b16 %v1035
    %v4115 = vunpack.c.l.b16 %v1036
    %v4116 = vunpack.c.l.b16 %v1037
    %v4117 = vunpack.c.l.b16 %v1038
    %v4118 = vunpack.c.l.b16 %v1039
    %v4119 = vunpack.c.l.b16 %v1040
    %v4120 = vunpack.c.l.b16 %v1041
    %v4121 = vunpack.c.l.b16 %v1042
    %v4122 = vunpack.c.l.b16 %v1043
    %v4123 = vunpack.c.l.b16 %v1044
    %v4124 = vunpack.c.l.b16 %v1045
    %v4125 = vunpack.c.l.b16 %v1046
    %v4126 = vunpack.c.l.b16 %v1047
    %v4127 = vunpack.c.l.b16 %v1048
    %v4128 = vunpack.c.l.b16 %v1049
    %v4129 = vunpack.c.l.b16 %v1050
    %v4130 = vunpack.c.l.b16 %v1051
    %v4131 = vunpack.c.l.b16 %v1052
    %v4132 = vunpack.c.l.b16 %v1053
    %v4133 = vunpack.c.l.b16 %v1054
    %v4134 = vunpack.c.l.b16 %v1055
    %v4135 = vunpack.c.l.b16 %v1056
    %v4136 = vunpack.c.l.b16 %v1057
    %v4137 = vunpack.c.l.b16 %v1058
    %v4138 = vunpack.c.l.b16 %v1059
    %v4139 = vunpack.c.l.b16 %v1060
    %v4140 = vunpack.c.l.b16 %v1061
    %v4141 = vunpack.c.l.b16 %v1062
    %v4142 = vunpack.c.l.b16 %v1063
    %v4143 = vunpack.c.l.b16 %v1064
    %v4144 = vunpack.c.l.b16 %v1065
    %v4145 = vunpack.c.l.b16 %v1066
    %v4146 = vunpack.c.l.b16 %v1067
    %v4147 = vunpack.c.l.b16 %v1068
    %v4148 = vunpack.c.l.b16 %v1069
    %v4149 = vunpack.c.l.b16 %v1070
    %v4150 = vunpack.c.l.b16 %v1071
    %v4151 = vunpack.c.l.b16 %v1072
    %v4152 = vunpack.c.l.b16 %v1073
    %v4153 = vunpack.c.l.b16 %v1074
    %v4154 = vunpack.c.l.b16 %v1075
    %v4155 = vunpack.c.l.b16 %v1076
    %v4156 = vunpack.c.l.b16 %v1077
    %v4157 = vunpack.c.l.b16 %v1078
    %v4158 = vunpack.c.l.b16 %v1079
    %v4159 = vunpack.c.l.b16 %v1080
    %v4160 = vunpack.c.l.b16 %v1081
    %v4161 = vunpack.c.l.b16 %v1082
    %v4162 = vunpack.c.l.b16 %v1083
    %v4163 = vunpack.c.l.b16 %v1084
    %v4164 = vunpack.c.l.b16 %v1085
    %v4165 = vunpack.c.l.b16 %v1086
    %v4166 = vunpack.c.l.b16 %v1087
    %v4167 = vunpack.c.l.b16 %v1088
    %v4168 = vunpack.c.l.b16 %v1089
    %v4169 = vunpack.c.l.b16 %v1090
    %v4170 = vunpack.c.l.b16 %v1091
    %v4171 = vunpack.c.l.b16 %v1092
    %v4172 = vunpack.c.l.b16 %v1093
    %v4173 = vunpack.c.l.b16 %v1094
    %v4174 = vunpack.c.l.b16 %v1095
    %v4175 = vunpack.c.l.b16 %v1096
    %v4176 = vunpack.c.l.b16 %v1097
    %v4177 = vunpack.c.l.b16 %v1098
    %v4178 = vunpack.c.l.b16 %v1099
    %v4179 = vunpack.c.l.b16 %v1100
    %v4180 = vunpack.c.l.b16 %v1101
    %v4181 = vunpack.c.l.b16 %v1102
    %v4182 = vunpack.c.l.b16 %v1103
    %v4183 = vunpack.c.l.b16 %v1104
    %v4184 = vunpack.c.l.b16 %v1105
    %v4185 = vunpack.c.l.b16 %v1106
    %v4186 = vunpack.c.l.b16 %v1107
    %v4187 = vunpack.c.l.b16 %v1108
    %v4188 = vunpack.c.l.b16 %v1109
    %v4189 = vunpack.c.l.b16 %v1110
    %v4190 = vunpack.c.l.b16 %v1111
    %v4191 = vunpack.c.l.b16 %v1112
    %v4192 = vunpack.c.l.b16 %v1113
    %v4193 = vunpack.c.l.b16 %v1114
    %v4194 = vunpack.c.l.b16 %v1115
    %v4195 = vunpack.c.l.b16 %v1116
    %v4196 = vunpack.c.l.b16 %v1117
    %v4197 = vunpack.c.l.b16 %v1118
    %v4198 = vunpack.c.l.b16 %v1119
    %v4199 = vunpack.c.l.b16 %v1120
    %v4200 = vunpack.c.l.b16 %v1121
    %v4201 = vunpack.c.l.b16 %v1122
    %v4202 = vunpack.c.l.b16 %v1123
    %v4203 = vunpack.c.l.b16 %v1124
    %v4204 = vunpack.c.l.b16 %v1125
    %v4205 = vunpack.c.l.b16 %v1126
    %v4206 = vunpack.c.l.b16 %v1127
    %v4207 = vunpack.c.l.b16 %v1128
    %v4208 = vunpack.c.l.b16 %v1129
    %v4209 = vunpack.c.l.b16 %v1130
    %v4210 = vunpack.c.l.b16 %v1131
    %v4211 = vunpack.c.l.b16 %v1132
    %v4212 = vunpack.c.l.b16 %v1133
    %v4213 = vunpack.c.l.b16 %v1134
    %v4214 = vunpack.c.l.b16 %v1135
    %v4215 = vunpack.c.l.b16 %v1136
    %v4216 = vunpack.c.l.b16 %v1137
    %v4217 = vunpack.c.l.b16 %v1138
    %v4218 = vunpack.c.l.b16 %v1139
    %v4219 = vunpack.c.l.b16 %v1140
    %v4220 = vunpack.c.l.b16 %v1141
    %v4221 = vunpack.c.l.b16 %v1142
    %v4222 = vunpack.c.l.b16 %v1143
    %v4223 = vunpack.c.l.b16 %v1144
    %v4224 = vunpack.c.l.b16 %v1145
    %v4225 = vunpack.c.l.b16 %v1146
    %v4226 = vunpack.c.l.b16 %v1147
    %v4227 = vunpack.c.l.b16 %v1148
    %v4228 = vunpack.c.l.b16 %v1149
    %v4229 = vunpack.c.l.b16 %v1150
    %v4230 = vunpack.c.l.b16 %v1151
    %v4231 = vunpack.c.l.b16 %v1152
    %v4232 = vunpack.c.l.b16 %v1153
    %v4233 = vunpack.c.l.b16 %v1154
    %v4234 = vunpack.c.l.b16 %v1155
    %v4235 = vunpack.c.l.b16 %v1156
    %v4236 = vunpack.c.l.b16 %v1157
    %v4237 = vunpack.c.l.b16 %v1158
    %v4238 = vunpack.c.l.b16 %v1159
    %v4239 = vunpack.c.l.b16 %v1160
    %v4240 = vunpack.c.l.b16 %v1161
    %v4241 = vunpack.c.l.b16 %v1162
    %v4242 = vunpack.c.l.b16 %v1163
    %v4243 = vunpack.c.l.b16 %v1164
    %v4244 = vunpack.c.l.b16 %v1165
    %v4245 = vunpack.c.l.b16 %v1166
    %v4246 = vunpack.c.l.b16 %v1167
    %v4247 = vunpack.c.l.b16 %v1168
    %v4248 = vunpack.c.l.b16 %v1169
    %v4249 = vunpack.c.l.b16 %v1170
    %v4250 = vunpack.c.l.b16 %v1171
    %v4251 = vunpack.c.l.b16 %v1172
    %v4252 = vunpack.c.l.b16 %v1173
    %v4253 = vunpack.c.l.b16 %v1174
    %v4254 = vunpack.c.l.b16 %v1175
    %v4255 = vunpack.c.l.b16 %v1176
    %v4256 = vunpack.c.l.b16 %v1177
    %v4257 = vunpack.c.l.b16 %v1178
    %v4258 = vunpack.c.l.b16 %v1179
    %v4259 = vunpack.c.l.b16 %v1180
    %v4260 = vunpack.c.l.b16 %v1181
    %v4261 = vunpack.c.l.b16 %v1182
    %v4262 = vunpack.c.l.b16 %v1183
    %v4263 = vunpack.c.l.b16 %v1184
    %v4264 = vunpack.c.l.b16 %v1185
    %v4265 = vunpack.c.l.b16 %v1186
    %v4266 = vunpack.c.l.b16 %v1187
    %v4267 = vunpack.c.l.b16 %v1188
    %v4268 = vunpack.c.l.b16 %v1189
    %v4269 = vunpack.c.l.b16 %v1190
    %v4270 = vunpack.c.l.b16 %v1191
    %v4271 = vunpack.c.l.b16 %v1192
    %v4272 = vunpack.c.l.b16 %v1193
    %v4273 = vunpack.c.l.b16 %v1194
    %v4274 = vunpack.c.l.b16 %v1195
    %v4275 = vunpack.c.l.b16 %v1196
    %v4276 = vunpack.c.l.b16 %v1197
    %v4277 = vunpack.c.l.b16 %v1198
    %v4278 = vunpack.c.l.b16 %v1199
    %v4279 = vunpack.c.l.b16 %v1200
    %v4280 = vunpack.c.l.b16 %v1201
    %v4281 = vunpack.c.l.b16 %v1202
    %v4282 = vunpack.c.l.b16 %v1203
    %v4283 = vunpack.c.l.b16 %v1204
    %v4284 = vunpack.c.l.b16 %v1205
    %v4285 = vunpack.c.l.b16 %v1206
    %v4286 = vunpack.c.l.b16 %v1207
    %v4287 = vunpack.c.l.b16 %v1208
    %v4288 = vunpack.c.l.b16 %v1209
    %v4289 = vunpack.c.l.b16 %v1210
    %v4290 = vunpack.c.l.b16 %v1211
    %v4291 = vunpack.c.l.b16 %v1212
    %v4292 = vunpack.c.l.b16 %v1213
    %v4293 = vunpack.c.l.b16 %v1214
    %v4294 = vunpack.c.l.b16 %v1215
    %v4295 = vunpack.c.l.b16 %v1216
    %v4296 = vunpack.c.l.b16 %v1217
    %v4297 = vunpack.c.l.b16 %v1218
    %v4298 = vunpack.c.l.b16 %v1219
    %v4299 = vunpack.c.l.b16 %v1220
    %v4300 = vunpack.c.l.b16 %v1221
    %v4301 = vunpack.c.l.b16 %v1222
    %v4302 = vunpack.c.l.b16 %v1223
    %v4303 = vunpack.c.l.b16 %v1224
    %v4304 = vunpack.c.l.b16 %v1225
    %v4305 = vunpack.c.l.b16 %v1226
    %v4306 = vunpack.c.l.b16 %v1227
    %v4307 = vunpack.c.l.b16 %v1228
    %v4308 = vunpack.c.l.b16 %v1229
    %v4309 = vunpack.c.l.b16 %v1230
    %v4310 = vunpack.c.l.b16 %v1231
    %v4311 = vunpack.c.l.b16 %v1232
    %v4312 = vunpack.c.l.b16 %v1233
    %v4313 = vunpack.c.l.b16 %v1234
    %v4314 = vunpack.c.l.b16 %v1235
    %v4315 = vunpack.c.l.b16 %v1236
    %v4316 = vunpack.c.l.b16 %v1237
    %v4317 = vunpack.c.l.b16 %v1238
    %v4318 = vunpack.c.l.b16 %v1239
    %v4319 = vunpack.c.l.b16 %v1240
    %v4320 = vunpack.c.l.b16 %v1241
    %v4321 = vunpack.c.l.b16 %v1242
    %v4322 = vunpack.c.l.b16 %v1243
    %v4323 = vunpack.c.l.b16 %v1244
    %v4324 = vunpack.c.l.b16 %v1245
    %v4325 = vunpack.c.l.b16 %v1246
    %v4326 = vunpack.c.l.b16 %v1247
    %v4327 = vunpack.c.l.b16 %v1248
    %v4328 = vunpack.c.l.b16 %v1249
    %v4329 = vunpack.c.l.b16 %v1250
    %v4330 = vunpack.c.l.b16 %v1251
    %v4331 = vunpack.c.l.b16 %v1252
    %v4332 = vunpack.c.l.b16 %v1253
    %v4333 = vunpack.c.l.b16 %v1254
    %v4334 = vunpack.c.l.b16 %v1255
    %v4335 = vunpack.c.l.b16 %v1256
    %v4336 = vunpack.c.l.b16 %v1257
    %v4337 = vunpack.c.l.b16 %v1258
    %v4338 = vunpack.c.l.b16 %v1259
    %v4339 = vunpack.c.l.b16 %v1260
    %v4340 = vunpack.c.l.b16 %v1261
    %v4341 = vunpack.c.l.b16 %v1262
    %v4342 = vunpack.c.l.b16 %v1263
    %v4343 = vunpack.c.l.b16 %v1264
    %v4344 = vunpack.c.l.b16 %v1265
    %v4345 = vunpack.c.l.b16 %v1266
    %v4346 = vunpack.c.l.b16 %v1267
    %v4347 = vunpack.c.l.b16 %v1268
    %v4348 = vunpack.c.l.b16 %v1269
    %v4349 = vunpack.c.l.b16 %v1270
    %v4350 = vunpack.c.l.b16 %v1271
    %v4351 = vunpack.c.l.b16 %v1272
    %v4352 = vunpack.c.l.b16 %v1273
    %v4353 = vunpack.c.l.b16 %v1274
    %v4354 = vunpack.c.l.b16 %v1275
    %v4355 = vunpack.c.l.b16 %v1276
    %v4356 = vunpack.c.l.b16 %v1277
    %v4357 = vunpack.c.l.b16 %v1278
    %v4358 = vunpack.c.l.b16 %v1279
    %v4359 = vunpack.c.l.b16 %v1280
    %v4360 = vunpack.c.l.b16 %v1281
    %v4361 = vunpack.c.l.b16 %v1282
    %v4362 = vunpack.c.l.b16 %v1283
    %v4363 = vunpack.c.l.b16 %v1284
    %v4364 = vunpack.c.l.b16 %v1285
    %v4365 = vunpack.c.l.b16 %v1286
    %v4366 = vunpack.c.l.b16 %v1287
    %v4367 = vunpack.c.l.b16 %v1288
    %v4368 = vunpack.c.l.b16 %v1289
    %v4369 = vunpack.c.l.b16 %v1290
    %v4370 = vunpack.c.l.b16 %v1291
    %v4371 = vunpack.c.l.b16 %v1292
    %v4372 = vunpack.c.l.b16 %v1293
    %v4373 = vunpack.c.l.b16 %v1294
    %v4374 = vunpack.c.l.b16 %v1295
    %v4375 = vunpack.c.l.b16 %v1296
    %v4376 = vunpack.c.l.b16 %v1297
    %v4377 = vunpack.c.l.b16 %v1298
    %v4378 = vunpack.c.l.b16 %v1299
    %v4379 = vunpack.c.l.b16 %v1300
    %v4380 = vunpack.c.l.b16 %v1301
    %v4381 = vunpack.c.l.b16 %v1302
    %v4382 = vunpack.c.l.b16 %v1303
    %v4383 = vunpack.c.l.b16 %v1304
    %v4384 = vunpack.c.l.b16 %v1305
    %v4385 = vunpack.c.l.b16 %v1306
    %v4386 = vunpack.c.l.b16 %v1307
    %v4387 = vunpack.c.l.b16 %v1308
    %v4388 = vunpack.c.l.b16 %v1309
    %v4389 = vunpack.c.l.b16 %v1310
    %v4390 = vunpack.c.l.b16 %v1311
    %v4391 = vunpack.c.l.b16 %v1312
    %v4392 = vunpack.c.l.b16 %v1313
    %v4393 = vunpack.c.l.b16 %v1314
    %v4394 = vunpack.c.l.b16 %v1315
    %v4395 = vunpack.c.l.b16 %v1316
    %v4396 = vunpack.c.l.b16 %v1317
    %v4397 = vunpack.c.l.b16 %v1318
    %v4398 = vunpack.c.l.b16 %v1319
    %v4399 = vunpack.c.l.b16 %v1320
    %v4400 = vunpack.c.l.b16 %v1321
    %v4401 = vunpack.c.l.b16 %v1322
    %v4402 = vunpack.c.l.b16 %v1323
    %v4403 = vunpack.c.l.b16 %v1324
    %v4404 = vunpack.c.l.b16 %v1325
    %v4405 = vunpack.c.l.b16 %v1326
    %v4406 = vunpack.c.l.b16 %v1327
    %v4407 = vunpack.c.l.b16 %v1328
    %v4408 = vunpack.c.l.b16 %v1329
    %v4409 = vunpack.c.l.b16 %v1330
    %v4410 = vunpack.c.l.b16 %v1331
    %v4411 = vunpack.c.l.b16 %v1332
    %v4412 = vunpack.c.l.b16 %v1333
    %v4413 = vunpack.c.l.b16 %v1334
    %v4414 = vunpack.c.l.b16 %v1335
    %v4415 = vunpack.c.l.b16 %v1336
    %v4416 = vunpack.c.l.b16 %v1337
    %v4417 = vunpack.c.l.b16 %v1338
    %v4418 = vunpack.c.l.b16 %v1339
    %v4419 = vunpack.c.l.b16 %v1340
    %v4420 = vunpack.c.l.b16 %v1341
    %v4421 = vunpack.c.l.b16 %v1342
    %v4422 = vunpack.c.l.b16 %v1343
    %v4423 = vunpack.c.l.b16 %v1344
    %v4424 = vunpack.c.l.b16 %v1345
    %v4425 = vunpack.c.l.b16 %v1346
    %v4426 = vunpack.c.l.b16 %v1347
    %v4427 = vunpack.c.l.b16 %v1348
    %v4428 = vunpack.c.l.b16 %v1349
    %v4429 = vunpack.c.l.b16 %v1350
    %v4430 = vunpack.c.l.b16 %v1351
    %v4431 = vunpack.c.l.b16 %v1352
    %v4432 = vunpack.c.l.b16 %v1353
    %v4433 = vunpack.c.l.b16 %v1354
    %v4434 = vunpack.c.l.b16 %v1355
    %v4435 = vunpack.c.l.b16 %v1356
    %v4436 = vunpack.c.l.b16 %v1357
    %v4437 = vunpack.c.l.b16 %v1358
    %v4438 = vunpack.c.l.b16 %v1359
    %v4439 = vunpack.c.l.b16 %v1360
    %v4440 = vunpack.c.l.b16 %v1361
    %v4441 = vunpack.c.l.b16 %v1362
    %v4442 = vunpack.c.l.b16 %v1363
    %v4443 = vunpack.c.l.b16 %v1364
    %v4444 = vunpack.c.l.b16 %v1365
    %v4445 = vunpack.c.l.b16 %v1366
    %v4446 = vunpack.c.l.b16 %v1367
    %v4447 = vunpack.c.l.b16 %v1368
    %v4448 = vunpack.c.l.b16 %v1369
    %v4449 = vunpack.c.l.b16 %v1370
    %v4450 = vunpack.c.l.b16 %v1371
    %v4451 = vunpack.c.l.b16 %v1372
    %v4452 = vunpack.c.l.b16 %v1373
    %v4453 = vunpack.c.l.b16 %v1374
    %v4454 = vunpack.c.l.b16 %v1375
    %v4455 = vunpack.c.l.b16 %v1376
    %v4456 = vunpack.c.l.b16 %v1377
    %v4457 = vunpack.c.l.b16 %v1378
    %v4458 = vunpack.c.l.b16 %v1379
    %v4459 = vunpack.c.l.b16 %v1380
    %v4460 = vunpack.c.l.b16 %v1381
    %v4461 = vunpack.c.l.b16 %v1382
    %v4462 = vunpack.c.l.b16 %v1383
    %v4463 = vunpack.c.l.b16 %v1384
    %v4464 = vunpack.c.l.b16 %v1385
    %v4465 = vunpack.c.l.b16 %v1386
    %v4466 = vunpack.c.l.b16 %v1387
    %v4467 = vunpack.c.l.b16 %v1388
    %v4468 = vunpack.c.l.b16 %v1389
    %v4469 = vunpack.c.l.b16 %v1390
    %v4470 = vunpack.c.l.b16 %v1391
    %v4471 = vunpack.c.l.b16 %v1392
    %v4472 = vunpack.c.l.b16 %v1393
    %v4473 = vunpack.c.l.b16 %v1394
    %v4474 = vunpack.c.l.b16 %v1395
    %v4475 = vunpack.c.l.b16 %v1396
    %v4476 = vunpack.c.l.b16 %v1397
    %v4477 = vunpack.c.l.b16 %v1398
    %v4478 = vunpack.c.l.b16 %v1399
    %v4479 = vunpack.c.l.b16 %v1400
    %v4480 = vunpack.c.l.b16 %v1401
    %v4481 = vunpack.c.l.b16 %v1402
    %v4482 = vunpack.c.l.b16 %v1403
    %v4483 = vunpack.c.l.b16 %v1404
    %v4484 = vunpack.c.l.b16 %v1405
    %v4485 = vunpack.c.l.b16 %v1406
    %v4486 = vunpack.c.l.b16 %v1407
    %v4487 = vunpack.c.l.b16 %v1408
    %v4488 = vunpack.c.l.b16 %v1409
    %v4489 = vunpack.c.l.b16 %v1410
    %v4490 = vunpack.c.l.b16 %v1411
    %v4491 = vunpack.c.l.b16 %v1412
    %v4492 = vunpack.c.l.b16 %v1413
    %v4493 = vunpack.c.l.b16 %v1414
    %v4494 = vunpack.c.l.b16 %v1415
    %v4495 = vunpack.c.l.b16 %v1416
    %v4496 = vunpack.c.l.b16 %v1417
    %v4497 = vunpack.c.l.b16 %v1418
    %v4498 = vunpack.c.l.b16 %v1419
    %v4499 = vunpack.c.l.b16 %v1420
    %v4500 = vunpack.c.l.b16 %v1421
    %v4501 = vunpack.c.l.b16 %v1422
    %v4502 = vunpack.c.l.b16 %v1423
    %v4503 = vunpack.c.l.b16 %v1424
    %v4504 = vunpack.c.l.b16 %v1425
    %v4505 = vunpack.c.l.b16 %v1426
    %v4506 = vunpack.c.l.b16 %v1427
    %v4507 = vunpack.c.l.b16 %v1428
    %v4508 = vunpack.c.l.b16 %v1429
    %v4509 = vunpack.c.l.b16 %v1430
    %v4510 = vunpack.c.l.b16 %v1431
    %v4511 = vunpack.c.l.b16 %v1432
    %v4512 = vunpack.c.l.b16 %v1433
    %v4513 = vunpack.c.l.b16 %v1434
    %v4514 = vunpack.c.l.b16 %v1435
    %v4515 = vunpack.c.l.b16 %v1436
    %v4516 = vunpack.c.l.b16 %v1437
    %v4517 = vunpack.c.l.b16 %v1438
    %v4518 = vunpack.c.l.b16 %v1439
    %v4519 = vunpack.c.l.b16 %v1440
    %v4520 = vunpack.c.l.b16 %v1441
    %v4521 = vunpack.c.l.b16 %v1442
    %v4522 = vunpack.c.l.b16 %v1443
    %v4523 = vunpack.c.l.b16 %v1444
    %v4524 = vunpack.c.l.b16 %v1445
    %v4525 = vunpack.c.l.b16 %v1446
    %v4526 = vunpack.c.l.b16 %v1447
    %v4527 = vunpack.c.l.b16 %v1448
    %v4528 = vunpack.c.l.b16 %v1449
    %v4529 = vunpack.c.l.b16 %v1450
    %v4530 = vunpack.c.l.b16 %v1451
    %v4531 = vunpack.c.l.b16 %v1452
    %v4532 = vunpack.c.l.b16 %v1453
    %v4533 = vunpack.c.l.b16 %v1454
    %v4534 = vunpack.c.l.b16 %v1455
    %v4535 = vunpack.c.l.b16 %v1456
    %v4536 = vunpack.c.l.b16 %v1457
    %v4537 = vunpack.c.l.b16 %v1458
    %v4538 = vunpack.c.l.b16 %v1459
    %v4539 = vunpack.c.l.b16 %v1460
    %v4540 = vunpack.c.l.b16 %v1461
    %v4541 = vunpack.c.l.b16 %v1462
    %v4542 = vunpack.c.l.b16 %v1463
    %v4543 = vunpack.c.l.b16 %v1464
    %v4544 = vunpack.c.l.b16 %v1465
    %v4545 = vunpack.c.l.b16 %v1466
    %v4546 = vunpack.c.l.b16 %v1467
    %v4547 = vunpack.c.l.b16 %v1468
    %v4548 = vunpack.c.l.b16 %v1469
    %v4549 = vunpack.c.l.b16 %v1470
    %v4550 = vunpack.c.l.b16 %v1471
    %v4551 = vunpack.c.l.b16 %v1472
    %v4552 = vunpack.c.l.b16 %v1473
    %v4553 = vunpack.c.l.b16 %v1474
    %v4554 = vunpack.c.l.b16 %v1475
    %v4555 = vunpack.c.l.b16 %v1476
    %v4556 = vunpack.c.l.b16 %v1477
    %v4557 = vunpack.c.l.b16 %v1478
    %v4558 = vunpack.c.l.b16 %v1479
    %v4559 = vunpack.c.l.b16 %v1480
    %v4560 = vunpack.c.l.b16 %v1481
    %v4561 = vunpack.c.l.b16 %v1482
    %v4562 = vunpack.c.l.b16 %v1483
    %v4563 = vunpack.c.l.b16 %v1484
    %v4564 = vunpack.c.l.b16 %v1485
    %v4565 = vunpack.c.l.b16 %v1486
    %v4566 = vunpack.c.l.b16 %v1487
    %v4567 = vunpack.c.l.b16 %v1488
    %v4568 = vunpack.c.l.b16 %v1489
    %v4569 = vunpack.c.l.b16 %v1490
    %v4570 = vunpack.c.l.b16 %v1491
    %v4571 = vunpack.c.l.b16 %v1492
    %v4572 = vunpack.c.l.b16 %v1493
    %v4573 = vunpack.c.l.b16 %v1494
    %v4574 = vunpack.c.l.b16 %v1495
    %v4575 = vunpack.c.l.b16 %v1496
    %v4576 = vunpack.c.l.b16 %v1497
    %v4577 = vunpack.c.l.b16 %v1498
    %v4578 = vunpack.c.l.b16 %v1499
    %v4579 = vunpack.c.l.b16 %v1500
    %v4580 = vunpack.c.l.b16 %v1501
    %v4581 = vunpack.c.l.b16 %v1502
    %v4582 = vunpack.c.l.b16 %v1503
    %v4583 = vunpack.c.l.b16 %v1504
    %v4584 = vunpack.c.l.b16 %v1505
    %v4585 = vunpack.c.l.b16 %v1506
    %v4586 = vunpack.c.l.b16 %v1507
    %v4587 = vunpack.c.l.b16 %v1508
    %v4588 = vunpack.c.l.b16 %v1509
    %v4589 = vunpack.c.l.b16 %v1510
    %v4590 = vunpack.c.l.b16 %v1511
    %v4591 = vunpack.c.l.b16 %v1512
    %v4592 = vunpack.c.l.b16 %v1513
    %v4593 = vunpack.c.l.b16 %v1514
    %v4594 = vunpack.c.l.b16 %v1515
    %v4595 = vunpack.c.l.b16 %v1516
    %v4596 = vunpack.c.l.b16 %v1517
    %v4597 = vunpack.c.l.b16 %v1518
    %v4598 = vunpack.c.l.b16 %v1519
    %v4599 = vunpack.c.l.b16 %v1520
    %v4600 = vunpack.c.l.b16 %v1521
    %v4601 = vunpack.c.l.b16 %v1522
    %v4602 = vunpack.c.l.b16 %v1523
    %v4603 = vunpack.c.l.b16 %v1524
    %v4604 = vunpack.c.l.b16 %v1525
    %v4605 = vunpack.c.l.b16 %v1526
    %v4606 = vunpack.c.l.b16 %v1527
    %v4607 = vunpack.c.l.b16 %v1528
    %v4608 = vunpack.c.l.b16 %v1529
    %v4609 = vunpack.c.l.b16 %v1530
    %v4610 = vunpack.c.l.b16 %v1531
    %v4611 = vunpack.c.l.b16 %v1532
    %v4612 = vunpack.c.l.b16 %v1533
    %v4613 = vunpack.c.l.b16 %v1534
    %v4614 = vunpack.c.l.b16 %v1535
    %v4615 = vunpack.c.l.b16 %v1536
    %v4616 = vunpack.c.l.b16 %v1537
    %v4617 = vunpack.c.l.b16 %v1538
    %v4618 = vunpack.c.l.b16 %v1539
    %v4619 = vunpack.c.l.b16 %v1540
    %v4620 = vunpack.c.l.b16 %v1541
    %v4621 = vunpack.c.l.b16 %v1542
    %v4622 = vunpack.c.l.b16 %v1543
    %v4623 = vunpack.c.l.b16 %v1544
    %v4624 = vunpack.c.l.b16 %v1545
    %v4625 = vunpack.c.l.b16 %v1546
    %v4626 = vunpack.c.l.b16 %v1547
    %v4627 = vunpack.c.l.b16 %v1548
    %v4628 = vunpack.c.l.b16 %v1549
    %v4629 = vunpack.c.l.b16 %v1550
    %v4630 = vunpack.c.l.b16 %v1551
    %v4631 = vunpack.c.l.b16 %v1552
    %v4632 = vunpack.c.l.b16 %v1553
    %v4633 = vunpack.c.l.b16 %v1554
    %v4634 = vunpack.c.l.b16 %v1555
    %v4635 = vunpack.c.l.b16 %v1556
    %v4636 = vunpack.c.l.b16 %v1557
    %v4637 = vunpack.c.l.b16 %v1558
    %v4638 = vunpack.c.l.b16 %v1559
    %v4639 = vunpack.c.l.b16 %v1560
    %v4640 = vunpack.c.l.b16 %v1561
    %v4641 = vunpack.c.l.b16 %v1562
    %v4642 = vunpack.c.l.b16 %v1563
    %v4643 = vunpack.c.l.b16 %v1564
    %v4644 = vunpack.c.l.b16 %v1565
    %v4645 = vunpack.c.l.b16 %v1566
    %v4646 = vunpack.c.l.b16 %v1567
    %v4647 = vunpack.c.l.b16 %v1568
    %v4648 = vunpack.c.l.b16 %v1569
    %v4649 = vunpack.c.l.b16 %v1570
    %v4650 = vunpack.c.l.b16 %v1571
    %v4651 = vunpack.c.l.b16 %v1572
    %v4652 = vunpack.c.l.b16 %v1573
    %v4653 = vunpack.c.l.b16 %v1574
    %v4654 = vunpack.c.l.b16 %v1575
    %v4655 = vunpack.c.l.b16 %v1576
    %v4656 = vunpack.c.l.b16 %v1577
    %v4657 = vunpack.c.l.b16 %v1578
    %v4658 = vunpack.c.l.b16 %v1579
    %v4659 = vunpack.c.l.b16 %v1580
    %v4660 = vunpack.c.l.b16 %v1581
    %v4661 = vunpack.c.l.b16 %v1582
    %v4662 = vunpack.c.l.b16 %v1583
    %v4663 = vunpack.c.l.b16 %v1584
    %v4664 = vunpack.c.l.b16 %v1585
    %v4665 = vunpack.c.l.b16 %v1586
    %v4666 = vunpack.c.l.b16 %v1587
    %v4667 = vunpack.c.l.b16 %v1588
    %v4668 = vunpack.c.l.b16 %v1589
    %v4669 = vunpack.c.l.b16 %v1590
    %v4670 = vunpack.c.l.b16 %v1591
    %v4671 = vunpack.c.l.b16 %v1592
    %v4672 = vunpack.c.l.b16 %v1593
    %v4673 = vunpack.c.l.b16 %v1594
    %v4674 = vunpack.c.l.b16 %v1595
    %v4675 = vunpack.c.l.b16 %v1596
    %v4676 = vunpack.c.l.b16 %v1597
    %v4677 = vunpack.c.l.b16 %v1598
    %v4678 = vunpack.c.l.b16 %v1599
    %v4679 = vunpack.c.l.b16 %v1600
    %v4680 = vunpack.c.l.b16 %v1601
    %v4681 = vunpack.c.l.b16 %v1602
    %v4682 = vunpack.c.l.b16 %v1603
    %v4683 = vunpack.c.l.b16 %v1604
    %v4684 = vunpack.c.l.b16 %v1605
    %v4685 = vunpack.c.l.b16 %v1606
    %v4686 = vunpack.c.l.b16 %v1607
    %v4687 = vunpack.c.l.b16 %v1608
    %v4688 = vunpack.c.l.b16 %v1609
    %v4689 = vunpack.c.l.b16 %v1610
    %v4690 = vunpack.c.l.b16 %v1611
    %v4691 = vunpack.c.l.b16 %v1612
    %v4692 = vunpack.c.l.b16 %v1613
    %v4693 = vunpack.c.l.b16 %v1614
    %v4694 = vunpack.c.l.b16 %v1615
    %v4695 = vunpack.c.l.b16 %v1616
    %v4696 = vunpack.c.l.b16 %v1617
    %v4697 = vunpack.c.l.b16 %v1618
    %v4698 = vunpack.c.l.b16 %v1619
    %v4699 = vunpack.c.l.b16 %v1620
    %v4700 = vunpack.c.l.b16 %v1621
    %v4701 = vunpack.c.l.b16 %v1622
    %v4702 = vunpack.c.l.b16 %v1623
    %v4703 = vunpack.c.l.b16 %v1624
    %v4704 = vunpack.c.l.b16 %v1625
    %v4705 = vunpack.c.l.b16 %v1626
    %v4706 = vunpack.c.l.b16 %v1627
    %v4707 = vunpack.c.l.b16 %v1628
    %v4708 = vunpack.c.l.b16 %v1629
    %v4709 = vunpack.c.l.b16 %v1630
    %v4710 = vunpack.c.l.b16 %v1631
    %v4711 = vunpack.c.l.b16 %v1632
    %v4712 = vunpack.c.l.b16 %v1633
    %v4713 = vunpack.c.l.b16 %v1634
    %v4714 = vunpack.c.l.b16 %v1635
    %v4715 = vunpack.c.l.b16 %v1636
    %v4716 = vunpack.c.l.b16 %v1637
    %v4717 = vunpack.c.l.b16 %v1638
    %v4718 = vunpack.c.l.b16 %v1639
    %v4719 = vunpack.c.l.b16 %v1640
    %v4720 = vunpack.c.l.b16 %v1641
    %v4721 = vunpack.c.l.b16 %v1642
    %v4722 = vunpack.c.l.b16 %v1643
    %v4723 = vunpack.c.l.b16 %v1644
    %v4724 = vunpack.c.l.b16 %v1645
    %v4725 = vunpack.c.l.b16 %v1646
    %v4726 = vunpack.c.l.b16 %v1647
    %v4727 = vunpack.c.l.b16 %v1648
    %v4728 = vunpack.c.l.b16 %v1649
    %v4729 = vunpack.c.l.b16 %v1650
    %v4730 = vunpack.c.l.b16 %v1651
    %v4731 = vunpack.c.l.b16 %v1652
    %v4732 = vunpack.c.l.b16 %v1653
    %v4733 = vunpack.c.l.b16 %v1654
    %v4734 = vunpack.c.l.b16 %v1655
    %v4735 = vunpack.c.l.b16 %v1656
    %v4736 = vunpack.c.l.b16 %v1657
    %v4737 = vunpack.c.l.b16 %v1658
    %v4738 = vunpack.c.l.b16 %v1659
    %v4739 = vunpack.c.l.b16 %v1660
    %v4740 = vunpack.c.l.b16 %v1661
    %v4741 = vunpack.c.l.b16 %v1662
    %v4742 = vunpack.c.l.b16 %v1663
    %v4743 = vunpack.c.l.b16 %v1664
    %v4744 = vunpack.c.l.b16 %v1665
    %v4745 = vunpack.c.l.b16 %v1666
    %v4746 = vunpack.c.l.b16 %v1667
    %v4747 = vunpack.c.l.b16 %v1668
    %v4748 = vunpack.c.l.b16 %v1669
    %v4749 = vunpack.c.l.b16 %v1670
    %v4750 = vunpack.c.l.b16 %v1671
    %v4751 = vunpack.c.l.b16 %v1672
    %v4752 = vunpack.c.l.b16 %v1673
    %v4753 = vunpack.c.l.b16 %v1674
    %v4754 = vunpack.c.l.b16 %v1675
    %v4755 = vunpack.c.l.b16 %v1676
    %v4756 = vunpack.c.l.b16 %v1677
    %v4757 = vunpack.c.l.b16 %v1678
    %v4758 = vunpack.c.l.b16 %v1679
    %v4759 = vunpack.c.l.b16 %v1680
    %v4760 = vunpack.c.l.b16 %v1681
    %v4761 = vunpack.c.l.b16 %v1682
    %v4762 = vunpack.c.l.b16 %v1683
    %v4763 = vunpack.c.l.b16 %v1684
    %v4764 = vunpack.c.l.b16 %v1685
    %v4765 = vunpack.c.l.b16 %v1686
    %v4766 = vunpack.c.l.b16 %v1687
    %v4767 = vunpack.c.l.b16 %v1688
    %v4768 = vunpack.c.l.b16 %v1689
    %v4769 = vunpack.c.l.b16 %v1690
    %v4770 = vunpack.c.l.b16 %v1691
    %v4771 = vunpack.c.l.b16 %v1692
    %v4772 = vunpack.c.l.b16 %v1693
    %v4773 = vunpack.c.l.b16 %v1694
    %v4774 = vunpack.c.l.b16 %v1695
    %v4775 = vunpack.c.l.b16 %v1696
    %v4776 = vunpack.c.l.b16 %v1697
    %v4777 = vunpack.c.l.b16 %v1698
    %v4778 = vunpack.c.l.b16 %v1699
    %v4779 = vunpack.c.l.b16 %v1700
    %v4780 = vunpack.c.l.b16 %v1701
    %v4781 = vunpack.c.l.b16 %v1702
    %v4782 = vunpack.c.l.b16 %v1703
    %v4783 = vunpack.c.l.b16 %v1704
    %v4784 = vunpack.c.l.b16 %v1705
    %v4785 = vunpack.c.l.b16 %v1706
    %v4786 = vunpack.c.l.b16 %v1707
    %v4787 = vunpack.c.l.b16 %v1708
    %v4788 = vunpack.c.l.b16 %v1709
    %v4789 = vunpack.c.l.b16 %v1710
    %v4790 = vunpack.c.l.b16 %v1711
    %v4791 = vunpack.c.l.b16 %v1712
    %v4792 = vunpack.c.l.b16 %v1713
    %v4793 = vunpack.c.l.b16 %v1714
    %v4794 = vunpack.c.l.b16 %v1715
    %v4795 = vunpack.c.l.b16 %v1716
    %v4796 = vunpack.c.l.b16 %v1717
    %v4797 = vunpack.c.l.b16 %v1718
    %v4798 = vunpack.c.l.b16 %v1719
    %v4799 = vunpack.c.l.b16 %v1720
    %v4800 = vunpack.c.l.b16 %v1721
    %v4801 = vunpack.c.l.b16 %v1722
    %v4802 = vunpack.c.l.b16 %v1723
    %v4803 = vunpack.c.l.b16 %v1724
    %v4804 = vunpack.c.l.b16 %v1725
    %v4805 = vunpack.c.l.b16 %v1726
    %v4806 = vunpack.c.l.b16 %v1727
    %v4807 = vunpack.c.l.b16 %v1728
    %v4808 = vunpack.c.l.b16 %v1729
    %v4809 = vunpack.c.l.b16 %v1730
    %v4810 = vunpack.c.l.b16 %v1731
    %v4811 = vunpack.c.l.b16 %v1732
    %v4812 = vunpack.c.l.b16 %v1733
    %v4813 = vunpack.c.l.b16 %v1734
    %v4814 = vunpack.c.l.b16 %v1735
    %v4815 = vunpack.c.l.b16 %v1736
    %v4816 = vunpack.c.l.b16 %v1737
    %v4817 = vunpack.c.l.b16 %v1738
    %v4818 = vunpack.c.l.b16 %v1739
    %v4819 = vunpack.c.l.b16 %v1740
    %v4820 = vunpack.c.l.b16 %v1741
    %v4821 = vunpack.c.l.b16 %v1742
    %v4822 = vunpack.c.l.b16 %v1743
    %v4823 = vunpack.c.l.b16 %v1744
    %v4824 = vunpack.c.l.b16 %v1745
    %v4825 = vunpack.c.l.b16 %v1746
    %v4826 = vunpack.c.l.b16 %v1747
    %v4827 = vunpack.c.l.b16 %v1748
    %v4828 = vunpack.c.l.b16 %v1749
    %v4829 = vunpack.c.l.b16 %v1750
    %v4830 = vunpack.c.l.b16 %v1751
    %v4831 = vunpack.c.l.b16 %v1752
    %v4832 = vunpack.c.l.b16 %v1753
    %v4833 = vunpack.c.l.b16 %v1754
    %v4834 = vunpack.c.l.b16 %v1755
    %v4835 = vunpack.c.l.b16 %v1756
    %v4836 = vunpack.c.l.b16 %v1757
    %v4837 = vunpack.c.l.b16 %v1758
    %v4838 = vunpack.c.l.b16 %v1759
    %v4839 = vunpack.c.l.b16 %v1760
    %v4840 = vunpack.c.l.b16 %v1761
    %v4841 = vunpack.c.l.b16 %v1762
    %v4842 = vunpack.c.l.b16 %v1763
    %v4843 = vunpack.c.l.b16 %v1764
    %v4844 = vunpack.c.l.b16 %v1765
    %v4845 = vunpack.c.l.b16 %v1766
    %v4846 = vunpack.c.l.b16 %v1767
    %v4847 = vunpack.c.l.b16 %v1768
    %v4848 = vunpack.c.l.b16 %v1769
    %v4849 = vunpack.c.l.b16 %v1770
    %v4850 = vunpack.c.l.b16 %v1771
    %v4851 = vunpack.c.l.b16 %v1772
    %v4852 = vunpack.c.l.b16 %v1773
    %v4853 = vunpack.c.l.b16 %v1774
    %v4854 = vunpack.c.l.b16 %v1775
    %v4855 = vunpack.c.l.b16 %v1776
    %v4856 = vunpack.c.l.b16 %v1777
    %v4857 = vunpack.c.l.b16 %v1778
    %v4858 = vunpack.c.l.b16 %v1779
    %v4859 = vunpack.c.l.b16 %v1780
    %v4860 = vunpack.c.l.b16 %v1781
    %v4861 = vunpack.c.l.b16 %v1782
    %v4862 = vunpack.c.l.b16 %v1783
    %v4863 = vunpack.c.l.b16 %v1784
    %v4864 = vunpack.c.l.b16 %v1785
    %v4865 = vunpack.c.l.b16 %v1786
    %v4866 = vunpack.c.l.b16 %v1787
    %v4867 = vunpack.c.l.b16 %v1788
    %v4868 = vunpack.c.l.b16 %v1789
    %v4869 = vunpack.c.l.b16 %v1790
    %v4870 = vunpack.c.l.b16 %v1791
    %v4871 = vunpack.c.l.b16 %v1792
    %v4872 = vunpack.c.l.b16 %v1793
    %v4873 = vunpack.c.l.b16 %v1794
    %v4874 = vunpack.c.l.b16 %v1795
    %v4875 = vunpack.c.l.b16 %v1796
    %v4876 = vunpack.c.l.b16 %v1797
    %v4877 = vunpack.c.l.b16 %v1798
    %v4878 = vunpack.c.l.b16 %v1799
    %v4879 = vunpack.c.l.b16 %v1800
    %v4880 = vunpack.c.l.b16 %v1801
    %v4881 = vunpack.c.l.b16 %v1802
    %v4882 = vunpack.c.l.b16 %v1803
    %v4883 = vunpack.c.l.b16 %v1804
    %v4884 = vunpack.c.l.b16 %v1805
    %v4885 = vunpack.c.l.b16 %v1806
    %v4886 = vunpack.c.l.b16 %v1807
    %v4887 = vunpack.c.l.b16 %v1808
    %v4888 = vunpack.c.l.b16 %v1809
    %v4889 = vunpack.c.l.b16 %v1810
    %v4890 = vunpack.c.l.b16 %v1811
    %v4891 = vunpack.c.l.b16 %v1812
    %v4892 = vunpack.c.l.b16 %v1813
    %v4893 = vunpack.c.l.b16 %v1814
    %v4894 = vunpack.c.l.b16 %v1815
    %v4895 = vunpack.c.l.b16 %v1816
    %v4896 = vunpack.c.l.b16 %v1817
    %v4897 = vunpack.c.l.b16 %v1818
    %v4898 = vunpack.c.l.b16 %v1819
    %v4899 = vunpack.c.l.b16 %v1820
    %v4900 = vunpack.c.l.b16 %v1821
    %v4901 = vunpack.c.l.b16 %v1822
    %v4902 = vunpack.c.l.b16 %v1823
    %v4903 = vunpack.c.l.b16 %v1824
    %v4904 = vunpack.c.l.b16 %v1825
    %v4905 = vunpack.c.l.b16 %v1826
    %v4906 = vunpack.c.l.b16 %v1827
    %v4907 = vunpack.c.l.b16 %v1828
    %v4908 = vunpack.c.l.b16 %v1829
    %v4909 = vunpack.c.l.b16 %v1830
    %v4910 = vunpack.c.l.b16 %v1831
    %v4911 = vunpack.c.l.b16 %v1832
    %v4912 = vunpack.c.l.b16 %v1833
    %v4913 = vunpack.c.l.b16 %v1834
    %v4914 = vunpack.c.l.b16 %v1835
    %v4915 = vunpack.c.l.b16 %v1836
    %v4916 = vunpack.c.l.b16 %v1837
    %v4917 = vunpack.c.l.b16 %v1838
    %v4918 = vunpack.c.l.b16 %v1839
    %v4919 = vunpack.c.l.b16 %v1840
    %v4920 = vunpack.c.l.b16 %v1841
    %v4921 = vunpack.c.l.b16 %v1842
    %v4922 = vunpack.c.l.b16 %v1843
    %v4923 = vunpack.c.l.b16 %v1844
    %v4924 = vunpack.c.l.b16 %v1845
    %v4925 = vunpack.c.l.b16 %v1846
    %v4926 = vunpack.c.l.b16 %v1847
    %v4927 = vunpack.c.l.b16 %v1848
    %v4928 = vunpack.c.l.b16 %v1849
    %v4929 = vunpack.c.l.b16 %v1850
    %v4930 = vunpack.c.l.b16 %v1851
    %v4931 = vunpack.c.l.b16 %v1852
    %v4932 = vunpack.c.l.b16 %v1853
    %v4933 = vunpack.c.l.b16 %v1854
    %v4934 = vunpack.c.l.b16 %v1855
    %v4935 = vunpack.c.l.b16 %v1856
    %v4936 = vunpack.c.l.b16 %v1857
    %v4937 = vunpack.c.l.b16 %v1858
    %v4938 = vunpack.c.l.b16 %v1859
    %v4939 = vunpack.c.l.b16 %v1860
    %v4940 = vunpack.c.l.b16 %v1861
    %v4941 = vunpack.c.l.b16 %v1862
    %v4942 = vunpack.c.l.b16 %v1863
    %v4943 = vunpack.c.l.b16 %v1864
    %v4944 = vunpack.c.l.b16 %v1865
    %v4945 = vunpack.c.l.b16 %v1866
    %v4946 = vunpack.c.l.b16 %v1867
    %v4947 = vunpack.c.l.b16 %v1868
    %v4948 = vunpack.c.l.b16 %v1869
    %v4949 = vunpack.c.l.b16 %v1870
    %v4950 = vunpack.c.l.b16 %v1871
    %v4951 = vunpack.c.l.b16 %v1872
    %v4952 = vunpack.c.l.b16 %v1873
    %v4953 = vunpack.c.l.b16 %v1874
    %v4954 = vunpack.c.l.b16 %v1875
    %v4955 = vunpack.c.l.b16 %v1876
    %v4956 = vunpack.c.l.b16 %v1877
    %v4957 = vunpack.c.l.b16 %v1878
    %v4958 = vunpack.c.l.b16 %v1879
    %v4959 = vunpack.c.l.b16 %v1880
    %v4960 = vunpack.c.l.b16 %v1881
    %v4961 = vunpack.c.l.b16 %v1882
    %v4962 = vunpack.c.l.b16 %v1883
    %v4963 = vunpack.c.l.b16 %v1884
    %v4964 = vunpack.c.l.b16 %v1885
    %v4965 = vunpack.c.l.b16 %v1886
    %v4966 = vunpack.c.l.b16 %v1887
    %v4967 = vunpack.c.l.b16 %v1888
    %v4968 = vunpack.c.l.b16 %v1889
    %v4969 = vunpack.c.l.b16 %v1890
    %v4970 = vunpack.c.l.b16 %v1891
    %v4971 = vunpack.c.l.b16 %v1892
    %v4972 = vunpack.c.l.b16 %v1893
    %v4973 = vunpack.c.l.b16 %v1894
    %v4974 = vunpack.c.l.b16 %v1895
    %v4975 = vunpack.c.l.b16 %v1896
    %v4976 = vunpack.c.l.b16 %v1897
    %v4977 = vunpack.c.l.b16 %v1898
    %v4978 = vunpack.c.l.b16 %v1899
    %v4979 = vunpack.c.l.b16 %v1900
    %v4980 = vunpack.c.l.b16 %v1901
    %v4981 = vunpack.c.l.b16 %v1902
    %v4982 = vunpack.c.l.b16 %v1903
    %v4983 = vunpack.c.l.b16 %v1904
    %v4984 = vunpack.c.l.b16 %v1905
    %v4985 = vunpack.c.l.b16 %v1906
    %v4986 = vunpack.c.l.b16 %v1907
    %v4987 = vunpack.c.l.b16 %v1908
    %v4988 = vunpack.c.l.b16 %v1909
    %v4989 = vunpack.c.l.b16 %v1910
    %v4990 = vunpack.c.l.b16 %v1911
    %v4991 = vunpack.c.l.b16 %v1912
    %v4992 = vunpack.c.l.b16 %v1913
    %v4993 = vunpack.c.l.b16 %v1914
    %v4994 = vunpack.c.l.b16 %v1915
    %v4995 = vunpack.c.l.b16 %v1916
    %v4996 = vunpack.c.l.b16 %v1917
    %v4997 = vunpack.c.l.b16 %v1918
    %v4998 = vunpack.c.l.b16 %v1919
    %v4999 = vunpack.c.l.b16 %v1920
    %v5000 = vunpack.c.l.b16 %v1921
    %v5001 = vunpack.c.l.b16 %v1922
    %v5002 = vunpack.c.l.b16 %v1923
    %v5003 = vunpack.c.l.b16 %v1924
    %v5004 = vunpack.c.l.b16 %v1925
    %v5005 = vunpack.c.l.b16 %v1926
    %v5006 = vunpack.c.l.b16 %v1927
    %v5007 = vunpack.c.l.b16 %v1928
    %v5008 = vunpack.c.l.b16 %v1929
    %v5009 = vunpack.c.l.b16 %v1930
    %v5010 = vunpack.c.l.b16 %v1931
    %v5011 = vunpack.c.l.b16 %v1932
    %v5012 = vunpack.c.l.b16 %v1933
    %v5013 = vunpack.c.l.b16 %v1934
    %v5014 = vunpack.c.l.b16 %v1935
    %v5015 = vunpack.c.l.b16 %v1936
    %v5016 = vunpack.c.l.b16 %v1937
    %v5017 = vunpack.c.l.b16 %v1938
    %v5018 = vunpack.c.l.b16 %v1939
    %v5019 = vunpack.c.l.b16 %v1940
    %v5020 = vunpack.c.l.b16 %v1941
    %v5021 = vunpack.c.l.b16 %v1942
    %v5022 = vunpack.c.l.b16 %v1943
    %v5023 = vunpack.c.l.b16 %v1944
    %v5024 = vunpack.c.l.b16 %v1945
    %v5025 = vunpack.c.l.b16 %v1946
    %v5026 = vunpack.c.l.b16 %v1947
    %v5027 = vunpack.c.l.b16 %v1948
    %v5028 = vunpack.c.l.b16 %v1949
    %v5029 = vunpack.c.l.b16 %v1950
    %v5030 = vunpack.c.l.b16 %v1951
    %v5031 = vunpack.c.l.b16 %v1952
    %v5032 = vunpack.c.l.b16 %v1953
    %v5033 = vunpack.c.l.b16 %v1954
    %v5034 = vunpack.c.l.b16 %v1955
    %v5035 = vunpack.c.l.b16 %v1956
    %v5036 = vunpack.c.l.b16 %v1957
    %v5037 = vunpack.c.l.b16 %v1958
    %v5038 = vunpack.c.l.b16 %v1959
    %v5039 = vunpack.c.l.b16 %v1960
    %v5040 = vunpack.c.l.b16 %v1961
    %v5041 = vunpack.c.l.b16 %v1962
    %v5042 = vunpack.c.l.b16 %v1963
    %v5043 = vunpack.c.l.b16 %v1964
    %v5044 = vunpack.c.l.b16 %v1965
    %v5045 = vunpack.c.l.b16 %v1966
    %v5046 = vunpack.c.l.b16 %v1967
    %v5047 = vunpack.c.l.b16 %v1968
    %v5048 = vunpack.c.l.b16 %v1969
    %v5049 = vunpack.c.l.b16 %v1970
    %v5050 = vunpack.c.l.b16 %v1971
    %v5051 = vunpack.c.l.b16 %v1972
    %v5052 = vunpack.c.l.b16 %v1973
    %v5053 = vunpack.c.l.b16 %v1974
    %v5054 = vunpack.c.l.b16 %v1975
    %v5055 = vunpack.c.l.b16 %v1976
    %v5056 = vunpack.c.l.b16 %v1977
    %v5057 = vunpack.c.l.b16 %v1978
    %v5058 = vunpack.c.l.b16 %v1979
    %v5059 = vunpack.c.l.b16 %v1980
    %v5060 = vunpack.c.l.b16 %v1981
    %v5061 = vunpack.c.l.b16 %v1982
    %v5062 = vunpack.c.l.b16 %v1983
    %v5063 = vunpack.c.l.b16 %v1984
    %v5064 = vunpack.c.l.b16 %v1985
    %v5065 = vunpack.c.l.b16 %v1986
    %v5066 = vunpack.c.l.b16 %v1987
    %v5067 = vunpack.c.l.b16 %v1988
    %v5068 = vunpack.c.l.b16 %v1989
    %v5069 = vunpack.c.l.b16 %v1990
    %v5070 = vunpack.c.l.b16 %v1991
    %v5071 = vunpack.c.l.b16 %v1992
    %v5072 = vunpack.c.l.b16 %v1993
    %v5073 = vunpack.c.l.b16 %v1994
    %v5074 = vunpack.c.l.b16 %v1995
    %v5075 = vunpack.c.l.b16 %v1996
    %v5076 = vunpack.c.l.b16 %v1997
    %v5077 = vunpack.c.l.b16 %v1998
    %v5078 = vunpack.c.l.b16 %v1999
    %v5079 = vunpack.c.l.b16 %v2000
    %v5080 = vunpack.c.l.b16 %v2001
    %v5081 = vunpack.c.l.b16 %v2002
    %v5082 = vunpack.c.l.b16 %v2003
    %v5083 = vunpack.c.l.b16 %v2004
    %v5084 = vunpack.c.l.b16 %v2005
    %v5085 = vunpack.c.l.b16 %v2006
    %v5086 = vunpack.c.l.b16 %v2007
    %v5087 = vunpack.c.l.b16 %v2008
    %v5088 = vunpack.c.l.b16 %v2009
    %v5089 = vunpack.c.l.b16 %v2010
    %v5090 = vunpack.c.l.b16 %v2011
    %v5091 = vunpack.c.l.b16 %v2012
    %v5092 = vunpack.c.l.b16 %v2013
    %v5093 = vunpack.c.l.b16 %v2014
    %v5094 = vunpack.c.l.b16 %v2015
    %v5095 = vunpack.c.l.b16 %v2016
    %v5096 = vunpack.c.l.b16 %v2017
    %v5097 = vunpack.c.l.b16 %v2018
    %v5098 = vunpack.c.l.b16 %v2019
    %v5099 = vunpack.c.l.b16 %v2020
    %v5100 = vunpack.c.l.b16 %v2021
    %v5101 = vunpack.c.l.b16 %v2022
    %v5102 = vunpack.c.l.b16 %v2023
    %v5103 = vunpack.c.l.b16 %v2024
    %v5104 = vunpack.c.l.b16 %v2025
    %v5105 = vunpack.c.l.b16 %v2026
    %v5106 = vunpack.c.l.b16 %v2027
    %v5107 = vunpack.c.l.b16 %v2028
    %v5108 = vunpack.c.l.b16 %v2029
    %v5109 = vunpack.c.l.b16 %v2030
    %v5110 = vunpack.c.l.b16 %v2031
    %v5111 = vunpack.c.l.b16 %v2032
    %v5112 = vunpack.c.l.b16 %v2033
    %v5113 = vunpack.c.l.b16 %v2034
    %v5114 = vunpack.c.l.b16 %v2035
    %v5115 = vunpack.c.l.b16 %v2036
    %v5116 = vunpack.c.l.b16 %v2037
    %v5117 = vunpack.c.l.b16 %v2038
    %v5118 = vunpack.c.l.b16 %v2039
    %v5119 = vunpack.c.l.b16 %v2040
    %v5120 = vunpack.c.l.b16 %v2041
    %v5121 = vunpack.c.l.b16 %v2042
    %v5122 = vunpack.c.l.b16 %v2043
    %v5123 = vunpack.c.l.b16 %v2044
    %v5124 = vunpack.c.l.b16 %v2045
    %v5125 = vunpack.c.l.b16 %v2046
    %v5126 = vunpack.c.l.b16 %v2047
    %v5127 = vunpack.c.l.b16 %v2048
    %v5128 = vunpack.c.l.b16 %v2049
    %v5129 = vunpack.c.l.b16 %v2050
    %v5130 = vunpack.c.l.b16 %v2051
    %v5131 = vunpack.c.l.b16 %v2052
    %v5132 = vunpack.c.l.b16 %v2053
    %v5133 = vunpack.c.l.b16 %v2054
    %v5134 = vunpack.c.l.b16 %v2055
    %v5135 = vunpack.c.l.b16 %v2056
    %v5136 = vunpack.c.l.b16 %v2057
    %v5137 = vunpack.c.l.b16 %v2058
    %v5138 = vunpack.c.l.b16 %v2059
    %v5139 = vunpack.c.l.b16 %v2060
    %v5140 = vunpack.c.l.b16 %v2061
    %v5141 = vunpack.c.l.b16 %v2062
    %v5142 = vunpack.c.l.b16 %v2063
    %v5143 = vunpack.c.l.b16 %v2064
    %v5144 = vunpack.c.l.b16 %v2065
    %v5145 = vunpack.c.l.b16 %v2066
    %v5146 = vunpack.c.l.b16 %v2067
    %v5147 = vunpack.c.l.b16 %v2068
    %v5148 = vunpack.c.l.b16 %v2069
    %v5149 = vunpack.c.l.b16 %v2070
    %v5150 = vunpack.c.l.b16 %v2071
    %v5151 = vunpack.c.l.b16 %v2072
    %v5152 = vunpack.c.l.b16 %v2073
    %v5153 = vunpack.c.l.b16 %v2074
    %v5154 = vunpack.c.l.b16 %v2075
    %v5155 = vunpack.c.l.b16 %v2076
    %v5156 = vunpack.c.l.b16 %v2077
    %v5157 = vunpack.c.l.b16 %v2078
    %v5158 = vunpack.c.l.b16 %v2079
    %v5159 = vunpack.c.l.b16 %v2080
    %v5160 = vunpack.c.l.b16 %v2081
    %v5161 = vunpack.c.l.b16 %v2082
    %v5162 = vunpack.c.l.b16 %v2083
    %v5163 = vunpack.c.l.b16 %v2084
    %v5164 = vunpack.c.l.b16 %v2085
    %v5165 = vunpack.c.l.b16 %v2086
    %v5166 = vunpack.c.l.b16 %v2087
    %v5167 = vunpack.c.l.b16 %v2088
    %v5168 = vunpack.c.l.b16 %v2089
    %v5169 = vunpack.c.l.b16 %v2090
    %v5170 = vunpack.c.l.b16 %v2091
    %v5171 = vunpack.c.l.b16 %v2092
    %v5172 = vunpack.c.l.b16 %v2093
    %v5173 = vunpack.c.l.b16 %v2094
    %v5174 = vunpack.c.l.b16 %v2095
    %v5175 = vunpack.c.l.b16 %v2096
    %v5176 = vunpack.c.l.b16 %v2097
    %v5177 = vunpack.c.l.b16 %v2098
    %v5178 = vunpack.c.l.b16 %v2099
    %v5179 = vunpack.c.l.b16 %v2100
    %v5180 = vunpack.c.l.b16 %v2101
    %v5181 = vunpack.c.l.b16 %v2102
    %v5182 = vunpack.c.l.b16 %v2103
    %v5183 = vunpack.c.l.b16 %v2104
    %v5184 = vunpack.c.l.b16 %v2105
    %v5185 = vunpack.c.l.b16 %v2106
    %v5186 = vunpack.c.l.b16 %v2107
    %v5187 = vunpack.c.l.b16 %v2108
    %v5188 = vunpack.c.l.b16 %v2109
    %v5189 = vunpack.c.l.b16 %v2110
    %v5190 = vunpack.c.l.b16 %v2111
    %v5191 = vunpack.c.l.b16 %v2112
    %v5192 = vunpack.c.l.b16 %v2113
    %v5193 = vunpack.c.l.b16 %v2114
    %v5194 = vunpack.c.l.b16 %v2115
    %v5195 = vunpack.c.l.b16 %v2116
    %v5196 = vunpack.c.l.b16 %v2117
    %v5197 = vunpack.c.l.b16 %v2118
    %v5198 = vunpack.c.l.b16 %v2119
    %v5199 = vunpack.c.l.b16 %v2120
    %v5200 = vunpack.c.l.b16 %v2121
    %v5201 = vunpack.c.l.b16 %v2122
    %v5202 = vunpack.c.l.b16 %v2123
    %v5203 = vunpack.c.l.b16 %v2124
    %v5204 = vunpack.c.l.b16 %v2125
    %v5205 = vunpack.c.l.b16 %v2126
    %v5206 = vunpack.c.l.b16 %v2127
    %v5207 = vunpack.c.l.b16 %v2128
    %v5208 = vunpack.c.l.b16 %v2129
    %v5209 = vunpack.c.l.b16 %v2130
    %v5210 = vunpack.c.l.b16 %v2131
    %v5211 = vunpack.c.l.b16 %v2132
    %v5212 = vunpack.c.l.b16 %v2133
    %v5213 = vunpack.c.l.b16 %v2134
    %v5214 = vunpack.c.l.b16 %v2135
    %v5215 = vunpack.c.l.b16 %v2136
    %v5216 = vunpack.c.l.b16 %v2137
    %v5217 = vunpack.c.l.b16 %v2138
    %v5218 = vunpack.c.l.b16 %v2139
    %v5219 = vunpack.c.l.b16 %v2140
    %v5220 = vunpack.c.l.b16 %v2141
    %v5221 = vunpack.c.l.b16 %v2142
    %v5222 = vunpack.c.l.b16 %v2143
    %v5223 = vunpack.c.l.b16 %v2144
    %v5224 = vunpack.c.l.b16 %v2145
    %v5225 = vunpack.c.l.b16 %v2146
    %v5226 = vunpack.c.l.b16 %v2147
    %v5227 = vunpack.c.l.b16 %v2148
    %v5228 = vunpack.c.l.b16 %v2149
    %v5229 = vunpack.c.l.b16 %v2150
    %v5230 = vunpack.c.l.b16 %v2151
    %v5231 = vunpack.c.l.b16 %v2152
    %v5232 = vunpack.c.l.b16 %v2153
    %v5233 = vunpack.c.l.b16 %v2154
    %v5234 = vunpack.c.l.b16 %v2155
    %v5235 = vunpack.c.l.b16 %v2156
    %v5236 = vunpack.c.l.b16 %v2157
    %v5237 = vunpack.c.l.b16 %v2158
    %v5238 = vunpack.c.l.b16 %v2159
    %v5239 = vunpack.c.l.b16 %v2160
    %v5240 = vunpack.c.l.b16 %v2161
    %v5241 = vunpack.c.l.b16 %v2162
    %v5242 = vunpack.c.l.b16 %v2163
    %v5243 = vunpack.c.l.b16 %v2164
    %v5244 = vunpack.c.l.b16 %v2165
    %v5245 = vunpack.c.l.b16 %v2166
    %v5246 = vunpack.c.l.b16 %v2167
    %v5247 = vunpack.c.l.b16 %v2168
    %v5248 = vunpack.c.l.b16 %v2169
    %v5249 = vunpack.c.l.b16 %v2170
    %v5250 = vunpack.c.l.b16 %v2171
    %v5251 = vunpack.c.l.b16 %v2172
    %v5252 = vunpack.c.l.b16 %v2173
    %v5253 = vunpack.c.l.b16 %v2174
    %v5254 = vunpack.c.l.b16 %v2175
    %v5255 = vunpack.c.l.b16 %v2176
    %v5256 = vunpack.c.l.b16 %v2177
    %v5257 = vunpack.c.l.b16 %v2178
    %v5258 = vunpack.c.l.b16 %v2179
    %v5259 = vunpack.c.l.b16 %v2180
    %v5260 = vunpack.c.l.b16 %v2181
    %v5261 = vunpack.c.l.b16 %v2182
    %v5262 = vunpack.c.l.b16 %v2183
    %v5263 = vunpack.c.l.b16 %v2184
    %v5264 = vunpack.c.l.b16 %v2185
    %v5265 = vunpack.c.l.b16 %v2186
    %v5266 = vunpack.c.l.b16 %v2187
    %v5267 = vunpack.c.l.b16 %v2188
    %v5268 = vunpack.c.l.b16 %v2189
    %v5269 = vunpack.c.l.b16 %v2190
    %v5270 = vunpack.c.l.b16 %v2191
    %v5271 = vunpack.c.l.b16 %v2192
    %v5272 = vunpack.c.l.b16 %v2193
    %v5273 = vunpack.c.l.b16 %v2194
    %v5274 = vunpack.c.l.b16 %v2195
    %v5275 = vunpack.c.l.b16 %v2196
    %v5276 = vunpack.c.l.b16 %v2197
    %v5277 = vunpack.c.l.b16 %v2198
    %v5278 = vunpack.c.l.b16 %v2199
    %v5279 = vunpack.c.l.b16 %v2200
    %v5280 = vunpack.c.l.b16 %v2201
    %v5281 = vunpack.c.l.b16 %v2202
    %v5282 = vunpack.c.l.b16 %v2203
    %v5283 = vunpack.c.l.b16 %v2204
    %v5284 = vunpack.c.l.b16 %v2205
    %v5285 = vunpack.c.l.b16 %v2206
    %v5286 = vunpack.c.l.b16 %v2207
    %v5287 = vunpack.c.l.b16 %v2208
    %v5288 = vunpack.c.l.b16 %v2209
    %v5289 = vunpack.c.l.b16 %v2210
    %v5290 = vunpack.c.l.b16 %v2211
    %v5291 = vunpack.c.l.b16 %v2212
    %v5292 = vunpack.c.l.b16 %v2213
    %v5293 = vunpack.c.l.b16 %v2214
    %v5294 = vunpack.c.l.b16 %v2215
    %v5295 = vunpack.c.l.b16 %v2216
    %v5296 = vunpack.c.l.b16 %v2217
    %v5297 = vunpack.c.l.b16 %v2218
    %v5298 = vunpack.c.l.b16 %v2219
    %v5299 = vunpack.c.l.b16 %v2220
    %v5300 = vunpack.c.l.b16 %v2221
    %v5301 = vunpack.c.l.b16 %v2222
    %v5302 = vunpack.c.l.b16 %v2223
    %v5303 = vunpack.c.l.b16 %v2224
    %v5304 = vunpack.c.l.b16 %v2225
    %v5305 = vunpack.c.l.b16 %v2226
    %v5306 = vunpack.c.l.b16 %v2227
    %v5307 = vunpack.c.l.b16 %v2228
    %v5308 = vunpack.c.l.b16 %v2229
    %v5309 = vunpack.c.l.b16 %v2230
    %v5310 = vunpack.c.l.b16 %v2231
    %v5311 = vunpack.c.l.b16 %v2232
    %v5312 = vunpack.c.l.b16 %v2233
    %v5313 = vunpack.c.l.b16 %v2234
    %v5314 = vunpack.c.l.b16 %v2235
    %v5315 = vunpack.c.l.b16 %v2236
    %v5316 = vunpack.c.l.b16 %v2237
    %v5317 = vunpack.c.l.b16 %v2238
    %v5318 = vunpack.c.l.b16 %v2239
    %v5319 = vunpack.c.l.b16 %v2240
    %v5320 = vunpack.c.l.b16 %v2241
    %v5321 = vunpack.c.l.b16 %v2242
    %v5322 = vunpack.c.l.b16 %v2243
    %v5323 = vunpack.c.l.b16 %v2244
    %v5324 = vunpack.c.l.b16 %v2245
    %v5325 = vunpack.c.l.b16 %v2246
    %v5326 = vunpack.c.l.b16 %v2247
    %v5327 = vunpack.c.l.b16 %v2248
    %v5328 = vunpack.c.l.b16 %v2249
    %v5329 = vunpack.c.l.b16 %v2250
    %v5330 = vunpack.c.l.b16 %v2251
    %v5331 = vunpack.c.l.b16 %v2252
    %v5332 = vunpack.c.l.b16 %v2253
    %v5333 = vunpack.c.l.b16 %v2254
    %v5334 = vunpack.c.l.b16 %v2255
    %v5335 = vunpack.c.l.b16 %v2256
    %v5336 = vunpack.c.l.b16 %v2257
    %v5337 = vunpack.c.l.b16 %v2258
    %v5338 = vunpack.c.l.b16 %v2259
    %v5339 = vunpack.c.l.b16 %v2260
    %v5340 = vunpack.c.l.b16 %v2261
    %v5341 = vunpack.c.l.b16 %v2262
    %v5342 = vunpack.c.l.b16 %v2263
    %v5343 = vunpack.c.l.b16 %v2264
    %v5344 = vunpack.c.l.b16 %v2265
    %v5345 = vunpack.c.l.b16 %v2266
    %v5346 = vunpack.c.l.b16 %v2267
    %v5347 = vunpack.c.l.b16 %v2268
    %v5348 = vunpack.c.l.b16 %v2269
    %v5349 = vunpack.c.l.b16 %v2270
    %v5350 = vunpack.c.l.b16 %v2271
    %v5351 = vunpack.c.l.b16 %v2272
    %v5352 = vunpack.c.l.b16 %v2273
    %v5353 = vunpack.c.l.b16 %v2274
    %v5354 = vunpack.c.l.b16 %v2275
    %v5355 = vunpack.c.l.b16 %v2276
    %v5356 = vunpack.c.l.b16 %v2277
    %v5357 = vunpack.c.l.b16 %v2278
    %v5358 = vunpack.c.l.b16 %v2279
    %v5359 = vunpack.c.l.b16 %v2280
    %v5360 = vunpack.c.l.b16 %v2281
    %v5361 = vunpack.c.l.b16 %v2282
    %v5362 = vunpack.c.l.b16 %v2283
    %v5363 = vunpack.c.l.b16 %v2284
    %v5364 = vunpack.c.l.b16 %v2285
    %v5365 = vunpack.c.l.b16 %v2286
    %v5366 = vunpack.c.l.b16 %v2287
    %v5367 = vunpack.c.l.b16 %v2288
    %v5368 = vunpack.c.l.b16 %v2289
    %v5369 = vunpack.c.l.b16 %v2290
    %v5370 = vunpack.c.l.b16 %v2291
    %v5371 = vunpack.c.l.b16 %v2292
    %v5372 = vunpack.c.l.b16 %v2293
    %v5373 = vunpack.c.l.b16 %v2294
    %v5374 = vunpack.c.l.b16 %v2295
    %v5375 = vunpack.c.l.b16 %v2296
    %v5376 = vunpack.c.l.b16 %v2297
    %v5377 = vunpack.c.l.b16 %v2298
    %v5378 = vpack.c.b16 %v3843, %v3842
    %v5379 = vpack.c.b16 %v3845, %v3844
    %v5380 = vpack.c.b16 %v3847, %v3846
    %v5381 = vpack.c.b16 %v3849, %v3848
    %v5382 = vpack.c.b16 %v3851, %v3850
    %v5383 = vpack.c.b16 %v3853, %v3852
    %v5384 = vpack.c.b16 %v3855, %v3854
    %v5385 = vpack.c.b16 %v3857, %v3856
    %v5386 = vpack.c.b16 %v3859, %v3858
    %v5387 = vpack.c.b16 %v3861, %v3860
    %v5388 = vpack.c.b16 %v3863, %v3862
    %v5389 = vpack.c.b16 %v3865, %v3864
    %v5390 = vpack.c.b16 %v3867, %v3866
    %v5391 = vpack.c.b16 %v3869, %v3868
    %v5392 = vpack.c.b16 %v3871, %v3870
    %v5393 = vpack.c.b16 %v3873, %v3872
    %v5394 = vpack.c.b16 %v3875, %v3874
    %v5395 = vpack.c.b16 %v3877, %v3876
    %v5396 = vpack.c.b16 %v3879, %v3878
    %v5397 = vpack.c.b16 %v3881, %v3880
    %v5398 = vpack.c.b16 %v3883, %v3882
    %v5399 = vpack.c.b16 %v3885, %v3884
    %v5400 = vpack.c.b16 %v3887, %v3886
    %v5401 = vpack.c.b16 %v3889, %v3888
    %v5402 = vpack.c.b16 %v3891, %v3890
    %v5403 = vpack.c.b16 %v3893, %v3892
    %v5404 = vpack.c.b16 %v3895, %v3894
    %v5405 = vpack.c.b16 %v3897, %v3896
    %v5406 = vpack.c.b16 %v3899, %v3898
    %v5407 = vpack.c.b16 %v3901, %v3900
    %v5408 = vpack.c.b16 %v3903, %v3902
    %v5409 = vpack.c.b16 %v3905, %v3904
    %v5410 = vpack.c.b16 %v3907, %v3906
    %v5411 = vpack.c.b16 %v3909, %v3908
    %v5412 = vpack.c.b16 %v3911, %v3910
    %v5413 = vpack.c.b16 %v3913, %v3912
    %v5414 = vpack.c.b16 %v3915, %v3914
    %v5415 = vpack.c.b16 %v3917, %v3916
    %v5416 = vpack.c.b16 %v3919, %v3918
    %v5417 = vpack.c.b16 %v3921, %v3920
    %v5418 = vpack.c.b16 %v3923, %v3922
    %v5419 = vpack.c.b16 %v3925, %v3924
    %v5420 = vpack.c.b16 %v3927, %v3926
    %v5421 = vpack.c.b16 %v3929, %v3928
    %v5422 = vpack.c.b16 %v3931, %v3930
    %v5423 = vpack.c.b16 %v3933, %v3932
    %v5424 = vpack.c.b16 %v3935, %v3934
    %v5425 = vpack.c.b16 %v3937, %v3936
    %v5426 = vpack.c.b16 %v3939, %v3938
    %v5427 = vpack.c.b16 %v3941, %v3940
    %v5428 = vpack.c.b16 %v3943, %v3942
    %v5429 = vpack.c.b16 %v3945, %v3944
    %v5430 = vpack.c.b16 %v3947, %v3946
    %v5431 = vpack.c.b16 %v3949, %v3948
    %v5432 = vpack.c.b16 %v3951, %v3950
    %v5433 = vpack.c.b16 %v3953, %v3952
    %v5434 = vpack.c.b16 %v3955, %v3954
    %v5435 = vpack.c.b16 %v3957, %v3956
    %v5436 = vpack.c.b16 %v3959, %v3958
    %v5437 = vpack.c.b16 %v3961, %v3960
    %v5438 = vpack.c.b16 %v3963, %v3962
    %v5439 = vpack.c.b16 %v3965, %v3964
    %v5440 = vpack.c.b16 %v3967, %v3966
    %v5441 = vpack.c.b16 %v3969, %v3968
    %v5442 = vpack.c.b16 %v3971, %v3970
    %v5443 = vpack.c.b16 %v3973, %v3972
    %v5444 = vpack.c.b16 %v3975, %v3974
    %v5445 = vpack.c.b16 %v3977, %v3976
    %v5446 = vpack.c.b16 %v3979, %v3978
    %v5447 = vpack.c.b16 %v3981, %v3980
    %v5448 = vpack.c.b16 %v3983, %v3982
    %v5449 = vpack.c.b16 %v3985, %v3984
    %v5450 = vpack.c.b16 %v3987, %v3986
    %v5451 = vpack.c.b16 %v3989, %v3988
    %v5452 = vpack.c.b16 %v3991, %v3990
    %v5453 = vpack.c.b16 %v3993, %v3992
    %v5454 = vpack.c.b16 %v3995, %v3994
    %v5455 = vpack.c.b16 %v3997, %v3996
    %v5456 = vpack.c.b16 %v3999, %v3998
    %v5457 = vpack.c.b16 %v4001, %v4000
    %v5458 = vpack.c.b16 %v4003, %v4002
    %v5459 = vpack.c.b16 %v4005, %v4004
    %v5460 = vpack.c.b16 %v4007, %v4006
    %v5461 = vpack.c.b16 %v4009, %v4008
    %v5462 = vpack.c.b16 %v4011, %v4010
    %v5463 = vpack.c.b16 %v4013, %v4012
    %v5464 = vpack.c.b16 %v4015, %v4014
    %v5465 = vpack.c.b16 %v4017, %v4016
    %v5466 = vpack.c.b16 %v4019, %v4018
    %v5467 = vpack.c.b16 %v4021, %v4020
    %v5468 = vpack.c.b16 %v4023, %v4022
    %v5469 = vpack.c.b16 %v4025, %v4024
    %v5470 = vpack.c.b16 %v4027, %v4026
    %v5471 = vpack.c.b16 %v4029, %v4028
    %v5472 = vpack.c.b16 %v4031, %v4030
    %v5473 = vpack.c.b16 %v4033, %v4032
    %v5474 = vpack.c.b16 %v4035, %v4034
    %v5475 = vpack.c.b16 %v4037, %v4036
    %v5476 = vpack.c.b16 %v4039, %v4038
    %v5477 = vpack.c.b16 %v4041, %v4040
    %v5478 = vpack.c.b16 %v4043, %v4042
    %v5479 = vpack.c.b16 %v4045, %v4044
    %v5480 = vpack.c.b16 %v4047, %v4046
    %v5481 = vpack.c.b16 %v4049, %v4048
    %v5482 = vpack.c.b16 %v4051, %v4050
    %v5483 = vpack.c.b16 %v4053, %v4052
    %v5484 = vpack.c.b16 %v4055, %v4054
    %v5485 = vpack.c.b16 %v4057, %v4056
    %v5486 = vpack.c.b16 %v4059, %v4058
    %v5487 = vpack.c.b16 %v4061, %v4060
    %v5488 = vpack.c.b16 %v4063, %v4062
    %v5489 = vpack.c.b16 %v4065, %v4064
    %v5490 = vpack.c.b16 %v4067, %v4066
    %v5491 = vpack.c.b16 %v4069, %v4068
    %v5492 = vpack.c.b16 %v4071, %v4070
    %v5493 = vpack.c.b16 %v4073, %v4072
    %v5494 = vpack.c.b16 %v4075, %v4074
    %v5495 = vpack.c.b16 %v4077, %v4076
    %v5496 = vpack.c.b16 %v4079, %v4078
    %v5497 = vpack.c.b16 %v4081, %v4080
    %v5498 = vpack.c.b16 %v4083, %v4082
    %v5499 = vpack.c.b16 %v4085, %v4084
    %v5500 = vpack.c.b16 %v4087, %v4086
    %v5501 = vpack.c.b16 %v4089, %v4088
    %v5502 = vpack.c.b16 %v4091, %v4090
    %v5503 = vpack.c.b16 %v4093, %v4092
    %v5504 = vpack.c.b16 %v4095, %v4094
    %v5505 = vpack.c.b16 %v4097, %v4096
    %v5506 = vpack.c.b16 %v4099, %v4098
    %v5507 = vpack.c.b16 %v4101, %v4100
    %v5508 = vpack.c.b16 %v4103, %v4102
    %v5509 = vpack.c.b16 %v4105, %v4104
    %v5510 = vpack.c.b16 %v4107, %v4106
    %v5511 = vpack.c.b16 %v4109, %v4108
    %v5512 = vpack.c.b16 %v4111, %v4110
    %v5513 = vpack.c.b16 %v4113, %v4112
    %v5514 = vpack.c.b16 %v4115, %v4114
    %v5515 = vpack.c.b16 %v4117, %v4116
    %v5516 = vpack.c.b16 %v4119, %v4118
    %v5517 = vpack.c.b16 %v4121, %v4120
    %v5518 = vpack.c.b16 %v4123, %v4122
    %v5519 = vpack.c.b16 %v4125, %v4124
    %v5520 = vpack.c.b16 %v4127, %v4126
    %v5521 = vpack.c.b16 %v4129, %v4128
    %v5522 = vpack.c.b16 %v4131, %v4130
    %v5523 = vpack.c.b16 %v4133, %v4132
    %v5524 = vpack.c.b16 %v4135, %v4134
    %v5525 = vpack.c.b16 %v4137, %v4136
    %v5526 = vpack.c.b16 %v4139, %v4138
    %v5527 = vpack.c.b16 %v4141, %v4140
    %v5528 = vpack.c.b16 %v4143, %v4142
    %v5529 = vpack.c.b16 %v4145, %v4144
    %v5530 = vpack.c.b16 %v4147, %v4146
    %v5531 = vpack.c.b16 %v4149, %v4148
    %v5532 = vpack.c.b16 %v4151, %v4150
    %v5533 = vpack.c.b16 %v4153, %v4152
    %v5534 = vpack.c.b16 %v4155, %v4154
    %v5535 = vpack.c.b16 %v4157, %v4156
    %v5536 = vpack.c.b16 %v4159, %v4158
    %v5537 = vpack.c.b16 %v4161, %v4160
    %v5538 = vpack.c.b16 %v4163, %v4162
    %v5539 = vpack.c.b16 %v4165, %v4164
    %v5540 = vpack.c.b16 %v4167, %v4166
    %v5541 = vpack.c.b16 %v4169, %v4168
    %v5542 = vpack.c.b16 %v4171, %v4170
    %v5543 = vpack.c.b16 %v4173, %v4172
    %v5544 = vpack.c.b16 %v4175, %v4174
    %v5545 = vpack.c.b16 %v4177, %v4176
    %v5546 = vpack.c.b16 %v4179, %v4178
    %v5547 = vpack.c.b16 %v4181, %v4180
    %v5548 = vpack.c.b16 %v4183, %v4182
    %v5549 = vpack.c.b16 %v4185, %v4184
    %v5550 = vpack.c.b16 %v4187, %v4186
    %v5551 = vpack.c.b16 %v4189, %v4188
    %v5552 = vpack.c.b16 %v4191, %v4190
    %v5553 = vpack.c.b16 %v4193, %v4192
    %v5554 = vpack.c.b16 %v4195, %v4194
    %v5555 = vpack.c.b16 %v4197, %v4196
    %v5556 = vpack.c.b16 %v4199, %v4198
    %v5557 = vpack.c.b16 %v4201, %v4200
    %v5558 = vpack.c.b16 %v4203, %v4202
    %v5559 = vpack.c.b16 %v4205, %v4204
    %v5560 = vpack.c.b16 %v4207, %v4206
    %v5561 = vpack.c.b16 %v4209, %v4208
    %v5562 = vpack.c.b16 %v4211, %v4210
    %v5563 = vpack.c.b16 %v4213, %v4212
    %v5564 = vpack.c.b16 %v4215, %v4214
    %v5565 = vpack.c.b16 %v4217, %v4216
    %v5566 = vpack.c.b16 %v4219, %v4218
    %v5567 = vpack.c.b16 %v4221, %v4220
    %v5568 = vpack.c.b16 %v4223, %v4222
    %v5569 = vpack.c.b16 %v4225, %v4224
    %v5570 = vpack.c.b16 %v4227, %v4226
    %v5571 = vpack.c.b16 %v4229, %v4228
    %v5572 = vpack.c.b16 %v4231, %v4230
    %v5573 = vpack.c.b16 %v4233, %v4232
    %v5574 = vpack.c.b16 %v4235, %v4234
    %v5575 = vpack.c.b16 %v4237, %v4236
    %v5576 = vpack.c.b16 %v4239, %v4238
    %v5577 = vpack.c.b16 %v4241, %v4240
    %v5578 = vpack.c.b16 %v4243, %v4242
    %v5579 = vpack.c.b16 %v4245, %v4244
    %v5580 = vpack.c.b16 %v4247, %v4246
    %v5581 = vpack.c.b16 %v4249, %v4248
    %v5582 = vpack.c.b16 %v4251, %v4250
    %v5583 = vpack.c.b16 %v4253, %v4252
    %v5584 = vpack.c.b16 %v4255, %v4254
    %v5585 = vpack.c.b16 %v4257, %v4256
    %v5586 = vpack.c.b16 %v4259, %v4258
    %v5587 = vpack.c.b16 %v4261, %v4260
    %v5588 = vpack.c.b16 %v4263, %v4262
    %v5589 = vpack.c.b16 %v4265, %v4264
    %v5590 = vpack.c.b16 %v4267, %v4266
    %v5591 = vpack.c.b16 %v4269, %v4268
    %v5592 = vpack.c.b16 %v4271, %v4270
    %v5593 = vpack.c.b16 %v4273, %v4272
    %v5594 = vpack.c.b16 %v4275, %v4274
    %v5595 = vpack.c.b16 %v4277, %v4276
    %v5596 = vpack.c.b16 %v4279, %v4278
    %v5597 = vpack.c.b16 %v4281, %v4280
    %v5598 = vpack.c.b16 %v4283, %v4282
    %v5599 = vpack.c.b16 %v4285, %v4284
    %v5600 = vpack.c.b16 %v4287, %v4286
    %v5601 = vpack.c.b16 %v4289, %v4288
    %v5602 = vpack.c.b16 %v4291, %v4290
    %v5603 = vpack.c.b16 %v4293, %v4292
    %v5604 = vpack.c.b16 %v4295, %v4294
    %v5605 = vpack.c.b16 %v4297, %v4296
    %v5606 = vpack.c.b16 %v4299, %v4298
    %v5607 = vpack.c.b16 %v4301, %v4300
    %v5608 = vpack.c.b16 %v4303, %v4302
    %v5609 = vpack.c.b16 %v4305, %v4304
    %v5610 = vpack.c.b16 %v4307, %v4306
    %v5611 = vpack.c.b16 %v4309, %v4308
    %v5612 = vpack.c.b16 %v4311, %v4310
    %v5613 = vpack.c.b16 %v4313, %v4312
    %v5614 = vpack.c.b16 %v4315, %v4314
    %v5615 = vpack.c.b16 %v4317, %v4316
    %v5616 = vpack.c.b16 %v4319, %v4318
    %v5617 = vpack.c.b16 %v4321, %v4320
    %v5618 = vpack.c.b16 %v4323, %v4322
    %v5619 = vpack.c.b16 %v4325, %v4324
    %v5620 = vpack.c.b16 %v4327, %v4326
    %v5621 = vpack.c.b16 %v4329, %v4328
    %v5622 = vpack.c.b16 %v4331, %v4330
    %v5623 = vpack.c.b16 %v4333, %v4332
    %v5624 = vpack.c.b16 %v4335, %v4334
    %v5625 = vpack.c.b16 %v4337, %v4336
    %v5626 = vpack.c.b16 %v4339, %v4338
    %v5627 = vpack.c.b16 %v4341, %v4340
    %v5628 = vpack.c.b16 %v4343, %v4342
    %v5629 = vpack.c.b16 %v4345, %v4344
    %v5630 = vpack.c.b16 %v4347, %v4346
    %v5631 = vpack.c.b16 %v4349, %v4348
    %v5632 = vpack.c.b16 %v4351, %v4350
    %v5633 = vpack.c.b16 %v4353, %v4352
    %v5634 = vpack.c.b16 %v4355, %v4354
    %v5635 = vpack.c.b16 %v4357, %v4356
    %v5636 = vpack.c.b16 %v4359, %v4358
    %v5637 = vpack.c.b16 %v4361, %v4360
    %v5638 = vpack.c.b16 %v4363, %v4362
    %v5639 = vpack.c.b16 %v4365, %v4364
    %v5640 = vpack.c.b16 %v4367, %v4366
    %v5641 = vpack.c.b16 %v4369, %v4368
    %v5642 = vpack.c.b16 %v4371, %v4370
    %v5643 = vpack.c.b16 %v4373, %v4372
    %v5644 = vpack.c.b16 %v4375, %v4374
    %v5645 = vpack.c.b16 %v4377, %v4376
    %v5646 = vpack.c.b16 %v4379, %v4378
    %v5647 = vpack.c.b16 %v4381, %v4380
    %v5648 = vpack.c.b16 %v4383, %v4382
    %v5649 = vpack.c.b16 %v4385, %v4384
    %v5650 = vpack.c.b16 %v4387, %v4386
    %v5651 = vpack.c.b16 %v4389, %v4388
    %v5652 = vpack.c.b16 %v4391, %v4390
    %v5653 = vpack.c.b16 %v4393, %v4392
    %v5654 = vpack.c.b16 %v4395, %v4394
    %v5655 = vpack.c.b16 %v4397, %v4396
    %v5656 = vpack.c.b16 %v4399, %v4398
    %v5657 = vpack.c.b16 %v4401, %v4400
    %v5658 = vpack.c.b16 %v4403, %v4402
    %v5659 = vpack.c.b16 %v4405, %v4404
    %v5660 = vpack.c.b16 %v4407, %v4406
    %v5661 = vpack.c.b16 %v4409, %v4408
    %v5662 = vpack.c.b16 %v4411, %v4410
    %v5663 = vpack.c.b16 %v4413, %v4412
    %v5664 = vpack.c.b16 %v4415, %v4414
    %v5665 = vpack.c.b16 %v4417, %v4416
    %v5666 = vpack.c.b16 %v4419, %v4418
    %v5667 = vpack.c.b16 %v4421, %v4420
    %v5668 = vpack.c.b16 %v4423, %v4422
    %v5669 = vpack.c.b16 %v4425, %v4424
    %v5670 = vpack.c.b16 %v4427, %v4426
    %v5671 = vpack.c.b16 %v4429, %v4428
    %v5672 = vpack.c.b16 %v4431, %v4430
    %v5673 = vpack.c.b16 %v4433, %v4432
    %v5674 = vpack.c.b16 %v4435, %v4434
    %v5675 = vpack.c.b16 %v4437, %v4436
    %v5676 = vpack.c.b16 %v4439, %v4438
    %v5677 = vpack.c.b16 %v4441, %v4440
    %v5678 = vpack.c.b16 %v4443, %v4442
    %v5679 = vpack.c.b16 %v4445, %v4444
    %v5680 = vpack.c.b16 %v4447, %v4446
    %v5681 = vpack.c.b16 %v4449, %v4448
    %v5682 = vpack.c.b16 %v4451, %v4450
    %v5683 = vpack.c.b16 %v4453, %v4452
    %v5684 = vpack.c.b16 %v4455, %v4454
    %v5685 = vpack.c.b16 %v4457, %v4456
    %v5686 = vpack.c.b16 %v4459, %v4458
    %v5687 = vpack.c.b16 %v4461, %v4460
    %v5688 = vpack.c.b16 %v4463, %v4462
    %v5689 = vpack.c.b16 %v4465, %v4464
    %v5690 = vpack.c.b16 %v4467, %v4466
    %v5691 = vpack.c.b16 %v4469, %v4468
    %v5692 = vpack.c.b16 %v4471, %v4470
    %v5693 = vpack.c.b16 %v4473, %v4472
    %v5694 = vpack.c.b16 %v4475, %v4474
    %v5695 = vpack.c.b16 %v4477, %v4476
    %v5696 = vpack.c.b16 %v4479, %v4478
    %v5697 = vpack.c.b16 %v4481, %v4480
    %v5698 = vpack.c.b16 %v4483, %v4482
    %v5699 = vpack.c.b16 %v4485, %v4484
    %v5700 = vpack.c.b16 %v4487, %v4486
    %v5701 = vpack.c.b16 %v4489, %v4488
    %v5702 = vpack.c.b16 %v4491, %v4490
    %v5703 = vpack.c.b16 %v4493, %v4492
    %v5704 = vpack.c.b16 %v4495, %v4494
    %v5705 = vpack.c.b16 %v4497, %v4496
    %v5706 = vpack.c.b16 %v4499, %v4498
    %v5707 = vpack.c.b16 %v4501, %v4500
    %v5708 = vpack.c.b16 %v4503, %v4502
    %v5709 = vpack.c.b16 %v4505, %v4504
    %v5710 = vpack.c.b16 %v4507, %v4506
    %v5711 = vpack.c.b16 %v4509, %v4508
    %v5712 = vpack.c.b16 %v4511, %v4510
    %v5713 = vpack.c.b16 %v4513, %v4512
    %v5714 = vpack.c.b16 %v4515, %v4514
    %v5715 = vpack.c.b16 %v4517, %v4516
    %v5716 = vpack.c.b16 %v4519, %v4518
    %v5717 = vpack.c.b16 %v4521, %v4520
    %v5718 = vpack.c.b16 %v4523, %v4522
    %v5719 = vpack.c.b16 %v4525, %v4524
    %v5720 = vpack.c.b16 %v4527, %v4526
    %v5721 = vpack.c.b16 %v4529, %v4528
    %v5722 = vpack.c.b16 %v4531, %v4530
    %v5723 = vpack.c.b16 %v4533, %v4532
    %v5724 = vpack.c.b16 %v4535, %v4534
    %v5725 = vpack.c.b16 %v4537, %v4536
    %v5726 = vpack.c.b16 %v4539, %v4538
    %v5727 = vpack.c.b16 %v4541, %v4540
    %v5728 = vpack.c.b16 %v4543, %v4542
    %v5729 = vpack.c.b16 %v4545, %v4544
    %v5730 = vpack.c.b16 %v4547, %v4546
    %v5731 = vpack.c.b16 %v4549, %v4548
    %v5732 = vpack.c.b16 %v4551, %v4550
    %v5733 = vpack.c.b16 %v4553, %v4552
    %v5734 = vpack.c.b16 %v4555, %v4554
    %v5735 = vpack.c.b16 %v4557, %v4556
    %v5736 = vpack.c.b16 %v4559, %v4558
    %v5737 = vpack.c.b16 %v4561, %v4560
    %v5738 = vpack.c.b16 %v4563, %v4562
    %v5739 = vpack.c.b16 %v4565, %v4564
    %v5740 = vpack.c.b16 %v4567, %v4566
    %v5741 = vpack.c.b16 %v4569, %v4568
    %v5742 = vpack.c.b16 %v4571, %v4570
    %v5743 = vpack.c.b16 %v4573, %v4572
    %v5744 = vpack.c.b16 %v4575, %v4574
    %v5745 = vpack.c.b16 %v4577, %v4576
    %v5746 = vpack.c.b16 %v4579, %v4578
    %v5747 = vpack.c.b16 %v4581, %v4580
    %v5748 = vpack.c.b16 %v4583, %v4582
    %v5749 = vpack.c.b16 %v4585, %v4584
    %v5750 = vpack.c.b16 %v4587, %v4586
    %v5751 = vpack.c.b16 %v4589, %v4588
    %v5752 = vpack.c.b16 %v4591, %v4590
    %v5753 = vpack.c.b16 %v4593, %v4592
    %v5754 = vpack.c.b16 %v4595, %v4594
    %v5755 = vpack.c.b16 %v4597, %v4596
    %v5756 = vpack.c.b16 %v4599, %v4598
    %v5757 = vpack.c.b16 %v4601, %v4600
    %v5758 = vpack.c.b16 %v4603, %v4602
    %v5759 = vpack.c.b16 %v4605, %v4604
    %v5760 = vpack.c.b16 %v4607, %v4606
    %v5761 = vpack.c.b16 %v4609, %v4608
    %v5762 = vpack.c.b16 %v4611, %v4610
    %v5763 = vpack.c.b16 %v4613, %v4612
    %v5764 = vpack.c.b16 %v4615, %v4614
    %v5765 = vpack.c.b16 %v4617, %v4616
    %v5766 = vpack.c.b16 %v4619, %v4618
    %v5767 = vpack.c.b16 %v4621, %v4620
    %v5768 = vpack.c.b16 %v4623, %v4622
    %v5769 = vpack.c.b16 %v4625, %v4624
    %v5770 = vpack.c.b16 %v4627, %v4626
    %v5771 = vpack.c.b16 %v4629, %v4628
    %v5772 = vpack.c.b16 %v4631, %v4630
    %v5773 = vpack.c.b16 %v4633, %v4632
    %v5774 = vpack.c.b16 %v4635, %v4634
    %v5775 = vpack.c.b16 %v4637, %v4636
    %v5776 = vpack.c.b16 %v4639, %v4638
    %v5777 = vpack.c.b16 %v4641, %v4640
    %v5778 = vpack.c.b16 %v4643, %v4642
    %v5779 = vpack.c.b16 %v4645, %v4644
    %v5780 = vpack.c.b16 %v4647, %v4646
    %v5781 = vpack.c.b16 %v4649, %v4648
    %v5782 = vpack.c.b16 %v4651, %v4650
    %v5783 = vpack.c.b16 %v4653, %v4652
    %v5784 = vpack.c.b16 %v4655, %v4654
    %v5785 = vpack.c.b16 %v4657, %v4656
    %v5786 = vpack.c.b16 %v4659, %v4658
    %v5787 = vpack.c.b16 %v4661, %v4660
    %v5788 = vpack.c.b16 %v4663, %v4662
    %v5789 = vpack.c.b16 %v4665, %v4664
    %v5790 = vpack.c.b16 %v4667, %v4666
    %v5791 = vpack.c.b16 %v4669, %v4668
    %v5792 = vpack.c.b16 %v4671, %v4670
    %v5793 = vpack.c.b16 %v4673, %v4672
    %v5794 = vpack.c.b16 %v4675, %v4674
    %v5795 = vpack.c.b16 %v4677, %v4676
    %v5796 = vpack.c.b16 %v4679, %v4678
    %v5797 = vpack.c.b16 %v4681, %v4680
    %v5798 = vpack.c.b16 %v4683, %v4682
    %v5799 = vpack.c.b16 %v4685, %v4684
    %v5800 = vpack.c.b16 %v4687, %v4686
    %v5801 = vpack.c.b16 %v4689, %v4688
    %v5802 = vpack.c.b16 %v4691, %v4690
    %v5803 = vpack.c.b16 %v4693, %v4692
    %v5804 = vpack.c.b16 %v4695, %v4694
    %v5805 = vpack.c.b16 %v4697, %v4696
    %v5806 = vpack.c.b16 %v4699, %v4698
    %v5807 = vpack.c.b16 %v4701, %v4700
    %v5808 = vpack.c.b16 %v4703, %v4702
    %v5809 = vpack.c.b16 %v4705, %v4704
    %v5810 = vpack.c.b16 %v4707, %v4706
    %v5811 = vpack.c.b16 %v4709, %v4708
    %v5812 = vpack.c.b16 %v4711, %v4710
    %v5813 = vpack.c.b16 %v4713, %v4712
    %v5814 = vpack.c.b16 %v4715, %v4714
    %v5815 = vpack.c.b16 %v4717, %v4716
    %v5816 = vpack.c.b16 %v4719, %v4718
    %v5817 = vpack.c.b16 %v4721, %v4720
    %v5818 = vpack.c.b16 %v4723, %v4722
    %v5819 = vpack.c.b16 %v4725, %v4724
    %v5820 = vpack.c.b16 %v4727, %v4726
    %v5821 = vpack.c.b16 %v4729, %v4728
    %v5822 = vpack.c.b16 %v4731, %v4730
    %v5823 = vpack.c.b16 %v4733, %v4732
    %v5824 = vpack.c.b16 %v4735, %v4734
    %v5825 = vpack.c.b16 %v4737, %v4736
    %v5826 = vpack.c.b16 %v4739, %v4738
    %v5827 = vpack.c.b16 %v4741, %v4740
    %v5828 = vpack.c.b16 %v4743, %v4742
    %v5829 = vpack.c.b16 %v4745, %v4744
    %v5830 = vpack.c.b16 %v4747, %v4746
    %v5831 = vpack.c.b16 %v4749, %v4748
    %v5832 = vpack.c.b16 %v4751, %v4750
    %v5833 = vpack.c.b16 %v4753, %v4752
    %v5834 = vpack.c.b16 %v4755, %v4754
    %v5835 = vpack.c.b16 %v4757, %v4756
    %v5836 = vpack.c.b16 %v4759, %v4758
    %v5837 = vpack.c.b16 %v4761, %v4760
    %v5838 = vpack.c.b16 %v4763, %v4762
    %v5839 = vpack.c.b16 %v4765, %v4764
    %v5840 = vpack.c.b16 %v4767, %v4766
    %v5841 = vpack.c.b16 %v4769, %v4768
    %v5842 = vpack.c.b16 %v4771, %v4770
    %v5843 = vpack.c.b16 %v4773, %v4772
    %v5844 = vpack.c.b16 %v4775, %v4774
    %v5845 = vpack.c.b16 %v4777, %v4776
    %v5846 = vpack.c.b16 %v4779, %v4778
    %v5847 = vpack.c.b16 %v4781, %v4780
    %v5848 = vpack.c.b16 %v4783, %v4782
    %v5849 = vpack.c.b16 %v4785, %v4784
    %v5850 = vpack.c.b16 %v4787, %v4786
    %v5851 = vpack.c.b16 %v4789, %v4788
    %v5852 = vpack.c.b16 %v4791, %v4790
    %v5853 = vpack.c.b16 %v4793, %v4792
    %v5854 = vpack.c.b16 %v4795, %v4794
    %v5855 = vpack.c.b16 %v4797, %v4796
    %v5856 = vpack.c.b16 %v4799, %v4798
    %v5857 = vpack.c.b16 %v4801, %v4800
    %v5858 = vpack.c.b16 %v4803, %v4802
    %v5859 = vpack.c.b16 %v4805, %v4804
    %v5860 = vpack.c.b16 %v4807, %v4806
    %v5861 = vpack.c.b16 %v4809, %v4808
    %v5862 = vpack.c.b16 %v4811, %v4810
    %v5863 = vpack.c.b16 %v4813, %v4812
    %v5864 = vpack.c.b16 %v4815, %v4814
    %v5865 = vpack.c.b16 %v4817, %v4816
    %v5866 = vpack.c.b16 %v4819, %v4818
    %v5867 = vpack.c.b16 %v4821, %v4820
    %v5868 = vpack.c.b16 %v4823, %v4822
    %v5869 = vpack.c.b16 %v4825, %v4824
    %v5870 = vpack.c.b16 %v4827, %v4826
    %v5871 = vpack.c.b16 %v4829, %v4828
    %v5872 = vpack.c.b16 %v4831, %v4830
    %v5873 = vpack.c.b16 %v4833, %v4832
    %v5874 = vpack.c.b16 %v4835, %v4834
    %v5875 = vpack.c.b16 %v4837, %v4836
    %v5876 = vpack.c.b16 %v4839, %v4838
    %v5877 = vpack.c.b16 %v4841, %v4840
    %v5878 = vpack.c.b16 %v4843, %v4842
    %v5879 = vpack.c.b16 %v4845, %v4844
    %v5880 = vpack.c.b16 %v4847, %v4846
    %v5881 = vpack.c.b16 %v4849, %v4848
    %v5882 = vpack.c.b16 %v4851, %v4850
    %v5883 = vpack.c.b16 %v4853, %v4852
    %v5884 = vpack.c.b16 %v4855, %v4854
    %v5885 = vpack.c.b16 %v4857, %v4856
    %v5886 = vpack.c.b16 %v4859, %v4858
    %v5887 = vpack.c.b16 %v4861, %v4860
    %v5888 = vpack.c.b16 %v4863, %v4862
    %v5889 = vpack.c.b16 %v4865, %v4864
    %v5890 = vpack.c.b16 %v4867, %v4866
    %v5891 = vpack.c.b16 %v4869, %v4868
    %v5892 = vpack.c.b16 %v4871, %v4870
    %v5893 = vpack.c.b16 %v4873, %v4872
    %v5894 = vpack.c.b16 %v4875, %v4874
    %v5895 = vpack.c.b16 %v4877, %v4876
    %v5896 = vpack.c.b16 %v4879, %v4878
    %v5897 = vpack.c.b16 %v4881, %v4880
    %v5898 = vpack.c.b16 %v4883, %v4882
    %v5899 = vpack.c.b16 %v4885, %v4884
    %v5900 = vpack.c.b16 %v4887, %v4886
    %v5901 = vpack.c.b16 %v4889, %v4888
    %v5902 = vpack.c.b16 %v4891, %v4890
    %v5903 = vpack.c.b16 %v4893, %v4892
    %v5904 = vpack.c.b16 %v4895, %v4894
    %v5905 = vpack.c.b16 %v4897, %v4896
    %v5906 = vpack.c.b16 %v4899, %v4898
    %v5907 = vpack.c.b16 %v4901, %v4900
    %v5908 = vpack.c.b16 %v4903, %v4902
    %v5909 = vpack.c.b16 %v4905, %v4904
    %v5910 = vpack.c.b16 %v4907, %v4906
    %v5911 = vpack.c.b16 %v4909, %v4908
    %v5912 = vpack.c.b16 %v4911, %v4910
    %v5913 = vpack.c.b16 %v4913, %v4912
    %v5914 = vpack.c.b16 %v4915, %v4914
    %v5915 = vpack.c.b16 %v4917, %v4916
    %v5916 = vpack.c.b16 %v4919, %v4918
    %v5917 = vpack.c.b16 %v4921, %v4920
    %v5918 = vpack.c.b16 %v4923, %v4922
    %v5919 = vpack.c.b16 %v4925, %v4924
    %v5920 = vpack.c.b16 %v4927, %v4926
    %v5921 = vpack.c.b16 %v4929, %v4928
    %v5922 = vpack.c.b16 %v4931, %v4930
    %v5923 = vpack.c.b16 %v4933, %v4932
    %v5924 = vpack.c.b16 %v4935, %v4934
    %v5925 = vpack.c.b16 %v4937, %v4936
    %v5926 = vpack.c.b16 %v4939, %v4938
    %v5927 = vpack.c.b16 %v4941, %v4940
    %v5928 = vpack.c.b16 %v4943, %v4942
    %v5929 = vpack.c.b16 %v4945, %v4944
    %v5930 = vpack.c.b16 %v4947, %v4946
    %v5931 = vpack.c.b16 %v4949, %v4948
    %v5932 = vpack.c.b16 %v4951, %v4950
    %v5933 = vpack.c.b16 %v4953, %v4952
    %v5934 = vpack.c.b16 %v4955, %v4954
    %v5935 = vpack.c.b16 %v4957, %v4956
    %v5936 = vpack.c.b16 %v4959, %v4958
    %v5937 = vpack.c.b16 %v4961, %v4960
    %v5938 = vpack.c.b16 %v4963, %v4962
    %v5939 = vpack.c.b16 %v4965, %v4964
    %v5940 = vpack.c.b16 %v4967, %v4966
    %v5941 = vpack.c.b16 %v4969, %v4968
    %v5942 = vpack.c.b16 %v4971, %v4970
    %v5943 = vpack.c.b16 %v4973, %v4972
    %v5944 = vpack.c.b16 %v4975, %v4974
    %v5945 = vpack.c.b16 %v4977, %v4976
    %v5946 = vpack.c.b16 %v4979, %v4978
    %v5947 = vpack.c.b16 %v4981, %v4980
    %v5948 = vpack.c.b16 %v4983, %v4982
    %v5949 = vpack.c.b16 %v4985, %v4984
    %v5950 = vpack.c.b16 %v4987, %v4986
    %v5951 = vpack.c.b16 %v4989, %v4988
    %v5952 = vpack.c.b16 %v4991, %v4990
    %v5953 = vpack.c.b16 %v4993, %v4992
    %v5954 = vpack.c.b16 %v4995, %v4994
    %v5955 = vpack.c.b16 %v4997, %v4996
    %v5956 = vpack.c.b16 %v4999, %v4998
    %v5957 = vpack.c.b16 %v5001, %v5000
    %v5958 = vpack.c.b16 %v5003, %v5002
    %v5959 = vpack.c.b16 %v5005, %v5004
    %v5960 = vpack.c.b16 %v5007, %v5006
    %v5961 = vpack.c.b16 %v5009, %v5008
    %v5962 = vpack.c.b16 %v5011, %v5010
    %v5963 = vpack.c.b16 %v5013, %v5012
    %v5964 = vpack.c.b16 %v5015, %v5014
    %v5965 = vpack.c.b16 %v5017, %v5016
    %v5966 = vpack.c.b16 %v5019, %v5018
    %v5967 = vpack.c.b16 %v5021, %v5020
    %v5968 = vpack.c.b16 %v5023, %v5022
    %v5969 = vpack.c.b16 %v5025, %v5024
    %v5970 = vpack.c.b16 %v5027, %v5026
    %v5971 = vpack.c.b16 %v5029, %v5028
    %v5972 = vpack.c.b16 %v5031, %v5030
    %v5973 = vpack.c.b16 %v5033, %v5032
    %v5974 = vpack.c.b16 %v5035, %v5034
    %v5975 = vpack.c.b16 %v5037, %v5036
    %v5976 = vpack.c.b16 %v5039, %v5038
    %v5977 = vpack.c.b16 %v5041, %v5040
    %v5978 = vpack.c.b16 %v5043, %v5042
    %v5979 = vpack.c.b16 %v5045, %v5044
    %v5980 = vpack.c.b16 %v5047, %v5046
    %v5981 = vpack.c.b16 %v5049, %v5048
    %v5982 = vpack.c.b16 %v5051, %v5050
    %v5983 = vpack.c.b16 %v5053, %v5052
    %v5984 = vpack.c.b16 %v5055, %v5054
    %v5985 = vpack.c.b16 %v5057, %v5056
    %v5986 = vpack.c.b16 %v5059, %v5058
    %v5987 = vpack.c.b16 %v5061, %v5060
    %v5988 = vpack.c.b16 %v5063, %v5062
    %v5989 = vpack.c.b16 %v5065, %v5064
    %v5990 = vpack.c.b16 %v5067, %v5066
    %v5991 = vpack.c.b16 %v5069, %v5068
    %v5992 = vpack.c.b16 %v5071, %v5070
    %v5993 = vpack.c.b16 %v5073, %v5072
    %v5994 = vpack.c.b16 %v5075, %v5074
    %v5995 = vpack.c.b16 %v5077, %v5076
    %v5996 = vpack.c.b16 %v5079, %v5078
    %v5997 = vpack.c.b16 %v5081, %v5080
    %v5998 = vpack.c.b16 %v5083, %v5082
    %v5999 = vpack.c.b16 %v5085, %v5084
    %v6000 = vpack.c.b16 %v5087, %v5086
    %v6001 = vpack.c.b16 %v5089, %v5088
    %v6002 = vpack.c.b16 %v5091, %v5090
    %v6003 = vpack.c.b16 %v5093, %v5092
    %v6004 = vpack.c.b16 %v5095, %v5094
    %v6005 = vpack.c.b16 %v5097, %v5096
    %v6006 = vpack.c.b16 %v5099, %v5098
    %v6007 = vpack.c.b16 %v5101, %v5100
    %v6008 = vpack.c.b16 %v5103, %v5102
    %v6009 = vpack.c.b16 %v5105, %v5104
    %v6010 = vpack.c.b16 %v5107, %v5106
    %v6011 = vpack.c.b16 %v5109, %v5108
    %v6012 = vpack.c.b16 %v5111, %v5110
    %v6013 = vpack.c.b16 %v5113, %v5112
    %v6014 = vpack.c.b16 %v5115, %v5114
    %v6015 = vpack.c.b16 %v5117, %v5116
    %v6016 = vpack.c.b16 %v5119, %v5118
    %v6017 = vpack.c.b16 %v5121, %v5120
    %v6018 = vpack.c.b16 %v5123, %v5122
    %v6019 = vpack.c.b16 %v5125, %v5124
    %v6020 = vpack.c.b16 %v5127, %v5126
    %v6021 = vpack.c.b16 %v5129, %v5128
    %v6022 = vpack.c.b16 %v5131, %v5130
    %v6023 = vpack.c.b16 %v5133, %v5132
    %v6024 = vpack.c.b16 %v5135, %v5134
    %v6025 = vpack.c.b16 %v5137, %v5136
    %v6026 = vpack.c.b16 %v5139, %v5138
    %v6027 = vpack.c.b16 %v5141, %v5140
    %v6028 = vpack.c.b16 %v5143, %v5142
    %v6029 = vpack.c.b16 %v5145, %v5144
    %v6030 = vpack.c.b16 %v5147, %v5146
    %v6031 = vpack.c.b16 %v5149, %v5148
    %v6032 = vpack.c.b16 %v5151, %v5150
    %v6033 = vpack.c.b16 %v5153, %v5152
    %v6034 = vpack.c.b16 %v5155, %v5154
    %v6035 = vpack.c.b16 %v5157, %v5156
    %v6036 = vpack.c.b16 %v5159, %v5158
    %v6037 = vpack.c.b16 %v5161, %v5160
    %v6038 = vpack.c.b16 %v5163, %v5162
    %v6039 = vpack.c.b16 %v5165, %v5164
    %v6040 = vpack.c.b16 %v5167, %v5166
    %v6041 = vpack.c.b16 %v5169, %v5168
    %v6042 = vpack.c.b16 %v5171, %v5170
    %v6043 = vpack.c.b16 %v5173, %v5172
    %v6044 = vpack.c.b16 %v5175, %v5174
    %v6045 = vpack.c.b16 %v5177, %v5176
    %v6046 = vpack.c.b16 %v5179, %v5178
    %v6047 = vpack.c.b16 %v5181, %v5180
    %v6048 = vpack.c.b16 %v5183, %v5182
    %v6049 = vpack.c.b16 %v5185, %v5184
    %v6050 = vpack.c.b16 %v5187, %v5186
    %v6051 = vpack.c.b16 %v5189, %v5188
    %v6052 = vpack.c.b16 %v5191, %v5190
    %v6053 = vpack.c.b16 %v5193, %v5192
    %v6054 = vpack.c.b16 %v5195, %v5194
    %v6055 = vpack.c.b16 %v5197, %v5196
    %v6056 = vpack.c.b16 %v5199, %v5198
    %v6057 = vpack.c.b16 %v5201, %v5200
    %v6058 = vpack.c.b16 %v5203, %v5202
    %v6059 = vpack.c.b16 %v5205, %v5204
    %v6060 = vpack.c.b16 %v5207, %v5206
    %v6061 = vpack.c.b16 %v5209, %v5208
    %v6062 = vpack.c.b16 %v5211, %v5210
    %v6063 = vpack.c.b16 %v5213, %v5212
    %v6064 = vpack.c.b16 %v5215, %v5214
    %v6065 = vpack.c.b16 %v5217, %v5216
    %v6066 = vpack.c.b16 %v5219, %v5218
    %v6067 = vpack.c.b16 %v5221, %v5220
    %v6068 = vpack.c.b16 %v5223, %v5222
    %v6069 = vpack.c.b16 %v5225, %v5224
    %v6070 = vpack.c.b16 %v5227, %v5226
    %v6071 = vpack.c.b16 %v5229, %v5228
    %v6072 = vpack.c.b16 %v5231, %v5230
    %v6073 = vpack.c.b16 %v5233, %v5232
    %v6074 = vpack.c.b16 %v5235, %v5234
    %v6075 = vpack.c.b16 %v5237, %v5236
    %v6076 = vpack.c.b16 %v5239, %v5238
    %v6077 = vpack.c.b16 %v5241, %v5240
    %v6078 = vpack.c.b16 %v5243, %v5242
    %v6079 = vpack.c.b16 %v5245, %v5244
    %v6080 = vpack.c.b16 %v5247, %v5246
    %v6081 = vpack.c.b16 %v5249, %v5248
    %v6082 = vpack.c.b16 %v5251, %v5250
    %v6083 = vpack.c.b16 %v5253, %v5252
    %v6084 = vpack.c.b16 %v5255, %v5254
    %v6085 = vpack.c.b16 %v5257, %v5256
    %v6086 = vpack.c.b16 %v5259, %v5258
    %v6087 = vpack.c.b16 %v5261, %v5260
    %v6088 = vpack.c.b16 %v5263, %v5262
    %v6089 = vpack.c.b16 %v5265, %v5264
    %v6090 = vpack.c.b16 %v5267, %v5266
    %v6091 = vpack.c.b16 %v5269, %v5268
    %v6092 = vpack.c.b16 %v5271, %v5270
    %v6093 = vpack.c.b16 %v5273, %v5272
    %v6094 = vpack.c.b16 %v5275, %v5274
    %v6095 = vpack.c.b16 %v5277, %v5276
    %v6096 = vpack.c.b16 %v5279, %v5278
    %v6097 = vpack.c.b16 %v5281, %v5280
    %v6098 = vpack.c.b16 %v5283, %v5282
    %v6099 = vpack.c.b16 %v5285, %v5284
    %v6100 = vpack.c.b16 %v5287, %v5286
    %v6101 = vpack.c.b16 %v5289, %v5288
    %v6102 = vpack.c.b16 %v5291, %v5290
    %v6103 = vpack.c.b16 %v5293, %v5292
    %v6104 = vpack.c.b16 %v5295, %v5294
    %v6105 = vpack.c.b16 %v5297, %v5296
    %v6106 = vpack.c.b16 %v5299, %v5298
    %v6107 = vpack.c.b16 %v5301, %v5300
    %v6108 = vpack.c.b16 %v5303, %v5302
    %v6109 = vpack.c.b16 %v5305, %v5304
    %v6110 = vpack.c.b16 %v5307, %v5306
    %v6111 = vpack.c.b16 %v5309, %v5308
    %v6112 = vpack.c.b16 %v5311, %v5310
    %v6113 = vpack.c.b16 %v5313, %v5312
    %v6114 = vpack.c.b16 %v5315, %v5314
    %v6115 = vpack.c.b16 %v5317, %v5316
    %v6116 = vpack.c.b16 %v5319, %v5318
    %v6117 = vpack.c.b16 %v5321, %v5320
    %v6118 = vpack.c.b16 %v5323, %v5322
    %v6119 = vpack.c.b16 %v5325, %v5324
    %v6120 = vpack.c.b16 %v5327, %v5326
    %v6121 = vpack.c.b16 %v5329, %v5328
    %v6122 = vpack.c.b16 %v5331, %v5330
    %v6123 = vpack.c.b16 %v5333, %v5332
    %v6124 = vpack.c.b16 %v5335, %v5334
    %v6125 = vpack.c.b16 %v5337, %v5336
    %v6126 = vpack.c.b16 %v5339, %v5338
    %v6127 = vpack.c.b16 %v5341, %v5340
    %v6128 = vpack.c.b16 %v5343, %v5342
    %v6129 = vpack.c.b16 %v5345, %v5344
    %v6130 = vpack.c.b16 %v5347, %v5346
    %v6131 = vpack.c.b16 %v5349, %v5348
    %v6132 = vpack.c.b16 %v5351, %v5350
    %v6133 = vpack.c.b16 %v5353, %v5352
    %v6134 = vpack.c.b16 %v5355, %v5354
    %v6135 = vpack.c.b16 %v5357, %v5356
    %v6136 = vpack.c.b16 %v5359, %v5358
    %v6137 = vpack.c.b16 %v5361, %v5360
    %v6138 = vpack.c.b16 %v5363, %v5362
    %v6139 = vpack.c.b16 %v5365, %v5364
    %v6140 = vpack.c.b16 %v5367, %v5366
    %v6141 = vpack.c.b16 %v5369, %v5368
    %v6142 = vpack.c.b16 %v5371, %v5370
    %v6143 = vpack.c.b16 %v5373, %v5372
    %v6144 = vpack.c.b16 %v5375, %v5374
    %v6145 = vpack.c.b16 %v5377, %v5376
    %6914 = vmatprep.subr.bf16.mxu0 0
    %6915 = vmatpush1.bf16.msra.mxu0 %v5378
    %6916 = vmatprep.subr.bf16.mxu0 0
    %6917 = vmatpush1.bf16.msra.mxu0 %v5379
    %6918 = vmatprep.subr.bf16.mxu0 0
    %6919 = vmatpush1.bf16.msra.mxu0 %v5380
    %6920 = vmatprep.subr.bf16.mxu0 0
    %6921 = vmatpush1.bf16.msra.mxu0 %v5381
    %6922 = vmatprep.subr.bf16.mxu0 0
    %6923 = vmatpush1.bf16.msra.mxu0 %v5382
    %6924 = vmatprep.subr.bf16.mxu0 0
    %6925 = vmatpush1.bf16.msra.mxu0 %v5383
    %6926 = vmatprep.subr.bf16.mxu0 0
    %6927 = vmatpush1.bf16.msra.mxu0 %v5384
    %6928 = vmatprep.subr.bf16.mxu0 0
    %6929 = vmatpush1.bf16.msra.mxu0 %v5385
    %6930 = vmatprep.subr.bf16.mxu0 0
    %6931 = vmatpush1.bf16.msra.mxu0 %v5386
    %6932 = vmatprep.subr.bf16.mxu0 0
    %6933 = vmatpush1.bf16.msra.mxu0 %v5387
    %6934 = vmatprep.subr.bf16.mxu0 0
    %6935 = vmatpush1.bf16.msra.mxu0 %v5388
    %6936 = vmatprep.subr.bf16.mxu0 0
    %6937 = vmatpush1.bf16.msra.mxu0 %v5389
    %6938 = vmatprep.subr.bf16.mxu0 0
    %6939 = vmatpush1.bf16.msra.mxu0 %v5390
    %6940 = vmatprep.subr.bf16.mxu0 0
    %6941 = vmatpush1.bf16.msra.mxu0 %v5391
    %6942 = vmatprep.subr.bf16.mxu0 0
    %6943 = vmatpush1.bf16.msra.mxu0 %v5392
    %6944 = vmatprep.subr.bf16.mxu0 0
    %6945 = vmatpush1.bf16.msra.mxu0 %v5393
    %6946 = vmatprep.mubr.bf16.mxu0 %v668
    %6947 = vmatmul.mubr.bf16.gmra.mrb[0].mxu0 %v667
    %v6948 = vpop.f32.mrb[0].mxu0
    %v6949 = vadd.f32 %v2304, %v6948
    %v6950 = vpop.f32.mrb[0].mxu0
    %v6951 = vpop.f32.mrb[0].mxu0
    %v6952 = vpop.f32.mrb[0].mxu0
    %6953 = vdwg.mxu0
    %6954 = vmatprep.subr.bf16.mxu0 0
    %6955 = vmatpush1.bf16.msra.mxu0 %v5394
    %6956 = vmatprep.subr.bf16.mxu0 0
    %6957 = vmatpush1.bf16.msra.mxu0 %v5395
    %6958 = vmatprep.subr.bf16.mxu0 0
    %6959 = vmatpush1.bf16.msra.mxu0 %v5396
    %6960 = vmatprep.subr.bf16.mxu0 0
    %6961 = vmatpush1.bf16.msra.mxu0 %v5397
    %6962 = vmatprep.subr.bf16.mxu0 0
    %6963 = vmatpush1.bf16.msra.mxu0 %v5398
    %6964 = vmatprep.subr.bf16.mxu0 0
    %6965 = vmatpush1.bf16.msra.mxu0 %v5399
    %6966 = vmatprep.subr.bf16.mxu0 0
    %6967 = vmatpush1.bf16.msra.mxu0 %v5400
    %6968 = vmatprep.subr.bf16.mxu0 0
    %6969 = vmatpush1.bf16.msra.mxu0 %v5401
    %6970 = vmatprep.subr.bf16.mxu0 0
    %6971 = vmatpush1.bf16.msra.mxu0 %v5402
    %6972 = vmatprep.subr.bf16.mxu0 0
    %6973 = vmatpush1.bf16.msra.mxu0 %v5403
    %6974 = vmatprep.subr.bf16.mxu0 0
    %6975 = vmatpush1.bf16.msra.mxu0 %v5404
    %6976 = vmatprep.subr.bf16.mxu0 0
    %6977 = vmatpush1.bf16.msra.mxu0 %v5405
    %6978 = vmatprep.subr.bf16.mxu0 0
    %6979 = vmatpush1.bf16.msra.mxu0 %v5406
    %6980 = vmatprep.subr.bf16.mxu0 0
    %6981 = vmatpush1.bf16.msra.mxu0 %v5407
    %6982 = vmatprep.subr.bf16.mxu0 0
    %6983 = vmatpush1.bf16.msra.mxu0 %v5408
    %6984 = vmatprep.subr.bf16.mxu0 0
    %6985 = vmatpush1.bf16.msra.mxu0 %v5409
    %6986 = vmatprep.mubr.bf16.mxu0 %v670
    %6987 = vmatmul.mubr.bf16.gmra.mrb[0].mxu0 %v669
    %v6988 = vpop.f32.mrb[0].mxu0
    %v6989 = vadd.f32 %v6949, %v6988
    %v6990 = vpop.f32.mrb[0].mxu0
    %v6991 = vpop.f32.mrb[0].mxu0
    %v6992 = vpop.f32.mrb[0].mxu0
    %6993 = vdwg.mxu0
    %6994 = vmatprep.subr.bf16.mxu0 0
    %6995 = vmatpush1.bf16.msra.mxu0 %v5410
    %6996 = vmatprep.subr.bf16.mxu0 0
    %6997 = vmatpush1.bf16.msra.mxu0 %v5411
    %6998 = vmatprep.subr.bf16.mxu0 0
    %6999 = vmatpush1.bf16.msra.mxu0 %v5412
    %7000 = vmatprep.subr.bf16.mxu0 0
    %7001 = vmatpush1.bf16.msra.mxu0 %v5413
    %7002 = vmatprep.subr.bf16.mxu0 0
    %7003 = vmatpush1.bf16.msra.mxu0 %v5414
    %7004 = vmatprep.subr.bf16.mxu0 0
    %7005 = vmatpush1.bf16.msra.mxu0 %v5415
    %7006 = vmatprep.subr.bf16.mxu0 0
    %7007 = vmatpush1.bf16.msra.mxu0 %v5416
    %7008 = vmatprep.subr.bf16.mxu0 0
    %7009 = vmatpush1.bf16.msra.mxu0 %v5417
    %7010 = vmatprep.subr.bf16.mxu0 0
    %7011 = vmatpush1.bf16.msra.mxu0 %v5418
    %7012 = vmatprep.subr.bf16.mxu0 0
    %7013 = vmatpush1.bf16.msra.mxu0 %v5419
    %7014 = vmatprep.subr.bf16.mxu0 0
    %7015 = vmatpush1.bf16.msra.mxu0 %v5420
    %7016 = vmatprep.subr.bf16.mxu0 0
    %7017 = vmatpush1.bf16.msra.mxu0 %v5421
    %7018 = vmatprep.subr.bf16.mxu0 0
    %7019 = vmatpush1.bf16.msra.mxu0 %v5422
    %7020 = vmatprep.subr.bf16.mxu0 0
    %7021 = vmatpush1.bf16.msra.mxu0 %v5423
    %7022 = vmatprep.subr.bf16.mxu0 0
    %7023 = vmatpush1.bf16.msra.mxu0 %v5424
    %7024 = vmatprep.subr.bf16.mxu0 0
    %7025 = vmatpush1.bf16.msra.mxu0 %v5425
    %7026 = vmatprep.mubr.bf16.mxu0 %v672
    %7027 = vmatmul.mubr.bf16.gmra.mrb[0].mxu0 %v671
    %v7028 = vpop.f32.mrb[0].mxu0
    %v7029 = vadd.f32 %v6989, %v7028
    %v7030 = vpop.f32.mrb[0].mxu0
    %v7031 = vpop.f32.mrb[0].mxu0
    %v7032 = vpop.f32.mrb[0].mxu0
    %7033 = vdwg.mxu0
    %7034 = vmatprep.subr.bf16.mxu0 0
    %7035 = vmatpush1.bf16.msra.mxu0 %v5426
    %7036 = vmatprep.subr.bf16.mxu0 0
    %7037 = vmatpush1.bf16.msra.mxu0 %v5427
    %7038 = vmatprep.subr.bf16.mxu0 0
    %7039 = vmatpush1.bf16.msra.mxu0 %v5428
    %7040 = vmatprep.subr.bf16.mxu0 0
    %7041 = vmatpush1.bf16.msra.mxu0 %v5429
    %7042 = vmatprep.subr.bf16.mxu0 0
    %7043 = vmatpush1.bf16.msra.mxu0 %v5430
    %7044 = vmatprep.subr.bf16.mxu0 0
    %7045 = vmatpush1.bf16.msra.mxu0 %v5431
    %7046 = vmatprep.subr.bf16.mxu0 0
    %7047 = vmatpush1.bf16.msra.mxu0 %v5432
    %7048 = vmatprep.subr.bf16.mxu0 0
    %7049 = vmatpush1.bf16.msra.mxu0 %v5433
    %7050 = vmatprep.subr.bf16.mxu0 0
    %7051 = vmatpush1.bf16.msra.mxu0 %v5434
    %7052 = vmatprep.subr.bf16.mxu0 0
    %7053 = vmatpush1.bf16.msra.mxu0 %v5435
    %7054 = vmatprep.subr.bf16.mxu0 0
    %7055 = vmatpush1.bf16.msra.mxu0 %v5436
    %7056 = vmatprep.subr.bf16.mxu0 0
    %7057 = vmatpush1.bf16.msra.mxu0 %v5437
    %7058 = vmatprep.subr.bf16.mxu0 0
    %7059 = vmatpush1.bf16.msra.mxu0 %v5438
    %7060 = vmatprep.subr.bf16.mxu0 0
    %7061 = vmatpush1.bf16.msra.mxu0 %v5439
    %7062 = vmatprep.subr.bf16.mxu0 0
    %7063 = vmatpush1.bf16.msra.mxu0 %v5440
    %7064 = vmatprep.subr.bf16.mxu0 0
    %7065 = vmatpush1.bf16.msra.mxu0 %v5441
    %7066 = vmatprep.mubr.bf16.mxu0 %v674
    %7067 = vmatmul.mubr.bf16.gmra.mrb[0].mxu0 %v673
    %v7068 = vpop.f32.mrb[0].mxu0
    %v7069 = vadd.f32 %v7029, %v7068
    %v7070 = vpop.f32.mrb[0].mxu0
    %v7071 = vpop.f32.mrb[0].mxu0
    %v7072 = vpop.f32.mrb[0].mxu0
    %7073 = vdwg.mxu0
    %7074 = vmatprep.subr.bf16.mxu0 0
    %7075 = vmatpush1.bf16.msra.mxu0 %v5442
    %7076 = vmatprep.subr.bf16.mxu0 0
    %7077 = vmatpush1.bf16.msra.mxu0 %v5443
    %7078 = vmatprep.subr.bf16.mxu0 0
    %7079 = vmatpush1.bf16.msra.mxu0 %v5444
    %7080 = vmatprep.subr.bf16.mxu0 0
    %7081 = vmatpush1.bf16.msra.mxu0 %v5445
    %7082 = vmatprep.subr.bf16.mxu0 0
    %7083 = vmatpush1.bf16.msra.mxu0 %v5446
    %7084 = vmatprep.subr.bf16.mxu0 0
    %7085 = vmatpush1.bf16.msra.mxu0 %v5447
    %7086 = vmatprep.subr.bf16.mxu0 0
    %7087 = vmatpush1.bf16.msra.mxu0 %v5448
    %7088 = vmatprep.subr.bf16.mxu0 0
    %7089 = vmatpush1.bf16.msra.mxu0 %v5449
    %7090 = vmatprep.subr.bf16.mxu0 0
    %7091 = vmatpush1.bf16.msra.mxu0 %v5450
    %7092 = vmatprep.subr.bf16.mxu0 0
    %7093 = vmatpush1.bf16.msra.mxu0 %v5451
    %7094 = vmatprep.subr.bf16.mxu0 0
    %7095 = vmatpush1.bf16.msra.mxu0 %v5452
    %7096 = vmatprep.subr.bf16.mxu0 0
    %7097 = vmatpush1.bf16.msra.mxu0 %v5453
    %7098 = vmatprep.subr.bf16.mxu0 0
    %7099 = vmatpush1.bf16.msra.mxu0 %v5454
    %7100 = vmatprep.subr.bf16.mxu0 0
    %7101 = vmatpush1.bf16.msra.mxu0 %v5455
    %7102 = vmatprep.subr.bf16.mxu0 0
    %7103 = vmatpush1.bf16.msra.mxu0 %v5456
    %7104 = vmatprep.subr.bf16.mxu0 0
    %7105 = vmatpush1.bf16.msra.mxu0 %v5457
    %7106 = vmatprep.mubr.bf16.mxu0 %v676
    %7107 = vmatmul.mubr.bf16.gmra.mrb[0].mxu0 %v675
    %v7108 = vpop.f32.mrb[0].mxu0
    %v7109 = vadd.f32 %v7069, %v7108
    %v7110 = vpop.f32.mrb[0].mxu0
    %v7111 = vpop.f32.mrb[0].mxu0
    %v7112 = vpop.f32.mrb[0].mxu0
    %7113 = vdwg.mxu0
    %7114 = vmatprep.subr.bf16.mxu0 0
    %7115 = vmatpush1.bf16.msra.mxu0 %v5458
    %7116 = vmatprep.subr.bf16.mxu0 0
    %7117 = vmatpush1.bf16.msra.mxu0 %v5459
    %7118 = vmatprep.subr.bf16.mxu0 0
    %7119 = vmatpush1.bf16.msra.mxu0 %v5460
    %7120 = vmatprep.subr.bf16.mxu0 0
    %7121 = vmatpush1.bf16.msra.mxu0 %v5461
    %7122 = vmatprep.subr.bf16.mxu0 0
    %7123 = vmatpush1.bf16.msra.mxu0 %v5462
    %7124 = vmatprep.subr.bf16.mxu0 0
    %7125 = vmatpush1.bf16.msra.mxu0 %v5463
    %7126 = vmatprep.subr.bf16.mxu0 0
    %7127 = vmatpush1.bf16.msra.mxu0 %v5464
    %7128 = vmatprep.subr.bf16.mxu0 0
    %7129 = vmatpush1.bf16.msra.mxu0 %v5465
    %7130 = vmatprep.subr.bf16.mxu0 0
    %7131 = vmatpush1.bf16.msra.mxu0 %v5466
    %7132 = vmatprep.subr.bf16.mxu0 0
    %7133 = vmatpush1.bf16.msra.mxu0 %v5467
    %7134 = vmatprep.subr.bf16.mxu0 0
    %7135 = vmatpush1.bf16.msra.mxu0 %v5468
    %7136 = vmatprep.subr.bf16.mxu0 0
    %7137 = vmatpush1.bf16.msra.mxu0 %v5469
    %7138 = vmatprep.subr.bf16.mxu0 0
    %7139 = vmatpush1.bf16.msra.mxu0 %v5470
    %7140 = vmatprep.subr.bf16.mxu0 0
    %7141 = vmatpush1.bf16.msra.mxu0 %v5471
    %7142 = vmatprep.subr.bf16.mxu0 0
    %7143 = vmatpush1.bf16.msra.mxu0 %v5472
    %7144 = vmatprep.subr.bf16.mxu0 0
    %7145 = vmatpush1.bf16.msra.mxu0 %v5473
    %7146 = vmatprep.mubr.bf16.mxu0 %v678
    %7147 = vmatmul.mubr.bf16.gmra.mrb[0].mxu0 %v677
    %v7148 = vpop.f32.mrb[0].mxu0
    %v7149 = vadd.f32 %v7109, %v7148
    %v7150 = vpop.f32.mrb[0].mxu0
    %v7151 = vpop.f32.mrb[0].mxu0
    %v7152 = vpop.f32.mrb[0].mxu0
    %7153 = vdwg.mxu0
    %7154 = vmatprep.subr.bf16.mxu0 0
    %7155 = vmatpush1.bf16.msra.mxu0 %v5474
    %7156 = vmatprep.subr.bf16.mxu0 0
    %7157 = vmatpush1.bf16.msra.mxu0 %v5475
    %7158 = vmatprep.subr.bf16.mxu0 0
    %7159 = vmatpush1.bf16.msra.mxu0 %v5476
    %7160 = vmatprep.subr.bf16.mxu0 0
    %7161 = vmatpush1.bf16.msra.mxu0 %v5477
    %7162 = vmatprep.subr.bf16.mxu0 0
    %7163 = vmatpush1.bf16.msra.mxu0 %v5478
    %7164 = vmatprep.subr.bf16.mxu0 0
    %7165 = vmatpush1.bf16.msra.mxu0 %v5479
    %7166 = vmatprep.subr.bf16.mxu0 0
    %7167 = vmatpush1.bf16.msra.mxu0 %v5480
    %7168 = vmatprep.subr.bf16.mxu0 0
    %7169 = vmatpush1.bf16.msra.mxu0 %v5481
    %7170 = vmatprep.subr.bf16.mxu0 0
    %7171 = vmatpush1.bf16.msra.mxu0 %v5482
    %7172 = vmatprep.subr.bf16.mxu0 0
    %7173 = vmatpush1.bf16.msra.mxu0 %v5483
    %7174 = vmatprep.subr.bf16.mxu0 0
    %7175 = vmatpush1.bf16.msra.mxu0 %v5484
    %7176 = vmatprep.subr.bf16.mxu0 0
    %7177 = vmatpush1.bf16.msra.mxu0 %v5485
    %7178 = vmatprep.subr.bf16.mxu0 0
    %7179 = vmatpush1.bf16.msra.mxu0 %v5486
    %7180 = vmatprep.subr.bf16.mxu0 0
    %7181 = vmatpush1.bf16.msra.mxu0 %v5487
    %7182 = vmatprep.subr.bf16.mxu0 0
    %7183 = vmatpush1.bf16.msra.mxu0 %v5488
    %7184 = vmatprep.subr.bf16.mxu0 0
    %7185 = vmatpush1.bf16.msra.mxu0 %v5489
    %7186 = vmatprep.mubr.bf16.mxu0 %v680
    %7187 = vmatmul.mubr.bf16.gmra.mrb[0].mxu0 %v679
    %v7188 = vpop.f32.mrb[0].mxu0
    %v7189 = vadd.f32 %v7149, %v7188
    %v7190 = vpop.f32.mrb[0].mxu0
    %v7191 = vpop.f32.mrb[0].mxu0
    %v7192 = vpop.f32.mrb[0].mxu0
    %7193 = vdwg.mxu0
    %7194 = vmatprep.subr.bf16.mxu0 0
    %7195 = vmatpush1.bf16.msra.mxu0 %v5490
    %7196 = vmatprep.subr.bf16.mxu0 0
    %7197 = vmatpush1.bf16.msra.mxu0 %v5491
    %7198 = vmatprep.subr.bf16.mxu0 0
    %7199 = vmatpush1.bf16.msra.mxu0 %v5492
    %7200 = vmatprep.subr.bf16.mxu0 0
    %7201 = vmatpush1.bf16.msra.mxu0 %v5493
    %7202 = vmatprep.subr.bf16.mxu0 0
    %7203 = vmatpush1.bf16.msra.mxu0 %v5494
    %7204 = vmatprep.subr.bf16.mxu0 0
    %7205 = vmatpush1.bf16.msra.mxu0 %v5495
    %7206 = vmatprep.subr.bf16.mxu0 0
    %7207 = vmatpush1.bf16.msra.mxu0 %v5496
    %7208 = vmatprep.subr.bf16.mxu0 0
    %7209 = vmatpush1.bf16.msra.mxu0 %v5497
    %7210 = vmatprep.subr.bf16.mxu0 0
    %7211 = vmatpush1.bf16.msra.mxu0 %v5498
    %7212 = vmatprep.subr.bf16.mxu0 0
    %7213 = vmatpush1.bf16.msra.mxu0 %v5499
    %7214 = vmatprep.subr.bf16.mxu0 0
    %7215 = vmatpush1.bf16.msra.mxu0 %v5500
    %7216 = vmatprep.subr.bf16.mxu0 0
    %7217 = vmatpush1.bf16.msra.mxu0 %v5501
    %7218 = vmatprep.subr.bf16.mxu0 0
    %7219 = vmatpush1.bf16.msra.mxu0 %v5502
    %7220 = vmatprep.subr.bf16.mxu0 0
    %7221 = vmatpush1.bf16.msra.mxu0 %v5503
    %7222 = vmatprep.subr.bf16.mxu0 0
    %7223 = vmatpush1.bf16.msra.mxu0 %v5504
    %7224 = vmatprep.subr.bf16.mxu0 0
    %7225 = vmatpush1.bf16.msra.mxu0 %v5505
    %7226 = vmatprep.mubr.bf16.mxu0 %v682
    %7227 = vmatmul.mubr.bf16.gmra.mrb[0].mxu0 %v681
    %v7228 = vpop.f32.mrb[0].mxu0
    %v7229 = vadd.f32 %v7189, %v7228
    %v7230 = vpop.f32.mrb[0].mxu0
    %v7231 = vpop.f32.mrb[0].mxu0
    %v7232 = vpop.f32.mrb[0].mxu0
    %7233 = vdwg.mxu0
    %7234 = vmatprep.subr.bf16.mxu0 0
    %7235 = vmatpush1.bf16.msra.mxu0 %v5506
    %7236 = vmatprep.subr.bf16.mxu0 0
    %7237 = vmatpush1.bf16.msra.mxu0 %v5507
    %7238 = vmatprep.subr.bf16.mxu0 0
    %7239 = vmatpush1.bf16.msra.mxu0 %v5508
    %7240 = vmatprep.subr.bf16.mxu0 0
    %7241 = vmatpush1.bf16.msra.mxu0 %v5509
    %7242 = vmatprep.subr.bf16.mxu0 0
    %7243 = vmatpush1.bf16.msra.mxu0 %v5510
    %7244 = vmatprep.subr.bf16.mxu0 0
    %7245 = vmatpush1.bf16.msra.mxu0 %v5511
    %7246 = vmatprep.subr.bf16.mxu0 0
    %7247 = vmatpush1.bf16.msra.mxu0 %v5512
    %7248 = vmatprep.subr.bf16.mxu0 0
    %7249 = vmatpush1.bf16.msra.mxu0 %v5513
    %7250 = vmatprep.subr.bf16.mxu0 0
    %7251 = vmatpush1.bf16.msra.mxu0 %v5514
    %7252 = vmatprep.subr.bf16.mxu0 0
    %7253 = vmatpush1.bf16.msra.mxu0 %v5515
    %7254 = vmatprep.subr.bf16.mxu0 0
    %7255 = vmatpush1.bf16.msra.mxu0 %v5516
    %7256 = vmatprep.subr.bf16.mxu0 0
    %7257 = vmatpush1.bf16.msra.mxu0 %v5517
    %7258 = vmatprep.subr.bf16.mxu0 0
    %7259 = vmatpush1.bf16.msra.mxu0 %v5518
    %7260 = vmatprep.subr.bf16.mxu0 0
    %7261 = vmatpush1.bf16.msra.mxu0 %v5519
    %7262 = vmatprep.subr.bf16.mxu0 0
    %7263 = vmatpush1.bf16.msra.mxu0 %v5520
    %7264 = vmatprep.subr.bf16.mxu0 0
    %7265 = vmatpush1.bf16.msra.mxu0 %v5521
    %7266 = vmatprep.mubr.bf16.mxu0 %v684
    %7267 = vmatmul.mubr.bf16.gmra.mrb[0].mxu0 %v683
    %v7268 = vpop.f32.mrb[0].mxu0
    %v7269 = vadd.f32 %v7229, %v7268
    %v7270 = vpop.f32.mrb[0].mxu0
    %v7271 = vpop.f32.mrb[0].mxu0
    %v7272 = vpop.f32.mrb[0].mxu0
    %7273 = vdwg.mxu0
    %7274 = vmatprep.subr.bf16.mxu0 0
    %7275 = vmatpush1.bf16.msra.mxu0 %v5522
    %7276 = vmatprep.subr.bf16.mxu0 0
    %7277 = vmatpush1.bf16.msra.mxu0 %v5523
    %7278 = vmatprep.subr.bf16.mxu0 0
    %7279 = vmatpush1.bf16.msra.mxu0 %v5524
    %7280 = vmatprep.subr.bf16.mxu0 0
    %7281 = vmatpush1.bf16.msra.mxu0 %v5525
    %7282 = vmatprep.subr.bf16.mxu0 0
    %7283 = vmatpush1.bf16.msra.mxu0 %v5526
    %7284 = vmatprep.subr.bf16.mxu0 0
    %7285 = vmatpush1.bf16.msra.mxu0 %v5527
    %7286 = vmatprep.subr.bf16.mxu0 0
    %7287 = vmatpush1.bf16.msra.mxu0 %v5528
    %7288 = vmatprep.subr.bf16.mxu0 0
    %7289 = vmatpush1.bf16.msra.mxu0 %v5529
    %7290 = vmatprep.subr.bf16.mxu0 0
    %7291 = vmatpush1.bf16.msra.mxu0 %v5530
    %7292 = vmatprep.subr.bf16.mxu0 0
    %7293 = vmatpush1.bf16.msra.mxu0 %v5531
    %7294 = vmatprep.subr.bf16.mxu0 0
    %7295 = vmatpush1.bf16.msra.mxu0 %v5532
    %7296 = vmatprep.subr.bf16.mxu0 0
    %7297 = vmatpush1.bf16.msra.mxu0 %v5533
    %7298 = vmatprep.subr.bf16.mxu0 0
    %7299 = vmatpush1.bf16.msra.mxu0 %v5534
    %7300 = vmatprep.subr.bf16.mxu0 0
    %7301 = vmatpush1.bf16.msra.mxu0 %v5535
    %7302 = vmatprep.subr.bf16.mxu0 0
    %7303 = vmatpush1.bf16.msra.mxu0 %v5536
    %7304 = vmatprep.subr.bf16.mxu0 0
    %7305 = vmatpush1.bf16.msra.mxu0 %v5537
    %7306 = vmatprep.mubr.bf16.mxu0 %v686
    %7307 = vmatmul.mubr.bf16.gmra.mrb[0].mxu0 %v685
    %v7308 = vpop.f32.mrb[0].mxu0
    %v7309 = vadd.f32 %v7269, %v7308
    %v7310 = vpop.f32.mrb[0].mxu0
    %v7311 = vpop.f32.mrb[0].mxu0
    %v7312 = vpop.f32.mrb[0].mxu0
    %7313 = vdwg.mxu0
    %7314 = vmatprep.subr.bf16.mxu0 0
    %7315 = vmatpush1.bf16.msra.mxu0 %v5538
    %7316 = vmatprep.subr.bf16.mxu0 0
    %7317 = vmatpush1.bf16.msra.mxu0 %v5539
    %7318 = vmatprep.subr.bf16.mxu0 0
    %7319 = vmatpush1.bf16.msra.mxu0 %v5540
    %7320 = vmatprep.subr.bf16.mxu0 0
    %7321 = vmatpush1.bf16.msra.mxu0 %v5541
    %7322 = vmatprep.subr.bf16.mxu0 0
    %7323 = vmatpush1.bf16.msra.mxu0 %v5542
    %7324 = vmatprep.subr.bf16.mxu0 0
    %7325 = vmatpush1.bf16.msra.mxu0 %v5543
    %7326 = vmatprep.subr.bf16.mxu0 0
    %7327 = vmatpush1.bf16.msra.mxu0 %v5544
    %7328 = vmatprep.subr.bf16.mxu0 0
    %7329 = vmatpush1.bf16.msra.mxu0 %v5545
    %7330 = vmatprep.subr.bf16.mxu0 0
    %7331 = vmatpush1.bf16.msra.mxu0 %v5546
    %7332 = vmatprep.subr.bf16.mxu0 0
    %7333 = vmatpush1.bf16.msra.mxu0 %v5547
    %7334 = vmatprep.subr.bf16.mxu0 0
    %7335 = vmatpush1.bf16.msra.mxu0 %v5548
    %7336 = vmatprep.subr.bf16.mxu0 0
    %7337 = vmatpush1.bf16.msra.mxu0 %v5549
    %7338 = vmatprep.subr.bf16.mxu0 0
    %7339 = vmatpush1.bf16.msra.mxu0 %v5550
    %7340 = vmatprep.subr.bf16.mxu0 0
    %7341 = vmatpush1.bf16.msra.mxu0 %v5551
    %7342 = vmatprep.subr.bf16.mxu0 0
    %7343 = vmatpush1.bf16.msra.mxu0 %v5552
    %7344 = vmatprep.subr.bf16.mxu0 0
    %7345 = vmatpush1.bf16.msra.mxu0 %v5553
    %7346 = vmatprep.mubr.bf16.mxu0 %v688
    %7347 = vmatmul.mubr.bf16.gmra.mrb[0].mxu0 %v687
    %v7348 = vpop.f32.mrb[0].mxu0
    %v7349 = vadd.f32 %v7309, %v7348
    %v7350 = vpop.f32.mrb[0].mxu0
    %v7351 = vpop.f32.mrb[0].mxu0
    %v7352 = vpop.f32.mrb[0].mxu0
    %7353 = vdwg.mxu0
    %7354 = vmatprep.subr.bf16.mxu0 0
    %7355 = vmatpush1.bf16.msra.mxu0 %v5554
    %7356 = vmatprep.subr.bf16.mxu0 0
    %7357 = vmatpush1.bf16.msra.mxu0 %v5555
    %7358 = vmatprep.subr.bf16.mxu0 0
    %7359 = vmatpush1.bf16.msra.mxu0 %v5556
    %7360 = vmatprep.subr.bf16.mxu0 0
    %7361 = vmatpush1.bf16.msra.mxu0 %v5557
    %7362 = vmatprep.subr.bf16.mxu0 0
    %7363 = vmatpush1.bf16.msra.mxu0 %v5558
    %7364 = vmatprep.subr.bf16.mxu0 0
    %7365 = vmatpush1.bf16.msra.mxu0 %v5559
    %7366 = vmatprep.subr.bf16.mxu0 0
    %7367 = vmatpush1.bf16.msra.mxu0 %v5560
    %7368 = vmatprep.subr.bf16.mxu0 0
    %7369 = vmatpush1.bf16.msra.mxu0 %v5561
    %7370 = vmatprep.subr.bf16.mxu0 0
    %7371 = vmatpush1.bf16.msra.mxu0 %v5562
    %7372 = vmatprep.subr.bf16.mxu0 0
    %7373 = vmatpush1.bf16.msra.mxu0 %v5563
    %7374 = vmatprep.subr.bf16.mxu0 0
    %7375 = vmatpush1.bf16.msra.mxu0 %v5564
    %7376 = vmatprep.subr.bf16.mxu0 0
    %7377 = vmatpush1.bf16.msra.mxu0 %v5565
    %7378 = vmatprep.subr.bf16.mxu0 0
    %7379 = vmatpush1.bf16.msra.mxu0 %v5566
    %7380 = vmatprep.subr.bf16.mxu0 0
    %7381 = vmatpush1.bf16.msra.mxu0 %v5567
    %7382 = vmatprep.subr.bf16.mxu0 0
    %7383 = vmatpush1.bf16.msra.mxu0 %v5568
    %7384 = vmatprep.subr.bf16.mxu0 0
    %7385 = vmatpush1.bf16.msra.mxu0 %v5569
    %7386 = vmatprep.mubr.bf16.mxu0 %v690
    %7387 = vmatmul.mubr.bf16.gmra.mrb[0].mxu0 %v689
    %v7388 = vpop.f32.mrb[0].mxu0
    %v7389 = vadd.f32 %v7349, %v7388
    %v7390 = vpop.f32.mrb[0].mxu0
    %v7391 = vpop.f32.mrb[0].mxu0
    %v7392 = vpop.f32.mrb[0].mxu0
    %7393 = vdwg.mxu0
    %7394 = vmatprep.subr.bf16.mxu0 0
    %7395 = vmatpush1.bf16.msra.mxu0 %v5570
    %7396 = vmatprep.subr.bf16.mxu0 0
    %7397 = vmatpush1.bf16.msra.mxu0 %v5571
    %7398 = vmatprep.subr.bf16.mxu0 0
    %7399 = vmatpush1.bf16.msra.mxu0 %v5572
    %7400 = vmatprep.subr.bf16.mxu0 0
    %7401 = vmatpush1.bf16.msra.mxu0 %v5573
    %7402 = vmatprep.subr.bf16.mxu0 0
    %7403 = vmatpush1.bf16.msra.mxu0 %v5574
    %7404 = vmatprep.subr.bf16.mxu0 0
    %7405 = vmatpush1.bf16.msra.mxu0 %v5575
    %7406 = vmatprep.subr.bf16.mxu0 0
    %7407 = vmatpush1.bf16.msra.mxu0 %v5576
    %7408 = vmatprep.subr.bf16.mxu0 0
    %7409 = vmatpush1.bf16.msra.mxu0 %v5577
    %7410 = vmatprep.subr.bf16.mxu0 0
    %7411 = vmatpush1.bf16.msra.mxu0 %v5578
    %7412 = vmatprep.subr.bf16.mxu0 0
    %7413 = vmatpush1.bf16.msra.mxu0 %v5579
    %7414 = vmatprep.subr.bf16.mxu0 0
    %7415 = vmatpush1.bf16.msra.mxu0 %v5580
    %7416 = vmatprep.subr.bf16.mxu0 0
    %7417 = vmatpush1.bf16.msra.mxu0 %v5581
    %7418 = vmatprep.subr.bf16.mxu0 0
    %7419 = vmatpush1.bf16.msra.mxu0 %v5582
    %7420 = vmatprep.subr.bf16.mxu0 0
    %7421 = vmatpush1.bf16.msra.mxu0 %v5583
    %7422 = vmatprep.subr.bf16.mxu0 0
    %7423 = vmatpush1.bf16.msra.mxu0 %v5584
    %7424 = vmatprep.subr.bf16.mxu0 0
    %7425 = vmatpush1.bf16.msra.mxu0 %v5585
    %7426 = vmatprep.mubr.bf16.mxu0 %v692
    %7427 = vmatmul.mubr.bf16.gmra.mrb[0].mxu0 %v691
    %v7428 = vpop.f32.mrb[0].mxu0
    %v7429 = vadd.f32 %v7389, %v7428
    %v7430 = vpop.f32.mrb[0].mxu0
    %v7431 = vpop.f32.mrb[0].mxu0
    %v7432 = vpop.f32.mrb[0].mxu0
    %7433 = vdwg.mxu0
    %7434 = vmatprep.subr.bf16.mxu0 0
    %7435 = vmatpush1.bf16.msra.mxu0 %v5586
    %7436 = vmatprep.subr.bf16.mxu0 0
    %7437 = vmatpush1.bf16.msra.mxu0 %v5587
    %7438 = vmatprep.subr.bf16.mxu0 0
    %7439 = vmatpush1.bf16.msra.mxu0 %v5588
    %7440 = vmatprep.subr.bf16.mxu0 0
    %7441 = vmatpush1.bf16.msra.mxu0 %v5589
    %7442 = vmatprep.subr.bf16.mxu0 0
    %7443 = vmatpush1.bf16.msra.mxu0 %v5590
    %7444 = vmatprep.subr.bf16.mxu0 0
    %7445 = vmatpush1.bf16.msra.mxu0 %v5591
    %7446 = vmatprep.subr.bf16.mxu0 0
    %7447 = vmatpush1.bf16.msra.mxu0 %v5592
    %7448 = vmatprep.subr.bf16.mxu0 0
    %7449 = vmatpush1.bf16.msra.mxu0 %v5593
    %7450 = vmatprep.subr.bf16.mxu0 0
    %7451 = vmatpush1.bf16.msra.mxu0 %v5594
    %7452 = vmatprep.subr.bf16.mxu0 0
    %7453 = vmatpush1.bf16.msra.mxu0 %v5595
    %7454 = vmatprep.subr.bf16.mxu0 0
    %7455 = vmatpush1.bf16.msra.mxu0 %v5596
    %7456 = vmatprep.subr.bf16.mxu0 0
    %7457 = vmatpush1.bf16.msra.mxu0 %v5597
    %7458 = vmatprep.subr.bf16.mxu0 0
    %7459 = vmatpush1.bf16.msra.mxu0 %v5598
    %7460 = vmatprep.subr.bf16.mxu0 0
    %7461 = vmatpush1.bf16.msra.mxu0 %v5599
    %7462 = vmatprep.subr.bf16.mxu0 0
    %7463 = vmatpush1.bf16.msra.mxu0 %v5600
    %7464 = vmatprep.subr.bf16.mxu0 0
    %7465 = vmatpush1.bf16.msra.mxu0 %v5601
    %7466 = vmatprep.mubr.bf16.mxu0 %v694
    %7467 = vmatmul.mubr.bf16.gmra.mrb[0].mxu0 %v693
    %v7468 = vpop.f32.mrb[0].mxu0
    %v7469 = vadd.f32 %v7429, %v7468
    %v7470 = vpop.f32.mrb[0].mxu0
    %v7471 = vpop.f32.mrb[0].mxu0
    %v7472 = vpop.f32.mrb[0].mxu0
    %7473 = vdwg.mxu0
    %7474 = vmatprep.subr.bf16.mxu0 0
    %7475 = vmatpush1.bf16.msra.mxu0 %v5602
    %7476 = vmatprep.subr.bf16.mxu0 0
    %7477 = vmatpush1.bf16.msra.mxu0 %v5603
    %7478 = vmatprep.subr.bf16.mxu0 0
    %7479 = vmatpush1.bf16.msra.mxu0 %v5604
    %7480 = vmatprep.subr.bf16.mxu0 0
    %7481 = vmatpush1.bf16.msra.mxu0 %v5605
    %7482 = vmatprep.subr.bf16.mxu0 0
    %7483 = vmatpush1.bf16.msra.mxu0 %v5606
    %7484 = vmatprep.subr.bf16.mxu0 0
    %7485 = vmatpush1.bf16.msra.mxu0 %v5607
    %7486 = vmatprep.subr.bf16.mxu0 0
    %7487 = vmatpush1.bf16.msra.mxu0 %v5608
    %7488 = vmatprep.subr.bf16.mxu0 0
    %7489 = vmatpush1.bf16.msra.mxu0 %v5609
    %7490 = vmatprep.subr.bf16.mxu0 0
    %7491 = vmatpush1.bf16.msra.mxu0 %v5610
    %7492 = vmatprep.subr.bf16.mxu0 0
    %7493 = vmatpush1.bf16.msra.mxu0 %v5611
    %7494 = vmatprep.subr.bf16.mxu0 0
    %7495 = vmatpush1.bf16.msra.mxu0 %v5612
    %7496 = vmatprep.subr.bf16.mxu0 0
    %7497 = vmatpush1.bf16.msra.mxu0 %v5613
    %7498 = vmatprep.subr.bf16.mxu0 0
    %7499 = vmatpush1.bf16.msra.mxu0 %v5614
    %7500 = vmatprep.subr.bf16.mxu0 0
    %7501 = vmatpush1.bf16.msra.mxu0 %v5615
    %7502 = vmatprep.subr.bf16.mxu0 0
    %7503 = vmatpush1.bf16.msra.mxu0 %v5616
    %7504 = vmatprep.subr.bf16.mxu0 0
    %7505 = vmatpush1.bf16.msra.mxu0 %v5617
    %7506 = vmatprep.mubr.bf16.mxu0 %v696
    %7507 = vmatmul.mubr.bf16.gmra.mrb[0].mxu0 %v695
    %v7508 = vpop.f32.mrb[0].mxu0
    %v7509 = vadd.f32 %v7469, %v7508
    %v7510 = vpop.f32.mrb[0].mxu0
    %v7511 = vpop.f32.mrb[0].mxu0
    %v7512 = vpop.f32.mrb[0].mxu0
    %7513 = vdwg.mxu0
    %7514 = vmatprep.subr.bf16.mxu0 0
    %7515 = vmatpush1.bf16.msra.mxu0 %v5618
    %7516 = vmatprep.subr.bf16.mxu0 0
    %7517 = vmatpush1.bf16.msra.mxu0 %v5619
    %7518 = vmatprep.subr.bf16.mxu0 0
    %7519 = vmatpush1.bf16.msra.mxu0 %v5620
    %7520 = vmatprep.subr.bf16.mxu0 0
    %7521 = vmatpush1.bf16.msra.mxu0 %v5621
    %7522 = vmatprep.subr.bf16.mxu0 0
    %7523 = vmatpush1.bf16.msra.mxu0 %v5622
    %7524 = vmatprep.subr.bf16.mxu0 0
    %7525 = vmatpush1.bf16.msra.mxu0 %v5623
    %7526 = vmatprep.subr.bf16.mxu0 0
    %7527 = vmatpush1.bf16.msra.mxu0 %v5624
    %7528 = vmatprep.subr.bf16.mxu0 0
    %7529 = vmatpush1.bf16.msra.mxu0 %v5625
    %7530 = vmatprep.subr.bf16.mxu0 0
    %7531 = vmatpush1.bf16.msra.mxu0 %v5626
    %7532 = vmatprep.subr.bf16.mxu0 0
    %7533 = vmatpush1.bf16.msra.mxu0 %v5627
    %7534 = vmatprep.subr.bf16.mxu0 0
    %7535 = vmatpush1.bf16.msra.mxu0 %v5628
    %7536 = vmatprep.subr.bf16.mxu0 0
    %7537 = vmatpush1.bf16.msra.mxu0 %v5629
    %7538 = vmatprep.subr.bf16.mxu0 0
    %7539 = vmatpush1.bf16.msra.mxu0 %v5630
    %7540 = vmatprep.subr.bf16.mxu0 0
    %7541 = vmatpush1.bf16.msra.mxu0 %v5631
    %7542 = vmatprep.subr.bf16.mxu0 0
    %7543 = vmatpush1.bf16.msra.mxu0 %v5632
    %7544 = vmatprep.subr.bf16.mxu0 0
    %7545 = vmatpush1.bf16.msra.mxu0 %v5633
    %7546 = vmatprep.mubr.bf16.mxu0 %v698
    %7547 = vmatmul.mubr.bf16.gmra.mrb[0].mxu0 %v697
    %v7548 = vpop.f32.mrb[0].mxu0
    %v7549 = vadd.f32 %v7509, %v7548
    %v7550 = vpop.f32.mrb[0].mxu0
    %v7551 = vpop.f32.mrb[0].mxu0
    %v7552 = vpop.f32.mrb[0].mxu0
    %7553 = vdwg.mxu0
    %7554 = vmatprep.subr.bf16.mxu0 0
    %7555 = vmatpush1.bf16.msra.mxu0 %v5634
    %7556 = vmatprep.subr.bf16.mxu0 0
    %7557 = vmatpush1.bf16.msra.mxu0 %v5635
    %7558 = vmatprep.subr.bf16.mxu0 0
    %7559 = vmatpush1.bf16.msra.mxu0 %v5636
    %7560 = vmatprep.subr.bf16.mxu0 0
    %7561 = vmatpush1.bf16.msra.mxu0 %v5637
    %7562 = vmatprep.subr.bf16.mxu0 0
    %7563 = vmatpush1.bf16.msra.mxu0 %v5638
    %7564 = vmatprep.subr.bf16.mxu0 0
    %7565 = vmatpush1.bf16.msra.mxu0 %v5639
    %7566 = vmatprep.subr.bf16.mxu0 0
    %7567 = vmatpush1.bf16.msra.mxu0 %v5640
    %7568 = vmatprep.subr.bf16.mxu0 0
    %7569 = vmatpush1.bf16.msra.mxu0 %v5641
    %7570 = vmatprep.subr.bf16.mxu0 0
    %7571 = vmatpush1.bf16.msra.mxu0 %v5642
    %7572 = vmatprep.subr.bf16.mxu0 0
    %7573 = vmatpush1.bf16.msra.mxu0 %v5643
    %7574 = vmatprep.subr.bf16.mxu0 0
    %7575 = vmatpush1.bf16.msra.mxu0 %v5644
    %7576 = vmatprep.subr.bf16.mxu0 0
    %7577 = vmatpush1.bf16.msra.mxu0 %v5645
    %7578 = vmatprep.subr.bf16.mxu0 0
    %7579 = vmatpush1.bf16.msra.mxu0 %v5646
    %7580 = vmatprep.subr.bf16.mxu0 0
    %7581 = vmatpush1.bf16.msra.mxu0 %v5647
    %7582 = vmatprep.subr.bf16.mxu0 0
    %7583 = vmatpush1.bf16.msra.mxu0 %v5648
    %7584 = vmatprep.subr.bf16.mxu0 0
    %7585 = vmatpush1.bf16.msra.mxu0 %v5649
    %7586 = vmatprep.mubr.bf16.mxu0 %v700
    %7587 = vmatmul.mubr.bf16.gmra.mrb[0].mxu0 %v699
    %v7588 = vpop.f32.mrb[0].mxu0
    %v7589 = vadd.f32 %v7549, %v7588
    %v7590 = vpop.f32.mrb[0].mxu0
    %v7591 = vpop.f32.mrb[0].mxu0
    %v7592 = vpop.f32.mrb[0].mxu0
    %7593 = vdwg.mxu0
    %7594 = vmatprep.subr.bf16.mxu0 0
    %7595 = vmatpush1.bf16.msra.mxu0 %v5650
    %7596 = vmatprep.subr.bf16.mxu0 0
    %7597 = vmatpush1.bf16.msra.mxu0 %v5651
    %7598 = vmatprep.subr.bf16.mxu0 0
    %7599 = vmatpush1.bf16.msra.mxu0 %v5652
    %7600 = vmatprep.subr.bf16.mxu0 0
    %7601 = vmatpush1.bf16.msra.mxu0 %v5653
    %7602 = vmatprep.subr.bf16.mxu0 0
    %7603 = vmatpush1.bf16.msra.mxu0 %v5654
    %7604 = vmatprep.subr.bf16.mxu0 0
    %7605 = vmatpush1.bf16.msra.mxu0 %v5655
    %7606 = vmatprep.subr.bf16.mxu0 0
    %7607 = vmatpush1.bf16.msra.mxu0 %v5656
    %7608 = vmatprep.subr.bf16.mxu0 0
    %7609 = vmatpush1.bf16.msra.mxu0 %v5657
    %7610 = vmatprep.subr.bf16.mxu0 0
    %7611 = vmatpush1.bf16.msra.mxu0 %v5658
    %7612 = vmatprep.subr.bf16.mxu0 0
    %7613 = vmatpush1.bf16.msra.mxu0 %v5659
    %7614 = vmatprep.subr.bf16.mxu0 0
    %7615 = vmatpush1.bf16.msra.mxu0 %v5660
    %7616 = vmatprep.subr.bf16.mxu0 0
    %7617 = vmatpush1.bf16.msra.mxu0 %v5661
    %7618 = vmatprep.subr.bf16.mxu0 0
    %7619 = vmatpush1.bf16.msra.mxu0 %v5662
    %7620 = vmatprep.subr.bf16.mxu0 0
    %7621 = vmatpush1.bf16.msra.mxu0 %v5663
    %7622 = vmatprep.subr.bf16.mxu0 0
    %7623 = vmatpush1.bf16.msra.mxu0 %v5664
    %7624 = vmatprep.subr.bf16.mxu0 0
    %7625 = vmatpush1.bf16.msra.mxu0 %v5665
    %7626 = vmatprep.mubr.bf16.mxu0 %v702
    %7627 = vmatmul.mubr.bf16.gmra.mrb[0].mxu0 %v701
    %v7628 = vpop.f32.mrb[0].mxu0
    %v7629 = vadd.f32 %v7589, %v7628
    %v7630 = vpop.f32.mrb[0].mxu0
    %v7631 = vpop.f32.mrb[0].mxu0
    %v7632 = vpop.f32.mrb[0].mxu0
    %7633 = vdwg.mxu0
    %7634 = vmatprep.subr.bf16.mxu0 0
    %7635 = vmatpush1.bf16.msra.mxu0 %v5666
    %7636 = vmatprep.subr.bf16.mxu0 0
    %7637 = vmatpush1.bf16.msra.mxu0 %v5667
    %7638 = vmatprep.subr.bf16.mxu0 0
    %7639 = vmatpush1.bf16.msra.mxu0 %v5668
    %7640 = vmatprep.subr.bf16.mxu0 0
    %7641 = vmatpush1.bf16.msra.mxu0 %v5669
    %7642 = vmatprep.subr.bf16.mxu0 0
    %7643 = vmatpush1.bf16.msra.mxu0 %v5670
    %7644 = vmatprep.subr.bf16.mxu0 0
    %7645 = vmatpush1.bf16.msra.mxu0 %v5671
    %7646 = vmatprep.subr.bf16.mxu0 0
    %7647 = vmatpush1.bf16.msra.mxu0 %v5672
    %7648 = vmatprep.subr.bf16.mxu0 0
    %7649 = vmatpush1.bf16.msra.mxu0 %v5673
    %7650 = vmatprep.subr.bf16.mxu0 0
    %7651 = vmatpush1.bf16.msra.mxu0 %v5674
    %7652 = vmatprep.subr.bf16.mxu0 0
    %7653 = vmatpush1.bf16.msra.mxu0 %v5675
    %7654 = vmatprep.subr.bf16.mxu0 0
    %7655 = vmatpush1.bf16.msra.mxu0 %v5676
    %7656 = vmatprep.subr.bf16.mxu0 0
    %7657 = vmatpush1.bf16.msra.mxu0 %v5677
    %7658 = vmatprep.subr.bf16.mxu0 0
    %7659 = vmatpush1.bf16.msra.mxu0 %v5678
    %7660 = vmatprep.subr.bf16.mxu0 0
    %7661 = vmatpush1.bf16.msra.mxu0 %v5679
    %7662 = vmatprep.subr.bf16.mxu0 0
    %7663 = vmatpush1.bf16.msra.mxu0 %v5680
    %7664 = vmatprep.subr.bf16.mxu0 0
    %7665 = vmatpush1.bf16.msra.mxu0 %v5681
    %7666 = vmatprep.mubr.bf16.mxu0 %v704
    %7667 = vmatmul.mubr.bf16.gmra.mrb[0].mxu0 %v703
    %v7668 = vpop.f32.mrb[0].mxu0
    %v7669 = vadd.f32 %v7629, %v7668
    %v7670 = vpop.f32.mrb[0].mxu0
    %v7671 = vpop.f32.mrb[0].mxu0
    %v7672 = vpop.f32.mrb[0].mxu0
    %7673 = vdwg.mxu0
    %7674 = vmatprep.subr.bf16.mxu0 0
    %7675 = vmatpush1.bf16.msra.mxu0 %v5682
    %7676 = vmatprep.subr.bf16.mxu0 0
    %7677 = vmatpush1.bf16.msra.mxu0 %v5683
    %7678 = vmatprep.subr.bf16.mxu0 0
    %7679 = vmatpush1.bf16.msra.mxu0 %v5684
    %7680 = vmatprep.subr.bf16.mxu0 0
    %7681 = vmatpush1.bf16.msra.mxu0 %v5685
    %7682 = vmatprep.subr.bf16.mxu0 0
    %7683 = vmatpush1.bf16.msra.mxu0 %v5686
    %7684 = vmatprep.subr.bf16.mxu0 0
    %7685 = vmatpush1.bf16.msra.mxu0 %v5687
    %7686 = vmatprep.subr.bf16.mxu0 0
    %7687 = vmatpush1.bf16.msra.mxu0 %v5688
    %7688 = vmatprep.subr.bf16.mxu0 0
    %7689 = vmatpush1.bf16.msra.mxu0 %v5689
    %7690 = vmatprep.subr.bf16.mxu0 0
    %7691 = vmatpush1.bf16.msra.mxu0 %v5690
    %7692 = vmatprep.subr.bf16.mxu0 0
    %7693 = vmatpush1.bf16.msra.mxu0 %v5691
    %7694 = vmatprep.subr.bf16.mxu0 0
    %7695 = vmatpush1.bf16.msra.mxu0 %v5692
    %7696 = vmatprep.subr.bf16.mxu0 0
    %7697 = vmatpush1.bf16.msra.mxu0 %v5693
    %7698 = vmatprep.subr.bf16.mxu0 0
    %7699 = vmatpush1.bf16.msra.mxu0 %v5694
    %7700 = vmatprep.subr.bf16.mxu0 0
    %7701 = vmatpush1.bf16.msra.mxu0 %v5695
    %7702 = vmatprep.subr.bf16.mxu0 0
    %7703 = vmatpush1.bf16.msra.mxu0 %v5696
    %7704 = vmatprep.subr.bf16.mxu0 0
    %7705 = vmatpush1.bf16.msra.mxu0 %v5697
    %7706 = vmatprep.mubr.bf16.mxu0 %v706
    %7707 = vmatmul.mubr.bf16.gmra.mrb[0].mxu0 %v705
    %v7708 = vpop.f32.mrb[0].mxu0
    %v7709 = vadd.f32 %v7669, %v7708
    %v7710 = vpop.f32.mrb[0].mxu0
    %v7711 = vpop.f32.mrb[0].mxu0
    %v7712 = vpop.f32.mrb[0].mxu0
    %7713 = vdwg.mxu0
    %7714 = vmatprep.subr.bf16.mxu0 0
    %7715 = vmatpush1.bf16.msra.mxu0 %v5698
    %7716 = vmatprep.subr.bf16.mxu0 0
    %7717 = vmatpush1.bf16.msra.mxu0 %v5699
    %7718 = vmatprep.subr.bf16.mxu0 0
    %7719 = vmatpush1.bf16.msra.mxu0 %v5700
    %7720 = vmatprep.subr.bf16.mxu0 0
    %7721 = vmatpush1.bf16.msra.mxu0 %v5701
    %7722 = vmatprep.subr.bf16.mxu0 0
    %7723 = vmatpush1.bf16.msra.mxu0 %v5702
    %7724 = vmatprep.subr.bf16.mxu0 0
    %7725 = vmatpush1.bf16.msra.mxu0 %v5703
    %7726 = vmatprep.subr.bf16.mxu0 0
    %7727 = vmatpush1.bf16.msra.mxu0 %v5704
    %7728 = vmatprep.subr.bf16.mxu0 0
    %7729 = vmatpush1.bf16.msra.mxu0 %v5705
    %7730 = vmatprep.subr.bf16.mxu0 0
    %7731 = vmatpush1.bf16.msra.mxu0 %v5706
    %7732 = vmatprep.subr.bf16.mxu0 0
    %7733 = vmatpush1.bf16.msra.mxu0 %v5707
    %7734 = vmatprep.subr.bf16.mxu0 0
    %7735 = vmatpush1.bf16.msra.mxu0 %v5708
    %7736 = vmatprep.subr.bf16.mxu0 0
    %7737 = vmatpush1.bf16.msra.mxu0 %v5709
    %7738 = vmatprep.subr.bf16.mxu0 0
    %7739 = vmatpush1.bf16.msra.mxu0 %v5710
    %7740 = vmatprep.subr.bf16.mxu0 0
    %7741 = vmatpush1.bf16.msra.mxu0 %v5711
    %7742 = vmatprep.subr.bf16.mxu0 0
    %7743 = vmatpush1.bf16.msra.mxu0 %v5712
    %7744 = vmatprep.subr.bf16.mxu0 0
    %7745 = vmatpush1.bf16.msra.mxu0 %v5713
    %7746 = vmatprep.mubr.bf16.mxu0 %v708
    %7747 = vmatmul.mubr.bf16.gmra.mrb[0].mxu0 %v707
    %v7748 = vpop.f32.mrb[0].mxu0
    %v7749 = vadd.f32 %v7709, %v7748
    %v7750 = vpop.f32.mrb[0].mxu0
    %v7751 = vpop.f32.mrb[0].mxu0
    %v7752 = vpop.f32.mrb[0].mxu0
    %7753 = vdwg.mxu0
    %7754 = vmatprep.subr.bf16.mxu0 0
    %7755 = vmatpush1.bf16.msra.mxu0 %v5714
    %7756 = vmatprep.subr.bf16.mxu0 0
    %7757 = vmatpush1.bf16.msra.mxu0 %v5715
    %7758 = vmatprep.subr.bf16.mxu0 0
    %7759 = vmatpush1.bf16.msra.mxu0 %v5716
    %7760 = vmatprep.subr.bf16.mxu0 0
    %7761 = vmatpush1.bf16.msra.mxu0 %v5717
    %7762 = vmatprep.subr.bf16.mxu0 0
    %7763 = vmatpush1.bf16.msra.mxu0 %v5718
    %7764 = vmatprep.subr.bf16.mxu0 0
    %7765 = vmatpush1.bf16.msra.mxu0 %v5719
    %7766 = vmatprep.subr.bf16.mxu0 0
    %7767 = vmatpush1.bf16.msra.mxu0 %v5720
    %7768 = vmatprep.subr.bf16.mxu0 0
    %7769 = vmatpush1.bf16.msra.mxu0 %v5721
    %7770 = vmatprep.subr.bf16.mxu0 0
    %7771 = vmatpush1.bf16.msra.mxu0 %v5722
    %7772 = vmatprep.subr.bf16.mxu0 0
    %7773 = vmatpush1.bf16.msra.mxu0 %v5723
    %7774 = vmatprep.subr.bf16.mxu0 0
    %7775 = vmatpush1.bf16.msra.mxu0 %v5724
    %7776 = vmatprep.subr.bf16.mxu0 0
    %7777 = vmatpush1.bf16.msra.mxu0 %v5725
    %7778 = vmatprep.subr.bf16.mxu0 0
    %7779 = vmatpush1.bf16.msra.mxu0 %v5726
    %7780 = vmatprep.subr.bf16.mxu0 0
    %7781 = vmatpush1.bf16.msra.mxu0 %v5727
    %7782 = vmatprep.subr.bf16.mxu0 0
    %7783 = vmatpush1.bf16.msra.mxu0 %v5728
    %7784 = vmatprep.subr.bf16.mxu0 0
    %7785 = vmatpush1.bf16.msra.mxu0 %v5729
    %7786 = vmatprep.mubr.bf16.mxu0 %v710
    %7787 = vmatmul.mubr.bf16.gmra.mrb[0].mxu0 %v709
    %v7788 = vpop.f32.mrb[0].mxu0
    %v7789 = vadd.f32 %v7749, %v7788
    %v7790 = vpop.f32.mrb[0].mxu0
    %v7791 = vpop.f32.mrb[0].mxu0
    %v7792 = vpop.f32.mrb[0].mxu0
    %7793 = vdwg.mxu0
    %7794 = vmatprep.subr.bf16.mxu0 0
    %7795 = vmatpush1.bf16.msra.mxu0 %v5730
    %7796 = vmatprep.subr.bf16.mxu0 0
    %7797 = vmatpush1.bf16.msra.mxu0 %v5731
    %7798 = vmatprep.subr.bf16.mxu0 0
    %7799 = vmatpush1.bf16.msra.mxu0 %v5732
    %7800 = vmatprep.subr.bf16.mxu0 0
    %7801 = vmatpush1.bf16.msra.mxu0 %v5733
    %7802 = vmatprep.subr.bf16.mxu0 0
    %7803 = vmatpush1.bf16.msra.mxu0 %v5734
    %7804 = vmatprep.subr.bf16.mxu0 0
    %7805 = vmatpush1.bf16.msra.mxu0 %v5735
    %7806 = vmatprep.subr.bf16.mxu0 0
    %7807 = vmatpush1.bf16.msra.mxu0 %v5736
    %7808 = vmatprep.subr.bf16.mxu0 0
    %7809 = vmatpush1.bf16.msra.mxu0 %v5737
    %7810 = vmatprep.subr.bf16.mxu0 0
    %7811 = vmatpush1.bf16.msra.mxu0 %v5738
    %7812 = vmatprep.subr.bf16.mxu0 0
    %7813 = vmatpush1.bf16.msra.mxu0 %v5739
    %7814 = vmatprep.subr.bf16.mxu0 0
    %7815 = vmatpush1.bf16.msra.mxu0 %v5740
    %7816 = vmatprep.subr.bf16.mxu0 0
    %7817 = vmatpush1.bf16.msra.mxu0 %v5741
    %7818 = vmatprep.subr.bf16.mxu0 0
    %7819 = vmatpush1.bf16.msra.mxu0 %v5742
    %7820 = vmatprep.subr.bf16.mxu0 0
    %7821 = vmatpush1.bf16.msra.mxu0 %v5743
    %7822 = vmatprep.subr.bf16.mxu0 0
    %7823 = vmatpush1.bf16.msra.mxu0 %v5744
    %7824 = vmatprep.subr.bf16.mxu0 0
    %7825 = vmatpush1.bf16.msra.mxu0 %v5745
    %7826 = vmatprep.mubr.bf16.mxu0 %v712
    %7827 = vmatmul.mubr.bf16.gmra.mrb[0].mxu0 %v711
    %v7828 = vpop.f32.mrb[0].mxu0
    %v7829 = vadd.f32 %v7789, %v7828
    %v7830 = vpop.f32.mrb[0].mxu0
    %v7831 = vpop.f32.mrb[0].mxu0
    %v7832 = vpop.f32.mrb[0].mxu0
    %7833 = vdwg.mxu0
    %7834 = vmatprep.subr.bf16.mxu0 0
    %7835 = vmatpush1.bf16.msra.mxu0 %v5746
    %7836 = vmatprep.subr.bf16.mxu0 0
    %7837 = vmatpush1.bf16.msra.mxu0 %v5747
    %7838 = vmatprep.subr.bf16.mxu0 0
    %7839 = vmatpush1.bf16.msra.mxu0 %v5748
    %7840 = vmatprep.subr.bf16.mxu0 0
    %7841 = vmatpush1.bf16.msra.mxu0 %v5749
    %7842 = vmatprep.subr.bf16.mxu0 0
    %7843 = vmatpush1.bf16.msra.mxu0 %v5750
    %7844 = vmatprep.subr.bf16.mxu0 0
    %7845 = vmatpush1.bf16.msra.mxu0 %v5751
    %7846 = vmatprep.subr.bf16.mxu0 0
    %7847 = vmatpush1.bf16.msra.mxu0 %v5752
    %7848 = vmatprep.subr.bf16.mxu0 0
    %7849 = vmatpush1.bf16.msra.mxu0 %v5753
    %7850 = vmatprep.subr.bf16.mxu0 0
    %7851 = vmatpush1.bf16.msra.mxu0 %v5754
    %7852 = vmatprep.subr.bf16.mxu0 0
    %7853 = vmatpush1.bf16.msra.mxu0 %v5755
    %7854 = vmatprep.subr.bf16.mxu0 0
    %7855 = vmatpush1.bf16.msra.mxu0 %v5756
    %7856 = vmatprep.subr.bf16.mxu0 0
    %7857 = vmatpush1.bf16.msra.mxu0 %v5757
    %7858 = vmatprep.subr.bf16.mxu0 0
    %7859 = vmatpush1.bf16.msra.mxu0 %v5758
    %7860 = vmatprep.subr.bf16.mxu0 0
    %7861 = vmatpush1.bf16.msra.mxu0 %v5759
    %7862 = vmatprep.subr.bf16.mxu0 0
    %7863 = vmatpush1.bf16.msra.mxu0 %v5760
    %7864 = vmatprep.subr.bf16.mxu0 0
    %7865 = vmatpush1.bf16.msra.mxu0 %v5761
    %7866 = vmatprep.mubr.bf16.mxu0 %v714
    %7867 = vmatmul.mubr.bf16.gmra.mrb[0].mxu0 %v713
    %v7868 = vpop.f32.mrb[0].mxu0
    %v7869 = vadd.f32 %v7829, %v7868
    %v7870 = vpop.f32.mrb[0].mxu0
    %v7871 = vpop.f32.mrb[0].mxu0
    %v7872 = vpop.f32.mrb[0].mxu0
    %7873 = vdwg.mxu0
    %7874 = vmatprep.subr.bf16.mxu0 0
    %7875 = vmatpush1.bf16.msra.mxu0 %v5762
    %7876 = vmatprep.subr.bf16.mxu0 0
    %7877 = vmatpush1.bf16.msra.mxu0 %v5763
    %7878 = vmatprep.subr.bf16.mxu0 0
    %7879 = vmatpush1.bf16.msra.mxu0 %v5764
    %7880 = vmatprep.subr.bf16.mxu0 0
    %7881 = vmatpush1.bf16.msra.mxu0 %v5765
    %7882 = vmatprep.subr.bf16.mxu0 0
    %7883 = vmatpush1.bf16.msra.mxu0 %v5766
    %7884 = vmatprep.subr.bf16.mxu0 0
    %7885 = vmatpush1.bf16.msra.mxu0 %v5767
    %7886 = vmatprep.subr.bf16.mxu0 0
    %7887 = vmatpush1.bf16.msra.mxu0 %v5768
    %7888 = vmatprep.subr.bf16.mxu0 0
    %7889 = vmatpush1.bf16.msra.mxu0 %v5769
    %7890 = vmatprep.subr.bf16.mxu0 0
    %7891 = vmatpush1.bf16.msra.mxu0 %v5770
    %7892 = vmatprep.subr.bf16.mxu0 0
    %7893 = vmatpush1.bf16.msra.mxu0 %v5771
    %7894 = vmatprep.subr.bf16.mxu0 0
    %7895 = vmatpush1.bf16.msra.mxu0 %v5772
    %7896 = vmatprep.subr.bf16.mxu0 0
    %7897 = vmatpush1.bf16.msra.mxu0 %v5773
    %7898 = vmatprep.subr.bf16.mxu0 0
    %7899 = vmatpush1.bf16.msra.mxu0 %v5774
    %7900 = vmatprep.subr.bf16.mxu0 0
    %7901 = vmatpush1.bf16.msra.mxu0 %v5775
    %7902 = vmatprep.subr.bf16.mxu0 0
    %7903 = vmatpush1.bf16.msra.mxu0 %v5776
    %7904 = vmatprep.subr.bf16.mxu0 0
    %7905 = vmatpush1.bf16.msra.mxu0 %v5777
    %7906 = vmatprep.mubr.bf16.mxu0 %v716
    %7907 = vmatmul.mubr.bf16.gmra.mrb[0].mxu0 %v715
    %v7908 = vpop.f32.mrb[0].mxu0
    %v7909 = vadd.f32 %v7869, %v7908
    %v7910 = vpop.f32.mrb[0].mxu0
    %v7911 = vpop.f32.mrb[0].mxu0
    %v7912 = vpop.f32.mrb[0].mxu0
    %7913 = vdwg.mxu0
    %7914 = vmatprep.subr.bf16.mxu0 0
    %7915 = vmatpush1.bf16.msra.mxu0 %v5778
    %7916 = vmatprep.subr.bf16.mxu0 0
    %7917 = vmatpush1.bf16.msra.mxu0 %v5779
    %7918 = vmatprep.subr.bf16.mxu0 0
    %7919 = vmatpush1.bf16.msra.mxu0 %v5780
    %7920 = vmatprep.subr.bf16.mxu0 0
    %7921 = vmatpush1.bf16.msra.mxu0 %v5781
    %7922 = vmatprep.subr.bf16.mxu0 0
    %7923 = vmatpush1.bf16.msra.mxu0 %v5782
    %7924 = vmatprep.subr.bf16.mxu0 0
    %7925 = vmatpush1.bf16.msra.mxu0 %v5783
    %7926 = vmatprep.subr.bf16.mxu0 0
    %7927 = vmatpush1.bf16.msra.mxu0 %v5784
    %7928 = vmatprep.subr.bf16.mxu0 0
    %7929 = vmatpush1.bf16.msra.mxu0 %v5785
    %7930 = vmatprep.subr.bf16.mxu0 0
    %7931 = vmatpush1.bf16.msra.mxu0 %v5786
    %7932 = vmatprep.subr.bf16.mxu0 0
    %7933 = vmatpush1.bf16.msra.mxu0 %v5787
    %7934 = vmatprep.subr.bf16.mxu0 0
    %7935 = vmatpush1.bf16.msra.mxu0 %v5788
    %7936 = vmatprep.subr.bf16.mxu0 0
    %7937 = vmatpush1.bf16.msra.mxu0 %v5789
    %7938 = vmatprep.subr.bf16.mxu0 0
    %7939 = vmatpush1.bf16.msra.mxu0 %v5790
    %7940 = vmatprep.subr.bf16.mxu0 0
    %7941 = vmatpush1.bf16.msra.mxu0 %v5791
    %7942 = vmatprep.subr.bf16.mxu0 0
    %7943 = vmatpush1.bf16.msra.mxu0 %v5792
    %7944 = vmatprep.subr.bf16.mxu0 0
    %7945 = vmatpush1.bf16.msra.mxu0 %v5793
    %7946 = vmatprep.mubr.bf16.mxu0 %v718
    %7947 = vmatmul.mubr.bf16.gmra.mrb[0].mxu0 %v717
    %v7948 = vpop.f32.mrb[0].mxu0
    %v7949 = vadd.f32 %v7909, %v7948
    %v7950 = vpop.f32.mrb[0].mxu0
    %v7951 = vpop.f32.mrb[0].mxu0
    %v7952 = vpop.f32.mrb[0].mxu0
    %7953 = vdwg.mxu0
    %7954 = vmatprep.subr.bf16.mxu0 0
    %7955 = vmatpush1.bf16.msra.mxu0 %v5794
    %7956 = vmatprep.subr.bf16.mxu0 0
    %7957 = vmatpush1.bf16.msra.mxu0 %v5795
    %7958 = vmatprep.subr.bf16.mxu0 0
    %7959 = vmatpush1.bf16.msra.mxu0 %v5796
    %7960 = vmatprep.subr.bf16.mxu0 0
    %7961 = vmatpush1.bf16.msra.mxu0 %v5797
    %7962 = vmatprep.subr.bf16.mxu0 0
    %7963 = vmatpush1.bf16.msra.mxu0 %v5798
    %7964 = vmatprep.subr.bf16.mxu0 0
    %7965 = vmatpush1.bf16.msra.mxu0 %v5799
    %7966 = vmatprep.subr.bf16.mxu0 0
    %7967 = vmatpush1.bf16.msra.mxu0 %v5800
    %7968 = vmatprep.subr.bf16.mxu0 0
    %7969 = vmatpush1.bf16.msra.mxu0 %v5801
    %7970 = vmatprep.subr.bf16.mxu0 0
    %7971 = vmatpush1.bf16.msra.mxu0 %v5802
    %7972 = vmatprep.subr.bf16.mxu0 0
    %7973 = vmatpush1.bf16.msra.mxu0 %v5803
    %7974 = vmatprep.subr.bf16.mxu0 0
    %7975 = vmatpush1.bf16.msra.mxu0 %v5804
    %7976 = vmatprep.subr.bf16.mxu0 0
    %7977 = vmatpush1.bf16.msra.mxu0 %v5805
    %7978 = vmatprep.subr.bf16.mxu0 0
    %7979 = vmatpush1.bf16.msra.mxu0 %v5806
    %7980 = vmatprep.subr.bf16.mxu0 0
    %7981 = vmatpush1.bf16.msra.mxu0 %v5807
    %7982 = vmatprep.subr.bf16.mxu0 0
    %7983 = vmatpush1.bf16.msra.mxu0 %v5808
    %7984 = vmatprep.subr.bf16.mxu0 0
    %7985 = vmatpush1.bf16.msra.mxu0 %v5809
    %7986 = vmatprep.mubr.bf16.mxu0 %v720
    %7987 = vmatmul.mubr.bf16.gmra.mrb[0].mxu0 %v719
    %v7988 = vpop.f32.mrb[0].mxu0
    %v7989 = vadd.f32 %v7949, %v7988
    %v7990 = vpop.f32.mrb[0].mxu0
    %v7991 = vpop.f32.mrb[0].mxu0
    %v7992 = vpop.f32.mrb[0].mxu0
    %7993 = vdwg.mxu0
    %7994 = vmatprep.subr.bf16.mxu0 0
    %7995 = vmatpush1.bf16.msra.mxu0 %v5810
    %7996 = vmatprep.subr.bf16.mxu0 0
    %7997 = vmatpush1.bf16.msra.mxu0 %v5811
    %7998 = vmatprep.subr.bf16.mxu0 0
    %7999 = vmatpush1.bf16.msra.mxu0 %v5812
    %8000 = vmatprep.subr.bf16.mxu0 0
    %8001 = vmatpush1.bf16.msra.mxu0 %v5813
    %8002 = vmatprep.subr.bf16.mxu0 0
    %8003 = vmatpush1.bf16.msra.mxu0 %v5814
    %8004 = vmatprep.subr.bf16.mxu0 0
    %8005 = vmatpush1.bf16.msra.mxu0 %v5815
    %8006 = vmatprep.subr.bf16.mxu0 0
    %8007 = vmatpush1.bf16.msra.mxu0 %v5816
    %8008 = vmatprep.subr.bf16.mxu0 0
    %8009 = vmatpush1.bf16.msra.mxu0 %v5817
    %8010 = vmatprep.subr.bf16.mxu0 0
    %8011 = vmatpush1.bf16.msra.mxu0 %v5818
    %8012 = vmatprep.subr.bf16.mxu0 0
    %8013 = vmatpush1.bf16.msra.mxu0 %v5819
    %8014 = vmatprep.subr.bf16.mxu0 0
    %8015 = vmatpush1.bf16.msra.mxu0 %v5820
    %8016 = vmatprep.subr.bf16.mxu0 0
    %8017 = vmatpush1.bf16.msra.mxu0 %v5821
    %8018 = vmatprep.subr.bf16.mxu0 0
    %8019 = vmatpush1.bf16.msra.mxu0 %v5822
    %8020 = vmatprep.subr.bf16.mxu0 0
    %8021 = vmatpush1.bf16.msra.mxu0 %v5823
    %8022 = vmatprep.subr.bf16.mxu0 0
    %8023 = vmatpush1.bf16.msra.mxu0 %v5824
    %8024 = vmatprep.subr.bf16.mxu0 0
    %8025 = vmatpush1.bf16.msra.mxu0 %v5825
    %8026 = vmatprep.mubr.bf16.mxu0 %v722
    %8027 = vmatmul.mubr.bf16.gmra.mrb[0].mxu0 %v721
    %v8028 = vpop.f32.mrb[0].mxu0
    %v8029 = vadd.f32 %v7989, %v8028
    %v8030 = vpop.f32.mrb[0].mxu0
    %v8031 = vpop.f32.mrb[0].mxu0
    %v8032 = vpop.f32.mrb[0].mxu0
    %8033 = vdwg.mxu0
    %8034 = vmatprep.subr.bf16.mxu0 0
    %8035 = vmatpush1.bf16.msra.mxu0 %v5826
    %8036 = vmatprep.subr.bf16.mxu0 0
    %8037 = vmatpush1.bf16.msra.mxu0 %v5827
    %8038 = vmatprep.subr.bf16.mxu0 0
    %8039 = vmatpush1.bf16.msra.mxu0 %v5828
    %8040 = vmatprep.subr.bf16.mxu0 0
    %8041 = vmatpush1.bf16.msra.mxu0 %v5829
    %8042 = vmatprep.subr.bf16.mxu0 0
    %8043 = vmatpush1.bf16.msra.mxu0 %v5830
    %8044 = vmatprep.subr.bf16.mxu0 0
    %8045 = vmatpush1.bf16.msra.mxu0 %v5831
    %8046 = vmatprep.subr.bf16.mxu0 0
    %8047 = vmatpush1.bf16.msra.mxu0 %v5832
    %8048 = vmatprep.subr.bf16.mxu0 0
    %8049 = vmatpush1.bf16.msra.mxu0 %v5833
    %8050 = vmatprep.subr.bf16.mxu0 0
    %8051 = vmatpush1.bf16.msra.mxu0 %v5834
    %8052 = vmatprep.subr.bf16.mxu0 0
    %8053 = vmatpush1.bf16.msra.mxu0 %v5835
    %8054 = vmatprep.subr.bf16.mxu0 0
    %8055 = vmatpush1.bf16.msra.mxu0 %v5836
    %8056 = vmatprep.subr.bf16.mxu0 0
    %8057 = vmatpush1.bf16.msra.mxu0 %v5837
    %8058 = vmatprep.subr.bf16.mxu0 0
    %8059 = vmatpush1.bf16.msra.mxu0 %v5838
    %8060 = vmatprep.subr.bf16.mxu0 0
    %8061 = vmatpush1.bf16.msra.mxu0 %v5839
    %8062 = vmatprep.subr.bf16.mxu0 0
    %8063 = vmatpush1.bf16.msra.mxu0 %v5840
    %8064 = vmatprep.subr.bf16.mxu0 0
    %8065 = vmatpush1.bf16.msra.mxu0 %v5841
    %8066 = vmatprep.mubr.bf16.mxu0 %v724
    %8067 = vmatmul.mubr.bf16.gmra.mrb[0].mxu0 %v723
    %v8068 = vpop.f32.mrb[0].mxu0
    %v8069 = vadd.f32 %v8029, %v8068
    %v8070 = vpop.f32.mrb[0].mxu0
    %v8071 = vpop.f32.mrb[0].mxu0
    %v8072 = vpop.f32.mrb[0].mxu0
    %8073 = vdwg.mxu0
    %8074 = vmatprep.subr.bf16.mxu0 0
    %8075 = vmatpush1.bf16.msra.mxu0 %v5842
    %8076 = vmatprep.subr.bf16.mxu0 0
    %8077 = vmatpush1.bf16.msra.mxu0 %v5843
    %8078 = vmatprep.subr.bf16.mxu0 0
    %8079 = vmatpush1.bf16.msra.mxu0 %v5844
    %8080 = vmatprep.subr.bf16.mxu0 0
    %8081 = vmatpush1.bf16.msra.mxu0 %v5845
    %8082 = vmatprep.subr.bf16.mxu0 0
    %8083 = vmatpush1.bf16.msra.mxu0 %v5846
    %8084 = vmatprep.subr.bf16.mxu0 0
    %8085 = vmatpush1.bf16.msra.mxu0 %v5847
    %8086 = vmatprep.subr.bf16.mxu0 0
    %8087 = vmatpush1.bf16.msra.mxu0 %v5848
    %8088 = vmatprep.subr.bf16.mxu0 0
    %8089 = vmatpush1.bf16.msra.mxu0 %v5849
    %8090 = vmatprep.subr.bf16.mxu0 0
    %8091 = vmatpush1.bf16.msra.mxu0 %v5850
    %8092 = vmatprep.subr.bf16.mxu0 0
    %8093 = vmatpush1.bf16.msra.mxu0 %v5851
    %8094 = vmatprep.subr.bf16.mxu0 0
    %8095 = vmatpush1.bf16.msra.mxu0 %v5852
    %8096 = vmatprep.subr.bf16.mxu0 0
    %8097 = vmatpush1.bf16.msra.mxu0 %v5853
    %8098 = vmatprep.subr.bf16.mxu0 0
    %8099 = vmatpush1.bf16.msra.mxu0 %v5854
    %8100 = vmatprep.subr.bf16.mxu0 0
    %8101 = vmatpush1.bf16.msra.mxu0 %v5855
    %8102 = vmatprep.subr.bf16.mxu0 0
    %8103 = vmatpush1.bf16.msra.mxu0 %v5856
    %8104 = vmatprep.subr.bf16.mxu0 0
    %8105 = vmatpush1.bf16.msra.mxu0 %v5857
    %8106 = vmatprep.mubr.bf16.mxu0 %v726
    %8107 = vmatmul.mubr.bf16.gmra.mrb[0].mxu0 %v725
    %v8108 = vpop.f32.mrb[0].mxu0
    %v8109 = vadd.f32 %v8069, %v8108
    %v8110 = vpop.f32.mrb[0].mxu0
    %v8111 = vpop.f32.mrb[0].mxu0
    %v8112 = vpop.f32.mrb[0].mxu0
    %8113 = vdwg.mxu0
    %8114 = vmatprep.subr.bf16.mxu0 0
    %8115 = vmatpush1.bf16.msra.mxu0 %v5858
    %8116 = vmatprep.subr.bf16.mxu0 0
    %8117 = vmatpush1.bf16.msra.mxu0 %v5859
    %8118 = vmatprep.subr.bf16.mxu0 0
    %8119 = vmatpush1.bf16.msra.mxu0 %v5860
    %8120 = vmatprep.subr.bf16.mxu0 0
    %8121 = vmatpush1.bf16.msra.mxu0 %v5861
    %8122 = vmatprep.subr.bf16.mxu0 0
    %8123 = vmatpush1.bf16.msra.mxu0 %v5862
    %8124 = vmatprep.subr.bf16.mxu0 0
    %8125 = vmatpush1.bf16.msra.mxu0 %v5863
    %8126 = vmatprep.subr.bf16.mxu0 0
    %8127 = vmatpush1.bf16.msra.mxu0 %v5864
    %8128 = vmatprep.subr.bf16.mxu0 0
    %8129 = vmatpush1.bf16.msra.mxu0 %v5865
    %8130 = vmatprep.subr.bf16.mxu0 0
    %8131 = vmatpush1.bf16.msra.mxu0 %v5866
    %8132 = vmatprep.subr.bf16.mxu0 0
    %8133 = vmatpush1.bf16.msra.mxu0 %v5867
    %8134 = vmatprep.subr.bf16.mxu0 0
    %8135 = vmatpush1.bf16.msra.mxu0 %v5868
    %8136 = vmatprep.subr.bf16.mxu0 0
    %8137 = vmatpush1.bf16.msra.mxu0 %v5869
    %8138 = vmatprep.subr.bf16.mxu0 0
    %8139 = vmatpush1.bf16.msra.mxu0 %v5870
    %8140 = vmatprep.subr.bf16.mxu0 0
    %8141 = vmatpush1.bf16.msra.mxu0 %v5871
    %8142 = vmatprep.subr.bf16.mxu0 0
    %8143 = vmatpush1.bf16.msra.mxu0 %v5872
    %8144 = vmatprep.subr.bf16.mxu0 0
    %8145 = vmatpush1.bf16.msra.mxu0 %v5873
    %8146 = vmatprep.mubr.bf16.mxu0 %v728
    %8147 = vmatmul.mubr.bf16.gmra.mrb[0].mxu0 %v727
    %v8148 = vpop.f32.mrb[0].mxu0
    %v8149 = vadd.f32 %v8109, %v8148
    %v8150 = vpop.f32.mrb[0].mxu0
    %v8151 = vpop.f32.mrb[0].mxu0
    %v8152 = vpop.f32.mrb[0].mxu0
    %8153 = vdwg.mxu0
    %8154 = vmatprep.subr.bf16.mxu0 0
    %8155 = vmatpush1.bf16.msra.mxu0 %v5874
    %8156 = vmatprep.subr.bf16.mxu0 0
    %8157 = vmatpush1.bf16.msra.mxu0 %v5875
    %8158 = vmatprep.subr.bf16.mxu0 0
    %8159 = vmatpush1.bf16.msra.mxu0 %v5876
    %8160 = vmatprep.subr.bf16.mxu0 0
    %8161 = vmatpush1.bf16.msra.mxu0 %v5877
    %8162 = vmatprep.subr.bf16.mxu0 0
    %8163 = vmatpush1.bf16.msra.mxu0 %v5878
    %8164 = vmatprep.subr.bf16.mxu0 0
    %8165 = vmatpush1.bf16.msra.mxu0 %v5879
    %8166 = vmatprep.subr.bf16.mxu0 0
    %8167 = vmatpush1.bf16.msra.mxu0 %v5880
    %8168 = vmatprep.subr.bf16.mxu0 0
    %8169 = vmatpush1.bf16.msra.mxu0 %v5881
    %8170 = vmatprep.subr.bf16.mxu0 0
    %8171 = vmatpush1.bf16.msra.mxu0 %v5882
    %8172 = vmatprep.subr.bf16.mxu0 0
    %8173 = vmatpush1.bf16.msra.mxu0 %v5883
    %8174 = vmatprep.subr.bf16.mxu0 0
    %8175 = vmatpush1.bf16.msra.mxu0 %v5884
    %8176 = vmatprep.subr.bf16.mxu0 0
    %8177 = vmatpush1.bf16.msra.mxu0 %v5885
    %8178 = vmatprep.subr.bf16.mxu0 0
    %8179 = vmatpush1.bf16.msra.mxu0 %v5886
    %8180 = vmatprep.subr.bf16.mxu0 0
    %8181 = vmatpush1.bf16.msra.mxu0 %v5887
    %8182 = vmatprep.subr.bf16.mxu0 0
    %8183 = vmatpush1.bf16.msra.mxu0 %v5888
    %8184 = vmatprep.subr.bf16.mxu0 0
    %8185 = vmatpush1.bf16.msra.mxu0 %v5889
    %8186 = vmatprep.mubr.bf16.mxu0 %v730
    %8187 = vmatmul.mubr.bf16.gmra.mrb[0].mxu0 %v729
    %v8188 = vpop.f32.mrb[0].mxu0
    %v8189 = vadd.f32 %v8149, %v8188
    %v8190 = vpop.f32.mrb[0].mxu0
    %v8191 = vpop.f32.mrb[0].mxu0
    %v8192 = vpop.f32.mrb[0].mxu0
    %8193 = vdwg.mxu0
    %8194 = vmatprep.subr.bf16.mxu0 0
    %8195 = vmatpush1.bf16.msra.mxu0 %v5890
    %8196 = vmatprep.subr.bf16.mxu0 0
    %8197 = vmatpush1.bf16.msra.mxu0 %v5891
    %8198 = vmatprep.subr.bf16.mxu0 0
    %8199 = vmatpush1.bf16.msra.mxu0 %v5892
    %8200 = vmatprep.subr.bf16.mxu0 0
    %8201 = vmatpush1.bf16.msra.mxu0 %v5893
    %8202 = vmatprep.subr.bf16.mxu0 0
    %8203 = vmatpush1.bf16.msra.mxu0 %v5894
    %8204 = vmatprep.subr.bf16.mxu0 0
    %8205 = vmatpush1.bf16.msra.mxu0 %v5895
    %8206 = vmatprep.subr.bf16.mxu0 0
    %8207 = vmatpush1.bf16.msra.mxu0 %v5896
    %8208 = vmatprep.subr.bf16.mxu0 0
    %8209 = vmatpush1.bf16.msra.mxu0 %v5897
    %8210 = vmatprep.subr.bf16.mxu0 0
    %8211 = vmatpush1.bf16.msra.mxu0 %v5898
    %8212 = vmatprep.subr.bf16.mxu0 0
    %8213 = vmatpush1.bf16.msra.mxu0 %v5899
    %8214 = vmatprep.subr.bf16.mxu0 0
    %8215 = vmatpush1.bf16.msra.mxu0 %v5900
    %8216 = vmatprep.subr.bf16.mxu0 0
    %8217 = vmatpush1.bf16.msra.mxu0 %v5901
    %8218 = vmatprep.subr.bf16.mxu0 0
    %8219 = vmatpush1.bf16.msra.mxu0 %v5902
    %8220 = vmatprep.subr.bf16.mxu0 0
    %8221 = vmatpush1.bf16.msra.mxu0 %v5903
    %8222 = vmatprep.subr.bf16.mxu0 0
    %8223 = vmatpush1.bf16.msra.mxu0 %v5904
    %8224 = vmatprep.subr.bf16.mxu0 0
    %8225 = vmatpush1.bf16.msra.mxu0 %v5905
    %8226 = vmatprep.mubr.bf16.mxu0 %v732
    %8227 = vmatmul.mubr.bf16.gmra.mrb[0].mxu0 %v731
    %v8228 = vpop.f32.mrb[0].mxu0
    %v8229 = vadd.f32 %v8189, %v8228
    %v8230 = vpop.f32.mrb[0].mxu0
    %v8231 = vpop.f32.mrb[0].mxu0
    %v8232 = vpop.f32.mrb[0].mxu0
    %8233 = vdwg.mxu0
    %8234 = vmatprep.subr.bf16.mxu0 0
    %8235 = vmatpush1.bf16.msra.mxu0 %v5906
    %8236 = vmatprep.subr.bf16.mxu0 0
    %8237 = vmatpush1.bf16.msra.mxu0 %v5907
    %8238 = vmatprep.subr.bf16.mxu0 0
    %8239 = vmatpush1.bf16.msra.mxu0 %v5908
    %8240 = vmatprep.subr.bf16.mxu0 0
    %8241 = vmatpush1.bf16.msra.mxu0 %v5909
    %8242 = vmatprep.subr.bf16.mxu0 0
    %8243 = vmatpush1.bf16.msra.mxu0 %v5910
    %8244 = vmatprep.subr.bf16.mxu0 0
    %8245 = vmatpush1.bf16.msra.mxu0 %v5911
    %8246 = vmatprep.subr.bf16.mxu0 0
    %8247 = vmatpush1.bf16.msra.mxu0 %v5912
    %8248 = vmatprep.subr.bf16.mxu0 0
    %8249 = vmatpush1.bf16.msra.mxu0 %v5913
    %8250 = vmatprep.subr.bf16.mxu0 0
    %8251 = vmatpush1.bf16.msra.mxu0 %v5914
    %8252 = vmatprep.subr.bf16.mxu0 0
    %8253 = vmatpush1.bf16.msra.mxu0 %v5915
    %8254 = vmatprep.subr.bf16.mxu0 0
    %8255 = vmatpush1.bf16.msra.mxu0 %v5916
    %8256 = vmatprep.subr.bf16.mxu0 0
    %8257 = vmatpush1.bf16.msra.mxu0 %v5917
    %8258 = vmatprep.subr.bf16.mxu0 0
    %8259 = vmatpush1.bf16.msra.mxu0 %v5918
    %8260 = vmatprep.subr.bf16.mxu0 0
    %8261 = vmatpush1.bf16.msra.mxu0 %v5919
    %8262 = vmatprep.subr.bf16.mxu0 0
    %8263 = vmatpush1.bf16.msra.mxu0 %v5920
    %8264 = vmatprep.subr.bf16.mxu0 0
    %8265 = vmatpush1.bf16.msra.mxu0 %v5921
    %8266 = vmatprep.mubr.bf16.mxu0 %v734
    %8267 = vmatmul.mubr.bf16.gmra.mrb[0].mxu0 %v733
    %v8268 = vpop.f32.mrb[0].mxu0
    %v8269 = vadd.f32 %v8229, %v8268
    %v8270 = vpop.f32.mrb[0].mxu0
    %v8271 = vpop.f32.mrb[0].mxu0
    %v8272 = vpop.f32.mrb[0].mxu0
    %8273 = vdwg.mxu0
    %8274 = vmatprep.subr.bf16.mxu0 0
    %8275 = vmatpush1.bf16.msra.mxu0 %v5922
    %8276 = vmatprep.subr.bf16.mxu0 0
    %8277 = vmatpush1.bf16.msra.mxu0 %v5923
    %8278 = vmatprep.subr.bf16.mxu0 0
    %8279 = vmatpush1.bf16.msra.mxu0 %v5924
    %8280 = vmatprep.subr.bf16.mxu0 0
    %8281 = vmatpush1.bf16.msra.mxu0 %v5925
    %8282 = vmatprep.subr.bf16.mxu0 0
    %8283 = vmatpush1.bf16.msra.mxu0 %v5926
    %8284 = vmatprep.subr.bf16.mxu0 0
    %8285 = vmatpush1.bf16.msra.mxu0 %v5927
    %8286 = vmatprep.subr.bf16.mxu0 0
    %8287 = vmatpush1.bf16.msra.mxu0 %v5928
    %8288 = vmatprep.subr.bf16.mxu0 0
    %8289 = vmatpush1.bf16.msra.mxu0 %v5929
    %8290 = vmatprep.subr.bf16.mxu0 0
    %8291 = vmatpush1.bf16.msra.mxu0 %v5930
    %8292 = vmatprep.subr.bf16.mxu0 0
    %8293 = vmatpush1.bf16.msra.mxu0 %v5931
    %8294 = vmatprep.subr.bf16.mxu0 0
    %8295 = vmatpush1.bf16.msra.mxu0 %v5932
    %8296 = vmatprep.subr.bf16.mxu0 0
    %8297 = vmatpush1.bf16.msra.mxu0 %v5933
    %8298 = vmatprep.subr.bf16.mxu0 0
    %8299 = vmatpush1.bf16.msra.mxu0 %v5934
    %8300 = vmatprep.subr.bf16.mxu0 0
    %8301 = vmatpush1.bf16.msra.mxu0 %v5935
    %8302 = vmatprep.subr.bf16.mxu0 0
    %8303 = vmatpush1.bf16.msra.mxu0 %v5936
    %8304 = vmatprep.subr.bf16.mxu0 0
    %8305 = vmatpush1.bf16.msra.mxu0 %v5937
    %8306 = vmatprep.mubr.bf16.mxu0 %v736
    %8307 = vmatmul.mubr.bf16.gmra.mrb[0].mxu0 %v735
    %v8308 = vpop.f32.mrb[0].mxu0
    %v8309 = vadd.f32 %v8269, %v8308
    %v8310 = vpop.f32.mrb[0].mxu0
    %v8311 = vpop.f32.mrb[0].mxu0
    %v8312 = vpop.f32.mrb[0].mxu0
    %8313 = vdwg.mxu0
    %8314 = vmatprep.subr.bf16.mxu0 0
    %8315 = vmatpush1.bf16.msra.mxu0 %v5938
    %8316 = vmatprep.subr.bf16.mxu0 0
    %8317 = vmatpush1.bf16.msra.mxu0 %v5939
    %8318 = vmatprep.subr.bf16.mxu0 0
    %8319 = vmatpush1.bf16.msra.mxu0 %v5940
    %8320 = vmatprep.subr.bf16.mxu0 0
    %8321 = vmatpush1.bf16.msra.mxu0 %v5941
    %8322 = vmatprep.subr.bf16.mxu0 0
    %8323 = vmatpush1.bf16.msra.mxu0 %v5942
    %8324 = vmatprep.subr.bf16.mxu0 0
    %8325 = vmatpush1.bf16.msra.mxu0 %v5943
    %8326 = vmatprep.subr.bf16.mxu0 0
    %8327 = vmatpush1.bf16.msra.mxu0 %v5944
    %8328 = vmatprep.subr.bf16.mxu0 0
    %8329 = vmatpush1.bf16.msra.mxu0 %v5945
    %8330 = vmatprep.subr.bf16.mxu0 0
    %8331 = vmatpush1.bf16.msra.mxu0 %v5946
    %8332 = vmatprep.subr.bf16.mxu0 0
    %8333 = vmatpush1.bf16.msra.mxu0 %v5947
    %8334 = vmatprep.subr.bf16.mxu0 0
    %8335 = vmatpush1.bf16.msra.mxu0 %v5948
    %8336 = vmatprep.subr.bf16.mxu0 0
    %8337 = vmatpush1.bf16.msra.mxu0 %v5949
    %8338 = vmatprep.subr.bf16.mxu0 0
    %8339 = vmatpush1.bf16.msra.mxu0 %v5950
    %8340 = vmatprep.subr.bf16.mxu0 0
    %8341 = vmatpush1.bf16.msra.mxu0 %v5951
    %8342 = vmatprep.subr.bf16.mxu0 0
    %8343 = vmatpush1.bf16.msra.mxu0 %v5952
    %8344 = vmatprep.subr.bf16.mxu0 0
    %8345 = vmatpush1.bf16.msra.mxu0 %v5953
    %8346 = vmatprep.mubr.bf16.mxu0 %v738
    %8347 = vmatmul.mubr.bf16.gmra.mrb[0].mxu0 %v737
    %v8348 = vpop.f32.mrb[0].mxu0
    %v8349 = vadd.f32 %v8309, %v8348
    %v8350 = vpop.f32.mrb[0].mxu0
    %v8351 = vpop.f32.mrb[0].mxu0
    %v8352 = vpop.f32.mrb[0].mxu0
    %8353 = vdwg.mxu0
    %8354 = vmatprep.subr.bf16.mxu0 0
    %8355 = vmatpush1.bf16.msra.mxu0 %v5954
    %8356 = vmatprep.subr.bf16.mxu0 0
    %8357 = vmatpush1.bf16.msra.mxu0 %v5955
    %8358 = vmatprep.subr.bf16.mxu0 0
    %8359 = vmatpush1.bf16.msra.mxu0 %v5956
    %8360 = vmatprep.subr.bf16.mxu0 0
    %8361 = vmatpush1.bf16.msra.mxu0 %v5957
    %8362 = vmatprep.subr.bf16.mxu0 0
    %8363 = vmatpush1.bf16.msra.mxu0 %v5958
    %8364 = vmatprep.subr.bf16.mxu0 0
    %8365 = vmatpush1.bf16.msra.mxu0 %v5959
    %8366 = vmatprep.subr.bf16.mxu0 0
    %8367 = vmatpush1.bf16.msra.mxu0 %v5960
    %8368 = vmatprep.subr.bf16.mxu0 0
    %8369 = vmatpush1.bf16.msra.mxu0 %v5961
    %8370 = vmatprep.subr.bf16.mxu0 0
    %8371 = vmatpush1.bf16.msra.mxu0 %v5962
    %8372 = vmatprep.subr.bf16.mxu0 0
    %8373 = vmatpush1.bf16.msra.mxu0 %v5963
    %8374 = vmatprep.subr.bf16.mxu0 0
    %8375 = vmatpush1.bf16.msra.mxu0 %v5964
    %8376 = vmatprep.subr.bf16.mxu0 0
    %8377 = vmatpush1.bf16.msra.mxu0 %v5965
    %8378 = vmatprep.subr.bf16.mxu0 0
    %8379 = vmatpush1.bf16.msra.mxu0 %v5966
    %8380 = vmatprep.subr.bf16.mxu0 0
    %8381 = vmatpush1.bf16.msra.mxu0 %v5967
    %8382 = vmatprep.subr.bf16.mxu0 0
    %8383 = vmatpush1.bf16.msra.mxu0 %v5968
    %8384 = vmatprep.subr.bf16.mxu0 0
    %8385 = vmatpush1.bf16.msra.mxu0 %v5969
    %8386 = vmatprep.mubr.bf16.mxu0 %v740
    %8387 = vmatmul.mubr.bf16.gmra.mrb[0].mxu0 %v739
    %v8388 = vpop.f32.mrb[0].mxu0
    %v8389 = vadd.f32 %v8349, %v8388
    %v8390 = vpop.f32.mrb[0].mxu0
    %v8391 = vpop.f32.mrb[0].mxu0
    %v8392 = vpop.f32.mrb[0].mxu0
    %8393 = vdwg.mxu0
    %8394 = vmatprep.subr.bf16.mxu0 0
    %8395 = vmatpush1.bf16.msra.mxu0 %v5970
    %8396 = vmatprep.subr.bf16.mxu0 0
    %8397 = vmatpush1.bf16.msra.mxu0 %v5971
    %8398 = vmatprep.subr.bf16.mxu0 0
    %8399 = vmatpush1.bf16.msra.mxu0 %v5972
    %8400 = vmatprep.subr.bf16.mxu0 0
    %8401 = vmatpush1.bf16.msra.mxu0 %v5973
    %8402 = vmatprep.subr.bf16.mxu0 0
    %8403 = vmatpush1.bf16.msra.mxu0 %v5974
    %8404 = vmatprep.subr.bf16.mxu0 0
    %8405 = vmatpush1.bf16.msra.mxu0 %v5975
    %8406 = vmatprep.subr.bf16.mxu0 0
    %8407 = vmatpush1.bf16.msra.mxu0 %v5976
    %8408 = vmatprep.subr.bf16.mxu0 0
    %8409 = vmatpush1.bf16.msra.mxu0 %v5977
    %8410 = vmatprep.subr.bf16.mxu0 0
    %8411 = vmatpush1.bf16.msra.mxu0 %v5978
    %8412 = vmatprep.subr.bf16.mxu0 0
    %8413 = vmatpush1.bf16.msra.mxu0 %v5979
    %8414 = vmatprep.subr.bf16.mxu0 0
    %8415 = vmatpush1.bf16.msra.mxu0 %v5980
    %8416 = vmatprep.subr.bf16.mxu0 0
    %8417 = vmatpush1.bf16.msra.mxu0 %v5981
    %8418 = vmatprep.subr.bf16.mxu0 0
    %8419 = vmatpush1.bf16.msra.mxu0 %v5982
    %8420 = vmatprep.subr.bf16.mxu0 0
    %8421 = vmatpush1.bf16.msra.mxu0 %v5983
    %8422 = vmatprep.subr.bf16.mxu0 0
    %8423 = vmatpush1.bf16.msra.mxu0 %v5984
    %8424 = vmatprep.subr.bf16.mxu0 0
    %8425 = vmatpush1.bf16.msra.mxu0 %v5985
    %8426 = vmatprep.mubr.bf16.mxu0 %v742
    %8427 = vmatmul.mubr.bf16.gmra.mrb[0].mxu0 %v741
    %v8428 = vpop.f32.mrb[0].mxu0
    %v8429 = vadd.f32 %v8389, %v8428
    %v8430 = vpop.f32.mrb[0].mxu0
    %v8431 = vpop.f32.mrb[0].mxu0
    %v8432 = vpop.f32.mrb[0].mxu0
    %8433 = vdwg.mxu0
    %8434 = vmatprep.subr.bf16.mxu0 0
    %8435 = vmatpush1.bf16.msra.mxu0 %v5986
    %8436 = vmatprep.subr.bf16.mxu0 0
    %8437 = vmatpush1.bf16.msra.mxu0 %v5987
    %8438 = vmatprep.subr.bf16.mxu0 0
    %8439 = vmatpush1.bf16.msra.mxu0 %v5988
    %8440 = vmatprep.subr.bf16.mxu0 0
    %8441 = vmatpush1.bf16.msra.mxu0 %v5989
    %8442 = vmatprep.subr.bf16.mxu0 0
    %8443 = vmatpush1.bf16.msra.mxu0 %v5990
    %8444 = vmatprep.subr.bf16.mxu0 0
    %8445 = vmatpush1.bf16.msra.mxu0 %v5991
    %8446 = vmatprep.subr.bf16.mxu0 0
    %8447 = vmatpush1.bf16.msra.mxu0 %v5992
    %8448 = vmatprep.subr.bf16.mxu0 0
    %8449 = vmatpush1.bf16.msra.mxu0 %v5993
    %8450 = vmatprep.subr.bf16.mxu0 0
    %8451 = vmatpush1.bf16.msra.mxu0 %v5994
    %8452 = vmatprep.subr.bf16.mxu0 0
    %8453 = vmatpush1.bf16.msra.mxu0 %v5995
    %8454 = vmatprep.subr.bf16.mxu0 0
    %8455 = vmatpush1.bf16.msra.mxu0 %v5996
    %8456 = vmatprep.subr.bf16.mxu0 0
    %8457 = vmatpush1.bf16.msra.mxu0 %v5997
    %8458 = vmatprep.subr.bf16.mxu0 0
    %8459 = vmatpush1.bf16.msra.mxu0 %v5998
    %8460 = vmatprep.subr.bf16.mxu0 0
    %8461 = vmatpush1.bf16.msra.mxu0 %v5999
    %8462 = vmatprep.subr.bf16.mxu0 0
    %8463 = vmatpush1.bf16.msra.mxu0 %v6000
    %8464 = vmatprep.subr.bf16.mxu0 0
    %8465 = vmatpush1.bf16.msra.mxu0 %v6001
    %8466 = vmatprep.mubr.bf16.mxu0 %v744
    %8467 = vmatmul.mubr.bf16.gmra.mrb[0].mxu0 %v743
    %v8468 = vpop.f32.mrb[0].mxu0
    %v8469 = vadd.f32 %v8429, %v8468
    %v8470 = vpop.f32.mrb[0].mxu0
    %v8471 = vpop.f32.mrb[0].mxu0
    %v8472 = vpop.f32.mrb[0].mxu0
    %8473 = vdwg.mxu0
    %8474 = vmatprep.subr.bf16.mxu0 0
    %8475 = vmatpush1.bf16.msra.mxu0 %v6002
    %8476 = vmatprep.subr.bf16.mxu0 0
    %8477 = vmatpush1.bf16.msra.mxu0 %v6003
    %8478 = vmatprep.subr.bf16.mxu0 0
    %8479 = vmatpush1.bf16.msra.mxu0 %v6004
    %8480 = vmatprep.subr.bf16.mxu0 0
    %8481 = vmatpush1.bf16.msra.mxu0 %v6005
    %8482 = vmatprep.subr.bf16.mxu0 0
    %8483 = vmatpush1.bf16.msra.mxu0 %v6006
    %8484 = vmatprep.subr.bf16.mxu0 0
    %8485 = vmatpush1.bf16.msra.mxu0 %v6007
    %8486 = vmatprep.subr.bf16.mxu0 0
    %8487 = vmatpush1.bf16.msra.mxu0 %v6008
    %8488 = vmatprep.subr.bf16.mxu0 0
    %8489 = vmatpush1.bf16.msra.mxu0 %v6009
    %8490 = vmatprep.subr.bf16.mxu0 0
    %8491 = vmatpush1.bf16.msra.mxu0 %v6010
    %8492 = vmatprep.subr.bf16.mxu0 0
    %8493 = vmatpush1.bf16.msra.mxu0 %v6011
    %8494 = vmatprep.subr.bf16.mxu0 0
    %8495 = vmatpush1.bf16.msra.mxu0 %v6012
    %8496 = vmatprep.subr.bf16.mxu0 0
    %8497 = vmatpush1.bf16.msra.mxu0 %v6013
    %8498 = vmatprep.subr.bf16.mxu0 0
    %8499 = vmatpush1.bf16.msra.mxu0 %v6014
    %8500 = vmatprep.subr.bf16.mxu0 0
    %8501 = vmatpush1.bf16.msra.mxu0 %v6015
    %8502 = vmatprep.subr.bf16.mxu0 0
    %8503 = vmatpush1.bf16.msra.mxu0 %v6016
    %8504 = vmatprep.subr.bf16.mxu0 0
    %8505 = vmatpush1.bf16.msra.mxu0 %v6017
    %8506 = vmatprep.mubr.bf16.mxu0 %v746
    %8507 = vmatmul.mubr.bf16.gmra.mrb[0].mxu0 %v745
    %v8508 = vpop.f32.mrb[0].mxu0
    %v8509 = vadd.f32 %v8469, %v8508
    %v8510 = vpop.f32.mrb[0].mxu0
    %v8511 = vpop.f32.mrb[0].mxu0
    %v8512 = vpop.f32.mrb[0].mxu0
    %8513 = vdwg.mxu0
    %8514 = vmatprep.subr.bf16.mxu0 0
    %8515 = vmatpush1.bf16.msra.mxu0 %v6018
    %8516 = vmatprep.subr.bf16.mxu0 0
    %8517 = vmatpush1.bf16.msra.mxu0 %v6019
    %8518 = vmatprep.subr.bf16.mxu0 0
    %8519 = vmatpush1.bf16.msra.mxu0 %v6020
    %8520 = vmatprep.subr.bf16.mxu0 0
    %8521 = vmatpush1.bf16.msra.mxu0 %v6021
    %8522 = vmatprep.subr.bf16.mxu0 0
    %8523 = vmatpush1.bf16.msra.mxu0 %v6022
    %8524 = vmatprep.subr.bf16.mxu0 0
    %8525 = vmatpush1.bf16.msra.mxu0 %v6023
    %8526 = vmatprep.subr.bf16.mxu0 0
    %8527 = vmatpush1.bf16.msra.mxu0 %v6024
    %8528 = vmatprep.subr.bf16.mxu0 0
    %8529 = vmatpush1.bf16.msra.mxu0 %v6025
    %8530 = vmatprep.subr.bf16.mxu0 0
    %8531 = vmatpush1.bf16.msra.mxu0 %v6026
    %8532 = vmatprep.subr.bf16.mxu0 0
    %8533 = vmatpush1.bf16.msra.mxu0 %v6027
    %8534 = vmatprep.subr.bf16.mxu0 0
    %8535 = vmatpush1.bf16.msra.mxu0 %v6028
    %8536 = vmatprep.subr.bf16.mxu0 0
    %8537 = vmatpush1.bf16.msra.mxu0 %v6029
    %8538 = vmatprep.subr.bf16.mxu0 0
    %8539 = vmatpush1.bf16.msra.mxu0 %v6030
    %8540 = vmatprep.subr.bf16.mxu0 0
    %8541 = vmatpush1.bf16.msra.mxu0 %v6031
    %8542 = vmatprep.subr.bf16.mxu0 0
    %8543 = vmatpush1.bf16.msra.mxu0 %v6032
    %8544 = vmatprep.subr.bf16.mxu0 0
    %8545 = vmatpush1.bf16.msra.mxu0 %v6033
    %8546 = vmatprep.mubr.bf16.mxu0 %v748
    %8547 = vmatmul.mubr.bf16.gmra.mrb[0].mxu0 %v747
    %v8548 = vpop.f32.mrb[0].mxu0
    %v8549 = vadd.f32 %v8509, %v8548
    %v8550 = vpop.f32.mrb[0].mxu0
    %v8551 = vpop.f32.mrb[0].mxu0
    %v8552 = vpop.f32.mrb[0].mxu0
    %8553 = vdwg.mxu0
    %8554 = vmatprep.subr.bf16.mxu0 0
    %8555 = vmatpush1.bf16.msra.mxu0 %v6034
    %8556 = vmatprep.subr.bf16.mxu0 0
    %8557 = vmatpush1.bf16.msra.mxu0 %v6035
    %8558 = vmatprep.subr.bf16.mxu0 0
    %8559 = vmatpush1.bf16.msra.mxu0 %v6036
    %8560 = vmatprep.subr.bf16.mxu0 0
    %8561 = vmatpush1.bf16.msra.mxu0 %v6037
    %8562 = vmatprep.subr.bf16.mxu0 0
    %8563 = vmatpush1.bf16.msra.mxu0 %v6038
    %8564 = vmatprep.subr.bf16.mxu0 0
    %8565 = vmatpush1.bf16.msra.mxu0 %v6039
    %8566 = vmatprep.subr.bf16.mxu0 0
    %8567 = vmatpush1.bf16.msra.mxu0 %v6040
    %8568 = vmatprep.subr.bf16.mxu0 0
    %8569 = vmatpush1.bf16.msra.mxu0 %v6041
    %8570 = vmatprep.subr.bf16.mxu0 0
    %8571 = vmatpush1.bf16.msra.mxu0 %v6042
    %8572 = vmatprep.subr.bf16.mxu0 0
    %8573 = vmatpush1.bf16.msra.mxu0 %v6043
    %8574 = vmatprep.subr.bf16.mxu0 0
    %8575 = vmatpush1.bf16.msra.mxu0 %v6044
    %8576 = vmatprep.subr.bf16.mxu0 0
    %8577 = vmatpush1.bf16.msra.mxu0 %v6045
    %8578 = vmatprep.subr.bf16.mxu0 0
    %8579 = vmatpush1.bf16.msra.mxu0 %v6046
    %8580 = vmatprep.subr.bf16.mxu0 0
    %8581 = vmatpush1.bf16.msra.mxu0 %v6047
    %8582 = vmatprep.subr.bf16.mxu0 0
    %8583 = vmatpush1.bf16.msra.mxu0 %v6048
    %8584 = vmatprep.subr.bf16.mxu0 0
    %8585 = vmatpush1.bf16.msra.mxu0 %v6049
    %8586 = vmatprep.mubr.bf16.mxu0 %v750
    %8587 = vmatmul.mubr.bf16.gmra.mrb[0].mxu0 %v749
    %v8588 = vpop.f32.mrb[0].mxu0
    %v8589 = vadd.f32 %v8549, %v8588
    %v8590 = vpop.f32.mrb[0].mxu0
    %v8591 = vpop.f32.mrb[0].mxu0
    %v8592 = vpop.f32.mrb[0].mxu0
    %8593 = vdwg.mxu0
    %8594 = vmatprep.subr.bf16.mxu0 0
    %8595 = vmatpush1.bf16.msra.mxu0 %v6050
    %8596 = vmatprep.subr.bf16.mxu0 0
    %8597 = vmatpush1.bf16.msra.mxu0 %v6051
    %8598 = vmatprep.subr.bf16.mxu0 0
    %8599 = vmatpush1.bf16.msra.mxu0 %v6052
    %8600 = vmatprep.subr.bf16.mxu0 0
    %8601 = vmatpush1.bf16.msra.mxu0 %v6053
    %8602 = vmatprep.subr.bf16.mxu0 0
    %8603 = vmatpush1.bf16.msra.mxu0 %v6054
    %8604 = vmatprep.subr.bf16.mxu0 0
    %8605 = vmatpush1.bf16.msra.mxu0 %v6055
    %8606 = vmatprep.subr.bf16.mxu0 0
    %8607 = vmatpush1.bf16.msra.mxu0 %v6056
    %8608 = vmatprep.subr.bf16.mxu0 0
    %8609 = vmatpush1.bf16.msra.mxu0 %v6057
    %8610 = vmatprep.subr.bf16.mxu0 0
    %8611 = vmatpush1.bf16.msra.mxu0 %v6058
    %8612 = vmatprep.subr.bf16.mxu0 0
    %8613 = vmatpush1.bf16.msra.mxu0 %v6059
    %8614 = vmatprep.subr.bf16.mxu0 0
    %8615 = vmatpush1.bf16.msra.mxu0 %v6060
    %8616 = vmatprep.subr.bf16.mxu0 0
    %8617 = vmatpush1.bf16.msra.mxu0 %v6061
    %8618 = vmatprep.subr.bf16.mxu0 0
    %8619 = vmatpush1.bf16.msra.mxu0 %v6062
    %8620 = vmatprep.subr.bf16.mxu0 0
    %8621 = vmatpush1.bf16.msra.mxu0 %v6063
    %8622 = vmatprep.subr.bf16.mxu0 0
    %8623 = vmatpush1.bf16.msra.mxu0 %v6064
    %8624 = vmatprep.subr.bf16.mxu0 0
    %8625 = vmatpush1.bf16.msra.mxu0 %v6065
    %8626 = vmatprep.mubr.bf16.mxu0 %v752
    %8627 = vmatmul.mubr.bf16.gmra.mrb[0].mxu0 %v751
    %v8628 = vpop.f32.mrb[0].mxu0
    %v8629 = vadd.f32 %v8589, %v8628
    %v8630 = vpop.f32.mrb[0].mxu0
    %v8631 = vpop.f32.mrb[0].mxu0
    %v8632 = vpop.f32.mrb[0].mxu0
    %8633 = vdwg.mxu0
    %8634 = vmatprep.subr.bf16.mxu0 0
    %8635 = vmatpush1.bf16.msra.mxu0 %v6066
    %8636 = vmatprep.subr.bf16.mxu0 0
    %8637 = vmatpush1.bf16.msra.mxu0 %v6067
    %8638 = vmatprep.subr.bf16.mxu0 0
    %8639 = vmatpush1.bf16.msra.mxu0 %v6068
    %8640 = vmatprep.subr.bf16.mxu0 0
    %8641 = vmatpush1.bf16.msra.mxu0 %v6069
    %8642 = vmatprep.subr.bf16.mxu0 0
    %8643 = vmatpush1.bf16.msra.mxu0 %v6070
    %8644 = vmatprep.subr.bf16.mxu0 0
    %8645 = vmatpush1.bf16.msra.mxu0 %v6071
    %8646 = vmatprep.subr.bf16.mxu0 0
    %8647 = vmatpush1.bf16.msra.mxu0 %v6072
    %8648 = vmatprep.subr.bf16.mxu0 0
    %8649 = vmatpush1.bf16.msra.mxu0 %v6073
    %8650 = vmatprep.subr.bf16.mxu0 0
    %8651 = vmatpush1.bf16.msra.mxu0 %v6074
    %8652 = vmatprep.subr.bf16.mxu0 0
    %8653 = vmatpush1.bf16.msra.mxu0 %v6075
    %8654 = vmatprep.subr.bf16.mxu0 0
    %8655 = vmatpush1.bf16.msra.mxu0 %v6076
    %8656 = vmatprep.subr.bf16.mxu0 0
    %8657 = vmatpush1.bf16.msra.mxu0 %v6077
    %8658 = vmatprep.subr.bf16.mxu0 0
    %8659 = vmatpush1.bf16.msra.mxu0 %v6078
    %8660 = vmatprep.subr.bf16.mxu0 0
    %8661 = vmatpush1.bf16.msra.mxu0 %v6079
    %8662 = vmatprep.subr.bf16.mxu0 0
    %8663 = vmatpush1.bf16.msra.mxu0 %v6080
    %8664 = vmatprep.subr.bf16.mxu0 0
    %8665 = vmatpush1.bf16.msra.mxu0 %v6081
    %8666 = vmatprep.mubr.bf16.mxu0 %v754
    %8667 = vmatmul.mubr.bf16.gmra.mrb[0].mxu0 %v753
    %v8668 = vpop.f32.mrb[0].mxu0
    %v8669 = vadd.f32 %v8629, %v8668
    %v8670 = vpop.f32.mrb[0].mxu0
    %v8671 = vpop.f32.mrb[0].mxu0
    %v8672 = vpop.f32.mrb[0].mxu0
    %8673 = vdwg.mxu0
    %8674 = vmatprep.subr.bf16.mxu0 0
    %8675 = vmatpush1.bf16.msra.mxu0 %v6082
    %8676 = vmatprep.subr.bf16.mxu0 0
    %8677 = vmatpush1.bf16.msra.mxu0 %v6083
    %8678 = vmatprep.subr.bf16.mxu0 0
    %8679 = vmatpush1.bf16.msra.mxu0 %v6084
    %8680 = vmatprep.subr.bf16.mxu0 0
    %8681 = vmatpush1.bf16.msra.mxu0 %v6085
    %8682 = vmatprep.subr.bf16.mxu0 0
    %8683 = vmatpush1.bf16.msra.mxu0 %v6086
    %8684 = vmatprep.subr.bf16.mxu0 0
    %8685 = vmatpush1.bf16.msra.mxu0 %v6087
    %8686 = vmatprep.subr.bf16.mxu0 0
    %8687 = vmatpush1.bf16.msra.mxu0 %v6088
    %8688 = vmatprep.subr.bf16.mxu0 0
    %8689 = vmatpush1.bf16.msra.mxu0 %v6089
    %8690 = vmatprep.subr.bf16.mxu0 0
    %8691 = vmatpush1.bf16.msra.mxu0 %v6090
    %8692 = vmatprep.subr.bf16.mxu0 0
    %8693 = vmatpush1.bf16.msra.mxu0 %v6091
    %8694 = vmatprep.subr.bf16.mxu0 0
    %8695 = vmatpush1.bf16.msra.mxu0 %v6092
    %8696 = vmatprep.subr.bf16.mxu0 0
    %8697 = vmatpush1.bf16.msra.mxu0 %v6093
    %8698 = vmatprep.subr.bf16.mxu0 0
    %8699 = vmatpush1.bf16.msra.mxu0 %v6094
    %8700 = vmatprep.subr.bf16.mxu0 0
    %8701 = vmatpush1.bf16.msra.mxu0 %v6095
    %8702 = vmatprep.subr.bf16.mxu0 0
    %8703 = vmatpush1.bf16.msra.mxu0 %v6096
    %8704 = vmatprep.subr.bf16.mxu0 0
    %8705 = vmatpush1.bf16.msra.mxu0 %v6097
    %8706 = vmatprep.mubr.bf16.mxu0 %v756
    %8707 = vmatmul.mubr.bf16.gmra.mrb[0].mxu0 %v755
    %v8708 = vpop.f32.mrb[0].mxu0
    %v8709 = vadd.f32 %v8669, %v8708
    %v8710 = vpop.f32.mrb[0].mxu0
    %v8711 = vpop.f32.mrb[0].mxu0
    %v8712 = vpop.f32.mrb[0].mxu0
    %8713 = vdwg.mxu0
    %8714 = vmatprep.subr.bf16.mxu0 0
    %8715 = vmatpush1.bf16.msra.mxu0 %v6098
    %8716 = vmatprep.subr.bf16.mxu0 0
    %8717 = vmatpush1.bf16.msra.mxu0 %v6099
    %8718 = vmatprep.subr.bf16.mxu0 0
    %8719 = vmatpush1.bf16.msra.mxu0 %v6100
    %8720 = vmatprep.subr.bf16.mxu0 0
    %8721 = vmatpush1.bf16.msra.mxu0 %v6101
    %8722 = vmatprep.subr.bf16.mxu0 0
    %8723 = vmatpush1.bf16.msra.mxu0 %v6102
    %8724 = vmatprep.subr.bf16.mxu0 0
    %8725 = vmatpush1.bf16.msra.mxu0 %v6103
    %8726 = vmatprep.subr.bf16.mxu0 0
    %8727 = vmatpush1.bf16.msra.mxu0 %v6104
    %8728 = vmatprep.subr.bf16.mxu0 0
    %8729 = vmatpush1.bf16.msra.mxu0 %v6105
    %8730 = vmatprep.subr.bf16.mxu0 0
    %8731 = vmatpush1.bf16.msra.mxu0 %v6106
    %8732 = vmatprep.subr.bf16.mxu0 0
    %8733 = vmatpush1.bf16.msra.mxu0 %v6107
    %8734 = vmatprep.subr.bf16.mxu0 0
    %8735 = vmatpush1.bf16.msra.mxu0 %v6108
    %8736 = vmatprep.subr.bf16.mxu0 0
    %8737 = vmatpush1.bf16.msra.mxu0 %v6109
    %8738 = vmatprep.subr.bf16.mxu0 0
    %8739 = vmatpush1.bf16.msra.mxu0 %v6110
    %8740 = vmatprep.subr.bf16.mxu0 0
    %8741 = vmatpush1.bf16.msra.mxu0 %v6111
    %8742 = vmatprep.subr.bf16.mxu0 0
    %8743 = vmatpush1.bf16.msra.mxu0 %v6112
    %8744 = vmatprep.subr.bf16.mxu0 0
    %8745 = vmatpush1.bf16.msra.mxu0 %v6113
    %8746 = vmatprep.mubr.bf16.mxu0 %v758
    %8747 = vmatmul.mubr.bf16.gmra.mrb[0].mxu0 %v757
    %v8748 = vpop.f32.mrb[0].mxu0
    %v8749 = vadd.f32 %v8709, %v8748
    %v8750 = vpop.f32.mrb[0].mxu0
    %v8751 = vpop.f32.mrb[0].mxu0
    %v8752 = vpop.f32.mrb[0].mxu0
    %8753 = vdwg.mxu0
    %8754 = vmatprep.subr.bf16.mxu0 0
    %8755 = vmatpush1.bf16.msra.mxu0 %v6114
    %8756 = vmatprep.subr.bf16.mxu0 0
    %8757 = vmatpush1.bf16.msra.mxu0 %v6115
    %8758 = vmatprep.subr.bf16.mxu0 0
    %8759 = vmatpush1.bf16.msra.mxu0 %v6116
    %8760 = vmatprep.subr.bf16.mxu0 0
    %8761 = vmatpush1.bf16.msra.mxu0 %v6117
    %8762 = vmatprep.subr.bf16.mxu0 0
    %8763 = vmatpush1.bf16.msra.mxu0 %v6118
    %8764 = vmatprep.subr.bf16.mxu0 0
    %8765 = vmatpush1.bf16.msra.mxu0 %v6119
    %8766 = vmatprep.subr.bf16.mxu0 0
    %8767 = vmatpush1.bf16.msra.mxu0 %v6120
    %8768 = vmatprep.subr.bf16.mxu0 0
    %8769 = vmatpush1.bf16.msra.mxu0 %v6121
    %8770 = vmatprep.subr.bf16.mxu0 0
    %8771 = vmatpush1.bf16.msra.mxu0 %v6122
    %8772 = vmatprep.subr.bf16.mxu0 0
    %8773 = vmatpush1.bf16.msra.mxu0 %v6123
    %8774 = vmatprep.subr.bf16.mxu0 0
    %8775 = vmatpush1.bf16.msra.mxu0 %v6124
    %8776 = vmatprep.subr.bf16.mxu0 0
    %8777 = vmatpush1.bf16.msra.mxu0 %v6125
    %8778 = vmatprep.subr.bf16.mxu0 0
    %8779 = vmatpush1.bf16.msra.mxu0 %v6126
    %8780 = vmatprep.subr.bf16.mxu0 0
    %8781 = vmatpush1.bf16.msra.mxu0 %v6127
    %8782 = vmatprep.subr.bf16.mxu0 0
    %8783 = vmatpush1.bf16.msra.mxu0 %v6128
    %8784 = vmatprep.subr.bf16.mxu0 0
    %8785 = vmatpush1.bf16.msra.mxu0 %v6129
    %8786 = vmatprep.mubr.bf16.mxu0 %v760
    %8787 = vmatmul.mubr.bf16.gmra.mrb[0].mxu0 %v759
    %v8788 = vpop.f32.mrb[0].mxu0
    %v8789 = vadd.f32 %v8749, %v8788
    %v8790 = vpop.f32.mrb[0].mxu0
    %v8791 = vpop.f32.mrb[0].mxu0
    %v8792 = vpop.f32.mrb[0].mxu0
    %8793 = vdwg.mxu0
    %8794 = vmatprep.subr.bf16.mxu0 0
    %8795 = vmatpush1.bf16.msra.mxu0 %v6130
    %8796 = vmatprep.subr.bf16.mxu0 0
    %8797 = vmatpush1.bf16.msra.mxu0 %v6131
    %8798 = vmatprep.subr.bf16.mxu0 0
    %8799 = vmatpush1.bf16.msra.mxu0 %v6132
    %8800 = vmatprep.subr.bf16.mxu0 0
    %8801 = vmatpush1.bf16.msra.mxu0 %v6133
    %8802 = vmatprep.subr.bf16.mxu0 0
    %8803 = vmatpush1.bf16.msra.mxu0 %v6134
    %8804 = vmatprep.subr.bf16.mxu0 0
    %8805 = vmatpush1.bf16.msra.mxu0 %v6135
    %8806 = vmatprep.subr.bf16.mxu0 0
    %8807 = vmatpush1.bf16.msra.mxu0 %v6136
    %8808 = vmatprep.subr.bf16.mxu0 0
    %8809 = vmatpush1.bf16.msra.mxu0 %v6137
    %8810 = vmatprep.subr.bf16.mxu0 0
    %8811 = vmatpush1.bf16.msra.mxu0 %v6138
    %8812 = vmatprep.subr.bf16.mxu0 0
    %8813 = vmatpush1.bf16.msra.mxu0 %v6139
    %8814 = vmatprep.subr.bf16.mxu0 0
    %8815 = vmatpush1.bf16.msra.mxu0 %v6140
    %8816 = vmatprep.subr.bf16.mxu0 0
    %8817 = vmatpush1.bf16.msra.mxu0 %v6141
    %8818 = vmatprep.subr.bf16.mxu0 0
    %8819 = vmatpush1.bf16.msra.mxu0 %v6142
    %8820 = vmatprep.subr.bf16.mxu0 0
    %8821 = vmatpush1.bf16.msra.mxu0 %v6143
    %8822 = vmatprep.subr.bf16.mxu0 0
    %8823 = vmatpush1.bf16.msra.mxu0 %v6144
    %8824 = vmatprep.subr.bf16.mxu0 0
    %8825 = vmatpush1.bf16.msra.mxu0 %v6145
    %8826 = vmatprep.mubr.bf16.mxu0 %v762
    %8827 = vmatmul.mubr.bf16.gmra.mrb[0].mxu0 %v761
    %v8828 = vpop.f32.mrb[0].mxu0
    %v8829 = vadd.f32 %v8789, %v8828
    %v8830 = vpop.f32.mrb[0].mxu0
    %v8831 = vpop.f32.mrb[0].mxu0
    %v8832 = vpop.f32.mrb[0].mxu0
    %8833 = vdwg.mxu0
    %v8834 = vmax.f32 %v8829, 0.0
    %v8835 = vld [vmem:[#allocation8] sm:$0xff]
    %v8836 = vld [vmem:[#allocation8 + $0x8] sm:$0xff]
    %v8837 = vld [vmem:[#allocation8 + $0x10] sm:$0xff]
    %v8838 = vld [vmem:[#allocation8 + $0x18] sm:$0xff]
    %v8839 = vld [vmem:[#allocation8 + $0x20] sm:$0xff]
    %v8840 = vld [vmem:[#allocation8 + $0x28] sm:$0xff]
    %v8841 = vld [vmem:[#allocation8 + $0x30] sm:$0xff]
    %v8842 = vld [vmem:[#allocation8 + $0x38] sm:$0xff]
    %v8843 = vld [vmem:[#allocation8 + $0x40] sm:$0xff]
    %v8844 = vld [vmem:[#allocation8 + $0x48] sm:$0xff]
    %v8845 = vld [vmem:[#allocation8 + $0x50] sm:$0xff]
    %v8846 = vld [vmem:[#allocation8 + $0x58] sm:$0xff]
    %v8847 = vld [vmem:[#allocation8 + $0x60] sm:$0xff]
    %v8848 = vld [vmem:[#allocation8 + $0x68] sm:$0xff]
    %v8849 = vld [vmem:[#allocation8 + $0x70] sm:$0xff]
    %v8850 = vld [vmem:[#allocation8 + $0x78] sm:$0xff]
    %v8851 = vld [vmem:[#allocation10] sm:$0x1]
    %v8853 = vlaneseq
    %v8854 = vshrl.u32 %v8853, 7
    %v8855 = vsub.s32 0, %v8854
    %v8856 = vrot.slane %v8851, %v8855
    %8858 = vmatprep.subr.mxu0 0.0
    %8859 = vmatpush1.msra.mxu0 %v8835
    %8860 = vmatprep.subr.mxu0 0.0
    %8861 = vmatpush1.msra.mxu0 %v8836
    %8862 = vmatprep.subr.mxu0 0.0
    %8863 = vmatpush1.msra.mxu0 %v8837
    %8864 = vmatprep.subr.mxu0 0.0
    %8865 = vmatpush1.msra.mxu0 %v8838
    %8866 = vmatprep.subr.mxu0 0.0
    %8867 = vmatpush1.msra.mxu0 %v8839
    %8868 = vmatprep.subr.mxu0 0.0
    %8869 = vmatpush1.msra.mxu0 %v8840
    %8870 = vmatprep.subr.mxu0 0.0
    %8871 = vmatpush1.msra.mxu0 %v8841
    %8872 = vmatprep.subr.mxu0 0.0
    %8873 = vmatpush1.msra.mxu0 %v8842
    %8874 = vmatprep.subr.mxu0 0.0
    %8875 = vmatpush1.msra.mxu0 %v8843
    %8876 = vmatprep.subr.mxu0 0.0
    %8877 = vmatpush1.msra.mxu0 %v8844
    %8878 = vmatprep.subr.mxu0 0.0
    %8879 = vmatpush1.msra.mxu0 %v8845
    %8880 = vmatprep.subr.mxu0 0.0
    %8881 = vmatpush1.msra.mxu0 %v8846
    %8882 = vmatprep.subr.mxu0 0.0
    %8883 = vmatpush1.msra.mxu0 %v8847
    %8884 = vmatprep.subr.mxu0 0.0
    %8885 = vmatpush1.msra.mxu0 %v8848
    %8886 = vmatprep.subr.mxu0 0.0
    %8887 = vmatpush1.msra.mxu0 %v8849
    %8888 = vmatprep.subr.mxu0 0.0
    %8889 = vmatpush1.msra.mxu0 %v8850
    %8890 = vmatprep.subr.mxu0 0.0
    %8891 = vmatpush1.msra.mxu0 0.0
    %8892 = vmatprep.subr.mxu0 0.0
    %8893 = vmatpush1.msra.mxu0 0.0
    %8894 = vmatprep.subr.mxu0 0.0
    %8895 = vmatpush1.msra.mxu0 0.0
    %8896 = vmatprep.subr.mxu0 0.0
    %8897 = vmatpush1.msra.mxu0 0.0
    %8898 = vmatprep.subr.mxu0 0.0
    %8899 = vmatpush1.msra.mxu0 0.0
    %8900 = vmatprep.subr.mxu0 0.0
    %8901 = vmatpush1.msra.mxu0 0.0
    %8902 = vmatprep.subr.mxu0 0.0
    %8903 = vmatpush1.msra.mxu0 0.0
    %8904 = vmatprep.subr.mxu0 0.0
    %8905 = vmatpush1.msra.mxu0 0.0
    %8906 = vmatprep.subr.mxu0 0.0
    %8907 = vmatpush1.msra.mxu0 0.0
    %8908 = vmatprep.subr.mxu0 0.0
    %8909 = vmatpush1.msra.mxu0 0.0
    %8910 = vmatprep.subr.mxu0 0.0
    %8911 = vmatpush1.msra.mxu0 0.0
    %8912 = vmatprep.subr.mxu0 0.0
    %8913 = vmatpush1.msra.mxu0 0.0
    %8914 = vmatprep.subr.mxu0 0.0
    %8915 = vmatpush1.msra.mxu0 0.0
    %8916 = vmatprep.subr.mxu0 0.0
    %8917 = vmatpush1.msra.mxu0 0.0
    %8918 = vmatprep.subr.mxu0 0.0
    %8919 = vmatpush1.msra.mxu0 0.0
    %8920 = vmatprep.subr.mxu0 0.0
    %8921 = vmatpush1.msra.mxu0 0.0
    %8922 = vmatprep.mubr.f32.mxu0 0.0
    %8923 = vmatmul.mubr.f32.gmra.mrb[0].mxu0 %v8834
    %v8924 = vpop.f32.mrb[0].mxu0
    %v8925 = vadd.f32 %v8856, %v8924
    %v8926 = vpop.f32.mrb[0].mxu0
    %8927 = vdwg.mxu0
    %v8928 = vmax.f32 %v8925, 0.0
    %v8929 = vld [vmem:[#allocation11] sm:$0xff]
    %v8930 = vld [vmem:[#allocation11 + $0x8] sm:$0xff]
    %v8931 = vld [vmem:[#allocation11 + $0x10] sm:$0xff]
    %v8932 = vld [vmem:[#allocation11 + $0x18] sm:$0xff]
    %v8933 = vld [vmem:[#allocation11 + $0x20] sm:$0xff]
    %v8934 = vld [vmem:[#allocation11 + $0x28] sm:$0xff]
    %v8935 = vld [vmem:[#allocation11 + $0x30] sm:$0xff]
    %v8936 = vld [vmem:[#allocation11 + $0x38] sm:$0xff]
    %v8937 = vld [vmem:[#allocation11 + $0x40] sm:$0xff]
    %v8938 = vld [vmem:[#allocation11 + $0x48] sm:$0xff]
    %v8939 = vld [vmem:[#allocation11 + $0x50] sm:$0xff]
    %v8940 = vld [vmem:[#allocation11 + $0x58] sm:$0xff]
    %v8941 = vld [vmem:[#allocation11 + $0x60] sm:$0xff]
    %v8942 = vld [vmem:[#allocation11 + $0x68] sm:$0xff]
    %v8943 = vld [vmem:[#allocation11 + $0x70] sm:$0xff]
    %v8944 = vld [vmem:[#allocation11 + $0x78] sm:$0xff]
    %v8945 = vld [vmem:[#allocation13] sm:$0x1]
    %v8947 = vlaneseq
    %v8948 = vshrl.u32 %v8947, 7
    %v8949 = vsub.s32 0, %v8948
    %v8950 = vrot.slane %v8945, %v8949
    %8952 = vmatprep.subr.mxu0 0.0
    %8953 = vmatpush1.msra.mxu0 %v8929
    %8954 = vmatprep.subr.mxu0 0.0
    %8955 = vmatpush1.msra.mxu0 %v8930
    %8956 = vmatprep.subr.mxu0 0.0
    %8957 = vmatpush1.msra.mxu0 %v8931
    %8958 = vmatprep.subr.mxu0 0.0
    %8959 = vmatpush1.msra.mxu0 %v8932
    %8960 = vmatprep.subr.mxu0 0.0
    %8961 = vmatpush1.msra.mxu0 %v8933
    %8962 = vmatprep.subr.mxu0 0.0
    %8963 = vmatpush1.msra.mxu0 %v8934
    %8964 = vmatprep.subr.mxu0 0.0
    %8965 = vmatpush1.msra.mxu0 %v8935
    %8966 = vmatprep.subr.mxu0 0.0
    %8967 = vmatpush1.msra.mxu0 %v8936
    %8968 = vmatprep.subr.mxu0 0.0
    %8969 = vmatpush1.msra.mxu0 %v8937
    %8970 = vmatprep.subr.mxu0 0.0
    %8971 = vmatpush1.msra.mxu0 %v8938
    %8972 = vmatprep.subr.mxu0 0.0
    %8973 = vmatpush1.msra.mxu0 %v8939
    %8974 = vmatprep.subr.mxu0 0.0
    %8975 = vmatpush1.msra.mxu0 %v8940
    %8976 = vmatprep.subr.mxu0 0.0
    %8977 = vmatpush1.msra.mxu0 %v8941
    %8978 = vmatprep.subr.mxu0 0.0
    %8979 = vmatpush1.msra.mxu0 %v8942
    %8980 = vmatprep.subr.mxu0 0.0
    %8981 = vmatpush1.msra.mxu0 %v8943
    %8982 = vmatprep.subr.mxu0 0.0
    %8983 = vmatpush1.msra.mxu0 %v8944
    %8984 = vmatprep.subr.mxu0 0.0
    %8985 = vmatpush1.msra.mxu0 0.0
    %8986 = vmatprep.subr.mxu0 0.0
    %8987 = vmatpush1.msra.mxu0 0.0
    %8988 = vmatprep.subr.mxu0 0.0
    %8989 = vmatpush1.msra.mxu0 0.0
    %8990 = vmatprep.subr.mxu0 0.0
    %8991 = vmatpush1.msra.mxu0 0.0
    %8992 = vmatprep.subr.mxu0 0.0
    %8993 = vmatpush1.msra.mxu0 0.0
    %8994 = vmatprep.subr.mxu0 0.0
    %8995 = vmatpush1.msra.mxu0 0.0
    %8996 = vmatprep.subr.mxu0 0.0
    %8997 = vmatpush1.msra.mxu0 0.0
    %8998 = vmatprep.subr.mxu0 0.0
    %8999 = vmatpush1.msra.mxu0 0.0
    %9000 = vmatprep.subr.mxu0 0.0
    %9001 = vmatpush1.msra.mxu0 0.0
    %9002 = vmatprep.subr.mxu0 0.0
    %9003 = vmatpush1.msra.mxu0 0.0
    %9004 = vmatprep.subr.mxu0 0.0
    %9005 = vmatpush1.msra.mxu0 0.0
    %9006 = vmatprep.subr.mxu0 0.0
    %9007 = vmatpush1.msra.mxu0 0.0
    %9008 = vmatprep.subr.mxu0 0.0
    %9009 = vmatpush1.msra.mxu0 0.0
    %9010 = vmatprep.subr.mxu0 0.0
    %9011 = vmatpush1.msra.mxu0 0.0
    %9012 = vmatprep.subr.mxu0 0.0
    %9013 = vmatpush1.msra.mxu0 0.0
    %9014 = vmatprep.subr.mxu0 0.0
    %9015 = vmatpush1.msra.mxu0 0.0
    %9016 = vmatprep.mubr.f32.mxu0 0.0
    %9017 = vmatmul.mubr.f32.gmra.mrb[0].mxu0 %v8928
    %v9018 = vpop.f32.mrb[0].mxu0
    %v9019 = vadd.f32 %v8950, %v9018
    %v9020 = vpop.f32.mrb[0].mxu0
    %9021 = vdwg.mxu0
    %9022 = vst [vmem:[#allocation14] sm:$0x3] %v9019
    // Predicated region
    $region58: #{tpu_custom_call.1} parent=1 // pred_check
      _
    $region59: #{tpu_custom_call.1} parent=1 // pred_check_branch
      %9024 = sbr.rel (0) target = $region61
    $region60: #{tpu_custom_call.1} parent=1 // pred_region
      %s9026 = ssub.s32 32, 32
      %9027 = vsyncadd [#allocation4], %s9026
      %s9029 = sshll.u32 [#allocation14], 4
      %s9030 = int_to_ptr.vmem [resolvable:$true] %s9029
      %9032 = dma.vmem_to_hbm [thread:$0]  %s9030, 32, %s7, [#allocation4]
    $region61: #{tpu_custom_call.1} parent=1 // pred_fallthru
      _
    // Predicated region
    $region62: #{tpu_custom_call.1} parent=1 // pred_check
      _
    $region63: #{tpu_custom_call.1} parent=1 // pred_check_branch
      %9034 = sbr.rel (0) target = $region65
    $region64: #{tpu_custom_call.1} parent=1 // pred_region
      %9035 = dma.done [#allocation4], 32
    $region65: #{tpu_custom_call.1} parent=1 // pred_fallthru
      _
    %9036 = vsyncpa [#allocation3], 1
    %9037 = vsyncpa [#allocation6], 1
    %9038 = vsyncpa [#allocation9], 1
    %9039 = vsyncpa [#allocation12], 1
    %9040 = vsyncpa [#allocation4], 1

</llo_original>
